<compile_context>
chip_gen: v5e
topology: v5e:2x2
jax: 0.10.0
libtpu: 0.0.40
codegen_flags: <defaults>
</compile_context>

<pallas_src>
import functools

import jax
import jax.numpy as jnp
import numpy as np
from jax.experimental import pallas as pl
from jax.experimental.pallas import tpu as pltpu

LANE = 128


def _round_up(x, m):
    return ((x + m - 1) // m) * m


def _pad_to(a, shape):
    return jnp.pad(a, [(0, t - s) for s, t in zip(a.shape, shape)])


def _itemsize(dt):
    return jnp.dtype(dt).itemsize


def _is_v5e():
    try:
        kind = jax.devices()[0].device_kind.lower()
        return ("v5 lite" in kind) or ("v5e" in kind) or ("v5litepod" in kind)
    except Exception:
        return False


def _vmem_capacity_bytes():
    try:
        return int(pltpu.get_tpu_info().vmem_capacity_bytes)
    except Exception:
        return 64 * 1024 * 1024  # v7x per-TC physical VMEM (smallest of the 3 gens)


# ----------------------------------------------------------------------------
# Pallas kernel: 3x3/stride-1/pad-1 conv (9 contiguous-row-window MXU matmuls)
#                + folded-BN bias [+ fused identity / projection shortcut]
#                + optional ReLU.  Single store of the f32 value accumulator.
# ----------------------------------------------------------------------------
def _conv3x3_bn_act_kernel(*refs, h, w, wp, shortcut, apply_relu):
    # shortcut in {"none", "identity", "project"}
    if shortcut == "project":
        x_ref, w_ref, b_ref, r_ref, wsc_ref, bsc_ref, o_ref, xp_ref = refs
    elif shortcut == "identity":
        x_ref, w_ref, b_ref, r_ref, o_ref, xp_ref = refs
    else:
        x_ref, w_ref, b_ref, o_ref, xp_ref = refs

    tn = o_ref.shape[-1]
    hw = h * w
    hwp = h * wp

    # ---- build the zero-halo tile in VMEM scratch (flattened (H+2)*Wp rows).
    # Zeroed every step: the scratch persists across grid steps, but with
    # megacore sharding a core may never see step 0, so no one-time init.
    xp_ref[...] = jnp.zeros_like(xp_ref)
    for y in range(h):  # small H per step; unrolled aligned loads, masked stores
        dst = (y + 1) * wp + 1
        xp_ref[dst:dst + w, :] = x_ref[y * w:(y + 1) * w, :]

    # ---- 9 shifted taps as contiguous row windows -> MXU, value accumulation.
    acc = None
    for dy in range(3):
        for dx in range(3):
            k = 3 * dy + dx
            start = dy * wp + dx
            patch = xp_ref[start:start + hwp, :]          # contiguous row window
            c = jnp.dot(patch, w_ref[k], preferred_element_type=jnp.float32)
            acc = c if acc is None else acc + c

    # Discard the (wp - w) wrap-around garbage columns (8-aligned reshapes since
    # wp % 8 == 0), add the folded-BN bias.
    y_val = acc.reshape(h, wp, tn)[:, :w, :].reshape(hw, tn) + b_ref[...]

    if shortcut == "identity":
        y_val = y_val + r_ref[...].astype(jnp.float32)
    elif shortcut == "project":
        y_val = (y_val
                 + jnp.dot(r_ref[...], wsc_ref[...],
                           preferred_element_type=jnp.float32)
                 + bsc_ref[...])

    if apply_relu:
        y_val = jnp.maximum(y_val, 0.0)

    o_ref[...] = y_val.astype(o_ref.dtype)                # single store


def fused_conv3x3_bn_act(x_flat, h, w, w9, bias, *, shortcut_flat=None,
                         shortcut_w=None, shortcut_b=None, apply_relu=True,
                         out_dtype=jnp.float32):
    """x_flat: (N, H*W, Cin_pad) bf16, NO spatial halo, channels padded to 128.
    w9: (9, Cin_pad, Cout_pad) bf16 (BN scale folded).  bias: (1, Cout_pad) f32.
    Optional fused shortcut (same unpadded flattened layout):
      identity -> shortcut_flat only (Cin_pad == Cout_pad)
      project  -> shortcut_flat + 1x1 weight (Cin_pad, Cout_pad) + bias.
    Returns (N, H*W, Cout_pad) in out_dtype."""
    n, hw, cin_pad = x_flat.shape
    assert hw == h * w
    cout_pad = w9.shape[-1]

    # Lane-dense Cout tile; 256 only helps the 256-wide v6e/v7x MXU — on v5e it
    # just doubles VMEM pressure.
    tn = 256 if (cout_pad % 256 == 0 and not _is_v5e()) else 128
    n_ct = cout_pad // tn

    if shortcut_flat is None:
        shortcut = "none"
    elif shortcut_w is None:
        shortcut = "identity"
        assert shortcut_flat.shape[-1] == cout_pad
    else:
        shortcut = "project"

    # ---- grid ordering: the heavier operand goes on the slow-varying axis so
    # Pallas (which skips DMA when a block index is unchanged) re-fetches the
    # smaller one.
    act_bytes = hw * cin_pad * _itemsize(x_flat.dtype) + hw * tn * _itemsize(out_dtype)
    w_bytes = 9 * cin_pad * tn * _itemsize(w9.dtype) + tn * 4
    if shortcut == "identity":
        act_bytes += hw * tn * _itemsize(shortcut_flat.dtype)
    elif shortcut == "project":
        act_bytes += hw * cin_pad * _itemsize(shortcut_flat.dtype)
        w_bytes += cin_pad * tn * _itemsize(shortcut_w.dtype) + tn * 4

    if w_bytes > act_bytes:            # weight-heavy: Cout tile outer, batch inner
        grid = (n_ct, n)
        bsel = lambda i, j: j
        csel = lambda i, j: i
    else:                              # activation-heavy: batch outer, Cout inner
        grid = (n, n_ct)
        bsel = lambda i, j: i
        csel = lambda i, j: j

    in_specs = [
        pl.BlockSpec((None, hw, cin_pad), lambda i, j: (bsel(i, j), 0, 0)),
        pl.BlockSpec((9, cin_pad, tn), lambda i, j: (0, 0, csel(i, j))),
        pl.BlockSpec((1, tn), lambda i, j: (0, csel(i, j))),
    ]
    operands = [x_flat, w9, bias]
    if shortcut == "identity":
        in_specs.append(pl.BlockSpec((None, hw, tn),
                                     lambda i, j: (bsel(i, j), 0, csel(i, j))))
        operands.append(shortcut_flat)
    elif shortcut == "project":
        cr = shortcut_flat.shape[-1]
        in_specs.append(pl.BlockSpec((None, hw, cr), lambda i, j: (bsel(i, j), 0, 0)))
        in_specs.append(pl.BlockSpec((cr, tn), lambda i, j: (0, csel(i, j))))
        in_specs.append(pl.BlockSpec((1, tn), lambda i, j: (0, csel(i, j))))
        operands += [shortcut_flat, shortcut_w, shortcut_b]

    out_spec = pl.BlockSpec((None, hw, tn), lambda i, j: (bsel(i, j), 0, csel(i, j)))

    # Flattened halo'd scratch: Wp padded to a multiple of 8 keeps the final
    # garbage-column discard 8-aligned; +2 rows absorb the last tap's wrap.
    wp = _round_up(w + 2, 8)
    scr_rows = _round_up((h + 2) * wp + 2, 8)

    # ---- VMEM budget (double-buffered blocks + single scratch) --------------
    working = (hw * cin_pad * _itemsize(x_flat.dtype)
               + 9 * cin_pad * tn * _itemsize(w9.dtype)
               + tn * 4
               + hw * tn * _itemsize(out_dtype))
    if shortcut == "identity":
        working += hw * tn * _itemsize(shortcut_flat.dtype)
    elif shortcut == "project":
        working += (hw * cin_pad * _itemsize(shortcut_flat.dtype)
                    + cin_pad * tn * _itemsize(shortcut_w.dtype) + tn * 4)
    vmem_needed = 2 * working + scr_rows * cin_pad * _itemsize(x_flat.dtype)

    cp_kwargs = dict(dimension_semantics=("parallel", "parallel"))
    if vmem_needed > 12 * 1024 * 1024:
        # Generation-aware cap: ~75% of physical VMEM leaves headroom for the
        # double-buffered DMA windows (v7x has only 64 MiB per TensorCore).
        cap = max(16 * 1024 * 1024, int(0.75 * _vmem_capacity_bytes()))
        cp_kwargs["vmem_limit_bytes"] = min(int(1.5 * vmem_needed), cap)

    # Advisory cost estimate for XLA's scheduler.
    flops = 2 * n * 9 * (h * wp) * cin_pad * cout_pad
    bytes_accessed = (n * hw * cin_pad * _itemsize(x_flat.dtype)
                      + 9 * cin_pad * cout_pad * _itemsize(w9.dtype)
                      + n * hw * cout_pad * _itemsize(out_dtype))
    if shortcut == "identity":
        bytes_accessed += n * hw * cout_pad * _itemsize(shortcut_flat.dtype)
    elif shortcut == "project":
        flops += 2 * n * hw * cin_pad * cout_pad
        bytes_accessed += (n * hw * cin_pad * _itemsize(shortcut_flat.dtype)
                           + cin_pad * cout_pad * _itemsize(shortcut_w.dtype))

    kernel = functools.partial(_conv3x3_bn_act_kernel, h=h, w=w, wp=wp,
                               shortcut=shortcut, apply_relu=apply_relu)
    return pl.pallas_call(
        kernel,
        out_shape=jax.ShapeDtypeStruct((n, hw, cout_pad), out_dtype),
        grid_spec=pltpu.PrefetchScalarGridSpec(
            num_scalar_prefetch=0,
            grid=grid,
            in_specs=in_specs,
            out_specs=out_spec,
            scratch_shapes=[pltpu.VMEM((scr_rows, cin_pad), x_flat.dtype)],
        ),
        compiler_params=pltpu.CompilerParams(**cp_kwargs),
        cost_estimate=pl.CostEstimate(flops=int(flops), transcendentals=0,
                                      bytes_accessed=int(bytes_accessed)),
    )(*operands)


# ----------------------------------------------------------------------------
# Parameter prep (BN folding, channel padding, bf16 cast) — plain JAX glue
# ----------------------------------------------------------------------------
def fold_bn(bn, eps=1e-5):
    scale = bn["gamma"] / jnp.sqrt(bn["var"] + eps)
    bias = bn["beta"] - bn["mean"] * scale
    return scale, bias


def prepare_block(params, cin):
    planes = params["w1"].shape[-1]
    cin_pad = _round_up(cin, LANE)
    p_pad = _round_up(planes, LANE)

    s1, b1 = fold_bn(params["bn1"])
    w1 = params["w1"].reshape(9, cin, planes) * s1[None, None, :]
    s2, b2 = fold_bn(params["bn2"])
    w2 = params["w2"].reshape(9, planes, planes) * s2[None, None, :]

    prep = dict(
        planes=planes, cin_pad=cin_pad, p_pad=p_pad,
        w1=_pad_to(w1, (9, cin_pad, p_pad)).astype(jnp.bfloat16),
        b1=_pad_to(b1, (p_pad,)).reshape(1, p_pad).astype(jnp.float32),
        w2=_pad_to(w2, (9, p_pad, p_pad)).astype(jnp.bfloat16),
        b2=_pad_to(b2, (p_pad,)).reshape(1, p_pad).astype(jnp.float32),
    )
    if "w_sc" in params:
        ssc, bsc = fold_bn(params["bn_sc"])
        wsc = params["w_sc"] * ssc[None, :]
        prep["w_sc"] = _pad_to(wsc, (cin_pad, p_pad)).astype(jnp.bfloat16)
        prep["b_sc"] = _pad_to(bsc, (p_pad,)).reshape(1, p_pad).astype(jnp.float32)
    return prep


def basic_block_forward(params, x_nhwc, stride=1, out_dtype=jnp.float32):
    """out = relu(bn2(conv2(relu(bn1(conv1(x))))) + shortcut(x)).  Pass
    out_dtype=jnp.bfloat16 when the consumer is another bf16 block."""
    assert stride == 1, "stride != 1 not implemented"
    n, h, w, cin = x_nhwc.shape
    prep = prepare_block(params, cin)
    planes, cin_pad, p_pad = prep["planes"], prep["cin_pad"], prep["p_pad"]

    # bf16 activations, channels padded to 128 lanes, spatially flattened.
    # No HBM-side halo padding — the zero halo is rebuilt inside each kernel.
    x_flat = (_pad_to(x_nhwc, (n, h, w, cin_pad)).astype(jnp.bfloat16)
              .reshape(n, h * w, cin_pad))

    # out1 = relu(bn1(conv1(x)))  — bf16 intermediate, consumed as-is by conv2.
    out1 = fused_conv3x3_bn_act(x_flat, h, w, prep["w1"], prep["b1"],
                                apply_relu=True, out_dtype=jnp.bfloat16)

    # out2 = relu(bn2(conv2(out1)) + shortcut(x)) — shortcut fused in-kernel.
    if "w_sc" in prep:
        out2 = fused_conv3x3_bn_act(out1, h, w, prep["w2"], prep["b2"],
                                    shortcut_flat=x_flat, shortcut_w=prep["w_sc"],
                                    shortcut_b=prep["b_sc"],
                                    apply_relu=True, out_dtype=out_dtype)
    else:
        assert cin_pad == p_pad
        out2 = fused_conv3x3_bn_act(out1, h, w, prep["w2"], prep["b2"],
                                    shortcut_flat=x_flat,
                                    apply_relu=True, out_dtype=out_dtype)

    return out2.reshape(n, h, w, p_pad)[:, :, :, :planes]


# ----------------------------------------------------------------------------
# Init + pure-JAX reference (for correctness check)
# ----------------------------------------------------------------------------
def init_bn(key, c):
    k1, k2, k3, k4 = jax.random.split(key, 4)
    return dict(
        gamma=1.0 + 0.1 * jax.random.normal(k1, (c,), jnp.float32),
        beta=0.1 * jax.random.normal(k2, (c,), jnp.float32),
        mean=0.1 * jax.random.normal(k3, (c,), jnp.float32),
        var=1.0 + 0.5 * jax.random.uniform(k4, (c,), jnp.float32),
    )


def init_basic_block(key, in_planes, planes, stride=1):
    ks = jax.random.split(key, 6)
    params = dict(
        w1=jax.random.normal(ks[0], (3, 3, in_planes, planes), jnp.float32)
        / np.sqrt(9 * in_planes),
        bn1=init_bn(ks[1], planes),
        w2=jax.random.normal(ks[2], (3, 3, planes, planes), jnp.float32)
        / np.sqrt(9 * planes),
        bn2=init_bn(ks[3], planes),
    )
    if stride != 1 or in_planes != planes:
        params["w_sc"] = jax.random.normal(ks[4], (in_planes, planes), jnp.float32) / np.sqrt(
            in_planes
        )
        params["bn_sc"] = init_bn(ks[5], planes)
    return params


def reference_forward(params, x_nhwc):
    def conv3x3(x, wgt):
        return jax.lax.conv_general_dilated(
            x, wgt, (1, 1), ((1, 1), (1, 1)),
            dimension_numbers=("NHWC", "HWIO", "NHWC"),
            precision=jax.lax.Precision.HIGHEST,
        )

    def bn(x, p, eps=1e-5):
        scale = p["gamma"] / jnp.sqrt(p["var"] + eps)
        return x * scale + (p["beta"] - p["mean"] * scale)

    out = jax.nn.relu(bn(conv3x3(x_nhwc, params["w1"]), params["bn1"]))
    out = bn(conv3x3(out, params["w2"]), params["bn2"])
    if "w_sc" in params:
        sc = bn(jnp.einsum("nhwc,cd->nhwd", x_nhwc, params["w_sc"],
                           precision=jax.lax.Precision.HIGHEST), params["bn_sc"])
    else:
        sc = x_nhwc
    return jax.nn.relu(out + sc)


# ----------------------------------------------------------------------------
if __name__ == "__main__":
    key = jax.random.PRNGKey(0)
    kx, kp1, kp2 = jax.random.split(key, 3)

    batch, in_planes, spatial = 2, 4, 16
    x_nchw = jax.random.normal(kx, (batch, in_planes, spatial, spatial), jnp.float32)
    x_nhwc = jnp.transpose(x_nchw, (0, 2, 3, 1))

    fwd = jax.jit(basic_block_forward)

    # Case 1: identity shortcut (in_planes == planes).
    params_id = init_basic_block(kp1, in_planes, in_planes, stride=1)
    out_id = jax.block_until_ready(fwd(params_id, x_nhwc))
    ref_id = reference_forward(params_id, x_nhwc)
    # bf16 MXU operands + bf16 intermediate activation => looser tolerance vs f32 reference.
    np.testing.assert_allclose(np.asarray(out_id), np.asarray(ref_id), rtol=2e-2, atol=2e-2)

    # Case 2: projection shortcut (1x1 conv + BN), in_planes != planes.
    planes2 = 8
    params_proj = init_basic_block(kp2, in_planes, planes2, stride=1)
    out_proj = jax.block_until_ready(fwd(params_proj, x_nhwc))
    ref_proj = reference_forward(params_proj, x_nhwc)
    np.testing.assert_allclose(np.asarray(out_proj), np.asarray(ref_proj), rtol=2e-2, atol=2e-2)

    assert out_id.shape == (batch, spatial, spatial, in_planes)
    assert out_proj.shape == (batch, spatial, spatial, planes2)
    print("KERNEL_OK")
</pallas_src>

<mosaic_0001>
module attributes {stable_mosaic.version = 11 : i64} {
  func.func @_conv3x3_bn_act_kernel(%arg0: i32, %arg1: i32, %arg2: memref<1x256x128xbf16, #tpu.memory_space<vmem>>, %arg3: memref<9x128x128xbf16, #tpu.memory_space<vmem>>, %arg4: memref<1x128xf32, #tpu.memory_space<vmem>>, %arg5: memref<1x256x128xbf16, #tpu.memory_space<vmem>>, %arg6: memref<440x128xbf16, #tpu.memory_space<vmem>>) attributes {dimension_semantics = [#tpu.dimension_semantics<parallel>, #tpu.dimension_semantics<parallel>], iteration_bounds = array<i64: 1, 2>, scalar_prefetch = 0 : i64, scratch_operands = 1 : i64, tpu.core_type = #tpu.core_type<tc>, window_params = [{transform_indices = @transform_0, window_bounds = array<i64: 1, 256, 128>}, {transform_indices = @transform_1, window_bounds = array<i64: 9, 128, 128>}, {transform_indices = @transform_2, window_bounds = array<i64: 1, 128>}, {transform_indices = @transform_3, window_bounds = array<i64: 1, 256, 128>}]} {
    %cst = arith.constant 0.000000e+00 : bf16
    %0 = vector.broadcast %cst : bf16 to vector<440x128xbf16>
    %c0 = arith.constant 0 : index
    %c0_0 = arith.constant 0 : index
    %1 = vector.load %arg6[%c0, %c0_0] : memref<440x128xbf16, #tpu.memory_space<vmem>>, vector<440x128xbf16>
    tpu.vector_store %arg6[%c0, %c0_0], %0 {strides = array<i32>} : memref<440x128xbf16, #tpu.memory_space<vmem>>, vector<440x128xbf16>,
    %c0_1 = arith.constant 0 : index
    %c0_2 = arith.constant 0 : index
    %c0_3 = arith.constant 0 : index
    %2 = vector.load %arg2[%c0_1, %c0_2, %c0_3] : memref<1x256x128xbf16, #tpu.memory_space<vmem>>, vector<1x16x128xbf16>
    %3 = vector.shape_cast %2 : vector<1x16x128xbf16> to vector<16x128xbf16>
    %c25 = arith.constant 25 : index
    %c0_4 = arith.constant 0 : index
    %4 = vector.load %arg6[%c25, %c0_4] : memref<440x128xbf16, #tpu.memory_space<vmem>>, vector<16x128xbf16>
    tpu.vector_store %arg6[%c25, %c0_4], %3 {strides = array<i32>} : memref<440x128xbf16, #tpu.memory_space<vmem>>, vector<16x128xbf16>,
    %c0_5 = arith.constant 0 : index
    %c16 = arith.constant 16 : index
    %c0_6 = arith.constant 0 : index
    %5 = vector.load %arg2[%c0_5, %c16, %c0_6] : memref<1x256x128xbf16, #tpu.memory_space<vmem>>, vector<1x16x128xbf16>
    %6 = vector.shape_cast %5 : vector<1x16x128xbf16> to vector<16x128xbf16>
    %c49 = arith.constant 49 : index
    %c0_7 = arith.constant 0 : index
    %7 = vector.load %arg6[%c49, %c0_7] : memref<440x128xbf16, #tpu.memory_space<vmem>>, vector<16x128xbf16>
    tpu.vector_store %arg6[%c49, %c0_7], %6 {strides = array<i32>} : memref<440x128xbf16, #tpu.memory_space<vmem>>, vector<16x128xbf16>,
    %c0_8 = arith.constant 0 : index
    %c32 = arith.constant 32 : index
    %c0_9 = arith.constant 0 : index
    %8 = vector.load %arg2[%c0_8, %c32, %c0_9] : memref<1x256x128xbf16, #tpu.memory_space<vmem>>, vector<1x16x128xbf16>
    %9 = vector.shape_cast %8 : vector<1x16x128xbf16> to vector<16x128xbf16>
    %c73 = arith.constant 73 : index
    %c0_10 = arith.constant 0 : index
    %10 = vector.load %arg6[%c73, %c0_10] : memref<440x128xbf16, #tpu.memory_space<vmem>>, vector<16x128xbf16>
    tpu.vector_store %arg6[%c73, %c0_10], %9 {strides = array<i32>} : memref<440x128xbf16, #tpu.memory_space<vmem>>, vector<16x128xbf16>,
    %c0_11 = arith.constant 0 : index
    %c48 = arith.constant 48 : index
    %c0_12 = arith.constant 0 : index
    %11 = vector.load %arg2[%c0_11, %c48, %c0_12] : memref<1x256x128xbf16, #tpu.memory_space<vmem>>, vector<1x16x128xbf16>
    %12 = vector.shape_cast %11 : vector<1x16x128xbf16> to vector<16x128xbf16>
    %c97 = arith.constant 97 : index
    %c0_13 = arith.constant 0 : index
    %13 = vector.load %arg6[%c97, %c0_13] : memref<440x128xbf16, #tpu.memory_space<vmem>>, vector<16x128xbf16>
    tpu.vector_store %arg6[%c97, %c0_13], %12 {strides = array<i32>} : memref<440x128xbf16, #tpu.memory_space<vmem>>, vector<16x128xbf16>,
    %c0_14 = arith.constant 0 : index
    %c64 = arith.constant 64 : index
    %c0_15 = arith.constant 0 : index
    %14 = vector.load %arg2[%c0_14, %c64, %c0_15] : memref<1x256x128xbf16, #tpu.memory_space<vmem>>, vector<1x16x128xbf16>
    %15 = vector.shape_cast %14 : vector<1x16x128xbf16> to vector<16x128xbf16>
    %c121 = arith.constant 121 : index
    %c0_16 = arith.constant 0 : index
    %16 = vector.load %arg6[%c121, %c0_16] : memref<440x128xbf16, #tpu.memory_space<vmem>>, vector<16x128xbf16>
    tpu.vector_store %arg6[%c121, %c0_16], %15 {strides = array<i32>} : memref<440x128xbf16, #tpu.memory_space<vmem>>, vector<16x128xbf16>,
    %c0_17 = arith.constant 0 : index
    %c80 = arith.constant 80 : index
    %c0_18 = arith.constant 0 : index
    %17 = vector.load %arg2[%c0_17, %c80, %c0_18] : memref<1x256x128xbf16, #tpu.memory_space<vmem>>, vector<1x16x128xbf16>
    %18 = vector.shape_cast %17 : vector<1x16x128xbf16> to vector<16x128xbf16>
    %c145 = arith.constant 145 : index
    %c0_19 = arith.constant 0 : index
    %19 = vector.load %arg6[%c145, %c0_19] : memref<440x128xbf16, #tpu.memory_space<vmem>>, vector<16x128xbf16>
    tpu.vector_store %arg6[%c145, %c0_19], %18 {strides = array<i32>} : memref<440x128xbf16, #tpu.memory_space<vmem>>, vector<16x128xbf16>,
    %c0_20 = arith.constant 0 : index
    %c96 = arith.constant 96 : index
    %c0_21 = arith.constant 0 : index
    %20 = vector.load %arg2[%c0_20, %c96, %c0_21] : memref<1x256x128xbf16, #tpu.memory_space<vmem>>, vector<1x16x128xbf16>
    %21 = vector.shape_cast %20 : vector<1x16x128xbf16> to vector<16x128xbf16>
    %c169 = arith.constant 169 : index
    %c0_22 = arith.constant 0 : index
    %22 = vector.load %arg6[%c169, %c0_22] : memref<440x128xbf16, #tpu.memory_space<vmem>>, vector<16x128xbf16>
    tpu.vector_store %arg6[%c169, %c0_22], %21 {strides = array<i32>} : memref<440x128xbf16, #tpu.memory_space<vmem>>, vector<16x128xbf16>,
    %c0_23 = arith.constant 0 : index
    %c112 = arith.constant 112 : index
    %c0_24 = arith.constant 0 : index
    %23 = vector.load %arg2[%c0_23, %c112, %c0_24] : memref<1x256x128xbf16, #tpu.memory_space<vmem>>, vector<1x16x128xbf16>
    %24 = vector.shape_cast %23 : vector<1x16x128xbf16> to vector<16x128xbf16>
    %c193 = arith.constant 193 : index
    %c0_25 = arith.constant 0 : index
    %25 = vector.load %arg6[%c193, %c0_25] : memref<440x128xbf16, #tpu.memory_space<vmem>>, vector<16x128xbf16>
    tpu.vector_store %arg6[%c193, %c0_25], %24 {strides = array<i32>} : memref<440x128xbf16, #tpu.memory_space<vmem>>, vector<16x128xbf16>,
    %c0_26 = arith.constant 0 : index
    %c128 = arith.constant 128 : index
    %c0_27 = arith.constant 0 : index
    %26 = vector.load %arg2[%c0_26, %c128, %c0_27] : memref<1x256x128xbf16, #tpu.memory_space<vmem>>, vector<1x16x128xbf16>
    %27 = vector.shape_cast %26 : vector<1x16x128xbf16> to vector<16x128xbf16>
    %c217 = arith.constant 217 : index
    %c0_28 = arith.constant 0 : index
    %28 = vector.load %arg6[%c217, %c0_28] : memref<440x128xbf16, #tpu.memory_space<vmem>>, vector<16x128xbf16>
    tpu.vector_store %arg6[%c217, %c0_28], %27 {strides = array<i32>} : memref<440x128xbf16, #tpu.memory_space<vmem>>, vector<16x128xbf16>,
    %c0_29 = arith.constant 0 : index
    %c144 = arith.constant 144 : index
    %c0_30 = arith.constant 0 : index
    %29 = vector.load %arg2[%c0_29, %c144, %c0_30] : memref<1x256x128xbf16, #tpu.memory_space<vmem>>, vector<1x16x128xbf16>
    %30 = vector.shape_cast %29 : vector<1x16x128xbf16> to vector<16x128xbf16>
    %c241 = arith.constant 241 : index
    %c0_31 = arith.constant 0 : index
    %31 = vector.load %arg6[%c241, %c0_31] : memref<440x128xbf16, #tpu.memory_space<vmem>>, vector<16x128xbf16>
    tpu.vector_store %arg6[%c241, %c0_31], %30 {strides = array<i32>} : memref<440x128xbf16, #tpu.memory_space<vmem>>, vector<16x128xbf16>,
    %c0_32 = arith.constant 0 : index
    %c160 = arith.constant 160 : index
    %c0_33 = arith.constant 0 : index
    %32 = vector.load %arg2[%c0_32, %c160, %c0_33] : memref<1x256x128xbf16, #tpu.memory_space<vmem>>, vector<1x16x128xbf16>
    %33 = vector.shape_cast %32 : vector<1x16x128xbf16> to vector<16x128xbf16>
    %c265 = arith.constant 265 : index
    %c0_34 = arith.constant 0 : index
    %34 = vector.load %arg6[%c265, %c0_34] : memref<440x128xbf16, #tpu.memory_space<vmem>>, vector<16x128xbf16>
    tpu.vector_store %arg6[%c265, %c0_34], %33 {strides = array<i32>} : memref<440x128xbf16, #tpu.memory_space<vmem>>, vector<16x128xbf16>,
    %c0_35 = arith.constant 0 : index
    %c176 = arith.constant 176 : index
    %c0_36 = arith.constant 0 : index
    %35 = vector.load %arg2[%c0_35, %c176, %c0_36] : memref<1x256x128xbf16, #tpu.memory_space<vmem>>, vector<1x16x128xbf16>
    %36 = vector.shape_cast %35 : vector<1x16x128xbf16> to vector<16x128xbf16>
    %c289 = arith.constant 289 : index
    %c0_37 = arith.constant 0 : index
    %37 = vector.load %arg6[%c289, %c0_37] : memref<440x128xbf16, #tpu.memory_space<vmem>>, vector<16x128xbf16>
    tpu.vector_store %arg6[%c289, %c0_37], %36 {strides = array<i32>} : memref<440x128xbf16, #tpu.memory_space<vmem>>, vector<16x128xbf16>,
    %c0_38 = arith.constant 0 : index
    %c192 = arith.constant 192 : index
    %c0_39 = arith.constant 0 : index
    %38 = vector.load %arg2[%c0_38, %c192, %c0_39] : memref<1x256x128xbf16, #tpu.memory_space<vmem>>, vector<1x16x128xbf16>
    %39 = vector.shape_cast %38 : vector<1x16x128xbf16> to vector<16x128xbf16>
    %c313 = arith.constant 313 : index
    %c0_40 = arith.constant 0 : index
    %40 = vector.load %arg6[%c313, %c0_40] : memref<440x128xbf16, #tpu.memory_space<vmem>>, vector<16x128xbf16>
    tpu.vector_store %arg6[%c313, %c0_40], %39 {strides = array<i32>} : memref<440x128xbf16, #tpu.memory_space<vmem>>, vector<16x128xbf16>,
    %c0_41 = arith.constant 0 : index
    %c208 = arith.constant 208 : index
    %c0_42 = arith.constant 0 : index
    %41 = vector.load %arg2[%c0_41, %c208, %c0_42] : memref<1x256x128xbf16, #tpu.memory_space<vmem>>, vector<1x16x128xbf16>
    %42 = vector.shape_cast %41 : vector<1x16x128xbf16> to vector<16x128xbf16>
    %c337 = arith.constant 337 : index
    %c0_43 = arith.constant 0 : index
    %43 = vector.load %arg6[%c337, %c0_43] : memref<440x128xbf16, #tpu.memory_space<vmem>>, vector<16x128xbf16>
    tpu.vector_store %arg6[%c337, %c0_43], %42 {strides = array<i32>} : memref<440x128xbf16, #tpu.memory_space<vmem>>, vector<16x128xbf16>,
    %c0_44 = arith.constant 0 : index
    %c224 = arith.constant 224 : index
    %c0_45 = arith.constant 0 : index
    %44 = vector.load %arg2[%c0_44, %c224, %c0_45] : memref<1x256x128xbf16, #tpu.memory_space<vmem>>, vector<1x16x128xbf16>
    %45 = vector.shape_cast %44 : vector<1x16x128xbf16> to vector<16x128xbf16>
    %c361 = arith.constant 361 : index
    %c0_46 = arith.constant 0 : index
    %46 = vector.load %arg6[%c361, %c0_46] : memref<440x128xbf16, #tpu.memory_space<vmem>>, vector<16x128xbf16>
    tpu.vector_store %arg6[%c361, %c0_46], %45 {strides = array<i32>} : memref<440x128xbf16, #tpu.memory_space<vmem>>, vector<16x128xbf16>,
    %c0_47 = arith.constant 0 : index
    %c240 = arith.constant 240 : index
    %c0_48 = arith.constant 0 : index
    %47 = vector.load %arg2[%c0_47, %c240, %c0_48] : memref<1x256x128xbf16, #tpu.memory_space<vmem>>, vector<1x16x128xbf16>
    %48 = vector.shape_cast %47 : vector<1x16x128xbf16> to vector<16x128xbf16>
    %c385 = arith.constant 385 : index
    %c0_49 = arith.constant 0 : index
    %49 = vector.load %arg6[%c385, %c0_49] : memref<440x128xbf16, #tpu.memory_space<vmem>>, vector<16x128xbf16>
    tpu.vector_store %arg6[%c385, %c0_49], %48 {strides = array<i32>} : memref<440x128xbf16, #tpu.memory_space<vmem>>, vector<16x128xbf16>,
    %c0_50 = arith.constant 0 : index
    %c0_51 = arith.constant 0 : index
    %50 = vector.load %arg6[%c0_50, %c0_51] : memref<440x128xbf16, #tpu.memory_space<vmem>>, vector<384x128xbf16>
    %c0_52 = arith.constant 0 : index
    %c0_53 = arith.constant 0 : index
    %c0_54 = arith.constant 0 : index
    %51 = vector.load %arg3[%c0_52, %c0_53, %c0_54] : memref<9x128x128xbf16, #tpu.memory_space<vmem>>, vector<1x128x128xbf16>
    %52 = vector.shape_cast %51 : vector<1x128x128xbf16> to vector<128x128xbf16>
    %cst_55 = arith.constant dense<0.000000e+00> : vector<384x128xf32>
    %53 = tpu.matmul %50, %52, %cst_55 {dimension_numbers = #tpu.dot_dimension_numbers<[1], [0], [0], [1], [0, 0, 1, 1], [], []>} : vector<384x128xbf16>, vector<128x128xbf16>, vector<384x128xf32> -> vector<384x128xf32>
    %c1 = arith.constant 1 : index
    %c0_56 = arith.constant 0 : index
    %54 = vector.load %arg6[%c1, %c0_56] : memref<440x128xbf16, #tpu.memory_space<vmem>>, vector<384x128xbf16>
    %c1_57 = arith.constant 1 : index
    %c0_58 = arith.constant 0 : index
    %c0_59 = arith.constant 0 : index
    %55 = vector.load %arg3[%c1_57, %c0_58, %c0_59] : memref<9x128x128xbf16, #tpu.memory_space<vmem>>, vector<1x128x128xbf16>
    %56 = vector.shape_cast %55 : vector<1x128x128xbf16> to vector<128x128xbf16>
    %cst_60 = arith.constant dense<0.000000e+00> : vector<384x128xf32>
    %57 = tpu.matmul %54, %56, %cst_60 {dimension_numbers = #tpu.dot_dimension_numbers<[1], [0], [0], [1], [0, 0, 1, 1], [], []>} : vector<384x128xbf16>, vector<128x128xbf16>, vector<384x128xf32> -> vector<384x128xf32>
    %58 = arith.addf %53, %57 : vector<384x128xf32>
    %c2 = arith.constant 2 : index
    %c0_61 = arith.constant 0 : index
    %59 = vector.load %arg6[%c2, %c0_61] : memref<440x128xbf16, #tpu.memory_space<vmem>>, vector<384x128xbf16>
    %c2_62 = arith.constant 2 : index
    %c0_63 = arith.constant 0 : index
    %c0_64 = arith.constant 0 : index
    %60 = vector.load %arg3[%c2_62, %c0_63, %c0_64] : memref<9x128x128xbf16, #tpu.memory_space<vmem>>, vector<1x128x128xbf16>
    %61 = vector.shape_cast %60 : vector<1x128x128xbf16> to vector<128x128xbf16>
    %cst_65 = arith.constant dense<0.000000e+00> : vector<384x128xf32>
    %62 = tpu.matmul %59, %61, %cst_65 {dimension_numbers = #tpu.dot_dimension_numbers<[1], [0], [0], [1], [0, 0, 1, 1], [], []>} : vector<384x128xbf16>, vector<128x128xbf16>, vector<384x128xf32> -> vector<384x128xf32>
    %63 = arith.addf %58, %62 : vector<384x128xf32>
    %c24 = arith.constant 24 : index
    %c0_66 = arith.constant 0 : index
    %64 = vector.load %arg6[%c24, %c0_66] : memref<440x128xbf16, #tpu.memory_space<vmem>>, vector<384x128xbf16>
    %c3 = arith.constant 3 : index
    %c0_67 = arith.constant 0 : index
    %c0_68 = arith.constant 0 : index
    %65 = vector.load %arg3[%c3, %c0_67, %c0_68] : memref<9x128x128xbf16, #tpu.memory_space<vmem>>, vector<1x128x128xbf16>
    %66 = vector.shape_cast %65 : vector<1x128x128xbf16> to vector<128x128xbf16>
    %cst_69 = arith.constant dense<0.000000e+00> : vector<384x128xf32>
    %67 = tpu.matmul %64, %66, %cst_69 {dimension_numbers = #tpu.dot_dimension_numbers<[1], [0], [0], [1], [0, 0, 1, 1], [], []>} : vector<384x128xbf16>, vector<128x128xbf16>, vector<384x128xf32> -> vector<384x128xf32>
    %68 = arith.addf %63, %67 : vector<384x128xf32>
    %c25_70 = arith.constant 25 : index
    %c0_71 = arith.constant 0 : index
    %69 = vector.load %arg6[%c25_70, %c0_71] : memref<440x128xbf16, #tpu.memory_space<vmem>>, vector<384x128xbf16>
    %c4 = arith.constant 4 : index
    %c0_72 = arith.constant 0 : index
    %c0_73 = arith.constant 0 : index
    %70 = vector.load %arg3[%c4, %c0_72, %c0_73] : memref<9x128x128xbf16, #tpu.memory_space<vmem>>, vector<1x128x128xbf16>
    %71 = vector.shape_cast %70 : vector<1x128x128xbf16> to vector<128x128xbf16>
    %cst_74 = arith.constant dense<0.000000e+00> : vector<384x128xf32>
    %72 = tpu.matmul %69, %71, %cst_74 {dimension_numbers = #tpu.dot_dimension_numbers<[1], [0], [0], [1], [0, 0, 1, 1], [], []>} : vector<384x128xbf16>, vector<128x128xbf16>, vector<384x128xf32> -> vector<384x128xf32>
    %73 = arith.addf %68, %72 : vector<384x128xf32>
    %c26 = arith.constant 26 : index
    %c0_75 = arith.constant 0 : index
    %74 = vector.load %arg6[%c26, %c0_75] : memref<440x128xbf16, #tpu.memory_space<vmem>>, vector<384x128xbf16>
    %c5 = arith.constant 5 : index
    %c0_76 = arith.constant 0 : index
    %c0_77 = arith.constant 0 : index
    %75 = vector.load %arg3[%c5, %c0_76, %c0_77] : memref<9x128x128xbf16, #tpu.memory_space<vmem>>, vector<1x128x128xbf16>
    %76 = vector.shape_cast %75 : vector<1x128x128xbf16> to vector<128x128xbf16>
    %cst_78 = arith.constant dense<0.000000e+00> : vector<384x128xf32>
    %77 = tpu.matmul %74, %76, %cst_78 {dimension_numbers = #tpu.dot_dimension_numbers<[1], [0], [0], [1], [0, 0, 1, 1], [], []>} : vector<384x128xbf16>, vector<128x128xbf16>, vector<384x128xf32> -> vector<384x128xf32>
    %78 = arith.addf %73, %77 : vector<384x128xf32>
    %c48_79 = arith.constant 48 : index
    %c0_80 = arith.constant 0 : index
    %79 = vector.load %arg6[%c48_79, %c0_80] : memref<440x128xbf16, #tpu.memory_space<vmem>>, vector<384x128xbf16>
    %c6 = arith.constant 6 : index
    %c0_81 = arith.constant 0 : index
    %c0_82 = arith.constant 0 : index
    %80 = vector.load %arg3[%c6, %c0_81, %c0_82] : memref<9x128x128xbf16, #tpu.memory_space<vmem>>, vector<1x128x128xbf16>
    %81 = vector.shape_cast %80 : vector<1x128x128xbf16> to vector<128x128xbf16>
    %cst_83 = arith.constant dense<0.000000e+00> : vector<384x128xf32>
    %82 = tpu.matmul %79, %81, %cst_83 {dimension_numbers = #tpu.dot_dimension_numbers<[1], [0], [0], [1], [0, 0, 1, 1], [], []>} : vector<384x128xbf16>, vector<128x128xbf16>, vector<384x128xf32> -> vector<384x128xf32>
    %83 = arith.addf %78, %82 : vector<384x128xf32>
    %c49_84 = arith.constant 49 : index
    %c0_85 = arith.constant 0 : index
    %84 = vector.load %arg6[%c49_84, %c0_85] : memref<440x128xbf16, #tpu.memory_space<vmem>>, vector<384x128xbf16>
    %c7 = arith.constant 7 : index
    %c0_86 = arith.constant 0 : index
    %c0_87 = arith.constant 0 : index
    %85 = vector.load %arg3[%c7, %c0_86, %c0_87] : memref<9x128x128xbf16, #tpu.memory_space<vmem>>, vector<1x128x128xbf16>
    %86 = vector.shape_cast %85 : vector<1x128x128xbf16> to vector<128x128xbf16>
    %cst_88 = arith.constant dense<0.000000e+00> : vector<384x128xf32>
    %87 = tpu.matmul %84, %86, %cst_88 {dimension_numbers = #tpu.dot_dimension_numbers<[1], [0], [0], [1], [0, 0, 1, 1], [], []>} : vector<384x128xbf16>, vector<128x128xbf16>, vector<384x128xf32> -> vector<384x128xf32>
    %88 = arith.addf %83, %87 : vector<384x128xf32>
    %c50 = arith.constant 50 : index
    %c0_89 = arith.constant 0 : index
    %89 = vector.load %arg6[%c50, %c0_89] : memref<440x128xbf16, #tpu.memory_space<vmem>>, vector<384x128xbf16>
    %c8 = arith.constant 8 : index
    %c0_90 = arith.constant 0 : index
    %c0_91 = arith.constant 0 : index
    %90 = vector.load %arg3[%c8, %c0_90, %c0_91] : memref<9x128x128xbf16, #tpu.memory_space<vmem>>, vector<1x128x128xbf16>
    %91 = vector.shape_cast %90 : vector<1x128x128xbf16> to vector<128x128xbf16>
    %cst_92 = arith.constant dense<0.000000e+00> : vector<384x128xf32>
    %92 = tpu.matmul %89, %91, %cst_92 {dimension_numbers = #tpu.dot_dimension_numbers<[1], [0], [0], [1], [0, 0, 1, 1], [], []>} : vector<384x128xbf16>, vector<128x128xbf16>, vector<384x128xf32> -> vector<384x128xf32>
    %93 = arith.addf %88, %92 : vector<384x128xf32>
    %94 = vector.shape_cast %93 : vector<384x128xf32> to vector<16x24x128xf32>
    %95 = vector.extract_strided_slice %94 {offsets = [0, 0, 0], sizes = [16, 16, 128], strides = [1, 1, 1]} : vector<16x24x128xf32> to vector<16x16x128xf32>
    %96 = vector.shape_cast %95 : vector<16x16x128xf32> to vector<256x128xf32>
    %c0_93 = arith.constant 0 : index
    %c0_94 = arith.constant 0 : index
    %97 = vector.load %arg4[%c0_93, %c0_94] : memref<1x128xf32, #tpu.memory_space<vmem>>, vector<1x128xf32>
    %98 = vector.broadcast %97 : vector<1x128xf32> to vector<256x128xf32>
    %99 = arith.addf %96, %98 : vector<256x128xf32>
    %cst_95 = arith.constant 0.000000e+00 : f32
    %100 = vector.broadcast %cst_95 : f32 to vector<256x128xf32>
    %101 = arith.maximumf %99, %100 : vector<256x128xf32>
    %102 = arith.truncf %101 : vector<256x128xf32> to vector<256x128xbf16>
    %c0_96 = arith.constant 0 : index
    %c0_97 = arith.constant 0 : index
    %c0_98 = arith.constant 0 : index
    %103 = vector.load %arg5[%c0_96, %c0_97, %c0_98] : memref<1x256x128xbf16, #tpu.memory_space<vmem>>, vector<1x256x128xbf16>
    %104 = vector.shape_cast %103 : vector<1x256x128xbf16> to vector<256x128xbf16>
    %105 = vector.shape_cast %102 : vector<256x128xbf16> to vector<1x256x128xbf16>
    tpu.vector_store %arg5[%c0_96, %c0_97, %c0_98], %105 {strides = array<i32>} : memref<1x256x128xbf16, #tpu.memory_space<vmem>>, vector<1x256x128xbf16>,
    return
  }
  func.func @transform_0(%arg0: i32, %arg1: i32) -> (i32, i32, i32) {
    %c0_i32 = arith.constant 0 : i32
    %c0_i32_0 = arith.constant 0 : i32
    %c0_i32_1 = arith.constant 0 : i32
    return %arg1, %c0_i32, %c0_i32_0 : i32, i32, i32
  }
  func.func @transform_1(%arg0: i32, %arg1: i32) -> (i32, i32, i32) {
    %c0_i32 = arith.constant 0 : i32
    %c0_i32_0 = arith.constant 0 : i32
    %c0_i32_1 = arith.constant 0 : i32
    return %c0_i32, %c0_i32_0, %arg0 : i32, i32, i32
  }
  func.func @transform_2(%arg0: i32, %arg1: i32) -> (i32, i32) {
    %c0_i32 = arith.constant 0 : i32
    %c0_i32_0 = arith.constant 0 : i32
    return %c0_i32, %arg0 : i32, i32
  }
  func.func @transform_3(%arg0: i32, %arg1: i32) -> (i32, i32, i32) {
    %c0_i32 = arith.constant 0 : i32
    %c0_i32_0 = arith.constant 0 : i32
    return %arg1, %c0_i32, %arg0 : i32, i32, i32
  }
}

module attributes {stable_mosaic.version = 11 : i64} {
  func.func @_conv3x3_bn_act_kernel(%arg0: i32, %arg1: i32, %arg2: memref<1x256x128xbf16, #tpu.memory_space<vmem>>, %arg3: memref<9x128x128xbf16, #tpu.memory_space<vmem>>, %arg4: memref<1x128xf32, #tpu.memory_space<vmem>>, %arg5: memref<1x256x128xbf16, #tpu.memory_space<vmem>>, %arg6: memref<1x256x128xf32, #tpu.memory_space<vmem>>, %arg7: memref<440x128xbf16, #tpu.memory_space<vmem>>) attributes {dimension_semantics = [#tpu.dimension_semantics<parallel>, #tpu.dimension_semantics<parallel>], iteration_bounds = array<i64: 1, 2>, scalar_prefetch = 0 : i64, scratch_operands = 1 : i64, tpu.core_type = #tpu.core_type<tc>, window_params = [{transform_indices = @transform_0, window_bounds = array<i64: 1, 256, 128>}, {transform_indices = @transform_1, window_bounds = array<i64: 9, 128, 128>}, {transform_indices = @transform_2, window_bounds = array<i64: 1, 128>}, {transform_indices = @transform_3, window_bounds = array<i64: 1, 256, 128>}, {transform_indices = @transform_4, window_bounds = array<i64: 1, 256, 128>}]} {
    %cst = arith.constant 0.000000e+00 : bf16
    %0 = vector.broadcast %cst : bf16 to vector<440x128xbf16>
    %c0 = arith.constant 0 : index
    %c0_0 = arith.constant 0 : index
    %1 = vector.load %arg7[%c0, %c0_0] : memref<440x128xbf16, #tpu.memory_space<vmem>>, vector<440x128xbf16>
    tpu.vector_store %arg7[%c0, %c0_0], %0 {strides = array<i32>} : memref<440x128xbf16, #tpu.memory_space<vmem>>, vector<440x128xbf16>,
    %c0_1 = arith.constant 0 : index
    %c0_2 = arith.constant 0 : index
    %c0_3 = arith.constant 0 : index
    %2 = vector.load %arg2[%c0_1, %c0_2, %c0_3] : memref<1x256x128xbf16, #tpu.memory_space<vmem>>, vector<1x16x128xbf16>
    %3 = vector.shape_cast %2 : vector<1x16x128xbf16> to vector<16x128xbf16>
    %c25 = arith.constant 25 : index
    %c0_4 = arith.constant 0 : index
    %4 = vector.load %arg7[%c25, %c0_4] : memref<440x128xbf16, #tpu.memory_space<vmem>>, vector<16x128xbf16>
    tpu.vector_store %arg7[%c25, %c0_4], %3 {strides = array<i32>} : memref<440x128xbf16, #tpu.memory_space<vmem>>, vector<16x128xbf16>,
    %c0_5 = arith.constant 0 : index
    %c16 = arith.constant 16 : index
    %c0_6 = arith.constant 0 : index
    %5 = vector.load %arg2[%c0_5, %c16, %c0_6] : memref<1x256x128xbf16, #tpu.memory_space<vmem>>, vector<1x16x128xbf16>
    %6 = vector.shape_cast %5 : vector<1x16x128xbf16> to vector<16x128xbf16>
    %c49 = arith.constant 49 : index
    %c0_7 = arith.constant 0 : index
    %7 = vector.load %arg7[%c49, %c0_7] : memref<440x128xbf16, #tpu.memory_space<vmem>>, vector<16x128xbf16>
    tpu.vector_store %arg7[%c49, %c0_7], %6 {strides = array<i32>} : memref<440x128xbf16, #tpu.memory_space<vmem>>, vector<16x128xbf16>,
    %c0_8 = arith.constant 0 : index
    %c32 = arith.constant 32 : index
    %c0_9 = arith.constant 0 : index
    %8 = vector.load %arg2[%c0_8, %c32, %c0_9] : memref<1x256x128xbf16, #tpu.memory_space<vmem>>, vector<1x16x128xbf16>
    %9 = vector.shape_cast %8 : vector<1x16x128xbf16> to vector<16x128xbf16>
    %c73 = arith.constant 73 : index
    %c0_10 = arith.constant 0 : index
    %10 = vector.load %arg7[%c73, %c0_10] : memref<440x128xbf16, #tpu.memory_space<vmem>>, vector<16x128xbf16>
    tpu.vector_store %arg7[%c73, %c0_10], %9 {strides = array<i32>} : memref<440x128xbf16, #tpu.memory_space<vmem>>, vector<16x128xbf16>,
    %c0_11 = arith.constant 0 : index
    %c48 = arith.constant 48 : index
    %c0_12 = arith.constant 0 : index
    %11 = vector.load %arg2[%c0_11, %c48, %c0_12] : memref<1x256x128xbf16, #tpu.memory_space<vmem>>, vector<1x16x128xbf16>
    %12 = vector.shape_cast %11 : vector<1x16x128xbf16> to vector<16x128xbf16>
    %c97 = arith.constant 97 : index
    %c0_13 = arith.constant 0 : index
    %13 = vector.load %arg7[%c97, %c0_13] : memref<440x128xbf16, #tpu.memory_space<vmem>>, vector<16x128xbf16>
    tpu.vector_store %arg7[%c97, %c0_13], %12 {strides = array<i32>} : memref<440x128xbf16, #tpu.memory_space<vmem>>, vector<16x128xbf16>,
    %c0_14 = arith.constant 0 : index
    %c64 = arith.constant 64 : index
    %c0_15 = arith.constant 0 : index
    %14 = vector.load %arg2[%c0_14, %c64, %c0_15] : memref<1x256x128xbf16, #tpu.memory_space<vmem>>, vector<1x16x128xbf16>
    %15 = vector.shape_cast %14 : vector<1x16x128xbf16> to vector<16x128xbf16>
    %c121 = arith.constant 121 : index
    %c0_16 = arith.constant 0 : index
    %16 = vector.load %arg7[%c121, %c0_16] : memref<440x128xbf16, #tpu.memory_space<vmem>>, vector<16x128xbf16>
    tpu.vector_store %arg7[%c121, %c0_16], %15 {strides = array<i32>} : memref<440x128xbf16, #tpu.memory_space<vmem>>, vector<16x128xbf16>,
    %c0_17 = arith.constant 0 : index
    %c80 = arith.constant 80 : index
    %c0_18 = arith.constant 0 : index
    %17 = vector.load %arg2[%c0_17, %c80, %c0_18] : memref<1x256x128xbf16, #tpu.memory_space<vmem>>, vector<1x16x128xbf16>
    %18 = vector.shape_cast %17 : vector<1x16x128xbf16> to vector<16x128xbf16>
    %c145 = arith.constant 145 : index
    %c0_19 = arith.constant 0 : index
    %19 = vector.load %arg7[%c145, %c0_19] : memref<440x128xbf16, #tpu.memory_space<vmem>>, vector<16x128xbf16>
    tpu.vector_store %arg7[%c145, %c0_19], %18 {strides = array<i32>} : memref<440x128xbf16, #tpu.memory_space<vmem>>, vector<16x128xbf16>,
    %c0_20 = arith.constant 0 : index
    %c96 = arith.constant 96 : index
    %c0_21 = arith.constant 0 : index
    %20 = vector.load %arg2[%c0_20, %c96, %c0_21] : memref<1x256x128xbf16, #tpu.memory_space<vmem>>, vector<1x16x128xbf16>
    %21 = vector.shape_cast %20 : vector<1x16x128xbf16> to vector<16x128xbf16>
    %c169 = arith.constant 169 : index
    %c0_22 = arith.constant 0 : index
    %22 = vector.load %arg7[%c169, %c0_22] : memref<440x128xbf16, #tpu.memory_space<vmem>>, vector<16x128xbf16>
    tpu.vector_store %arg7[%c169, %c0_22], %21 {strides = array<i32>} : memref<440x128xbf16, #tpu.memory_space<vmem>>, vector<16x128xbf16>,
    %c0_23 = arith.constant 0 : index
    %c112 = arith.constant 112 : index
    %c0_24 = arith.constant 0 : index
    %23 = vector.load %arg2[%c0_23, %c112, %c0_24] : memref<1x256x128xbf16, #tpu.memory_space<vmem>>, vector<1x16x128xbf16>
    %24 = vector.shape_cast %23 : vector<1x16x128xbf16> to vector<16x128xbf16>
    %c193 = arith.constant 193 : index
    %c0_25 = arith.constant 0 : index
    %25 = vector.load %arg7[%c193, %c0_25] : memref<440x128xbf16, #tpu.memory_space<vmem>>, vector<16x128xbf16>
    tpu.vector_store %arg7[%c193, %c0_25], %24 {strides = array<i32>} : memref<440x128xbf16, #tpu.memory_space<vmem>>, vector<16x128xbf16>,
    %c0_26 = arith.constant 0 : index
    %c128 = arith.constant 128 : index
    %c0_27 = arith.constant 0 : index
    %26 = vector.load %arg2[%c0_26, %c128, %c0_27] : memref<1x256x128xbf16, #tpu.memory_space<vmem>>, vector<1x16x128xbf16>
    %27 = vector.shape_cast %26 : vector<1x16x128xbf16> to vector<16x128xbf16>
    %c217 = arith.constant 217 : index
    %c0_28 = arith.constant 0 : index
    %28 = vector.load %arg7[%c217, %c0_28] : memref<440x128xbf16, #tpu.memory_space<vmem>>, vector<16x128xbf16>
    tpu.vector_store %arg7[%c217, %c0_28], %27 {strides = array<i32>} : memref<440x128xbf16, #tpu.memory_space<vmem>>, vector<16x128xbf16>,
    %c0_29 = arith.constant 0 : index
    %c144 = arith.constant 144 : index
    %c0_30 = arith.constant 0 : index
    %29 = vector.load %arg2[%c0_29, %c144, %c0_30] : memref<1x256x128xbf16, #tpu.memory_space<vmem>>, vector<1x16x128xbf16>
    %30 = vector.shape_cast %29 : vector<1x16x128xbf16> to vector<16x128xbf16>
    %c241 = arith.constant 241 : index
    %c0_31 = arith.constant 0 : index
    %31 = vector.load %arg7[%c241, %c0_31] : memref<440x128xbf16, #tpu.memory_space<vmem>>, vector<16x128xbf16>
    tpu.vector_store %arg7[%c241, %c0_31], %30 {strides = array<i32>} : memref<440x128xbf16, #tpu.memory_space<vmem>>, vector<16x128xbf16>,
    %c0_32 = arith.constant 0 : index
    %c160 = arith.constant 160 : index
    %c0_33 = arith.constant 0 : index
    %32 = vector.load %arg2[%c0_32, %c160, %c0_33] : memref<1x256x128xbf16, #tpu.memory_space<vmem>>, vector<1x16x128xbf16>
    %33 = vector.shape_cast %32 : vector<1x16x128xbf16> to vector<16x128xbf16>
    %c265 = arith.constant 265 : index
    %c0_34 = arith.constant 0 : index
    %34 = vector.load %arg7[%c265, %c0_34] : memref<440x128xbf16, #tpu.memory_space<vmem>>, vector<16x128xbf16>
    tpu.vector_store %arg7[%c265, %c0_34], %33 {strides = array<i32>} : memref<440x128xbf16, #tpu.memory_space<vmem>>, vector<16x128xbf16>,
    %c0_35 = arith.constant 0 : index
    %c176 = arith.constant 176 : index
    %c0_36 = arith.constant 0 : index
    %35 = vector.load %arg2[%c0_35, %c176, %c0_36] : memref<1x256x128xbf16, #tpu.memory_space<vmem>>, vector<1x16x128xbf16>
    %36 = vector.shape_cast %35 : vector<1x16x128xbf16> to vector<16x128xbf16>
    %c289 = arith.constant 289 : index
    %c0_37 = arith.constant 0 : index
    %37 = vector.load %arg7[%c289, %c0_37] : memref<440x128xbf16, #tpu.memory_space<vmem>>, vector<16x128xbf16>
    tpu.vector_store %arg7[%c289, %c0_37], %36 {strides = array<i32>} : memref<440x128xbf16, #tpu.memory_space<vmem>>, vector<16x128xbf16>,
    %c0_38 = arith.constant 0 : index
    %c192 = arith.constant 192 : index
    %c0_39 = arith.constant 0 : index
    %38 = vector.load %arg2[%c0_38, %c192, %c0_39] : memref<1x256x128xbf16, #tpu.memory_space<vmem>>, vector<1x16x128xbf16>
    %39 = vector.shape_cast %38 : vector<1x16x128xbf16> to vector<16x128xbf16>
    %c313 = arith.constant 313 : index
    %c0_40 = arith.constant 0 : index
    %40 = vector.load %arg7[%c313, %c0_40] : memref<440x128xbf16, #tpu.memory_space<vmem>>, vector<16x128xbf16>
    tpu.vector_store %arg7[%c313, %c0_40], %39 {strides = array<i32>} : memref<440x128xbf16, #tpu.memory_space<vmem>>, vector<16x128xbf16>,
    %c0_41 = arith.constant 0 : index
    %c208 = arith.constant 208 : index
    %c0_42 = arith.constant 0 : index
    %41 = vector.load %arg2[%c0_41, %c208, %c0_42] : memref<1x256x128xbf16, #tpu.memory_space<vmem>>, vector<1x16x128xbf16>
    %42 = vector.shape_cast %41 : vector<1x16x128xbf16> to vector<16x128xbf16>
    %c337 = arith.constant 337 : index
    %c0_43 = arith.constant 0 : index
    %43 = vector.load %arg7[%c337, %c0_43] : memref<440x128xbf16, #tpu.memory_space<vmem>>, vector<16x128xbf16>
    tpu.vector_store %arg7[%c337, %c0_43], %42 {strides = array<i32>} : memref<440x128xbf16, #tpu.memory_space<vmem>>, vector<16x128xbf16>,
    %c0_44 = arith.constant 0 : index
    %c224 = arith.constant 224 : index
    %c0_45 = arith.constant 0 : index
    %44 = vector.load %arg2[%c0_44, %c224, %c0_45] : memref<1x256x128xbf16, #tpu.memory_space<vmem>>, vector<1x16x128xbf16>
    %45 = vector.shape_cast %44 : vector<1x16x128xbf16> to vector<16x128xbf16>
    %c361 = arith.constant 361 : index
    %c0_46 = arith.constant 0 : index
    %46 = vector.load %arg7[%c361, %c0_46] : memref<440x128xbf16, #tpu.memory_space<vmem>>, vector<16x128xbf16>
    tpu.vector_store %arg7[%c361, %c0_46], %45 {strides = array<i32>} : memref<440x128xbf16, #tpu.memory_space<vmem>>, vector<16x128xbf16>,
    %c0_47 = arith.constant 0 : index
    %c240 = arith.constant 240 : index
    %c0_48 = arith.constant 0 : index
    %47 = vector.load %arg2[%c0_47, %c240, %c0_48] : memref<1x256x128xbf16, #tpu.memory_space<vmem>>, vector<1x16x128xbf16>
    %48 = vector.shape_cast %47 : vector<1x16x128xbf16> to vector<16x128xbf16>
    %c385 = arith.constant 385 : index
    %c0_49 = arith.constant 0 : index
    %49 = vector.load %arg7[%c385, %c0_49] : memref<440x128xbf16, #tpu.memory_space<vmem>>, vector<16x128xbf16>
    tpu.vector_store %arg7[%c385, %c0_49], %48 {strides = array<i32>} : memref<440x128xbf16, #tpu.memory_space<vmem>>, vector<16x128xbf16>,
    %c0_50 = arith.constant 0 : index
    %c0_51 = arith.constant 0 : index
    %50 = vector.load %arg7[%c0_50, %c0_51] : memref<440x128xbf16, #tpu.memory_space<vmem>>, vector<384x128xbf16>
    %c0_52 = arith.constant 0 : index
    %c0_53 = arith.constant 0 : index
    %c0_54 = arith.constant 0 : index
    %51 = vector.load %arg3[%c0_52, %c0_53, %c0_54] : memref<9x128x128xbf16, #tpu.memory_space<vmem>>, vector<1x128x128xbf16>
    %52 = vector.shape_cast %51 : vector<1x128x128xbf16> to vector<128x128xbf16>
    %cst_55 = arith.constant dense<0.000000e+00> : vector<384x128xf32>
    %53 = tpu.matmul %50, %52, %cst_55 {dimension_numbers = #tpu.dot_dimension_numbers<[1], [0], [0], [1], [0, 0, 1, 1], [], []>} : vector<384x128xbf16>, vector<128x128xbf16>, vector<384x128xf32> -> vector<384x128xf32>
    %c1 = arith.constant 1 : index
    %c0_56 = arith.constant 0 : index
    %54 = vector.load %arg7[%c1, %c0_56] : memref<440x128xbf16, #tpu.memory_space<vmem>>, vector<384x128xbf16>
    %c1_57 = arith.constant 1 : index
    %c0_58 = arith.constant 0 : index
    %c0_59 = arith.constant 0 : index
    %55 = vector.load %arg3[%c1_57, %c0_58, %c0_59] : memref<9x128x128xbf16, #tpu.memory_space<vmem>>, vector<1x128x128xbf16>
    %56 = vector.shape_cast %55 : vector<1x128x128xbf16> to vector<128x128xbf16>
    %cst_60 = arith.constant dense<0.000000e+00> : vector<384x128xf32>
    %57 = tpu.matmul %54, %56, %cst_60 {dimension_numbers = #tpu.dot_dimension_numbers<[1], [0], [0], [1], [0, 0, 1, 1], [], []>} : vector<384x128xbf16>, vector<128x128xbf16>, vector<384x128xf32> -> vector<384x128xf32>
    %58 = arith.addf %53, %57 : vector<384x128xf32>
    %c2 = arith.constant 2 : index
    %c0_61 = arith.constant 0 : index
    %59 = vector.load %arg7[%c2, %c0_61] : memref<440x128xbf16, #tpu.memory_space<vmem>>, vector<384x128xbf16>
    %c2_62 = arith.constant 2 : index
    %c0_63 = arith.constant 0 : index
    %c0_64 = arith.constant 0 : index
    %60 = vector.load %arg3[%c2_62, %c0_63, %c0_64] : memref<9x128x128xbf16, #tpu.memory_space<vmem>>, vector<1x128x128xbf16>
    %61 = vector.shape_cast %60 : vector<1x128x128xbf16> to vector<128x128xbf16>
    %cst_65 = arith.constant dense<0.000000e+00> : vector<384x128xf32>
    %62 = tpu.matmul %59, %61, %cst_65 {dimension_numbers = #tpu.dot_dimension_numbers<[1], [0], [0], [1], [0, 0, 1, 1], [], []>} : vector<384x128xbf16>, vector<128x128xbf16>, vector<384x128xf32> -> vector<384x128xf32>
    %63 = arith.addf %58, %62 : vector<384x128xf32>
    %c24 = arith.constant 24 : index
    %c0_66 = arith.constant 0 : index
    %64 = vector.load %arg7[%c24, %c0_66] : memref<440x128xbf16, #tpu.memory_space<vmem>>, vector<384x128xbf16>
    %c3 = arith.constant 3 : index
    %c0_67 = arith.constant 0 : index
    %c0_68 = arith.constant 0 : index
    %65 = vector.load %arg3[%c3, %c0_67, %c0_68] : memref<9x128x128xbf16, #tpu.memory_space<vmem>>, vector<1x128x128xbf16>
    %66 = vector.shape_cast %65 : vector<1x128x128xbf16> to vector<128x128xbf16>
    %cst_69 = arith.constant dense<0.000000e+00> : vector<384x128xf32>
    %67 = tpu.matmul %64, %66, %cst_69 {dimension_numbers = #tpu.dot_dimension_numbers<[1], [0], [0], [1], [0, 0, 1, 1], [], []>} : vector<384x128xbf16>, vector<128x128xbf16>, vector<384x128xf32> -> vector<384x128xf32>
    %68 = arith.addf %63, %67 : vector<384x128xf32>
    %c25_70 = arith.constant 25 : index
    %c0_71 = arith.constant 0 : index
    %69 = vector.load %arg7[%c25_70, %c0_71] : memref<440x128xbf16, #tpu.memory_space<vmem>>, vector<384x128xbf16>
    %c4 = arith.constant 4 : index
    %c0_72 = arith.constant 0 : index
    %c0_73 = arith.constant 0 : index
    %70 = vector.load %arg3[%c4, %c0_72, %c0_73] : memref<9x128x128xbf16, #tpu.memory_space<vmem>>, vector<1x128x128xbf16>
    %71 = vector.shape_cast %70 : vector<1x128x128xbf16> to vector<128x128xbf16>
    %cst_74 = arith.constant dense<0.000000e+00> : vector<384x128xf32>
    %72 = tpu.matmul %69, %71, %cst_74 {dimension_numbers = #tpu.dot_dimension_numbers<[1], [0], [0], [1], [0, 0, 1, 1], [], []>} : vector<384x128xbf16>, vector<128x128xbf16>, vector<384x128xf32> -> vector<384x128xf32>
    %73 = arith.addf %68, %72 : vector<384x128xf32>
    %c26 = arith.constant 26 : index
    %c0_75 = arith.constant 0 : index
    %74 = vector.load %arg7[%c26, %c0_75] : memref<440x128xbf16, #tpu.memory_space<vmem>>, vector<384x128xbf16>
    %c5 = arith.constant 5 : index
    %c0_76 = arith.constant 0 : index
    %c0_77 = arith.constant 0 : index
    %75 = vector.load %arg3[%c5, %c0_76, %c0_77] : memref<9x128x128xbf16, #tpu.memory_space<vmem>>, vector<1x128x128xbf16>
    %76 = vector.shape_cast %75 : vector<1x128x128xbf16> to vector<128x128xbf16>
    %cst_78 = arith.constant dense<0.000000e+00> : vector<384x128xf32>
    %77 = tpu.matmul %74, %76, %cst_78 {dimension_numbers = #tpu.dot_dimension_numbers<[1], [0], [0], [1], [0, 0, 1, 1], [], []>} : vector<384x128xbf16>, vector<128x128xbf16>, vector<384x128xf32> -> vector<384x128xf32>
    %78 = arith.addf %73, %77 : vector<384x128xf32>
    %c48_79 = arith.constant 48 : index
    %c0_80 = arith.constant 0 : index
    %79 = vector.load %arg7[%c48_79, %c0_80] : memref<440x128xbf16, #tpu.memory_space<vmem>>, vector<384x128xbf16>
    %c6 = arith.constant 6 : index
    %c0_81 = arith.constant 0 : index
    %c0_82 = arith.constant 0 : index
    %80 = vector.load %arg3[%c6, %c0_81, %c0_82] : memref<9x128x128xbf16, #tpu.memory_space<vmem>>, vector<1x128x128xbf16>
    %81 = vector.shape_cast %80 : vector<1x128x128xbf16> to vector<128x128xbf16>
    %cst_83 = arith.constant dense<0.000000e+00> : vector<384x128xf32>
    %82 = tpu.matmul %79, %81, %cst_83 {dimension_numbers = #tpu.dot_dimension_numbers<[1], [0], [0], [1], [0, 0, 1, 1], [], []>} : vector<384x128xbf16>, vector<128x128xbf16>, vector<384x128xf32> -> vector<384x128xf32>
    %83 = arith.addf %78, %82 : vector<384x128xf32>
    %c49_84 = arith.constant 49 : index
    %c0_85 = arith.constant 0 : index
    %84 = vector.load %arg7[%c49_84, %c0_85] : memref<440x128xbf16, #tpu.memory_space<vmem>>, vector<384x128xbf16>
    %c7 = arith.constant 7 : index
    %c0_86 = arith.constant 0 : index
    %c0_87 = arith.constant 0 : index
    %85 = vector.load %arg3[%c7, %c0_86, %c0_87] : memref<9x128x128xbf16, #tpu.memory_space<vmem>>, vector<1x128x128xbf16>
    %86 = vector.shape_cast %85 : vector<1x128x128xbf16> to vector<128x128xbf16>
    %cst_88 = arith.constant dense<0.000000e+00> : vector<384x128xf32>
    %87 = tpu.matmul %84, %86, %cst_88 {dimension_numbers = #tpu.dot_dimension_numbers<[1], [0], [0], [1], [0, 0, 1, 1], [], []>} : vector<384x128xbf16>, vector<128x128xbf16>, vector<384x128xf32> -> vector<384x128xf32>
    %88 = arith.addf %83, %87 : vector<384x128xf32>
    %c50 = arith.constant 50 : index
    %c0_89 = arith.constant 0 : index
    %89 = vector.load %arg7[%c50, %c0_89] : memref<440x128xbf16, #tpu.memory_space<vmem>>, vector<384x128xbf16>
    %c8 = arith.constant 8 : index
    %c0_90 = arith.constant 0 : index
    %c0_91 = arith.constant 0 : index
    %90 = vector.load %arg3[%c8, %c0_90, %c0_91] : memref<9x128x128xbf16, #tpu.memory_space<vmem>>, vector<1x128x128xbf16>
    %91 = vector.shape_cast %90 : vector<1x128x128xbf16> to vector<128x128xbf16>
    %cst_92 = arith.constant dense<0.000000e+00> : vector<384x128xf32>
    %92 = tpu.matmul %89, %91, %cst_92 {dimension_numbers = #tpu.dot_dimension_numbers<[1], [0], [0], [1], [0, 0, 1, 1], [], []>} : vector<384x128xbf16>, vector<128x128xbf16>, vector<384x128xf32> -> vector<384x128xf32>
    %93 = arith.addf %88, %92 : vector<384x128xf32>
    %94 = vector.shape_cast %93 : vector<384x128xf32> to vector<16x24x128xf32>
    %95 = vector.extract_strided_slice %94 {offsets = [0, 0, 0], sizes = [16, 16, 128], strides = [1, 1, 1]} : vector<16x24x128xf32> to vector<16x16x128xf32>
    %96 = vector.shape_cast %95 : vector<16x16x128xf32> to vector<256x128xf32>
    %c0_93 = arith.constant 0 : index
    %c0_94 = arith.constant 0 : index
    %97 = vector.load %arg4[%c0_93, %c0_94] : memref<1x128xf32, #tpu.memory_space<vmem>>, vector<1x128xf32>
    %98 = vector.broadcast %97 : vector<1x128xf32> to vector<256x128xf32>
    %99 = arith.addf %96, %98 : vector<256x128xf32>
    %c0_95 = arith.constant 0 : index
    %c0_96 = arith.constant 0 : index
    %c0_97 = arith.constant 0 : index
    %100 = vector.load %arg5[%c0_95, %c0_96, %c0_97] : memref<1x256x128xbf16, #tpu.memory_space<vmem>>, vector<1x256x128xbf16>
    %101 = vector.shape_cast %100 : vector<1x256x128xbf16> to vector<256x128xbf16>
    %102 = arith.extf %101 : vector<256x128xbf16> to vector<256x128xf32>
    %103 = arith.addf %99, %102 : vector<256x128xf32>
    %cst_98 = arith.constant 0.000000e+00 : f32
    %104 = vector.broadcast %cst_98 : f32 to vector<256x128xf32>
    %105 = arith.maximumf %103, %104 : vector<256x128xf32>
    %c0_99 = arith.constant 0 : index
    %c0_100 = arith.constant 0 : index
    %c0_101 = arith.constant 0 : index
    %106 = vector.load %arg6[%c0_99, %c0_100, %c0_101] : memref<1x256x128xf32, #tpu.memory_space<vmem>>, vector<1x256x128xf32>
    %107 = vector.shape_cast %106 : vector<1x256x128xf32> to vector<256x128xf32>
    %108 = vector.shape_cast %105 : vector<256x128xf32> to vector<1x256x128xf32>
    tpu.vector_store %arg6[%c0_99, %c0_100, %c0_101], %108 {strides = array<i32>} : memref<1x256x128xf32, #tpu.memory_space<vmem>>, vector<1x256x128xf32>,
    return
  }
  func.func @transform_0(%arg0: i32, %arg1: i32) -> (i32, i32, i32) {
    %c0_i32 = arith.constant 0 : i32
    %c0_i32_0 = arith.constant 0 : i32
    %c0_i32_1 = arith.constant 0 : i32
    return %arg1, %c0_i32, %c0_i32_0 : i32, i32, i32
  }
  func.func @transform_1(%arg0: i32, %arg1: i32) -> (i32, i32, i32) {
    %c0_i32 = arith.constant 0 : i32
    %c0_i32_0 = arith.constant 0 : i32
    %c0_i32_1 = arith.constant 0 : i32
    return %c0_i32, %c0_i32_0, %arg0 : i32, i32, i32
  }
  func.func @transform_2(%arg0: i32, %arg1: i32) -> (i32, i32) {
    %c0_i32 = arith.constant 0 : i32
    %c0_i32_0 = arith.constant 0 : i32
    return %c0_i32, %arg0 : i32, i32
  }
  func.func @transform_3(%arg0: i32, %arg1: i32) -> (i32, i32, i32) {
    %c0_i32 = arith.constant 0 : i32
    %c0_i32_0 = arith.constant 0 : i32
    return %arg1, %c0_i32, %arg0 : i32, i32, i32
  }
  func.func @transform_4(%arg0: i32, %arg1: i32) -> (i32, i32, i32) {
    %c0_i32 = arith.constant 0 : i32
    %c0_i32_0 = arith.constant 0 : i32
    return %arg1, %c0_i32, %arg0 : i32, i32, i32
  }
}

</mosaic_0001>

<llo_original>
// kernel: basic_block_forward.3
$region0: #{basic_block_forward.3}
  #allocation0 [shape = 'u32[]', space=smem, size = 0x4, offset = 0x4, fixed_abs, tag = 'smem constant byte address 0x4 - core index']
  #allocation1 [shape = 'u32[72,128]{1,0:T(1,128)}', space=vmem, size = 0x9000, scoped, tag = 'internal scratch']
  #allocation2 [shape = 'bf16[440,128]{1,0:T(8,128)(2,1)}', space=vmem, size = 0x1b800, scoped, tag = 'scratch operand']
  %s0 = inlined_call_operand.vmem [shape: bf16[2,256,128], index: 0, kind: input, shape index: {}]
  %s1 = inlined_call_operand.vmem [shape: bf16[9,128,128], index: 1, kind: input, shape index: {}]
  %s2 = inlined_call_operand.vmem [shape: f32[1,128], index: 2, kind: input, shape index: {}]
  %s3 = inlined_call_operand.vmem [shape: bf16[2,256,128], index: 3, kind: input, shape index: {}]
  %s4 = inlined_call_operand.vmem [shape: f32[2,256,128], index: 4, kind: output, shape index: {}]
  %s5 = sld [smem:[#allocation0]]
  $region49: #{basic_block_forward.3} parent=0
    _
  %s7 = ssub.s32 1, %s5
  %s8 = scalar_select 0, %s7, %s5
  loop: start=0, step=1, limit=4
  $region2: #{basic_block_forward.3} parent=0 // loop_pre_header
    _
  $region3: #{basic_block_forward.3} parent=0 // loop_header
    %s10 = sphi 0, %s14
    %p11 = scmp.ge.s32.totalorder %s10, 4
    %s17 = sphi 0, %s29
    %s18 = sphi 0, %s25
    %s19 = sphi 0, %s17
    %s20 = sphi 0, %s18
    %s21 = sphi 0, %s19
    %s22 = sphi 0, %s20
    %s32 = sphi 0, %s34
    %s35 = sphi 0, %s32
    %s36 = sphi 0, %s35
    %s52 = sphi 0, %s36
    %s58 = sphi 0, %s60
    %s61 = sphi 0, %s58
    %s62 = sphi 0, %s61
    %s78 = sphi 0, %s62
    %s84 = sphi 0, %s86
    %s87 = sphi 0, %s84
    %s88 = sphi 0, %s87
    %s104 = sphi 0, %s88
    %s112 = sphi 0, %s114
    %s115 = sphi 0, %s112
    %s116 = sphi 0, %s115
    %s132 = sphi 0, %s116
    %s140 = sphi 0, %s142
    %s143 = sphi 0, %s140
    %s144 = sphi 0, %s143
    %s160 = sphi 0, %s144
  $region4: #{basic_block_forward.3} parent=0 // loop_header_branch
    %13 = sbr.rel (%p11) target = $region8
  $region5: #{basic_block_forward.3} parent=0 // loop_body
    %s15 = ssub.s32 %s10, 1
    %s16 = ssub.s32 %s10, 2
    %s23 = sadd.s32 1, %s18
    %p24 = scmp.ge.s32.totalorder %s23, 2
    %s25 = scalar_select %p24, 0, %s23
    %s26 = sadd.s32 1, %s17
    %s27 = scalar_select %p24, %s26, %s17
    %p28 = scmp.ge.s32.totalorder %s27, 1
    %s29 = scalar_select %p28, 0, %s27
    %s30 = ssub.s32 %s18, %s25
    %p31 = scmp.eq.s32.totalorder %s30, 0
    %s33 = sadd.s32 %s32, 1
    %s34 = scalar_select %p31, %s32, %s33
    %p37 = pneg %p31
    %p38 = scmp.eq.s32.totalorder %s10, 1
    %p39 = por %p37, %p38
    %p40 = scmp.ne.s32.totalorder %s32, %s35
    %p41 = scmp.eq.s32.totalorder %s10, 0
    %p42 = por %p40, %p41
    %p43 = scmp.ne.s32.totalorder %s32, %s35
    %p44 = scmp.eq.s32.totalorder %s15, 1
    %p45 = por %p43, %p44
    %p46 = scmp.ne.s32.totalorder %s35, %s36
    %p47 = scmp.eq.s32.totalorder %s15, 0
    %p48 = por %p46, %p47
    %p49 = scmp.ne.s32.totalorder %s35, %s36
    %p50 = scmp.eq.s32.totalorder %s16, 1
    %p51 = por %p49, %p50
    %p53 = scmp.ne.s32.totalorder %s36, %s52
    %p54 = scmp.eq.s32.totalorder %s16, 0
    %p55 = por %p53, %p54
    %s56 = ssub.s32 %s17, %s29
    %p57 = scmp.eq.s32.totalorder %s56, 0
    %s59 = sadd.s32 %s58, 1
    %s60 = scalar_select %p57, %s58, %s59
    %p63 = pneg %p57
    %p64 = scmp.eq.s32.totalorder %s10, 1
    %p65 = por %p63, %p64
    %p66 = scmp.ne.s32.totalorder %s58, %s61
    %p67 = scmp.eq.s32.totalorder %s10, 0
    %p68 = por %p66, %p67
    %p69 = scmp.ne.s32.totalorder %s58, %s61
    %p70 = scmp.eq.s32.totalorder %s15, 1
    %p71 = por %p69, %p70
    %p72 = scmp.ne.s32.totalorder %s61, %s62
    %p73 = scmp.eq.s32.totalorder %s15, 0
    %p74 = por %p72, %p73
    %p75 = scmp.ne.s32.totalorder %s61, %s62
    %p76 = scmp.eq.s32.totalorder %s16, 1
    %p77 = por %p75, %p76
    %p79 = scmp.ne.s32.totalorder %s62, %s78
    %p80 = scmp.eq.s32.totalorder %s16, 0
    %p81 = por %p79, %p80
    %s82 = ssub.s32 %s17, %s29
    %p83 = scmp.eq.s32.totalorder %s82, 0
    %s85 = sadd.s32 %s84, 1
    %s86 = scalar_select %p83, %s84, %s85
    %p89 = pneg %p83
    %p90 = scmp.eq.s32.totalorder %s10, 1
    %p91 = por %p89, %p90
    %p92 = scmp.ne.s32.totalorder %s84, %s87
    %p93 = scmp.eq.s32.totalorder %s10, 0
    %p94 = por %p92, %p93
    %p95 = scmp.ne.s32.totalorder %s84, %s87
    %p96 = scmp.eq.s32.totalorder %s15, 1
    %p97 = por %p95, %p96
    %p98 = scmp.ne.s32.totalorder %s87, %s88
    %p99 = scmp.eq.s32.totalorder %s15, 0
    %p100 = por %p98, %p99
    %p101 = scmp.ne.s32.totalorder %s87, %s88
    %p102 = scmp.eq.s32.totalorder %s16, 1
    %p103 = por %p101, %p102
    %p105 = scmp.ne.s32.totalorder %s88, %s104
    %p106 = scmp.eq.s32.totalorder %s16, 0
    %p107 = por %p105, %p106
    %s108 = ssub.s32 %s18, %s25
    %s109 = ssub.s32 %s17, %s29
    %s110 = sor.u32 %s108, %s109
    %p111 = scmp.eq.s32.totalorder %s110, 0
    %s113 = sadd.s32 %s112, 1
    %s114 = scalar_select %p111, %s112, %s113
    %p117 = pneg %p111
    %p118 = scmp.eq.s32.totalorder %s10, 1
    %p119 = por %p117, %p118
    %p120 = scmp.ne.s32.totalorder %s112, %s115
    %p121 = scmp.eq.s32.totalorder %s10, 0
    %p122 = por %p120, %p121
    %p123 = scmp.ne.s32.totalorder %s112, %s115
    %p124 = scmp.eq.s32.totalorder %s15, 1
    %p125 = por %p123, %p124
    %p126 = scmp.ne.s32.totalorder %s115, %s116
    %p127 = scmp.eq.s32.totalorder %s15, 0
    %p128 = por %p126, %p127
    %p129 = scmp.ne.s32.totalorder %s115, %s116
    %p130 = scmp.eq.s32.totalorder %s16, 1
    %p131 = por %p129, %p130
    %p133 = scmp.ne.s32.totalorder %s116, %s132
    %p134 = scmp.eq.s32.totalorder %s16, 0
    %p135 = por %p133, %p134
    %s136 = ssub.s32 %s18, %s25
    %s137 = ssub.s32 %s17, %s29
    %s138 = sor.u32 %s136, %s137
    %p139 = scmp.eq.s32.totalorder %s138, 0
    %s141 = sadd.s32 %s140, 1
    %s142 = scalar_select %p139, %s140, %s141
    %p145 = pneg %p139
    %p146 = scmp.eq.s32.totalorder %s10, 1
    %p147 = por %p145, %p146
    %p148 = scmp.ne.s32.totalorder %s140, %s143
    %p149 = scmp.eq.s32.totalorder %s10, 0
    %p150 = por %p148, %p149
    %p151 = scmp.ne.s32.totalorder %s140, %s143
    %p152 = scmp.eq.s32.totalorder %s15, 1
    %p153 = por %p151, %p152
    %p154 = scmp.ne.s32.totalorder %s143, %s144
    %p155 = scmp.eq.s32.totalorder %s15, 0
    %p156 = por %p154, %p155
    %p157 = scmp.ne.s32.totalorder %s143, %s144
    %p158 = scmp.eq.s32.totalorder %s16, 1
    %p159 = por %p157, %p158
    %p161 = scmp.ne.s32.totalorder %s144, %s160
    %p162 = scmp.eq.s32.totalorder %s16, 0
    %p163 = por %p161, %p162
    %p164 = scmp.le.s32.totalorder 1, %s10
    %p165 = scmp.lt.s32.totalorder %s10, 3
    %p166 = pnand %p164, %p165
    %p167 = pneg %p166
    // Predicated region
    $region9: #{basic_block_forward.3} parent=5 // pred_check
      _
    $region10: #{basic_block_forward.3} parent=5 // pred_check_branch
      %169 = sbr.rel (%p166) target = $region12
    $region11: #{basic_block_forward.3} parent=5 // pred_region
      %s170 = ssub.s32 %s10, 1
      // Predicated region
      $region13: #{basic_block_forward.3} parent=11 // pred_check
        %p171 = pneg %p74
      $region14: #{basic_block_forward.3} parent=11 // pred_check_branch
        %173 = sbr.rel (%p171) target = $region16
      $region15: #{basic_block_forward.3} parent=11 // pred_region
        %p174 = scmp.lt.s32.totalorder %s19, 0
        %s175 = scalar_select %p174, %s19, 0
        %s176 = smul.addr %s175, 4
        %s177 = scalar_lea.vmem %s1, %s176
      $region16: #{basic_block_forward.3} parent=11 // pred_fallthru
        _
      // Predicated region
      $region17: #{basic_block_forward.3} parent=11 // pred_check
        %p178 = pneg %p100
      $region18: #{basic_block_forward.3} parent=11 // pred_check_branch
        %180 = sbr.rel (%p178) target = $region20
      $region19: #{basic_block_forward.3} parent=11 // pred_region
        %p181 = scmp.lt.s32.totalorder %s19, 0
        %s182 = scalar_select %p181, %s19, 0
        %s183 = scalar_lea.vmem %s2, %s182
      $region20: #{basic_block_forward.3} parent=11 // pred_fallthru
        _
    $region12: #{basic_block_forward.3} parent=5 // pred_fallthru
      _
    %p184 = scmp.lt.s32.totalorder %s10, 2
    // Predicated region
    $region21: #{basic_block_forward.3} parent=5 // pred_check
      %p185 = pneg %p184
    $region22: #{basic_block_forward.3} parent=5 // pred_check_branch
      %187 = sbr.rel (%p185) target = $region24
    $region23: #{basic_block_forward.3} parent=5 // pred_region
      // Predicated region
      $region25: #{basic_block_forward.3} parent=23 // pred_check
        %p188 = pneg %p42
      $region26: #{basic_block_forward.3} parent=23 // pred_check_branch
        %190 = sbr.rel (%p188) target = $region28
      $region27: #{basic_block_forward.3} parent=23 // pred_region
        %p191 = scmp.lt.s32.totalorder %s18, 1
        %s192 = scalar_select %p191, %s18, 1
        %s193 = smul.addr %s192, 32
        %s194 = smul.addr %s193, 4
        %s195 = scalar_lea.vmem %s0, %s194
      $region28: #{basic_block_forward.3} parent=23 // pred_fallthru
        _
      // Predicated region
      $region29: #{basic_block_forward.3} parent=23 // pred_check
        %p196 = pneg %p122
      $region30: #{basic_block_forward.3} parent=23 // pred_check_branch
        %198 = sbr.rel (%p196) target = $region32
      $region31: #{basic_block_forward.3} parent=23 // pred_region
        %p199 = scmp.lt.s32.totalorder %s18, 1
        %s200 = scalar_select %p199, %s18, 1
        %p201 = scmp.lt.s32.totalorder %s17, 0
        %s202 = scalar_select %p201, %s17, 0
        %s203 = smul.addr %s200, 32
        %s204 = sadd.s32 %s202, %s203
        %s205 = smul.addr %s204, 4
        %s206 = scalar_lea.vmem %s3, %s205
      $region32: #{basic_block_forward.3} parent=23 // pred_fallthru
        _
    $region24: #{basic_block_forward.3} parent=5 // pred_fallthru
      _
    %p207 = scmp.le.s32.totalorder 1, %s10
    %p208 = scmp.lt.s32.totalorder %s10, 3
    %p209 = pnand %p207, %p208
    %p210 = pneg %p209
    // Predicated region
    $region33: #{basic_block_forward.3} parent=5 // pred_check
      _
    $region34: #{basic_block_forward.3} parent=5 // pred_check_branch
      %212 = sbr.rel (%p209) target = $region36
    $region35: #{basic_block_forward.3} parent=5 // pred_region
      %s213 = ssub.s32 %s10, 1
      %p214 = scmp.lt.s32.totalorder %s20, 1
      %s215 = scalar_select %p214, %s20, 1
      %s216 = smul.addr %s215, 32
      %s217 = smul.addr %s216, 4
      %s218 = scalar_lea.vmem %s0, %s217
      %p219 = pneg %p48
      %p220 = pneg %p45
      %p221 = scmp.lt.s32.totalorder %s19, 0
      %s222 = scalar_select %p221, %s19, 0
      %s223 = smul.addr %s222, 4
      %s224 = scalar_lea.vmem %s1, %s223
      %p225 = pneg %p74
      %p226 = pneg %p71
      %p227 = scmp.lt.s32.totalorder %s19, 0
      %s228 = scalar_select %p227, %s19, 0
      %s229 = scalar_lea.vmem %s2, %s228
      %p230 = pneg %p100
      %p231 = pneg %p97
      %p232 = scmp.lt.s32.totalorder %s20, 1
      %s233 = scalar_select %p232, %s20, 1
      %p234 = scmp.lt.s32.totalorder %s19, 0
      %s235 = scalar_select %p234, %s19, 0
      %s236 = smul.addr %s233, 32
      %s237 = sadd.s32 %s235, %s236
      %s238 = smul.addr %s237, 4
      %s239 = scalar_lea.vmem %s3, %s238
      %p240 = pneg %p128
      %p241 = pneg %p125
      %p242 = pneg %p156
      %p243 = pneg %p153
      %p244 = scmp.lt.s32.totalorder %s20, 1
      %s245 = scalar_select %p244, %s20, 1
      %p246 = scmp.lt.s32.totalorder %s19, 0
      %s247 = scalar_select %p246, %s19, 0
      %s248 = smul.addr %s245, 32
      %s249 = sadd.s32 %s247, %s248
      %s250 = smul.addr %s249, 8
      %s251 = scalar_lea.vmem %s4, %s250
      %p252 = scmp.lt.s32.totalorder %s20, 1
      %s253 = scalar_select %p252, %s20, 1
      %s254 = smul.addr %s253, 32
      %s255 = smul.addr %s254, 4
      %s256 = scalar_lea.vmem %s0, %s255
      %p257 = scmp.lt.s32.totalorder %s19, 0
      %s258 = scalar_select %p257, %s19, 0
      %s259 = smul.addr %s258, 4
      %s260 = scalar_lea.vmem %s1, %s259
      %p261 = scmp.lt.s32.totalorder %s19, 0
      %s262 = scalar_select %p261, %s19, 0
      %s263 = scalar_lea.vmem %s2, %s262
      %p264 = scmp.lt.s32.totalorder %s20, 1
      %s265 = scalar_select %p264, %s20, 1
      %p266 = scmp.lt.s32.totalorder %s19, 0
      %s267 = scalar_select %p266, %s19, 0
      %s268 = smul.addr %s265, 32
      %s269 = sadd.s32 %s267, %s268
      %s270 = smul.addr %s269, 4
      %s271 = scalar_lea.vmem %s3, %s270
      %p272 = scmp.lt.s32.totalorder %s20, 1
      %s273 = scalar_select %p272, %s20, 1
      %p274 = scmp.lt.s32.totalorder %s19, 0
      %s275 = scalar_select %p274, %s19, 0
      %s276 = smul.addr %s273, 32
      %s277 = sadd.s32 %s275, %s276
      %s278 = smul.addr %s277, 8
      %s279 = scalar_lea.vmem %s4, %s278
      %281 = vst [vmem:[#allocation2] sm:$0xf] 0
      %282 = vst [vmem:[#allocation2 + $0x4] sm:$0xf] 0
      %283 = vst [vmem:[#allocation2 + $0x8] sm:$0xf] 0
      %284 = vst [vmem:[#allocation2 + $0xc] sm:$0xf] 0
      %285 = vst [vmem:[#allocation2 + $0x10] sm:$0xf] 0
      %286 = vst [vmem:[#allocation2 + $0x14] sm:$0xf] 0
      %287 = vst [vmem:[#allocation2 + $0x18] sm:$0xf] 0
      %288 = vst [vmem:[#allocation2 + $0x1c] sm:$0xf] 0
      %289 = vst [vmem:[#allocation2 + $0x20] sm:$0xf] 0
      %290 = vst [vmem:[#allocation2 + $0x24] sm:$0xf] 0
      %291 = vst [vmem:[#allocation2 + $0x28] sm:$0xf] 0
      %292 = vst [vmem:[#allocation2 + $0x2c] sm:$0xf] 0
      %293 = vst [vmem:[#allocation2 + $0x30] sm:$0xf] 0
      %294 = vst [vmem:[#allocation2 + $0x34] sm:$0xf] 0
      %295 = vst [vmem:[#allocation2 + $0x38] sm:$0xf] 0
      %296 = vst [vmem:[#allocation2 + $0x3c] sm:$0xf] 0
      %297 = vst [vmem:[#allocation2 + $0x40] sm:$0xf] 0
      %298 = vst [vmem:[#allocation2 + $0x44] sm:$0xf] 0
      %299 = vst [vmem:[#allocation2 + $0x48] sm:$0xf] 0
      %300 = vst [vmem:[#allocation2 + $0x4c] sm:$0xf] 0
      %301 = vst [vmem:[#allocation2 + $0x50] sm:$0xf] 0
      %302 = vst [vmem:[#allocation2 + $0x54] sm:$0xf] 0
      %303 = vst [vmem:[#allocation2 + $0x58] sm:$0xf] 0
      %304 = vst [vmem:[#allocation2 + $0x5c] sm:$0xf] 0
      %305 = vst [vmem:[#allocation2 + $0x60] sm:$0xf] 0
      %306 = vst [vmem:[#allocation2 + $0x64] sm:$0xf] 0
      %307 = vst [vmem:[#allocation2 + $0x68] sm:$0xf] 0
      %308 = vst [vmem:[#allocation2 + $0x6c] sm:$0xf] 0
      %309 = vst [vmem:[#allocation2 + $0x70] sm:$0xf] 0
      %310 = vst [vmem:[#allocation2 + $0x74] sm:$0xf] 0
      %311 = vst [vmem:[#allocation2 + $0x78] sm:$0xf] 0
      %312 = vst [vmem:[#allocation2 + $0x7c] sm:$0xf] 0
      %313 = vst [vmem:[#allocation2 + $0x80] sm:$0xf] 0
      %314 = vst [vmem:[#allocation2 + $0x84] sm:$0xf] 0
      %315 = vst [vmem:[#allocation2 + $0x88] sm:$0xf] 0
      %316 = vst [vmem:[#allocation2 + $0x8c] sm:$0xf] 0
      %317 = vst [vmem:[#allocation2 + $0x90] sm:$0xf] 0
      %318 = vst [vmem:[#allocation2 + $0x94] sm:$0xf] 0
      %319 = vst [vmem:[#allocation2 + $0x98] sm:$0xf] 0
      %320 = vst [vmem:[#allocation2 + $0x9c] sm:$0xf] 0
      %321 = vst [vmem:[#allocation2 + $0xa0] sm:$0xf] 0
      %322 = vst [vmem:[#allocation2 + $0xa4] sm:$0xf] 0
      %323 = vst [vmem:[#allocation2 + $0xa8] sm:$0xf] 0
      %324 = vst [vmem:[#allocation2 + $0xac] sm:$0xf] 0
      %325 = vst [vmem:[#allocation2 + $0xb0] sm:$0xf] 0
      %326 = vst [vmem:[#allocation2 + $0xb4] sm:$0xf] 0
      %327 = vst [vmem:[#allocation2 + $0xb8] sm:$0xf] 0
      %328 = vst [vmem:[#allocation2 + $0xbc] sm:$0xf] 0
      %329 = vst [vmem:[#allocation2 + $0xc0] sm:$0xf] 0
      %330 = vst [vmem:[#allocation2 + $0xc4] sm:$0xf] 0
      %331 = vst [vmem:[#allocation2 + $0xc8] sm:$0xf] 0
      %332 = vst [vmem:[#allocation2 + $0xcc] sm:$0xf] 0
      %333 = vst [vmem:[#allocation2 + $0xd0] sm:$0xf] 0
      %334 = vst [vmem:[#allocation2 + $0xd4] sm:$0xf] 0
      %335 = vst [vmem:[#allocation2 + $0xd8] sm:$0xf] 0
      %v336 = vld [vmem:[%s256] sm:$0xf]
      %v337 = vld [vmem:[%s256 + $0x4] sm:$0xf]
      %vm338 = vsmask.f32 256
      %vm339 = vsmask.f32 4368
      %vm340 = vmor %vm338, %vm339
      %v342 = vshrl.u32 %v336, 16
      %v344 = vrot.slane %v342, 7
      %v345 = vshll.u32 %v336, 16
      %v347 = vor.u32 %v344, %v345
      %v348 = vrot.slane %v344, 4
      %v350 = vshrl.u32 %v337, 16
      %v352 = vrot.slane %v350, 7
      %v353 = vshll.u32 %v337, 16
      %v355 = vor.u32 %v352, %v353
      %v356 = vsel %vm340, %v348, %v355
      %v357 = vrot.slane %v352, 4
      %vm361 = vcmask 1043456
      %vm362 = vsmask.f32 7938
      %vm363 = vmand %vm361, %vm362
      %v364 = vld [vmem:[#allocation2 + $0xc] sm:$0xf]
      %v365 = vsel %vm363, %v347, %v364
      %366 = vst [vmem:[#allocation2 + $0xc] sm:$0xf] %v365
      %367 = vst [vmem:[#allocation2 + $0x10] sm:$0xf] %v356
      %vm368 = vcmask 1040384
      %vm369 = vmand %vm368, %vm338
      %v370 = vld [vmem:[#allocation2 + $0x14] sm:$0x1]
      %v371 = vsel %vm369, %v357, %v370
      %372 = vst [vmem:[#allocation2 + $0x14] sm:$0x1] %v371
      %v373 = vld [vmem:[%s256 + $0x8] sm:$0xf]
      %v374 = vld [vmem:[%s256 + $0xc] sm:$0xf]
      %v376 = vshrl.u32 %v373, 16
      %v378 = vrot.slane %v376, 7
      %v379 = vshll.u32 %v373, 16
      %v381 = vor.u32 %v378, %v379
      %v382 = vrot.slane %v378, 4
      %v384 = vshrl.u32 %v374, 16
      %v386 = vrot.slane %v384, 7
      %v387 = vshll.u32 %v374, 16
      %v389 = vor.u32 %v386, %v387
      %v390 = vsel %vm340, %v382, %v389
      %v391 = vrot.slane %v386, 4
      %v395 = vld [vmem:[#allocation2 + $0x18] sm:$0xf]
      %v396 = vsel %vm363, %v381, %v395
      %397 = vst [vmem:[#allocation2 + $0x18] sm:$0xf] %v396
      %398 = vst [vmem:[#allocation2 + $0x1c] sm:$0xf] %v390
      %v399 = vld [vmem:[#allocation2 + $0x20] sm:$0x1]
      %v400 = vsel %vm369, %v391, %v399
      %401 = vst [vmem:[#allocation2 + $0x20] sm:$0x1] %v400
      %v402 = vld [vmem:[%s256 + $0x10] sm:$0xf]
      %v403 = vld [vmem:[%s256 + $0x14] sm:$0xf]
      %v405 = vshrl.u32 %v402, 16
      %v407 = vrot.slane %v405, 7
      %v408 = vshll.u32 %v402, 16
      %v410 = vor.u32 %v407, %v408
      %v411 = vrot.slane %v407, 4
      %v413 = vshrl.u32 %v403, 16
      %v415 = vrot.slane %v413, 7
      %v416 = vshll.u32 %v403, 16
      %v418 = vor.u32 %v415, %v416
      %v419 = vsel %vm340, %v411, %v418
      %v420 = vrot.slane %v415, 4
      %v424 = vld [vmem:[#allocation2 + $0x24] sm:$0xf]
      %v425 = vsel %vm363, %v410, %v424
      %426 = vst [vmem:[#allocation2 + $0x24] sm:$0xf] %v425
      %427 = vst [vmem:[#allocation2 + $0x28] sm:$0xf] %v419
      %v428 = vld [vmem:[#allocation2 + $0x2c] sm:$0x1]
      %v429 = vsel %vm369, %v420, %v428
      %430 = vst [vmem:[#allocation2 + $0x2c] sm:$0x1] %v429
      %v431 = vld [vmem:[%s256 + $0x18] sm:$0xf]
      %v432 = vld [vmem:[%s256 + $0x1c] sm:$0xf]
      %v434 = vshrl.u32 %v431, 16
      %v436 = vrot.slane %v434, 7
      %v437 = vshll.u32 %v431, 16
      %v439 = vor.u32 %v436, %v437
      %v440 = vrot.slane %v436, 4
      %v442 = vshrl.u32 %v432, 16
      %v444 = vrot.slane %v442, 7
      %v445 = vshll.u32 %v432, 16
      %v447 = vor.u32 %v444, %v445
      %v448 = vsel %vm340, %v440, %v447
      %v449 = vrot.slane %v444, 4
      %v453 = vld [vmem:[#allocation2 + $0x30] sm:$0xf]
      %v454 = vsel %vm363, %v439, %v453
      %455 = vst [vmem:[#allocation2 + $0x30] sm:$0xf] %v454
      %456 = vst [vmem:[#allocation2 + $0x34] sm:$0xf] %v448
      %v457 = vld [vmem:[#allocation2 + $0x38] sm:$0x1]
      %v458 = vsel %vm369, %v449, %v457
      %459 = vst [vmem:[#allocation2 + $0x38] sm:$0x1] %v458
      %v460 = vld [vmem:[%s256 + $0x20] sm:$0xf]
      %v461 = vld [vmem:[%s256 + $0x24] sm:$0xf]
      %v463 = vshrl.u32 %v460, 16
      %v465 = vrot.slane %v463, 7
      %v466 = vshll.u32 %v460, 16
      %v468 = vor.u32 %v465, %v466
      %v469 = vrot.slane %v465, 4
      %v471 = vshrl.u32 %v461, 16
      %v473 = vrot.slane %v471, 7
      %v474 = vshll.u32 %v461, 16
      %v476 = vor.u32 %v473, %v474
      %v477 = vsel %vm340, %v469, %v476
      %v478 = vrot.slane %v473, 4
      %v482 = vld [vmem:[#allocation2 + $0x3c] sm:$0xf]
      %v483 = vsel %vm363, %v468, %v482
      %484 = vst [vmem:[#allocation2 + $0x3c] sm:$0xf] %v483
      %485 = vst [vmem:[#allocation2 + $0x40] sm:$0xf] %v477
      %v486 = vld [vmem:[#allocation2 + $0x44] sm:$0x1]
      %v487 = vsel %vm369, %v478, %v486
      %488 = vst [vmem:[#allocation2 + $0x44] sm:$0x1] %v487
      %v489 = vld [vmem:[%s256 + $0x28] sm:$0xf]
      %v490 = vld [vmem:[%s256 + $0x2c] sm:$0xf]
      %v492 = vshrl.u32 %v489, 16
      %v494 = vrot.slane %v492, 7
      %v495 = vshll.u32 %v489, 16
      %v497 = vor.u32 %v494, %v495
      %v498 = vrot.slane %v494, 4
      %v500 = vshrl.u32 %v490, 16
      %v502 = vrot.slane %v500, 7
      %v503 = vshll.u32 %v490, 16
      %v505 = vor.u32 %v502, %v503
      %v506 = vsel %vm340, %v498, %v505
      %v507 = vrot.slane %v502, 4
      %v511 = vld [vmem:[#allocation2 + $0x48] sm:$0xf]
      %v512 = vsel %vm363, %v497, %v511
      %513 = vst [vmem:[#allocation2 + $0x48] sm:$0xf] %v512
      %514 = vst [vmem:[#allocation2 + $0x4c] sm:$0xf] %v506
      %v515 = vld [vmem:[#allocation2 + $0x50] sm:$0x1]
      %v516 = vsel %vm369, %v507, %v515
      %517 = vst [vmem:[#allocation2 + $0x50] sm:$0x1] %v516
      %v518 = vld [vmem:[%s256 + $0x30] sm:$0xf]
      %v519 = vld [vmem:[%s256 + $0x34] sm:$0xf]
      %v521 = vshrl.u32 %v518, 16
      %v523 = vrot.slane %v521, 7
      %v524 = vshll.u32 %v518, 16
      %v526 = vor.u32 %v523, %v524
      %v527 = vrot.slane %v523, 4
      %v529 = vshrl.u32 %v519, 16
      %v531 = vrot.slane %v529, 7
      %v532 = vshll.u32 %v519, 16
      %v534 = vor.u32 %v531, %v532
      %v535 = vsel %vm340, %v527, %v534
      %v536 = vrot.slane %v531, 4
      %v540 = vld [vmem:[#allocation2 + $0x54] sm:$0xf]
      %v541 = vsel %vm363, %v526, %v540
      %542 = vst [vmem:[#allocation2 + $0x54] sm:$0xf] %v541
      %543 = vst [vmem:[#allocation2 + $0x58] sm:$0xf] %v535
      %v544 = vld [vmem:[#allocation2 + $0x5c] sm:$0x1]
      %v545 = vsel %vm369, %v536, %v544
      %546 = vst [vmem:[#allocation2 + $0x5c] sm:$0x1] %v545
      %v547 = vld [vmem:[%s256 + $0x38] sm:$0xf]
      %v548 = vld [vmem:[%s256 + $0x3c] sm:$0xf]
      %v550 = vshrl.u32 %v547, 16
      %v552 = vrot.slane %v550, 7
      %v553 = vshll.u32 %v547, 16
      %v555 = vor.u32 %v552, %v553
      %v556 = vrot.slane %v552, 4
      %v558 = vshrl.u32 %v548, 16
      %v560 = vrot.slane %v558, 7
      %v561 = vshll.u32 %v548, 16
      %v563 = vor.u32 %v560, %v561
      %v564 = vsel %vm340, %v556, %v563
      %v565 = vrot.slane %v560, 4
      %v569 = vld [vmem:[#allocation2 + $0x60] sm:$0xf]
      %v570 = vsel %vm363, %v555, %v569
      %571 = vst [vmem:[#allocation2 + $0x60] sm:$0xf] %v570
      %572 = vst [vmem:[#allocation2 + $0x64] sm:$0xf] %v564
      %v573 = vld [vmem:[#allocation2 + $0x68] sm:$0x1]
      %v574 = vsel %vm369, %v565, %v573
      %575 = vst [vmem:[#allocation2 + $0x68] sm:$0x1] %v574
      %v576 = vld [vmem:[%s256 + $0x40] sm:$0xf]
      %v577 = vld [vmem:[%s256 + $0x44] sm:$0xf]
      %v579 = vshrl.u32 %v576, 16
      %v581 = vrot.slane %v579, 7
      %v582 = vshll.u32 %v576, 16
      %v584 = vor.u32 %v581, %v582
      %v585 = vrot.slane %v581, 4
      %v587 = vshrl.u32 %v577, 16
      %v589 = vrot.slane %v587, 7
      %v590 = vshll.u32 %v577, 16
      %v592 = vor.u32 %v589, %v590
      %v593 = vsel %vm340, %v585, %v592
      %v594 = vrot.slane %v589, 4
      %v598 = vld [vmem:[#allocation2 + $0x6c] sm:$0xf]
      %v599 = vsel %vm363, %v584, %v598
      %600 = vst [vmem:[#allocation2 + $0x6c] sm:$0xf] %v599
      %601 = vst [vmem:[#allocation2 + $0x70] sm:$0xf] %v593
      %v602 = vld [vmem:[#allocation2 + $0x74] sm:$0x1]
      %v603 = vsel %vm369, %v594, %v602
      %604 = vst [vmem:[#allocation2 + $0x74] sm:$0x1] %v603
      %v605 = vld [vmem:[%s256 + $0x48] sm:$0xf]
      %v606 = vld [vmem:[%s256 + $0x4c] sm:$0xf]
      %v608 = vshrl.u32 %v605, 16
      %v610 = vrot.slane %v608, 7
      %v611 = vshll.u32 %v605, 16
      %v613 = vor.u32 %v610, %v611
      %v614 = vrot.slane %v610, 4
      %v616 = vshrl.u32 %v606, 16
      %v618 = vrot.slane %v616, 7
      %v619 = vshll.u32 %v606, 16
      %v621 = vor.u32 %v618, %v619
      %v622 = vsel %vm340, %v614, %v621
      %v623 = vrot.slane %v618, 4
      %v627 = vld [vmem:[#allocation2 + $0x78] sm:$0xf]
      %v628 = vsel %vm363, %v613, %v627
      %629 = vst [vmem:[#allocation2 + $0x78] sm:$0xf] %v628
      %630 = vst [vmem:[#allocation2 + $0x7c] sm:$0xf] %v622
      %v631 = vld [vmem:[#allocation2 + $0x80] sm:$0x1]
      %v632 = vsel %vm369, %v623, %v631
      %633 = vst [vmem:[#allocation2 + $0x80] sm:$0x1] %v632
      %v634 = vld [vmem:[%s256 + $0x50] sm:$0xf]
      %v635 = vld [vmem:[%s256 + $0x54] sm:$0xf]
      %v637 = vshrl.u32 %v634, 16
      %v639 = vrot.slane %v637, 7
      %v640 = vshll.u32 %v634, 16
      %v642 = vor.u32 %v639, %v640
      %v643 = vrot.slane %v639, 4
      %v645 = vshrl.u32 %v635, 16
      %v647 = vrot.slane %v645, 7
      %v648 = vshll.u32 %v635, 16
      %v650 = vor.u32 %v647, %v648
      %v651 = vsel %vm340, %v643, %v650
      %v652 = vrot.slane %v647, 4
      %v656 = vld [vmem:[#allocation2 + $0x84] sm:$0xf]
      %v657 = vsel %vm363, %v642, %v656
      %658 = vst [vmem:[#allocation2 + $0x84] sm:$0xf] %v657
      %659 = vst [vmem:[#allocation2 + $0x88] sm:$0xf] %v651
      %v660 = vld [vmem:[#allocation2 + $0x8c] sm:$0x1]
      %v661 = vsel %vm369, %v652, %v660
      %662 = vst [vmem:[#allocation2 + $0x8c] sm:$0x1] %v661
      %v663 = vld [vmem:[%s256 + $0x58] sm:$0xf]
      %v664 = vld [vmem:[%s256 + $0x5c] sm:$0xf]
      %v666 = vshrl.u32 %v663, 16
      %v668 = vrot.slane %v666, 7
      %v669 = vshll.u32 %v663, 16
      %v671 = vor.u32 %v668, %v669
      %v672 = vrot.slane %v668, 4
      %v674 = vshrl.u32 %v664, 16
      %v676 = vrot.slane %v674, 7
      %v677 = vshll.u32 %v664, 16
      %v679 = vor.u32 %v676, %v677
      %v680 = vsel %vm340, %v672, %v679
      %v681 = vrot.slane %v676, 4
      %v685 = vld [vmem:[#allocation2 + $0x90] sm:$0xf]
      %v686 = vsel %vm363, %v671, %v685
      %687 = vst [vmem:[#allocation2 + $0x90] sm:$0xf] %v686
      %688 = vst [vmem:[#allocation2 + $0x94] sm:$0xf] %v680
      %v689 = vld [vmem:[#allocation2 + $0x98] sm:$0x1]
      %v690 = vsel %vm369, %v681, %v689
      %691 = vst [vmem:[#allocation2 + $0x98] sm:$0x1] %v690
      %v692 = vld [vmem:[%s256 + $0x60] sm:$0xf]
      %v693 = vld [vmem:[%s256 + $0x64] sm:$0xf]
      %v695 = vshrl.u32 %v692, 16
      %v697 = vrot.slane %v695, 7
      %v698 = vshll.u32 %v692, 16
      %v700 = vor.u32 %v697, %v698
      %v701 = vrot.slane %v697, 4
      %v703 = vshrl.u32 %v693, 16
      %v705 = vrot.slane %v703, 7
      %v706 = vshll.u32 %v693, 16
      %v708 = vor.u32 %v705, %v706
      %v709 = vsel %vm340, %v701, %v708
      %v710 = vrot.slane %v705, 4
      %v714 = vld [vmem:[#allocation2 + $0x9c] sm:$0xf]
      %v715 = vsel %vm363, %v700, %v714
      %716 = vst [vmem:[#allocation2 + $0x9c] sm:$0xf] %v715
      %717 = vst [vmem:[#allocation2 + $0xa0] sm:$0xf] %v709
      %v718 = vld [vmem:[#allocation2 + $0xa4] sm:$0x1]
      %v719 = vsel %vm369, %v710, %v718
      %720 = vst [vmem:[#allocation2 + $0xa4] sm:$0x1] %v719
      %v721 = vld [vmem:[%s256 + $0x68] sm:$0xf]
      %v722 = vld [vmem:[%s256 + $0x6c] sm:$0xf]
      %v724 = vshrl.u32 %v721, 16
      %v726 = vrot.slane %v724, 7
      %v727 = vshll.u32 %v721, 16
      %v729 = vor.u32 %v726, %v727
      %v730 = vrot.slane %v726, 4
      %v732 = vshrl.u32 %v722, 16
      %v734 = vrot.slane %v732, 7
      %v735 = vshll.u32 %v722, 16
      %v737 = vor.u32 %v734, %v735
      %v738 = vsel %vm340, %v730, %v737
      %v739 = vrot.slane %v734, 4
      %v743 = vld [vmem:[#allocation2 + $0xa8] sm:$0xf]
      %v744 = vsel %vm363, %v729, %v743
      %745 = vst [vmem:[#allocation2 + $0xa8] sm:$0xf] %v744
      %746 = vst [vmem:[#allocation2 + $0xac] sm:$0xf] %v738
      %v747 = vld [vmem:[#allocation2 + $0xb0] sm:$0x1]
      %v748 = vsel %vm369, %v739, %v747
      %749 = vst [vmem:[#allocation2 + $0xb0] sm:$0x1] %v748
      %v750 = vld [vmem:[%s256 + $0x70] sm:$0xf]
      %v751 = vld [vmem:[%s256 + $0x74] sm:$0xf]
      %v753 = vshrl.u32 %v750, 16
      %v755 = vrot.slane %v753, 7
      %v756 = vshll.u32 %v750, 16
      %v758 = vor.u32 %v755, %v756
      %v759 = vrot.slane %v755, 4
      %v761 = vshrl.u32 %v751, 16
      %v763 = vrot.slane %v761, 7
      %v764 = vshll.u32 %v751, 16
      %v766 = vor.u32 %v763, %v764
      %v767 = vsel %vm340, %v759, %v766
      %v768 = vrot.slane %v763, 4
      %v772 = vld [vmem:[#allocation2 + $0xb4] sm:$0xf]
      %v773 = vsel %vm363, %v758, %v772
      %774 = vst [vmem:[#allocation2 + $0xb4] sm:$0xf] %v773
      %775 = vst [vmem:[#allocation2 + $0xb8] sm:$0xf] %v767
      %v776 = vld [vmem:[#allocation2 + $0xbc] sm:$0x1]
      %v777 = vsel %vm369, %v768, %v776
      %778 = vst [vmem:[#allocation2 + $0xbc] sm:$0x1] %v777
      %v779 = vld [vmem:[%s256 + $0x78] sm:$0xf]
      %v780 = vld [vmem:[%s256 + $0x7c] sm:$0xf]
      %v782 = vshrl.u32 %v779, 16
      %v784 = vrot.slane %v782, 7
      %v785 = vshll.u32 %v779, 16
      %v787 = vor.u32 %v784, %v785
      %v788 = vrot.slane %v784, 4
      %v790 = vshrl.u32 %v780, 16
      %v792 = vrot.slane %v790, 7
      %v793 = vshll.u32 %v780, 16
      %v795 = vor.u32 %v792, %v793
      %v796 = vsel %vm340, %v788, %v795
      %v797 = vrot.slane %v792, 4
      %v801 = vld [vmem:[#allocation2 + $0xc0] sm:$0xf]
      %v802 = vsel %vm363, %v787, %v801
      %803 = vst [vmem:[#allocation2 + $0xc0] sm:$0xf] %v802
      %804 = vst [vmem:[#allocation2 + $0xc4] sm:$0xf] %v796
      %v805 = vld [vmem:[#allocation2 + $0xc8] sm:$0x1]
      %v806 = vsel %vm369, %v797, %v805
      %807 = vst [vmem:[#allocation2 + $0xc8] sm:$0x1] %v806
      %v808 = vld [vmem:[#allocation2] sm:$0xf]
      %v809 = vld [vmem:[#allocation2 + $0x4] sm:$0xf]
      %v810 = vld [vmem:[#allocation2 + $0x8] sm:$0xf]
      %v811 = vld [vmem:[#allocation2 + $0xc] sm:$0xf]
      %v812 = vld [vmem:[#allocation2 + $0x10] sm:$0xf]
      %v813 = vld [vmem:[#allocation2 + $0x14] sm:$0xf]
      %v814 = vld [vmem:[#allocation2 + $0x18] sm:$0xf]
      %v815 = vld [vmem:[#allocation2 + $0x1c] sm:$0xf]
      %v816 = vld [vmem:[#allocation2 + $0x20] sm:$0xf]
      %v817 = vld [vmem:[#allocation2 + $0x24] sm:$0xf]
      %v818 = vld [vmem:[#allocation2 + $0x28] sm:$0xf]
      %v819 = vld [vmem:[#allocation2 + $0x2c] sm:$0xf]
      %v820 = vld [vmem:[#allocation2 + $0x30] sm:$0xf]
      %v821 = vld [vmem:[#allocation2 + $0x34] sm:$0xf]
      %v822 = vld [vmem:[#allocation2 + $0x38] sm:$0xf]
      %v823 = vld [vmem:[#allocation2 + $0x3c] sm:$0xf]
      %v824 = vld [vmem:[#allocation2 + $0x40] sm:$0xf]
      %v825 = vld [vmem:[#allocation2 + $0x44] sm:$0xf]
      %v826 = vld [vmem:[#allocation2 + $0x48] sm:$0xf]
      %v827 = vld [vmem:[#allocation2 + $0x4c] sm:$0xf]
      %v828 = vld [vmem:[#allocation2 + $0x50] sm:$0xf]
      %v829 = vld [vmem:[#allocation2 + $0x54] sm:$0xf]
      %v830 = vld [vmem:[#allocation2 + $0x58] sm:$0xf]
      %v831 = vld [vmem:[#allocation2 + $0x5c] sm:$0xf]
      %v832 = vld [vmem:[#allocation2 + $0x60] sm:$0xf]
      %v833 = vld [vmem:[#allocation2 + $0x64] sm:$0xf]
      %v834 = vld [vmem:[#allocation2 + $0x68] sm:$0xf]
      %v835 = vld [vmem:[#allocation2 + $0x6c] sm:$0xf]
      %v836 = vld [vmem:[#allocation2 + $0x70] sm:$0xf]
      %v837 = vld [vmem:[#allocation2 + $0x74] sm:$0xf]
      %v838 = vld [vmem:[#allocation2 + $0x78] sm:$0xf]
      %v839 = vld [vmem:[#allocation2 + $0x7c] sm:$0xf]
      %v840 = vld [vmem:[#allocation2 + $0x80] sm:$0xf]
      %v841 = vld [vmem:[#allocation2 + $0x84] sm:$0xf]
      %v842 = vld [vmem:[#allocation2 + $0x88] sm:$0xf]
      %v843 = vld [vmem:[#allocation2 + $0x8c] sm:$0xf]
      %v844 = vld [vmem:[#allocation2 + $0x90] sm:$0xf]
      %v845 = vld [vmem:[#allocation2 + $0x94] sm:$0xf]
      %v846 = vld [vmem:[#allocation2 + $0x98] sm:$0xf]
      %v847 = vld [vmem:[#allocation2 + $0x9c] sm:$0xf]
      %v848 = vld [vmem:[#allocation2 + $0xa0] sm:$0xf]
      %v849 = vld [vmem:[#allocation2 + $0xa4] sm:$0xf]
      %v850 = vld [vmem:[#allocation2 + $0xa8] sm:$0xf]
      %v851 = vld [vmem:[#allocation2 + $0xac] sm:$0xf]
      %v852 = vld [vmem:[#allocation2 + $0xb0] sm:$0xf]
      %v853 = vld [vmem:[#allocation2 + $0xb4] sm:$0xf]
      %v854 = vld [vmem:[#allocation2 + $0xb8] sm:$0xf]
      %v855 = vld [vmem:[#allocation2 + $0xbc] sm:$0xf]
      %v856 = vld [vmem:[%s260] sm:$0xf]
      %v857 = vld [vmem:[%s260 + $0x4] sm:$0xf]
      %v858 = vld [vmem:[%s260 + $0x8] sm:$0xf]
      %v859 = vld [vmem:[%s260 + $0xc] sm:$0xf]
      %v860 = vld [vmem:[%s260 + $0x10] sm:$0xf]
      %v861 = vld [vmem:[%s260 + $0x14] sm:$0xf]
      %v862 = vld [vmem:[%s260 + $0x18] sm:$0xf]
      %v863 = vld [vmem:[%s260 + $0x1c] sm:$0xf]
      %v864 = vld [vmem:[%s260 + $0x20] sm:$0xf]
      %v865 = vld [vmem:[%s260 + $0x24] sm:$0xf]
      %v866 = vld [vmem:[%s260 + $0x28] sm:$0xf]
      %v867 = vld [vmem:[%s260 + $0x2c] sm:$0xf]
      %v868 = vld [vmem:[%s260 + $0x30] sm:$0xf]
      %v869 = vld [vmem:[%s260 + $0x34] sm:$0xf]
      %v870 = vld [vmem:[%s260 + $0x38] sm:$0xf]
      %v871 = vld [vmem:[%s260 + $0x3c] sm:$0xf]
      %v872 = vld [vmem:[#allocation2 + $0xc0] sm:$0x1]
      %s873 = scalar_lea.vmem %s260, 64
      %v874 = vld [vmem:[%s873] sm:$0xf]
      %v875 = vld [vmem:[%s873 + $0x4] sm:$0xf]
      %v876 = vld [vmem:[%s873 + $0x8] sm:$0xf]
      %v877 = vld [vmem:[%s873 + $0xc] sm:$0xf]
      %v878 = vld [vmem:[%s873 + $0x10] sm:$0xf]
      %v879 = vld [vmem:[%s873 + $0x14] sm:$0xf]
      %v880 = vld [vmem:[%s873 + $0x18] sm:$0xf]
      %v881 = vld [vmem:[%s873 + $0x1c] sm:$0xf]
      %v882 = vld [vmem:[%s873 + $0x20] sm:$0xf]
      %v883 = vld [vmem:[%s873 + $0x24] sm:$0xf]
      %v884 = vld [vmem:[%s873 + $0x28] sm:$0xf]
      %v885 = vld [vmem:[%s873 + $0x2c] sm:$0xf]
      %v886 = vld [vmem:[%s873 + $0x30] sm:$0xf]
      %v887 = vld [vmem:[%s873 + $0x34] sm:$0xf]
      %v888 = vld [vmem:[%s873 + $0x38] sm:$0xf]
      %v889 = vld [vmem:[%s873 + $0x3c] sm:$0xf]
      %v939 = vunpack.c.l.b16 %v808
      %v940 = vunpack.c.l.b16 %v809
      %v941 = vunpack.c.l.b16 %v810
      %v942 = vunpack.c.l.b16 %v811
      %v943 = vunpack.c.l.b16 %v812
      %v944 = vunpack.c.l.b16 %v813
      %v945 = vunpack.c.l.b16 %v814
      %v946 = vunpack.c.l.b16 %v815
      %v947 = vunpack.c.l.b16 %v816
      %v948 = vunpack.c.l.b16 %v817
      %v949 = vunpack.c.l.b16 %v818
      %v950 = vunpack.c.l.b16 %v819
      %v951 = vunpack.c.l.b16 %v820
      %v952 = vunpack.c.l.b16 %v821
      %v953 = vunpack.c.l.b16 %v822
      %v954 = vunpack.c.l.b16 %v823
      %v955 = vunpack.c.l.b16 %v824
      %v956 = vunpack.c.l.b16 %v825
      %v957 = vunpack.c.l.b16 %v826
      %v958 = vunpack.c.l.b16 %v827
      %v959 = vunpack.c.l.b16 %v828
      %v960 = vunpack.c.l.b16 %v829
      %v961 = vunpack.c.l.b16 %v830
      %v962 = vunpack.c.l.b16 %v831
      %v963 = vunpack.c.l.b16 %v832
      %v964 = vunpack.c.l.b16 %v833
      %v965 = vunpack.c.l.b16 %v834
      %v966 = vunpack.c.l.b16 %v835
      %v967 = vunpack.c.l.b16 %v836
      %v968 = vunpack.c.l.b16 %v837
      %v969 = vunpack.c.l.b16 %v838
      %v970 = vunpack.c.l.b16 %v839
      %v971 = vunpack.c.l.b16 %v840
      %v972 = vunpack.c.l.b16 %v841
      %v973 = vunpack.c.l.b16 %v842
      %v974 = vunpack.c.l.b16 %v843
      %v975 = vunpack.c.l.b16 %v844
      %v976 = vunpack.c.l.b16 %v845
      %v977 = vunpack.c.l.b16 %v846
      %v978 = vunpack.c.l.b16 %v847
      %v979 = vunpack.c.l.b16 %v848
      %v980 = vunpack.c.l.b16 %v849
      %v981 = vunpack.c.l.b16 %v850
      %v982 = vunpack.c.l.b16 %v851
      %v983 = vunpack.c.l.b16 %v852
      %v984 = vunpack.c.l.b16 %v853
      %v985 = vunpack.c.l.b16 %v854
      %v986 = vunpack.c.l.b16 %v855
      %v987 = vunpack.c.l.b16 %v872
      %v988 = vpack.c.b16 %v940, %v939
      %v989 = vpack.c.b16 %v942, %v941
      %v990 = vpack.c.b16 %v944, %v943
      %v991 = vpack.c.b16 %v946, %v945
      %v992 = vpack.c.b16 %v948, %v947
      %v993 = vpack.c.b16 %v950, %v949
      %v994 = vpack.c.b16 %v952, %v951
      %v995 = vpack.c.b16 %v954, %v953
      %v996 = vpack.c.b16 %v956, %v955
      %v997 = vpack.c.b16 %v958, %v957
      %v998 = vpack.c.b16 %v960, %v959
      %v999 = vpack.c.b16 %v962, %v961
      %v1000 = vpack.c.b16 %v964, %v963
      %v1001 = vpack.c.b16 %v966, %v965
      %v1002 = vpack.c.b16 %v968, %v967
      %v1003 = vpack.c.b16 %v970, %v969
      %v1004 = vpack.c.b16 %v972, %v971
      %v1005 = vpack.c.b16 %v974, %v973
      %v1006 = vpack.c.b16 %v976, %v975
      %v1007 = vpack.c.b16 %v978, %v977
      %v1008 = vpack.c.b16 %v980, %v979
      %v1009 = vpack.c.b16 %v982, %v981
      %v1010 = vpack.c.b16 %v984, %v983
      %v1011 = vpack.c.b16 %v986, %v985
      %v1012 = vpack.c.b16 %v987, %v987
      %vm1013 = vsmask.f32 7424
      %v1015 = vshrl.u32 %v988, 16
      %v1017 = vshll.u32 %v988, 16
      %v1019 = vrot.slane %v1017, 1
      %v1020 = vor.u32 %v1015, %v1019
      %v1022 = vshll.u32 %v989, 16
      %v1024 = vrot.slane %v1022, 1
      %v1025 = vsel %vm1013, %v1020, %v1024
      %v1026 = vshrl.u32 %v989, 16
      %v1028 = vor.u32 %v1026, %v1024
      %v1030 = vshll.u32 %v990, 16
      %v1032 = vrot.slane %v1030, 1
      %v1033 = vsel %vm1013, %v1028, %v1032
      %v1034 = vshrl.u32 %v990, 16
      %v1036 = vor.u32 %v1034, %v1032
      %v1038 = vshll.u32 %v991, 16
      %v1040 = vrot.slane %v1038, 1
      %v1041 = vsel %vm1013, %v1036, %v1040
      %v1042 = vshrl.u32 %v991, 16
      %v1044 = vor.u32 %v1042, %v1040
      %v1046 = vshll.u32 %v992, 16
      %v1048 = vrot.slane %v1046, 1
      %v1049 = vsel %vm1013, %v1044, %v1048
      %v1050 = vshrl.u32 %v992, 16
      %v1052 = vor.u32 %v1050, %v1048
      %v1054 = vshll.u32 %v993, 16
      %v1056 = vrot.slane %v1054, 1
      %v1057 = vsel %vm1013, %v1052, %v1056
      %v1058 = vshrl.u32 %v993, 16
      %v1060 = vor.u32 %v1058, %v1056
      %v1062 = vshll.u32 %v994, 16
      %v1064 = vrot.slane %v1062, 1
      %v1065 = vsel %vm1013, %v1060, %v1064
      %v1066 = vshrl.u32 %v994, 16
      %v1068 = vor.u32 %v1066, %v1064
      %v1070 = vshll.u32 %v995, 16
      %v1072 = vrot.slane %v1070, 1
      %v1073 = vsel %vm1013, %v1068, %v1072
      %v1074 = vshrl.u32 %v995, 16
      %v1076 = vor.u32 %v1074, %v1072
      %v1078 = vshll.u32 %v996, 16
      %v1080 = vrot.slane %v1078, 1
      %v1081 = vsel %vm1013, %v1076, %v1080
      %v1082 = vshrl.u32 %v996, 16
      %v1084 = vor.u32 %v1082, %v1080
      %v1086 = vshll.u32 %v997, 16
      %v1088 = vrot.slane %v1086, 1
      %v1089 = vsel %vm1013, %v1084, %v1088
      %v1090 = vshrl.u32 %v997, 16
      %v1092 = vor.u32 %v1090, %v1088
      %v1094 = vshll.u32 %v998, 16
      %v1096 = vrot.slane %v1094, 1
      %v1097 = vsel %vm1013, %v1092, %v1096
      %v1098 = vshrl.u32 %v998, 16
      %v1100 = vor.u32 %v1098, %v1096
      %v1102 = vshll.u32 %v999, 16
      %v1104 = vrot.slane %v1102, 1
      %v1105 = vsel %vm1013, %v1100, %v1104
      %v1106 = vshrl.u32 %v999, 16
      %v1108 = vor.u32 %v1106, %v1104
      %v1110 = vshll.u32 %v1000, 16
      %v1112 = vrot.slane %v1110, 1
      %v1113 = vsel %vm1013, %v1108, %v1112
      %v1114 = vshrl.u32 %v1000, 16
      %v1116 = vor.u32 %v1114, %v1112
      %v1118 = vshll.u32 %v1001, 16
      %v1120 = vrot.slane %v1118, 1
      %v1121 = vsel %vm1013, %v1116, %v1120
      %v1122 = vshrl.u32 %v1001, 16
      %v1124 = vor.u32 %v1122, %v1120
      %v1126 = vshll.u32 %v1002, 16
      %v1128 = vrot.slane %v1126, 1
      %v1129 = vsel %vm1013, %v1124, %v1128
      %v1130 = vshrl.u32 %v1002, 16
      %v1132 = vor.u32 %v1130, %v1128
      %v1134 = vshll.u32 %v1003, 16
      %v1136 = vrot.slane %v1134, 1
      %v1137 = vsel %vm1013, %v1132, %v1136
      %v1138 = vshrl.u32 %v1003, 16
      %v1140 = vor.u32 %v1138, %v1136
      %v1142 = vshll.u32 %v1004, 16
      %v1144 = vrot.slane %v1142, 1
      %v1145 = vsel %vm1013, %v1140, %v1144
      %v1146 = vshrl.u32 %v1004, 16
      %v1148 = vor.u32 %v1146, %v1144
      %v1150 = vshll.u32 %v1005, 16
      %v1152 = vrot.slane %v1150, 1
      %v1153 = vsel %vm1013, %v1148, %v1152
      %v1154 = vshrl.u32 %v1005, 16
      %v1156 = vor.u32 %v1154, %v1152
      %v1158 = vshll.u32 %v1006, 16
      %v1160 = vrot.slane %v1158, 1
      %v1161 = vsel %vm1013, %v1156, %v1160
      %v1162 = vshrl.u32 %v1006, 16
      %v1164 = vor.u32 %v1162, %v1160
      %v1166 = vshll.u32 %v1007, 16
      %v1168 = vrot.slane %v1166, 1
      %v1169 = vsel %vm1013, %v1164, %v1168
      %v1170 = vshrl.u32 %v1007, 16
      %v1172 = vor.u32 %v1170, %v1168
      %v1174 = vshll.u32 %v1008, 16
      %v1176 = vrot.slane %v1174, 1
      %v1177 = vsel %vm1013, %v1172, %v1176
      %v1178 = vshrl.u32 %v1008, 16
      %v1180 = vor.u32 %v1178, %v1176
      %v1182 = vshll.u32 %v1009, 16
      %v1184 = vrot.slane %v1182, 1
      %v1185 = vsel %vm1013, %v1180, %v1184
      %v1186 = vshrl.u32 %v1009, 16
      %v1188 = vor.u32 %v1186, %v1184
      %v1190 = vshll.u32 %v1010, 16
      %v1192 = vrot.slane %v1190, 1
      %v1193 = vsel %vm1013, %v1188, %v1192
      %v1194 = vshrl.u32 %v1010, 16
      %v1196 = vor.u32 %v1194, %v1192
      %v1198 = vshll.u32 %v1011, 16
      %v1200 = vrot.slane %v1198, 1
      %v1201 = vsel %vm1013, %v1196, %v1200
      %v1202 = vshrl.u32 %v1011, 16
      %v1204 = vor.u32 %v1202, %v1200
      %v1206 = vshll.u32 %v1012, 16
      %v1208 = vrot.slane %v1206, 1
      %v1209 = vsel %vm1013, %v1204, %v1208
      %v1250 = vunpack.c.l.b16 %v874
      %v1251 = vunpack.c.l.b16 %v875
      %v1252 = vunpack.c.l.b16 %v876
      %v1253 = vunpack.c.l.b16 %v877
      %v1254 = vunpack.c.l.b16 %v878
      %v1255 = vunpack.c.l.b16 %v879
      %v1256 = vunpack.c.l.b16 %v880
      %v1257 = vunpack.c.l.b16 %v881
      %v1258 = vunpack.c.l.b16 %v882
      %v1259 = vunpack.c.l.b16 %v883
      %v1260 = vunpack.c.l.b16 %v884
      %v1261 = vunpack.c.l.b16 %v885
      %v1262 = vunpack.c.l.b16 %v886
      %v1263 = vunpack.c.l.b16 %v887
      %v1264 = vunpack.c.l.b16 %v888
      %v1265 = vunpack.c.l.b16 %v889
      %v1266 = vpack.c.b16 %v1251, %v1250
      %v1267 = vpack.c.b16 %v1253, %v1252
      %v1268 = vpack.c.b16 %v1255, %v1254
      %v1269 = vpack.c.b16 %v1257, %v1256
      %v1270 = vpack.c.b16 %v1259, %v1258
      %v1271 = vpack.c.b16 %v1261, %v1260
      %v1272 = vpack.c.b16 %v1263, %v1262
      %v1273 = vpack.c.b16 %v1265, %v1264
      %1282 = vmatpush.bf16.msra.mxu0 %v1273
      %1283 = vmatpush.bf16.msra.mxu0 %v1272
      %1284 = vmatpush.bf16.msra.mxu0 %v1271
      %1285 = vmatpush.bf16.msra.mxu0 %v1270
      %1286 = vmatpush.bf16.msra.mxu0 %v1269
      %1287 = vmatpush.bf16.msra.mxu0 %v1268
      %1288 = vmatpush.bf16.msra.mxu0 %v1267
      %1289 = vmatpush.bf16.msra.mxu0 %v1266
      %1290 = vmatmul.bf16.gmra.mxu0 %v1025
      %v1291 = vpop.f32.mrf.mxu0
      %v1292 = vadd.f32 0.0, %v1291
      %v1293 = vpop.f32.mrf.mxu0
      %v1294 = vadd.f32 0.0, %v1293
      %1295 = vmatmul.bf16.gmra.mxu0 %v1033
      %v1296 = vpop.f32.mrf.mxu0
      %v1297 = vpop.f32.mrf.mxu0
      %v1298 = vadd.f32 0.0, %v1297
      %1299 = vmatmul.bf16.gmra.mxu0 %v1041
      %v1300 = vpop.f32.mrf.mxu0
      %v1301 = vadd.f32 0.0, %v1300
      %v1302 = vpop.f32.mrf.mxu0
      %1303 = vmatmul.bf16.gmra.mxu0 %v1049
      %v1304 = vpop.f32.mrf.mxu0
      %v1305 = vadd.f32 0.0, %v1304
      %v1306 = vpop.f32.mrf.mxu0
      %v1307 = vadd.f32 0.0, %v1306
      %1308 = vmatmul.bf16.gmra.mxu0 %v1057
      %v1309 = vpop.f32.mrf.mxu0
      %v1310 = vpop.f32.mrf.mxu0
      %v1311 = vadd.f32 0.0, %v1310
      %1312 = vmatmul.bf16.gmra.mxu0 %v1065
      %v1313 = vpop.f32.mrf.mxu0
      %v1314 = vadd.f32 0.0, %v1313
      %v1315 = vpop.f32.mrf.mxu0
      %1316 = vmatmul.bf16.gmra.mxu0 %v1073
      %v1317 = vpop.f32.mrf.mxu0
      %v1318 = vadd.f32 0.0, %v1317
      %v1319 = vpop.f32.mrf.mxu0
      %v1320 = vadd.f32 0.0, %v1319
      %1321 = vmatmul.bf16.gmra.mxu0 %v1081
      %v1322 = vpop.f32.mrf.mxu0
      %v1323 = vpop.f32.mrf.mxu0
      %v1324 = vadd.f32 0.0, %v1323
      %1325 = vmatmul.bf16.gmra.mxu0 %v1089
      %v1326 = vpop.f32.mrf.mxu0
      %v1327 = vadd.f32 0.0, %v1326
      %v1328 = vpop.f32.mrf.mxu0
      %1329 = vmatmul.bf16.gmra.mxu0 %v1097
      %v1330 = vpop.f32.mrf.mxu0
      %v1331 = vadd.f32 0.0, %v1330
      %v1332 = vpop.f32.mrf.mxu0
      %v1333 = vadd.f32 0.0, %v1332
      %1334 = vmatmul.bf16.gmra.mxu0 %v1105
      %v1335 = vpop.f32.mrf.mxu0
      %v1336 = vpop.f32.mrf.mxu0
      %v1337 = vadd.f32 0.0, %v1336
      %1338 = vmatmul.bf16.gmra.mxu0 %v1113
      %v1339 = vpop.f32.mrf.mxu0
      %v1340 = vadd.f32 0.0, %v1339
      %v1341 = vpop.f32.mrf.mxu0
      %1342 = vmatmul.bf16.gmra.mxu0 %v1121
      %v1343 = vpop.f32.mrf.mxu0
      %v1344 = vadd.f32 0.0, %v1343
      %v1345 = vpop.f32.mrf.mxu0
      %v1346 = vadd.f32 0.0, %v1345
      %1347 = vmatmul.bf16.gmra.mxu0 %v1129
      %v1348 = vpop.f32.mrf.mxu0
      %v1349 = vpop.f32.mrf.mxu0
      %v1350 = vadd.f32 0.0, %v1349
      %1351 = vmatmul.bf16.gmra.mxu0 %v1137
      %v1352 = vpop.f32.mrf.mxu0
      %v1353 = vadd.f32 0.0, %v1352
      %v1354 = vpop.f32.mrf.mxu0
      %1355 = vmatmul.bf16.gmra.mxu0 %v1145
      %v1356 = vpop.f32.mrf.mxu0
      %v1357 = vadd.f32 0.0, %v1356
      %v1358 = vpop.f32.mrf.mxu0
      %v1359 = vadd.f32 0.0, %v1358
      %1360 = vmatmul.bf16.gmra.mxu0 %v1153
      %v1361 = vpop.f32.mrf.mxu0
      %v1362 = vpop.f32.mrf.mxu0
      %v1363 = vadd.f32 0.0, %v1362
      %1364 = vmatmul.bf16.gmra.mxu0 %v1161
      %v1365 = vpop.f32.mrf.mxu0
      %v1366 = vadd.f32 0.0, %v1365
      %v1367 = vpop.f32.mrf.mxu0
      %1368 = vmatmul.bf16.gmra.mxu0 %v1169
      %v1369 = vpop.f32.mrf.mxu0
      %v1370 = vadd.f32 0.0, %v1369
      %v1371 = vpop.f32.mrf.mxu0
      %v1372 = vadd.f32 0.0, %v1371
      %1373 = vmatmul.bf16.gmra.mxu0 %v1177
      %v1374 = vpop.f32.mrf.mxu0
      %v1375 = vpop.f32.mrf.mxu0
      %v1376 = vadd.f32 0.0, %v1375
      %1377 = vmatmul.bf16.gmra.mxu0 %v1185
      %v1378 = vpop.f32.mrf.mxu0
      %v1379 = vadd.f32 0.0, %v1378
      %v1380 = vpop.f32.mrf.mxu0
      %1381 = vmatmul.bf16.gmra.mxu0 %v1193
      %v1382 = vpop.f32.mrf.mxu0
      %v1383 = vadd.f32 0.0, %v1382
      %v1384 = vpop.f32.mrf.mxu0
      %v1385 = vadd.f32 0.0, %v1384
      %1386 = vmatmul.bf16.gmra.mxu0 %v1201
      %v1387 = vpop.f32.mrf.mxu0
      %v1388 = vpop.f32.mrf.mxu0
      %v1389 = vadd.f32 0.0, %v1388
      %1390 = vmatmul.bf16.gmra.mxu0 %v1209
      %v1391 = vpop.f32.mrf.mxu0
      %v1392 = vadd.f32 0.0, %v1391
      %v1393 = vpop.f32.mrf.mxu0
      %1394 = vdwg.mxu0
      %v1435 = vunpack.c.l.b16 %v856
      %v1436 = vunpack.c.l.b16 %v857
      %v1437 = vunpack.c.l.b16 %v858
      %v1438 = vunpack.c.l.b16 %v859
      %v1439 = vunpack.c.l.b16 %v860
      %v1440 = vunpack.c.l.b16 %v861
      %v1441 = vunpack.c.l.b16 %v862
      %v1442 = vunpack.c.l.b16 %v863
      %v1443 = vunpack.c.l.b16 %v864
      %v1444 = vunpack.c.l.b16 %v865
      %v1445 = vunpack.c.l.b16 %v866
      %v1446 = vunpack.c.l.b16 %v867
      %v1447 = vunpack.c.l.b16 %v868
      %v1448 = vunpack.c.l.b16 %v869
      %v1449 = vunpack.c.l.b16 %v870
      %v1450 = vunpack.c.l.b16 %v871
      %v1451 = vpack.c.b16 %v1436, %v1435
      %v1452 = vpack.c.b16 %v1438, %v1437
      %v1453 = vpack.c.b16 %v1440, %v1439
      %v1454 = vpack.c.b16 %v1442, %v1441
      %v1455 = vpack.c.b16 %v1444, %v1443
      %v1456 = vpack.c.b16 %v1446, %v1445
      %v1457 = vpack.c.b16 %v1448, %v1447
      %v1458 = vpack.c.b16 %v1450, %v1449
      %1467 = vmatpush.bf16.msra.mxu0 %v1458
      %1468 = vmatpush.bf16.msra.mxu0 %v1457
      %1469 = vmatpush.bf16.msra.mxu0 %v1456
      %1470 = vmatpush.bf16.msra.mxu0 %v1455
      %1471 = vmatpush.bf16.msra.mxu0 %v1454
      %1472 = vmatpush.bf16.msra.mxu0 %v1453
      %1473 = vmatpush.bf16.msra.mxu0 %v1452
      %1474 = vmatpush.bf16.msra.mxu0 %v1451
      %1475 = vmatmul.bf16.gmra.mxu0 %v988
      %v1476 = vpop.f32.mrf.mxu0
      %v1477 = vadd.f32 %v1292, %v1476
      %v1478 = vpop.f32.mrf.mxu0
      %v1479 = vadd.f32 %v1294, %v1478
      %1480 = vmatmul.bf16.gmra.mxu0 %v989
      %v1481 = vpop.f32.mrf.mxu0
      %v1482 = vpop.f32.mrf.mxu0
      %v1483 = vadd.f32 %v1298, %v1482
      %1484 = vmatmul.bf16.gmra.mxu0 %v990
      %v1485 = vpop.f32.mrf.mxu0
      %v1486 = vadd.f32 %v1301, %v1485
      %v1487 = vpop.f32.mrf.mxu0
      %1488 = vmatmul.bf16.gmra.mxu0 %v991
      %v1489 = vpop.f32.mrf.mxu0
      %v1490 = vadd.f32 %v1305, %v1489
      %v1491 = vpop.f32.mrf.mxu0
      %v1492 = vadd.f32 %v1307, %v1491
      %1493 = vmatmul.bf16.gmra.mxu0 %v992
      %v1494 = vpop.f32.mrf.mxu0
      %v1495 = vpop.f32.mrf.mxu0
      %v1496 = vadd.f32 %v1311, %v1495
      %1497 = vmatmul.bf16.gmra.mxu0 %v993
      %v1498 = vpop.f32.mrf.mxu0
      %v1499 = vadd.f32 %v1314, %v1498
      %v1500 = vpop.f32.mrf.mxu0
      %1501 = vmatmul.bf16.gmra.mxu0 %v994
      %v1502 = vpop.f32.mrf.mxu0
      %v1503 = vadd.f32 %v1318, %v1502
      %v1504 = vpop.f32.mrf.mxu0
      %v1505 = vadd.f32 %v1320, %v1504
      %1506 = vmatmul.bf16.gmra.mxu0 %v995
      %v1507 = vpop.f32.mrf.mxu0
      %v1508 = vpop.f32.mrf.mxu0
      %v1509 = vadd.f32 %v1324, %v1508
      %1510 = vmatmul.bf16.gmra.mxu0 %v996
      %v1511 = vpop.f32.mrf.mxu0
      %v1512 = vadd.f32 %v1327, %v1511
      %v1513 = vpop.f32.mrf.mxu0
      %1514 = vmatmul.bf16.gmra.mxu0 %v997
      %v1515 = vpop.f32.mrf.mxu0
      %v1516 = vadd.f32 %v1331, %v1515
      %v1517 = vpop.f32.mrf.mxu0
      %v1518 = vadd.f32 %v1333, %v1517
      %1519 = vmatmul.bf16.gmra.mxu0 %v998
      %v1520 = vpop.f32.mrf.mxu0
      %v1521 = vpop.f32.mrf.mxu0
      %v1522 = vadd.f32 %v1337, %v1521
      %1523 = vmatmul.bf16.gmra.mxu0 %v999
      %v1524 = vpop.f32.mrf.mxu0
      %v1525 = vadd.f32 %v1340, %v1524
      %v1526 = vpop.f32.mrf.mxu0
      %1527 = vmatmul.bf16.gmra.mxu0 %v1000
      %v1528 = vpop.f32.mrf.mxu0
      %v1529 = vadd.f32 %v1344, %v1528
      %v1530 = vpop.f32.mrf.mxu0
      %v1531 = vadd.f32 %v1346, %v1530
      %1532 = vmatmul.bf16.gmra.mxu0 %v1001
      %v1533 = vpop.f32.mrf.mxu0
      %v1534 = vpop.f32.mrf.mxu0
      %v1535 = vadd.f32 %v1350, %v1534
      %1536 = vmatmul.bf16.gmra.mxu0 %v1002
      %v1537 = vpop.f32.mrf.mxu0
      %v1538 = vadd.f32 %v1353, %v1537
      %v1539 = vpop.f32.mrf.mxu0
      %1540 = vmatmul.bf16.gmra.mxu0 %v1003
      %v1541 = vpop.f32.mrf.mxu0
      %v1542 = vadd.f32 %v1357, %v1541
      %v1543 = vpop.f32.mrf.mxu0
      %v1544 = vadd.f32 %v1359, %v1543
      %1545 = vmatmul.bf16.gmra.mxu0 %v1004
      %v1546 = vpop.f32.mrf.mxu0
      %v1547 = vpop.f32.mrf.mxu0
      %v1548 = vadd.f32 %v1363, %v1547
      %1549 = vmatmul.bf16.gmra.mxu0 %v1005
      %v1550 = vpop.f32.mrf.mxu0
      %v1551 = vadd.f32 %v1366, %v1550
      %v1552 = vpop.f32.mrf.mxu0
      %1553 = vmatmul.bf16.gmra.mxu0 %v1006
      %v1554 = vpop.f32.mrf.mxu0
      %v1555 = vadd.f32 %v1370, %v1554
      %v1556 = vpop.f32.mrf.mxu0
      %v1557 = vadd.f32 %v1372, %v1556
      %1558 = vmatmul.bf16.gmra.mxu0 %v1007
      %v1559 = vpop.f32.mrf.mxu0
      %v1560 = vpop.f32.mrf.mxu0
      %v1561 = vadd.f32 %v1376, %v1560
      %1562 = vmatmul.bf16.gmra.mxu0 %v1008
      %v1563 = vpop.f32.mrf.mxu0
      %v1564 = vadd.f32 %v1379, %v1563
      %v1565 = vpop.f32.mrf.mxu0
      %1566 = vmatmul.bf16.gmra.mxu0 %v1009
      %v1567 = vpop.f32.mrf.mxu0
      %v1568 = vadd.f32 %v1383, %v1567
      %v1569 = vpop.f32.mrf.mxu0
      %v1570 = vadd.f32 %v1385, %v1569
      %1571 = vmatmul.bf16.gmra.mxu0 %v1010
      %v1572 = vpop.f32.mrf.mxu0
      %v1573 = vpop.f32.mrf.mxu0
      %v1574 = vadd.f32 %v1389, %v1573
      %1575 = vmatmul.bf16.gmra.mxu0 %v1011
      %v1576 = vpop.f32.mrf.mxu0
      %v1577 = vadd.f32 %v1392, %v1576
      %v1578 = vpop.f32.mrf.mxu0
      %1579 = vdwg.mxu0
      %v1580 = vld [vmem:[#allocation2] sm:$0xe]
      %s1581 = scalar_lea.vmem %s260, 128
      %v1582 = vld [vmem:[%s1581] sm:$0xf]
      %v1583 = vld [vmem:[%s1581 + $0x4] sm:$0xf]
      %v1584 = vld [vmem:[%s1581 + $0x8] sm:$0xf]
      %v1585 = vld [vmem:[%s1581 + $0xc] sm:$0xf]
      %v1586 = vld [vmem:[%s1581 + $0x10] sm:$0xf]
      %v1587 = vld [vmem:[%s1581 + $0x14] sm:$0xf]
      %v1588 = vld [vmem:[%s1581 + $0x18] sm:$0xf]
      %v1589 = vld [vmem:[%s1581 + $0x1c] sm:$0xf]
      %v1590 = vld [vmem:[%s1581 + $0x20] sm:$0xf]
      %v1591 = vld [vmem:[%s1581 + $0x24] sm:$0xf]
      %v1592 = vld [vmem:[%s1581 + $0x28] sm:$0xf]
      %v1593 = vld [vmem:[%s1581 + $0x2c] sm:$0xf]
      %v1594 = vld [vmem:[%s1581 + $0x30] sm:$0xf]
      %v1595 = vld [vmem:[%s1581 + $0x34] sm:$0xf]
      %v1596 = vld [vmem:[%s1581 + $0x38] sm:$0xf]
      %v1597 = vld [vmem:[%s1581 + $0x3c] sm:$0xf]
      %v1599 = vunpack.c.l.b16 %v1580
      %v1600 = vpack.c.b16 %v940, %v1599
      %vm1601 = vcmask 1046528
      %v1602 = vrot.slane %v1600, 1
      %v1603 = vrot.slane %v989, 1
      %v1604 = vsel %vm1601, %v1602, %v1603
      %v1605 = vrot.slane %v990, 1
      %v1606 = vsel %vm1601, %v1603, %v1605
      %v1607 = vrot.slane %v991, 1
      %v1608 = vsel %vm1601, %v1605, %v1607
      %v1609 = vrot.slane %v992, 1
      %v1610 = vsel %vm1601, %v1607, %v1609
      %v1611 = vrot.slane %v993, 1
      %v1612 = vsel %vm1601, %v1609, %v1611
      %v1613 = vrot.slane %v994, 1
      %v1614 = vsel %vm1601, %v1611, %v1613
      %v1615 = vrot.slane %v995, 1
      %v1616 = vsel %vm1601, %v1613, %v1615
      %v1617 = vrot.slane %v996, 1
      %v1618 = vsel %vm1601, %v1615, %v1617
      %v1619 = vrot.slane %v997, 1
      %v1620 = vsel %vm1601, %v1617, %v1619
      %v1621 = vrot.slane %v998, 1
      %v1622 = vsel %vm1601, %v1619, %v1621
      %v1623 = vrot.slane %v999, 1
      %v1624 = vsel %vm1601, %v1621, %v1623
      %v1625 = vrot.slane %v1000, 1
      %v1626 = vsel %vm1601, %v1623, %v1625
      %v1627 = vrot.slane %v1001, 1
      %v1628 = vsel %vm1601, %v1625, %v1627
      %v1629 = vrot.slane %v1002, 1
      %v1630 = vsel %vm1601, %v1627, %v1629
      %v1631 = vrot.slane %v1003, 1
      %v1632 = vsel %vm1601, %v1629, %v1631
      %v1633 = vrot.slane %v1004, 1
      %v1634 = vsel %vm1601, %v1631, %v1633
      %v1635 = vrot.slane %v1005, 1
      %v1636 = vsel %vm1601, %v1633, %v1635
      %v1637 = vrot.slane %v1006, 1
      %v1638 = vsel %vm1601, %v1635, %v1637
      %v1639 = vrot.slane %v1007, 1
      %v1640 = vsel %vm1601, %v1637, %v1639
      %v1641 = vrot.slane %v1008, 1
      %v1642 = vsel %vm1601, %v1639, %v1641
      %v1643 = vrot.slane %v1009, 1
      %v1644 = vsel %vm1601, %v1641, %v1643
      %v1645 = vrot.slane %v1010, 1
      %v1646 = vsel %vm1601, %v1643, %v1645
      %v1647 = vrot.slane %v1011, 1
      %v1648 = vsel %vm1601, %v1645, %v1647
      %v1649 = vrot.slane %v1012, 1
      %v1650 = vsel %vm1601, %v1647, %v1649
      %v1691 = vunpack.c.l.b16 %v1582
      %v1692 = vunpack.c.l.b16 %v1583
      %v1693 = vunpack.c.l.b16 %v1584
      %v1694 = vunpack.c.l.b16 %v1585
      %v1695 = vunpack.c.l.b16 %v1586
      %v1696 = vunpack.c.l.b16 %v1587
      %v1697 = vunpack.c.l.b16 %v1588
      %v1698 = vunpack.c.l.b16 %v1589
      %v1699 = vunpack.c.l.b16 %v1590
      %v1700 = vunpack.c.l.b16 %v1591
      %v1701 = vunpack.c.l.b16 %v1592
      %v1702 = vunpack.c.l.b16 %v1593
      %v1703 = vunpack.c.l.b16 %v1594
      %v1704 = vunpack.c.l.b16 %v1595
      %v1705 = vunpack.c.l.b16 %v1596
      %v1706 = vunpack.c.l.b16 %v1597
      %v1707 = vpack.c.b16 %v1692, %v1691
      %v1708 = vpack.c.b16 %v1694, %v1693
      %v1709 = vpack.c.b16 %v1696, %v1695
      %v1710 = vpack.c.b16 %v1698, %v1697
      %v1711 = vpack.c.b16 %v1700, %v1699
      %v1712 = vpack.c.b16 %v1702, %v1701
      %v1713 = vpack.c.b16 %v1704, %v1703
      %v1714 = vpack.c.b16 %v1706, %v1705
      %1723 = vmatpush.bf16.msra.mxu0 %v1714
      %1724 = vmatpush.bf16.msra.mxu0 %v1713
      %1725 = vmatpush.bf16.msra.mxu0 %v1712
      %1726 = vmatpush.bf16.msra.mxu0 %v1711
      %1727 = vmatpush.bf16.msra.mxu0 %v1710
      %1728 = vmatpush.bf16.msra.mxu0 %v1709
      %1729 = vmatpush.bf16.msra.mxu0 %v1708
      %1730 = vmatpush.bf16.msra.mxu0 %v1707
      %1731 = vmatmul.bf16.gmra.mxu0 %v1604
      %v1732 = vpop.f32.mrf.mxu0
      %v1733 = vadd.f32 0.0, %v1732
      %v1734 = vpop.f32.mrf.mxu0
      %v1735 = vadd.f32 0.0, %v1734
      %1736 = vmatmul.bf16.gmra.mxu0 %v1606
      %v1737 = vpop.f32.mrf.mxu0
      %v1738 = vpop.f32.mrf.mxu0
      %v1739 = vadd.f32 0.0, %v1738
      %1740 = vmatmul.bf16.gmra.mxu0 %v1608
      %v1741 = vpop.f32.mrf.mxu0
      %v1742 = vadd.f32 0.0, %v1741
      %v1743 = vpop.f32.mrf.mxu0
      %1744 = vmatmul.bf16.gmra.mxu0 %v1610
      %v1745 = vpop.f32.mrf.mxu0
      %v1746 = vadd.f32 0.0, %v1745
      %v1747 = vpop.f32.mrf.mxu0
      %v1748 = vadd.f32 0.0, %v1747
      %1749 = vmatmul.bf16.gmra.mxu0 %v1612
      %v1750 = vpop.f32.mrf.mxu0
      %v1751 = vpop.f32.mrf.mxu0
      %v1752 = vadd.f32 0.0, %v1751
      %1753 = vmatmul.bf16.gmra.mxu0 %v1614
      %v1754 = vpop.f32.mrf.mxu0
      %v1755 = vadd.f32 0.0, %v1754
      %v1756 = vpop.f32.mrf.mxu0
      %1757 = vmatmul.bf16.gmra.mxu0 %v1616
      %v1758 = vpop.f32.mrf.mxu0
      %v1759 = vadd.f32 0.0, %v1758
      %v1760 = vpop.f32.mrf.mxu0
      %v1761 = vadd.f32 0.0, %v1760
      %1762 = vmatmul.bf16.gmra.mxu0 %v1618
      %v1763 = vpop.f32.mrf.mxu0
      %v1764 = vpop.f32.mrf.mxu0
      %v1765 = vadd.f32 0.0, %v1764
      %1766 = vmatmul.bf16.gmra.mxu0 %v1620
      %v1767 = vpop.f32.mrf.mxu0
      %v1768 = vadd.f32 0.0, %v1767
      %v1769 = vpop.f32.mrf.mxu0
      %1770 = vmatmul.bf16.gmra.mxu0 %v1622
      %v1771 = vpop.f32.mrf.mxu0
      %v1772 = vadd.f32 0.0, %v1771
      %v1773 = vpop.f32.mrf.mxu0
      %v1774 = vadd.f32 0.0, %v1773
      %1775 = vmatmul.bf16.gmra.mxu0 %v1624
      %v1776 = vpop.f32.mrf.mxu0
      %v1777 = vpop.f32.mrf.mxu0
      %v1778 = vadd.f32 0.0, %v1777
      %1779 = vmatmul.bf16.gmra.mxu0 %v1626
      %v1780 = vpop.f32.mrf.mxu0
      %v1781 = vadd.f32 0.0, %v1780
      %v1782 = vpop.f32.mrf.mxu0
      %1783 = vmatmul.bf16.gmra.mxu0 %v1628
      %v1784 = vpop.f32.mrf.mxu0
      %v1785 = vadd.f32 0.0, %v1784
      %v1786 = vpop.f32.mrf.mxu0
      %v1787 = vadd.f32 0.0, %v1786
      %1788 = vmatmul.bf16.gmra.mxu0 %v1630
      %v1789 = vpop.f32.mrf.mxu0
      %v1790 = vpop.f32.mrf.mxu0
      %v1791 = vadd.f32 0.0, %v1790
      %1792 = vmatmul.bf16.gmra.mxu0 %v1632
      %v1793 = vpop.f32.mrf.mxu0
      %v1794 = vadd.f32 0.0, %v1793
      %v1795 = vpop.f32.mrf.mxu0
      %1796 = vmatmul.bf16.gmra.mxu0 %v1634
      %v1797 = vpop.f32.mrf.mxu0
      %v1798 = vadd.f32 0.0, %v1797
      %v1799 = vpop.f32.mrf.mxu0
      %v1800 = vadd.f32 0.0, %v1799
      %1801 = vmatmul.bf16.gmra.mxu0 %v1636
      %v1802 = vpop.f32.mrf.mxu0
      %v1803 = vpop.f32.mrf.mxu0
      %v1804 = vadd.f32 0.0, %v1803
      %1805 = vmatmul.bf16.gmra.mxu0 %v1638
      %v1806 = vpop.f32.mrf.mxu0
      %v1807 = vadd.f32 0.0, %v1806
      %v1808 = vpop.f32.mrf.mxu0
      %1809 = vmatmul.bf16.gmra.mxu0 %v1640
      %v1810 = vpop.f32.mrf.mxu0
      %v1811 = vadd.f32 0.0, %v1810
      %v1812 = vpop.f32.mrf.mxu0
      %v1813 = vadd.f32 0.0, %v1812
      %1814 = vmatmul.bf16.gmra.mxu0 %v1642
      %v1815 = vpop.f32.mrf.mxu0
      %v1816 = vpop.f32.mrf.mxu0
      %v1817 = vadd.f32 0.0, %v1816
      %1818 = vmatmul.bf16.gmra.mxu0 %v1644
      %v1819 = vpop.f32.mrf.mxu0
      %v1820 = vadd.f32 0.0, %v1819
      %v1821 = vpop.f32.mrf.mxu0
      %1822 = vmatmul.bf16.gmra.mxu0 %v1646
      %v1823 = vpop.f32.mrf.mxu0
      %v1824 = vadd.f32 0.0, %v1823
      %v1825 = vpop.f32.mrf.mxu0
      %v1826 = vadd.f32 0.0, %v1825
      %1827 = vmatmul.bf16.gmra.mxu0 %v1648
      %v1828 = vpop.f32.mrf.mxu0
      %v1829 = vpop.f32.mrf.mxu0
      %v1830 = vadd.f32 0.0, %v1829
      %1831 = vmatmul.bf16.gmra.mxu0 %v1650
      %v1832 = vpop.f32.mrf.mxu0
      %v1833 = vadd.f32 0.0, %v1832
      %v1834 = vpop.f32.mrf.mxu0
      %1835 = vdwg.mxu0
      %v1836 = vadd.f32 %v1477, %v1733
      %v1837 = vadd.f32 %v1479, %v1735
      %v1838 = vadd.f32 %v1483, %v1739
      %v1839 = vadd.f32 %v1486, %v1742
      %v1840 = vadd.f32 %v1490, %v1746
      %v1841 = vadd.f32 %v1492, %v1748
      %v1842 = vadd.f32 %v1496, %v1752
      %v1843 = vadd.f32 %v1499, %v1755
      %v1844 = vadd.f32 %v1503, %v1759
      %v1845 = vadd.f32 %v1505, %v1761
      %v1846 = vadd.f32 %v1509, %v1765
      %v1847 = vadd.f32 %v1512, %v1768
      %v1848 = vadd.f32 %v1516, %v1772
      %v1849 = vadd.f32 %v1518, %v1774
      %v1850 = vadd.f32 %v1522, %v1778
      %v1851 = vadd.f32 %v1525, %v1781
      %v1852 = vadd.f32 %v1529, %v1785
      %v1853 = vadd.f32 %v1531, %v1787
      %v1854 = vadd.f32 %v1535, %v1791
      %v1855 = vadd.f32 %v1538, %v1794
      %v1856 = vadd.f32 %v1542, %v1798
      %v1857 = vadd.f32 %v1544, %v1800
      %v1858 = vadd.f32 %v1548, %v1804
      %v1859 = vadd.f32 %v1551, %v1807
      %v1860 = vadd.f32 %v1555, %v1811
      %v1861 = vadd.f32 %v1557, %v1813
      %v1862 = vadd.f32 %v1561, %v1817
      %v1863 = vadd.f32 %v1564, %v1820
      %v1864 = vadd.f32 %v1568, %v1824
      %v1865 = vadd.f32 %v1570, %v1826
      %v1866 = vadd.f32 %v1574, %v1830
      %v1867 = vadd.f32 %v1577, %v1833
      %v1868 = vld [vmem:[#allocation2 + $0xc] sm:$0xf]
      %v1869 = vld [vmem:[#allocation2 + $0x10] sm:$0xf]
      %v1870 = vld [vmem:[#allocation2 + $0x14] sm:$0xf]
      %v1871 = vld [vmem:[#allocation2 + $0x18] sm:$0xf]
      %v1872 = vld [vmem:[#allocation2 + $0x1c] sm:$0xf]
      %v1873 = vld [vmem:[#allocation2 + $0x20] sm:$0xf]
      %v1874 = vld [vmem:[#allocation2 + $0x24] sm:$0xf]
      %v1875 = vld [vmem:[#allocation2 + $0x28] sm:$0xf]
      %v1876 = vld [vmem:[#allocation2 + $0x2c] sm:$0xf]
      %v1877 = vld [vmem:[#allocation2 + $0x30] sm:$0xf]
      %v1878 = vld [vmem:[#allocation2 + $0x34] sm:$0xf]
      %v1879 = vld [vmem:[#allocation2 + $0x38] sm:$0xf]
      %v1880 = vld [vmem:[#allocation2 + $0x3c] sm:$0xf]
      %v1881 = vld [vmem:[#allocation2 + $0x40] sm:$0xf]
      %v1882 = vld [vmem:[#allocation2 + $0x44] sm:$0xf]
      %v1883 = vld [vmem:[#allocation2 + $0x48] sm:$0xf]
      %v1884 = vld [vmem:[#allocation2 + $0x4c] sm:$0xf]
      %v1885 = vld [vmem:[#allocation2 + $0x50] sm:$0xf]
      %v1886 = vld [vmem:[#allocation2 + $0x54] sm:$0xf]
      %v1887 = vld [vmem:[#allocation2 + $0x58] sm:$0xf]
      %v1888 = vld [vmem:[#allocation2 + $0x5c] sm:$0xf]
      %v1889 = vld [vmem:[#allocation2 + $0x60] sm:$0xf]
      %v1890 = vld [vmem:[#allocation2 + $0x64] sm:$0xf]
      %v1891 = vld [vmem:[#allocation2 + $0x68] sm:$0xf]
      %v1892 = vld [vmem:[#allocation2 + $0x6c] sm:$0xf]
      %v1893 = vld [vmem:[#allocation2 + $0x70] sm:$0xf]
      %v1894 = vld [vmem:[#allocation2 + $0x74] sm:$0xf]
      %v1895 = vld [vmem:[#allocation2 + $0x78] sm:$0xf]
      %v1896 = vld [vmem:[#allocation2 + $0x7c] sm:$0xf]
      %v1897 = vld [vmem:[#allocation2 + $0x80] sm:$0xf]
      %v1898 = vld [vmem:[#allocation2 + $0x84] sm:$0xf]
      %v1899 = vld [vmem:[#allocation2 + $0x88] sm:$0xf]
      %v1900 = vld [vmem:[#allocation2 + $0x8c] sm:$0xf]
      %v1901 = vld [vmem:[#allocation2 + $0x90] sm:$0xf]
      %v1902 = vld [vmem:[#allocation2 + $0x94] sm:$0xf]
      %v1903 = vld [vmem:[#allocation2 + $0x98] sm:$0xf]
      %v1904 = vld [vmem:[#allocation2 + $0x9c] sm:$0xf]
      %v1905 = vld [vmem:[#allocation2 + $0xa0] sm:$0xf]
      %v1906 = vld [vmem:[#allocation2 + $0xa4] sm:$0xf]
      %v1907 = vld [vmem:[#allocation2 + $0xa8] sm:$0xf]
      %v1908 = vld [vmem:[#allocation2 + $0xac] sm:$0xf]
      %v1909 = vld [vmem:[#allocation2 + $0xb0] sm:$0xf]
      %v1910 = vld [vmem:[#allocation2 + $0xb4] sm:$0xf]
      %v1911 = vld [vmem:[#allocation2 + $0xb8] sm:$0xf]
      %v1912 = vld [vmem:[#allocation2 + $0xbc] sm:$0xf]
      %v1913 = vld [vmem:[#allocation2 + $0xc0] sm:$0xf]
      %v1914 = vld [vmem:[#allocation2 + $0xc4] sm:$0xf]
      %v1915 = vld [vmem:[#allocation2 + $0xc8] sm:$0xf]
      %s1916 = scalar_lea.vmem %s260, 192
      %v1917 = vld [vmem:[%s1916] sm:$0xf]
      %v1918 = vld [vmem:[%s1916 + $0x4] sm:$0xf]
      %v1919 = vld [vmem:[%s1916 + $0x8] sm:$0xf]
      %v1920 = vld [vmem:[%s1916 + $0xc] sm:$0xf]
      %v1921 = vld [vmem:[%s1916 + $0x10] sm:$0xf]
      %v1922 = vld [vmem:[%s1916 + $0x14] sm:$0xf]
      %v1923 = vld [vmem:[%s1916 + $0x18] sm:$0xf]
      %v1924 = vld [vmem:[%s1916 + $0x1c] sm:$0xf]
      %v1925 = vld [vmem:[%s1916 + $0x20] sm:$0xf]
      %v1926 = vld [vmem:[%s1916 + $0x24] sm:$0xf]
      %v1927 = vld [vmem:[%s1916 + $0x28] sm:$0xf]
      %v1928 = vld [vmem:[%s1916 + $0x2c] sm:$0xf]
      %v1929 = vld [vmem:[%s1916 + $0x30] sm:$0xf]
      %v1930 = vld [vmem:[%s1916 + $0x34] sm:$0xf]
      %v1931 = vld [vmem:[%s1916 + $0x38] sm:$0xf]
      %v1932 = vld [vmem:[%s1916 + $0x3c] sm:$0xf]
      %v1981 = vunpack.c.l.b16 %v1868
      %v1982 = vunpack.c.l.b16 %v1869
      %v1983 = vunpack.c.l.b16 %v1870
      %v1984 = vunpack.c.l.b16 %v1871
      %v1985 = vunpack.c.l.b16 %v1872
      %v1986 = vunpack.c.l.b16 %v1873
      %v1987 = vunpack.c.l.b16 %v1874
      %v1988 = vunpack.c.l.b16 %v1875
      %v1989 = vunpack.c.l.b16 %v1876
      %v1990 = vunpack.c.l.b16 %v1877
      %v1991 = vunpack.c.l.b16 %v1878
      %v1992 = vunpack.c.l.b16 %v1879
      %v1993 = vunpack.c.l.b16 %v1880
      %v1994 = vunpack.c.l.b16 %v1881
      %v1995 = vunpack.c.l.b16 %v1882
      %v1996 = vunpack.c.l.b16 %v1883
      %v1997 = vunpack.c.l.b16 %v1884
      %v1998 = vunpack.c.l.b16 %v1885
      %v1999 = vunpack.c.l.b16 %v1886
      %v2000 = vunpack.c.l.b16 %v1887
      %v2001 = vunpack.c.l.b16 %v1888
      %v2002 = vunpack.c.l.b16 %v1889
      %v2003 = vunpack.c.l.b16 %v1890
      %v2004 = vunpack.c.l.b16 %v1891
      %v2005 = vunpack.c.l.b16 %v1892
      %v2006 = vunpack.c.l.b16 %v1893
      %v2007 = vunpack.c.l.b16 %v1894
      %v2008 = vunpack.c.l.b16 %v1895
      %v2009 = vunpack.c.l.b16 %v1896
      %v2010 = vunpack.c.l.b16 %v1897
      %v2011 = vunpack.c.l.b16 %v1898
      %v2012 = vunpack.c.l.b16 %v1899
      %v2013 = vunpack.c.l.b16 %v1900
      %v2014 = vunpack.c.l.b16 %v1901
      %v2015 = vunpack.c.l.b16 %v1902
      %v2016 = vunpack.c.l.b16 %v1903
      %v2017 = vunpack.c.l.b16 %v1904
      %v2018 = vunpack.c.l.b16 %v1905
      %v2019 = vunpack.c.l.b16 %v1906
      %v2020 = vunpack.c.l.b16 %v1907
      %v2021 = vunpack.c.l.b16 %v1908
      %v2022 = vunpack.c.l.b16 %v1909
      %v2023 = vunpack.c.l.b16 %v1910
      %v2024 = vunpack.c.l.b16 %v1911
      %v2025 = vunpack.c.l.b16 %v1912
      %v2026 = vunpack.c.l.b16 %v1913
      %v2027 = vunpack.c.l.b16 %v1914
      %v2028 = vunpack.c.l.b16 %v1915
      %v2029 = vpack.c.b16 %v1982, %v1981
      %v2030 = vpack.c.b16 %v1984, %v1983
      %v2031 = vpack.c.b16 %v1986, %v1985
      %v2032 = vpack.c.b16 %v1988, %v1987
      %v2033 = vpack.c.b16 %v1990, %v1989
      %v2034 = vpack.c.b16 %v1992, %v1991
      %v2035 = vpack.c.b16 %v1994, %v1993
      %v2036 = vpack.c.b16 %v1996, %v1995
      %v2037 = vpack.c.b16 %v1998, %v1997
      %v2038 = vpack.c.b16 %v2000, %v1999
      %v2039 = vpack.c.b16 %v2002, %v2001
      %v2040 = vpack.c.b16 %v2004, %v2003
      %v2041 = vpack.c.b16 %v2006, %v2005
      %v2042 = vpack.c.b16 %v2008, %v2007
      %v2043 = vpack.c.b16 %v2010, %v2009
      %v2044 = vpack.c.b16 %v2012, %v2011
      %v2045 = vpack.c.b16 %v2014, %v2013
      %v2046 = vpack.c.b16 %v2016, %v2015
      %v2047 = vpack.c.b16 %v2018, %v2017
      %v2048 = vpack.c.b16 %v2020, %v2019
      %v2049 = vpack.c.b16 %v2022, %v2021
      %v2050 = vpack.c.b16 %v2024, %v2023
      %v2051 = vpack.c.b16 %v2026, %v2025
      %v2052 = vpack.c.b16 %v2028, %v2027
      %v2093 = vunpack.c.l.b16 %v1917
      %v2094 = vunpack.c.l.b16 %v1918
      %v2095 = vunpack.c.l.b16 %v1919
      %v2096 = vunpack.c.l.b16 %v1920
      %v2097 = vunpack.c.l.b16 %v1921
      %v2098 = vunpack.c.l.b16 %v1922
      %v2099 = vunpack.c.l.b16 %v1923
      %v2100 = vunpack.c.l.b16 %v1924
      %v2101 = vunpack.c.l.b16 %v1925
      %v2102 = vunpack.c.l.b16 %v1926
      %v2103 = vunpack.c.l.b16 %v1927
      %v2104 = vunpack.c.l.b16 %v1928
      %v2105 = vunpack.c.l.b16 %v1929
      %v2106 = vunpack.c.l.b16 %v1930
      %v2107 = vunpack.c.l.b16 %v1931
      %v2108 = vunpack.c.l.b16 %v1932
      %v2109 = vpack.c.b16 %v2094, %v2093
      %v2110 = vpack.c.b16 %v2096, %v2095
      %v2111 = vpack.c.b16 %v2098, %v2097
      %v2112 = vpack.c.b16 %v2100, %v2099
      %v2113 = vpack.c.b16 %v2102, %v2101
      %v2114 = vpack.c.b16 %v2104, %v2103
      %v2115 = vpack.c.b16 %v2106, %v2105
      %v2116 = vpack.c.b16 %v2108, %v2107
      %2125 = vmatpush.bf16.msra.mxu0 %v2116
      %2126 = vmatpush.bf16.msra.mxu0 %v2115
      %2127 = vmatpush.bf16.msra.mxu0 %v2114
      %2128 = vmatpush.bf16.msra.mxu0 %v2113
      %2129 = vmatpush.bf16.msra.mxu0 %v2112
      %2130 = vmatpush.bf16.msra.mxu0 %v2111
      %2131 = vmatpush.bf16.msra.mxu0 %v2110
      %2132 = vmatpush.bf16.msra.mxu0 %v2109
      %2133 = vmatmul.bf16.gmra.mxu0 %v2029
      %v2134 = vpop.f32.mrf.mxu0
      %v2135 = vadd.f32 0.0, %v2134
      %v2136 = vpop.f32.mrf.mxu0
      %v2137 = vadd.f32 0.0, %v2136
      %2138 = vmatmul.bf16.gmra.mxu0 %v2030
      %v2139 = vpop.f32.mrf.mxu0
      %v2140 = vpop.f32.mrf.mxu0
      %v2141 = vadd.f32 0.0, %v2140
      %2142 = vmatmul.bf16.gmra.mxu0 %v2031
      %v2143 = vpop.f32.mrf.mxu0
      %v2144 = vadd.f32 0.0, %v2143
      %v2145 = vpop.f32.mrf.mxu0
      %2146 = vmatmul.bf16.gmra.mxu0 %v2032
      %v2147 = vpop.f32.mrf.mxu0
      %v2148 = vadd.f32 0.0, %v2147
      %v2149 = vpop.f32.mrf.mxu0
      %v2150 = vadd.f32 0.0, %v2149
      %2151 = vmatmul.bf16.gmra.mxu0 %v2033
      %v2152 = vpop.f32.mrf.mxu0
      %v2153 = vpop.f32.mrf.mxu0
      %v2154 = vadd.f32 0.0, %v2153
      %2155 = vmatmul.bf16.gmra.mxu0 %v2034
      %v2156 = vpop.f32.mrf.mxu0
      %v2157 = vadd.f32 0.0, %v2156
      %v2158 = vpop.f32.mrf.mxu0
      %2159 = vmatmul.bf16.gmra.mxu0 %v2035
      %v2160 = vpop.f32.mrf.mxu0
      %v2161 = vadd.f32 0.0, %v2160
      %v2162 = vpop.f32.mrf.mxu0
      %v2163 = vadd.f32 0.0, %v2162
      %2164 = vmatmul.bf16.gmra.mxu0 %v2036
      %v2165 = vpop.f32.mrf.mxu0
      %v2166 = vpop.f32.mrf.mxu0
      %v2167 = vadd.f32 0.0, %v2166
      %2168 = vmatmul.bf16.gmra.mxu0 %v2037
      %v2169 = vpop.f32.mrf.mxu0
      %v2170 = vadd.f32 0.0, %v2169
      %v2171 = vpop.f32.mrf.mxu0
      %2172 = vmatmul.bf16.gmra.mxu0 %v2038
      %v2173 = vpop.f32.mrf.mxu0
      %v2174 = vadd.f32 0.0, %v2173
      %v2175 = vpop.f32.mrf.mxu0
      %v2176 = vadd.f32 0.0, %v2175
      %2177 = vmatmul.bf16.gmra.mxu0 %v2039
      %v2178 = vpop.f32.mrf.mxu0
      %v2179 = vpop.f32.mrf.mxu0
      %v2180 = vadd.f32 0.0, %v2179
      %2181 = vmatmul.bf16.gmra.mxu0 %v2040
      %v2182 = vpop.f32.mrf.mxu0
      %v2183 = vadd.f32 0.0, %v2182
      %v2184 = vpop.f32.mrf.mxu0
      %2185 = vmatmul.bf16.gmra.mxu0 %v2041
      %v2186 = vpop.f32.mrf.mxu0
      %v2187 = vadd.f32 0.0, %v2186
      %v2188 = vpop.f32.mrf.mxu0
      %v2189 = vadd.f32 0.0, %v2188
      %2190 = vmatmul.bf16.gmra.mxu0 %v2042
      %v2191 = vpop.f32.mrf.mxu0
      %v2192 = vpop.f32.mrf.mxu0
      %v2193 = vadd.f32 0.0, %v2192
      %2194 = vmatmul.bf16.gmra.mxu0 %v2043
      %v2195 = vpop.f32.mrf.mxu0
      %v2196 = vadd.f32 0.0, %v2195
      %v2197 = vpop.f32.mrf.mxu0
      %2198 = vmatmul.bf16.gmra.mxu0 %v2044
      %v2199 = vpop.f32.mrf.mxu0
      %v2200 = vadd.f32 0.0, %v2199
      %v2201 = vpop.f32.mrf.mxu0
      %v2202 = vadd.f32 0.0, %v2201
      %2203 = vmatmul.bf16.gmra.mxu0 %v2045
      %v2204 = vpop.f32.mrf.mxu0
      %v2205 = vpop.f32.mrf.mxu0
      %v2206 = vadd.f32 0.0, %v2205
      %2207 = vmatmul.bf16.gmra.mxu0 %v2046
      %v2208 = vpop.f32.mrf.mxu0
      %v2209 = vadd.f32 0.0, %v2208
      %v2210 = vpop.f32.mrf.mxu0
      %2211 = vmatmul.bf16.gmra.mxu0 %v2047
      %v2212 = vpop.f32.mrf.mxu0
      %v2213 = vadd.f32 0.0, %v2212
      %v2214 = vpop.f32.mrf.mxu0
      %v2215 = vadd.f32 0.0, %v2214
      %2216 = vmatmul.bf16.gmra.mxu0 %v2048
      %v2217 = vpop.f32.mrf.mxu0
      %v2218 = vpop.f32.mrf.mxu0
      %v2219 = vadd.f32 0.0, %v2218
      %2220 = vmatmul.bf16.gmra.mxu0 %v2049
      %v2221 = vpop.f32.mrf.mxu0
      %v2222 = vadd.f32 0.0, %v2221
      %v2223 = vpop.f32.mrf.mxu0
      %2224 = vmatmul.bf16.gmra.mxu0 %v2050
      %v2225 = vpop.f32.mrf.mxu0
      %v2226 = vadd.f32 0.0, %v2225
      %v2227 = vpop.f32.mrf.mxu0
      %v2228 = vadd.f32 0.0, %v2227
      %2229 = vmatmul.bf16.gmra.mxu0 %v2051
      %v2230 = vpop.f32.mrf.mxu0
      %v2231 = vpop.f32.mrf.mxu0
      %v2232 = vadd.f32 0.0, %v2231
      %2233 = vmatmul.bf16.gmra.mxu0 %v2052
      %v2234 = vpop.f32.mrf.mxu0
      %v2235 = vadd.f32 0.0, %v2234
      %v2236 = vpop.f32.mrf.mxu0
      %2237 = vdwg.mxu0
      %v2238 = vadd.f32 %v1836, %v2135
      %v2239 = vadd.f32 %v1837, %v2137
      %v2240 = vadd.f32 %v1838, %v2141
      %v2241 = vadd.f32 %v1839, %v2144
      %v2242 = vadd.f32 %v1840, %v2148
      %v2243 = vadd.f32 %v1841, %v2150
      %v2244 = vadd.f32 %v1842, %v2154
      %v2245 = vadd.f32 %v1843, %v2157
      %v2246 = vadd.f32 %v1844, %v2161
      %v2247 = vadd.f32 %v1845, %v2163
      %v2248 = vadd.f32 %v1846, %v2167
      %v2249 = vadd.f32 %v1847, %v2170
      %v2250 = vadd.f32 %v1848, %v2174
      %v2251 = vadd.f32 %v1849, %v2176
      %v2252 = vadd.f32 %v1850, %v2180
      %v2253 = vadd.f32 %v1851, %v2183
      %v2254 = vadd.f32 %v1852, %v2187
      %v2255 = vadd.f32 %v1853, %v2189
      %v2256 = vadd.f32 %v1854, %v2193
      %v2257 = vadd.f32 %v1855, %v2196
      %v2258 = vadd.f32 %v1856, %v2200
      %v2259 = vadd.f32 %v1857, %v2202
      %v2260 = vadd.f32 %v1858, %v2206
      %v2261 = vadd.f32 %v1859, %v2209
      %v2262 = vadd.f32 %v1860, %v2213
      %v2263 = vadd.f32 %v1861, %v2215
      %v2264 = vadd.f32 %v1862, %v2219
      %v2265 = vadd.f32 %v1863, %v2222
      %v2266 = vadd.f32 %v1864, %v2226
      %v2267 = vadd.f32 %v1865, %v2228
      %v2268 = vadd.f32 %v1866, %v2232
      %v2269 = vadd.f32 %v1867, %v2235
      %v2270 = vld [vmem:[#allocation2 + $0xc] sm:$0xf]
      %v2271 = vld [vmem:[#allocation2 + $0x10] sm:$0xf]
      %v2272 = vld [vmem:[#allocation2 + $0x14] sm:$0xf]
      %v2273 = vld [vmem:[#allocation2 + $0x18] sm:$0xf]
      %v2274 = vld [vmem:[#allocation2 + $0x1c] sm:$0xf]
      %v2275 = vld [vmem:[#allocation2 + $0x20] sm:$0xf]
      %v2276 = vld [vmem:[#allocation2 + $0x24] sm:$0xf]
      %v2277 = vld [vmem:[#allocation2 + $0x28] sm:$0xf]
      %v2278 = vld [vmem:[#allocation2 + $0x2c] sm:$0xf]
      %v2279 = vld [vmem:[#allocation2 + $0x30] sm:$0xf]
      %v2280 = vld [vmem:[#allocation2 + $0x34] sm:$0xf]
      %v2281 = vld [vmem:[#allocation2 + $0x38] sm:$0xf]
      %v2282 = vld [vmem:[#allocation2 + $0x3c] sm:$0xf]
      %v2283 = vld [vmem:[#allocation2 + $0x40] sm:$0xf]
      %v2284 = vld [vmem:[#allocation2 + $0x44] sm:$0xf]
      %v2285 = vld [vmem:[#allocation2 + $0x48] sm:$0xf]
      %v2286 = vld [vmem:[#allocation2 + $0x4c] sm:$0xf]
      %v2287 = vld [vmem:[#allocation2 + $0x50] sm:$0xf]
      %v2288 = vld [vmem:[#allocation2 + $0x54] sm:$0xf]
      %v2289 = vld [vmem:[#allocation2 + $0x58] sm:$0xf]
      %v2290 = vld [vmem:[#allocation2 + $0x5c] sm:$0xf]
      %v2291 = vld [vmem:[#allocation2 + $0x60] sm:$0xf]
      %v2292 = vld [vmem:[#allocation2 + $0x64] sm:$0xf]
      %v2293 = vld [vmem:[#allocation2 + $0x68] sm:$0xf]
      %v2294 = vld [vmem:[#allocation2 + $0x6c] sm:$0xf]
      %v2295 = vld [vmem:[#allocation2 + $0x70] sm:$0xf]
      %v2296 = vld [vmem:[#allocation2 + $0x74] sm:$0xf]
      %v2297 = vld [vmem:[#allocation2 + $0x78] sm:$0xf]
      %v2298 = vld [vmem:[#allocation2 + $0x7c] sm:$0xf]
      %v2299 = vld [vmem:[#allocation2 + $0x80] sm:$0xf]
      %v2300 = vld [vmem:[#allocation2 + $0x84] sm:$0xf]
      %v2301 = vld [vmem:[#allocation2 + $0x88] sm:$0xf]
      %v2302 = vld [vmem:[#allocation2 + $0x8c] sm:$0xf]
      %v2303 = vld [vmem:[#allocation2 + $0x90] sm:$0xf]
      %v2304 = vld [vmem:[#allocation2 + $0x94] sm:$0xf]
      %v2305 = vld [vmem:[#allocation2 + $0x98] sm:$0xf]
      %v2306 = vld [vmem:[#allocation2 + $0x9c] sm:$0xf]
      %v2307 = vld [vmem:[#allocation2 + $0xa0] sm:$0xf]
      %v2308 = vld [vmem:[#allocation2 + $0xa4] sm:$0xf]
      %v2309 = vld [vmem:[#allocation2 + $0xa8] sm:$0xf]
      %v2310 = vld [vmem:[#allocation2 + $0xac] sm:$0xf]
      %v2311 = vld [vmem:[#allocation2 + $0xb0] sm:$0xf]
      %v2312 = vld [vmem:[#allocation2 + $0xb4] sm:$0xf]
      %v2313 = vld [vmem:[#allocation2 + $0xb8] sm:$0xf]
      %v2314 = vld [vmem:[#allocation2 + $0xbc] sm:$0xf]
      %v2315 = vld [vmem:[#allocation2 + $0xc0] sm:$0xf]
      %v2316 = vld [vmem:[#allocation2 + $0xc4] sm:$0xf]
      %v2317 = vld [vmem:[#allocation2 + $0xc8] sm:$0xf]
      %v2318 = vld [vmem:[#allocation2 + $0xcc] sm:$0x1]
      %s2319 = scalar_lea.vmem %s260, 256
      %v2320 = vld [vmem:[%s2319] sm:$0xf]
      %v2321 = vld [vmem:[%s2319 + $0x4] sm:$0xf]
      %v2322 = vld [vmem:[%s2319 + $0x8] sm:$0xf]
      %v2323 = vld [vmem:[%s2319 + $0xc] sm:$0xf]
      %v2324 = vld [vmem:[%s2319 + $0x10] sm:$0xf]
      %v2325 = vld [vmem:[%s2319 + $0x14] sm:$0xf]
      %v2326 = vld [vmem:[%s2319 + $0x18] sm:$0xf]
      %v2327 = vld [vmem:[%s2319 + $0x1c] sm:$0xf]
      %v2328 = vld [vmem:[%s2319 + $0x20] sm:$0xf]
      %v2329 = vld [vmem:[%s2319 + $0x24] sm:$0xf]
      %v2330 = vld [vmem:[%s2319 + $0x28] sm:$0xf]
      %v2331 = vld [vmem:[%s2319 + $0x2c] sm:$0xf]
      %v2332 = vld [vmem:[%s2319 + $0x30] sm:$0xf]
      %v2333 = vld [vmem:[%s2319 + $0x34] sm:$0xf]
      %v2334 = vld [vmem:[%s2319 + $0x38] sm:$0xf]
      %v2335 = vld [vmem:[%s2319 + $0x3c] sm:$0xf]
      %v2385 = vunpack.c.l.b16 %v2270
      %v2386 = vunpack.c.l.b16 %v2271
      %v2387 = vunpack.c.l.b16 %v2272
      %v2388 = vunpack.c.l.b16 %v2273
      %v2389 = vunpack.c.l.b16 %v2274
      %v2390 = vunpack.c.l.b16 %v2275
      %v2391 = vunpack.c.l.b16 %v2276
      %v2392 = vunpack.c.l.b16 %v2277
      %v2393 = vunpack.c.l.b16 %v2278
      %v2394 = vunpack.c.l.b16 %v2279
      %v2395 = vunpack.c.l.b16 %v2280
      %v2396 = vunpack.c.l.b16 %v2281
      %v2397 = vunpack.c.l.b16 %v2282
      %v2398 = vunpack.c.l.b16 %v2283
      %v2399 = vunpack.c.l.b16 %v2284
      %v2400 = vunpack.c.l.b16 %v2285
      %v2401 = vunpack.c.l.b16 %v2286
      %v2402 = vunpack.c.l.b16 %v2287
      %v2403 = vunpack.c.l.b16 %v2288
      %v2404 = vunpack.c.l.b16 %v2289
      %v2405 = vunpack.c.l.b16 %v2290
      %v2406 = vunpack.c.l.b16 %v2291
      %v2407 = vunpack.c.l.b16 %v2292
      %v2408 = vunpack.c.l.b16 %v2293
      %v2409 = vunpack.c.l.b16 %v2294
      %v2410 = vunpack.c.l.b16 %v2295
      %v2411 = vunpack.c.l.b16 %v2296
      %v2412 = vunpack.c.l.b16 %v2297
      %v2413 = vunpack.c.l.b16 %v2298
      %v2414 = vunpack.c.l.b16 %v2299
      %v2415 = vunpack.c.l.b16 %v2300
      %v2416 = vunpack.c.l.b16 %v2301
      %v2417 = vunpack.c.l.b16 %v2302
      %v2418 = vunpack.c.l.b16 %v2303
      %v2419 = vunpack.c.l.b16 %v2304
      %v2420 = vunpack.c.l.b16 %v2305
      %v2421 = vunpack.c.l.b16 %v2306
      %v2422 = vunpack.c.l.b16 %v2307
      %v2423 = vunpack.c.l.b16 %v2308
      %v2424 = vunpack.c.l.b16 %v2309
      %v2425 = vunpack.c.l.b16 %v2310
      %v2426 = vunpack.c.l.b16 %v2311
      %v2427 = vunpack.c.l.b16 %v2312
      %v2428 = vunpack.c.l.b16 %v2313
      %v2429 = vunpack.c.l.b16 %v2314
      %v2430 = vunpack.c.l.b16 %v2315
      %v2431 = vunpack.c.l.b16 %v2316
      %v2432 = vunpack.c.l.b16 %v2317
      %v2433 = vunpack.c.l.b16 %v2318
      %v2434 = vpack.c.b16 %v2386, %v2385
      %v2435 = vpack.c.b16 %v2388, %v2387
      %v2436 = vpack.c.b16 %v2390, %v2389
      %v2437 = vpack.c.b16 %v2392, %v2391
      %v2438 = vpack.c.b16 %v2394, %v2393
      %v2439 = vpack.c.b16 %v2396, %v2395
      %v2440 = vpack.c.b16 %v2398, %v2397
      %v2441 = vpack.c.b16 %v2400, %v2399
      %v2442 = vpack.c.b16 %v2402, %v2401
      %v2443 = vpack.c.b16 %v2404, %v2403
      %v2444 = vpack.c.b16 %v2406, %v2405
      %v2445 = vpack.c.b16 %v2408, %v2407
      %v2446 = vpack.c.b16 %v2410, %v2409
      %v2447 = vpack.c.b16 %v2412, %v2411
      %v2448 = vpack.c.b16 %v2414, %v2413
      %v2449 = vpack.c.b16 %v2416, %v2415
      %v2450 = vpack.c.b16 %v2418, %v2417
      %v2451 = vpack.c.b16 %v2420, %v2419
      %v2452 = vpack.c.b16 %v2422, %v2421
      %v2453 = vpack.c.b16 %v2424, %v2423
      %v2454 = vpack.c.b16 %v2426, %v2425
      %v2455 = vpack.c.b16 %v2428, %v2427
      %v2456 = vpack.c.b16 %v2430, %v2429
      %v2457 = vpack.c.b16 %v2432, %v2431
      %v2458 = vpack.c.b16 %v2433, %v2433
      %v2460 = vshrl.u32 %v2434, 16
      %v2462 = vshll.u32 %v2434, 16
      %v2464 = vrot.slane %v2462, 1
      %v2465 = vor.u32 %v2460, %v2464
      %v2467 = vshll.u32 %v2435, 16
      %v2469 = vrot.slane %v2467, 1
      %v2470 = vsel %vm1013, %v2465, %v2469
      %v2471 = vshrl.u32 %v2435, 16
      %v2473 = vor.u32 %v2471, %v2469
      %v2475 = vshll.u32 %v2436, 16
      %v2477 = vrot.slane %v2475, 1
      %v2478 = vsel %vm1013, %v2473, %v2477
      %v2479 = vshrl.u32 %v2436, 16
      %v2481 = vor.u32 %v2479, %v2477
      %v2483 = vshll.u32 %v2437, 16
      %v2485 = vrot.slane %v2483, 1
      %v2486 = vsel %vm1013, %v2481, %v2485
      %v2487 = vshrl.u32 %v2437, 16
      %v2489 = vor.u32 %v2487, %v2485
      %v2491 = vshll.u32 %v2438, 16
      %v2493 = vrot.slane %v2491, 1
      %v2494 = vsel %vm1013, %v2489, %v2493
      %v2495 = vshrl.u32 %v2438, 16
      %v2497 = vor.u32 %v2495, %v2493
      %v2499 = vshll.u32 %v2439, 16
      %v2501 = vrot.slane %v2499, 1
      %v2502 = vsel %vm1013, %v2497, %v2501
      %v2503 = vshrl.u32 %v2439, 16
      %v2505 = vor.u32 %v2503, %v2501
      %v2507 = vshll.u32 %v2440, 16
      %v2509 = vrot.slane %v2507, 1
      %v2510 = vsel %vm1013, %v2505, %v2509
      %v2511 = vshrl.u32 %v2440, 16
      %v2513 = vor.u32 %v2511, %v2509
      %v2515 = vshll.u32 %v2441, 16
      %v2517 = vrot.slane %v2515, 1
      %v2518 = vsel %vm1013, %v2513, %v2517
      %v2519 = vshrl.u32 %v2441, 16
      %v2521 = vor.u32 %v2519, %v2517
      %v2523 = vshll.u32 %v2442, 16
      %v2525 = vrot.slane %v2523, 1
      %v2526 = vsel %vm1013, %v2521, %v2525
      %v2527 = vshrl.u32 %v2442, 16
      %v2529 = vor.u32 %v2527, %v2525
      %v2531 = vshll.u32 %v2443, 16
      %v2533 = vrot.slane %v2531, 1
      %v2534 = vsel %vm1013, %v2529, %v2533
      %v2535 = vshrl.u32 %v2443, 16
      %v2537 = vor.u32 %v2535, %v2533
      %v2539 = vshll.u32 %v2444, 16
      %v2541 = vrot.slane %v2539, 1
      %v2542 = vsel %vm1013, %v2537, %v2541
      %v2543 = vshrl.u32 %v2444, 16
      %v2545 = vor.u32 %v2543, %v2541
      %v2547 = vshll.u32 %v2445, 16
      %v2549 = vrot.slane %v2547, 1
      %v2550 = vsel %vm1013, %v2545, %v2549
      %v2551 = vshrl.u32 %v2445, 16
      %v2553 = vor.u32 %v2551, %v2549
      %v2555 = vshll.u32 %v2446, 16
      %v2557 = vrot.slane %v2555, 1
      %v2558 = vsel %vm1013, %v2553, %v2557
      %v2559 = vshrl.u32 %v2446, 16
      %v2561 = vor.u32 %v2559, %v2557
      %v2563 = vshll.u32 %v2447, 16
      %v2565 = vrot.slane %v2563, 1
      %v2566 = vsel %vm1013, %v2561, %v2565
      %v2567 = vshrl.u32 %v2447, 16
      %v2569 = vor.u32 %v2567, %v2565
      %v2571 = vshll.u32 %v2448, 16
      %v2573 = vrot.slane %v2571, 1
      %v2574 = vsel %vm1013, %v2569, %v2573
      %v2575 = vshrl.u32 %v2448, 16
      %v2577 = vor.u32 %v2575, %v2573
      %v2579 = vshll.u32 %v2449, 16
      %v2581 = vrot.slane %v2579, 1
      %v2582 = vsel %vm1013, %v2577, %v2581
      %v2583 = vshrl.u32 %v2449, 16
      %v2585 = vor.u32 %v2583, %v2581
      %v2587 = vshll.u32 %v2450, 16
      %v2589 = vrot.slane %v2587, 1
      %v2590 = vsel %vm1013, %v2585, %v2589
      %v2591 = vshrl.u32 %v2450, 16
      %v2593 = vor.u32 %v2591, %v2589
      %v2595 = vshll.u32 %v2451, 16
      %v2597 = vrot.slane %v2595, 1
      %v2598 = vsel %vm1013, %v2593, %v2597
      %v2599 = vshrl.u32 %v2451, 16
      %v2601 = vor.u32 %v2599, %v2597
      %v2603 = vshll.u32 %v2452, 16
      %v2605 = vrot.slane %v2603, 1
      %v2606 = vsel %vm1013, %v2601, %v2605
      %v2607 = vshrl.u32 %v2452, 16
      %v2609 = vor.u32 %v2607, %v2605
      %v2611 = vshll.u32 %v2453, 16
      %v2613 = vrot.slane %v2611, 1
      %v2614 = vsel %vm1013, %v2609, %v2613
      %v2615 = vshrl.u32 %v2453, 16
      %v2617 = vor.u32 %v2615, %v2613
      %v2619 = vshll.u32 %v2454, 16
      %v2621 = vrot.slane %v2619, 1
      %v2622 = vsel %vm1013, %v2617, %v2621
      %v2623 = vshrl.u32 %v2454, 16
      %v2625 = vor.u32 %v2623, %v2621
      %v2627 = vshll.u32 %v2455, 16
      %v2629 = vrot.slane %v2627, 1
      %v2630 = vsel %vm1013, %v2625, %v2629
      %v2631 = vshrl.u32 %v2455, 16
      %v2633 = vor.u32 %v2631, %v2629
      %v2635 = vshll.u32 %v2456, 16
      %v2637 = vrot.slane %v2635, 1
      %v2638 = vsel %vm1013, %v2633, %v2637
      %v2639 = vshrl.u32 %v2456, 16
      %v2641 = vor.u32 %v2639, %v2637
      %v2643 = vshll.u32 %v2457, 16
      %v2645 = vrot.slane %v2643, 1
      %v2646 = vsel %vm1013, %v2641, %v2645
      %v2647 = vshrl.u32 %v2457, 16
      %v2649 = vor.u32 %v2647, %v2645
      %v2651 = vshll.u32 %v2458, 16
      %v2653 = vrot.slane %v2651, 1
      %v2654 = vsel %vm1013, %v2649, %v2653
      %v2695 = vunpack.c.l.b16 %v2320
      %v2696 = vunpack.c.l.b16 %v2321
      %v2697 = vunpack.c.l.b16 %v2322
      %v2698 = vunpack.c.l.b16 %v2323
      %v2699 = vunpack.c.l.b16 %v2324
      %v2700 = vunpack.c.l.b16 %v2325
      %v2701 = vunpack.c.l.b16 %v2326
      %v2702 = vunpack.c.l.b16 %v2327
      %v2703 = vunpack.c.l.b16 %v2328
      %v2704 = vunpack.c.l.b16 %v2329
      %v2705 = vunpack.c.l.b16 %v2330
      %v2706 = vunpack.c.l.b16 %v2331
      %v2707 = vunpack.c.l.b16 %v2332
      %v2708 = vunpack.c.l.b16 %v2333
      %v2709 = vunpack.c.l.b16 %v2334
      %v2710 = vunpack.c.l.b16 %v2335
      %v2711 = vpack.c.b16 %v2696, %v2695
      %v2712 = vpack.c.b16 %v2698, %v2697
      %v2713 = vpack.c.b16 %v2700, %v2699
      %v2714 = vpack.c.b16 %v2702, %v2701
      %v2715 = vpack.c.b16 %v2704, %v2703
      %v2716 = vpack.c.b16 %v2706, %v2705
      %v2717 = vpack.c.b16 %v2708, %v2707
      %v2718 = vpack.c.b16 %v2710, %v2709
      %2727 = vmatpush.bf16.msra.mxu0 %v2718
      %2728 = vmatpush.bf16.msra.mxu0 %v2717
      %2729 = vmatpush.bf16.msra.mxu0 %v2716
      %2730 = vmatpush.bf16.msra.mxu0 %v2715
      %2731 = vmatpush.bf16.msra.mxu0 %v2714
      %2732 = vmatpush.bf16.msra.mxu0 %v2713
      %2733 = vmatpush.bf16.msra.mxu0 %v2712
      %2734 = vmatpush.bf16.msra.mxu0 %v2711
      %2735 = vmatmul.bf16.gmra.mxu0 %v2470
      %v2736 = vpop.f32.mrf.mxu0
      %v2737 = vadd.f32 0.0, %v2736
      %v2738 = vpop.f32.mrf.mxu0
      %v2739 = vadd.f32 0.0, %v2738
      %2740 = vmatmul.bf16.gmra.mxu0 %v2478
      %v2741 = vpop.f32.mrf.mxu0
      %v2742 = vpop.f32.mrf.mxu0
      %v2743 = vadd.f32 0.0, %v2742
      %2744 = vmatmul.bf16.gmra.mxu0 %v2486
      %v2745 = vpop.f32.mrf.mxu0
      %v2746 = vadd.f32 0.0, %v2745
      %v2747 = vpop.f32.mrf.mxu0
      %2748 = vmatmul.bf16.gmra.mxu0 %v2494
      %v2749 = vpop.f32.mrf.mxu0
      %v2750 = vadd.f32 0.0, %v2749
      %v2751 = vpop.f32.mrf.mxu0
      %v2752 = vadd.f32 0.0, %v2751
      %2753 = vmatmul.bf16.gmra.mxu0 %v2502
      %v2754 = vpop.f32.mrf.mxu0
      %v2755 = vpop.f32.mrf.mxu0
      %v2756 = vadd.f32 0.0, %v2755
      %2757 = vmatmul.bf16.gmra.mxu0 %v2510
      %v2758 = vpop.f32.mrf.mxu0
      %v2759 = vadd.f32 0.0, %v2758
      %v2760 = vpop.f32.mrf.mxu0
      %2761 = vmatmul.bf16.gmra.mxu0 %v2518
      %v2762 = vpop.f32.mrf.mxu0
      %v2763 = vadd.f32 0.0, %v2762
      %v2764 = vpop.f32.mrf.mxu0
      %v2765 = vadd.f32 0.0, %v2764
      %2766 = vmatmul.bf16.gmra.mxu0 %v2526
      %v2767 = vpop.f32.mrf.mxu0
      %v2768 = vpop.f32.mrf.mxu0
      %v2769 = vadd.f32 0.0, %v2768
      %2770 = vmatmul.bf16.gmra.mxu0 %v2534
      %v2771 = vpop.f32.mrf.mxu0
      %v2772 = vadd.f32 0.0, %v2771
      %v2773 = vpop.f32.mrf.mxu0
      %2774 = vmatmul.bf16.gmra.mxu0 %v2542
      %v2775 = vpop.f32.mrf.mxu0
      %v2776 = vadd.f32 0.0, %v2775
      %v2777 = vpop.f32.mrf.mxu0
      %v2778 = vadd.f32 0.0, %v2777
      %2779 = vmatmul.bf16.gmra.mxu0 %v2550
      %v2780 = vpop.f32.mrf.mxu0
      %v2781 = vpop.f32.mrf.mxu0
      %v2782 = vadd.f32 0.0, %v2781
      %2783 = vmatmul.bf16.gmra.mxu0 %v2558
      %v2784 = vpop.f32.mrf.mxu0
      %v2785 = vadd.f32 0.0, %v2784
      %v2786 = vpop.f32.mrf.mxu0
      %2787 = vmatmul.bf16.gmra.mxu0 %v2566
      %v2788 = vpop.f32.mrf.mxu0
      %v2789 = vadd.f32 0.0, %v2788
      %v2790 = vpop.f32.mrf.mxu0
      %v2791 = vadd.f32 0.0, %v2790
      %2792 = vmatmul.bf16.gmra.mxu0 %v2574
      %v2793 = vpop.f32.mrf.mxu0
      %v2794 = vpop.f32.mrf.mxu0
      %v2795 = vadd.f32 0.0, %v2794
      %2796 = vmatmul.bf16.gmra.mxu0 %v2582
      %v2797 = vpop.f32.mrf.mxu0
      %v2798 = vadd.f32 0.0, %v2797
      %v2799 = vpop.f32.mrf.mxu0
      %2800 = vmatmul.bf16.gmra.mxu0 %v2590
      %v2801 = vpop.f32.mrf.mxu0
      %v2802 = vadd.f32 0.0, %v2801
      %v2803 = vpop.f32.mrf.mxu0
      %v2804 = vadd.f32 0.0, %v2803
      %2805 = vmatmul.bf16.gmra.mxu0 %v2598
      %v2806 = vpop.f32.mrf.mxu0
      %v2807 = vpop.f32.mrf.mxu0
      %v2808 = vadd.f32 0.0, %v2807
      %2809 = vmatmul.bf16.gmra.mxu0 %v2606
      %v2810 = vpop.f32.mrf.mxu0
      %v2811 = vadd.f32 0.0, %v2810
      %v2812 = vpop.f32.mrf.mxu0
      %2813 = vmatmul.bf16.gmra.mxu0 %v2614
      %v2814 = vpop.f32.mrf.mxu0
      %v2815 = vadd.f32 0.0, %v2814
      %v2816 = vpop.f32.mrf.mxu0
      %v2817 = vadd.f32 0.0, %v2816
      %2818 = vmatmul.bf16.gmra.mxu0 %v2622
      %v2819 = vpop.f32.mrf.mxu0
      %v2820 = vpop.f32.mrf.mxu0
      %v2821 = vadd.f32 0.0, %v2820
      %2822 = vmatmul.bf16.gmra.mxu0 %v2630
      %v2823 = vpop.f32.mrf.mxu0
      %v2824 = vadd.f32 0.0, %v2823
      %v2825 = vpop.f32.mrf.mxu0
      %2826 = vmatmul.bf16.gmra.mxu0 %v2638
      %v2827 = vpop.f32.mrf.mxu0
      %v2828 = vadd.f32 0.0, %v2827
      %v2829 = vpop.f32.mrf.mxu0
      %v2830 = vadd.f32 0.0, %v2829
      %2831 = vmatmul.bf16.gmra.mxu0 %v2646
      %v2832 = vpop.f32.mrf.mxu0
      %v2833 = vpop.f32.mrf.mxu0
      %v2834 = vadd.f32 0.0, %v2833
      %2835 = vmatmul.bf16.gmra.mxu0 %v2654
      %v2836 = vpop.f32.mrf.mxu0
      %v2837 = vadd.f32 0.0, %v2836
      %v2838 = vpop.f32.mrf.mxu0
      %2839 = vdwg.mxu0
      %v2840 = vadd.f32 %v2238, %v2737
      %v2841 = vadd.f32 %v2239, %v2739
      %v2842 = vadd.f32 %v2240, %v2743
      %v2843 = vadd.f32 %v2241, %v2746
      %v2844 = vadd.f32 %v2242, %v2750
      %v2845 = vadd.f32 %v2243, %v2752
      %v2846 = vadd.f32 %v2244, %v2756
      %v2847 = vadd.f32 %v2245, %v2759
      %v2848 = vadd.f32 %v2246, %v2763
      %v2849 = vadd.f32 %v2247, %v2765
      %v2850 = vadd.f32 %v2248, %v2769
      %v2851 = vadd.f32 %v2249, %v2772
      %v2852 = vadd.f32 %v2250, %v2776
      %v2853 = vadd.f32 %v2251, %v2778
      %v2854 = vadd.f32 %v2252, %v2782
      %v2855 = vadd.f32 %v2253, %v2785
      %v2856 = vadd.f32 %v2254, %v2789
      %v2857 = vadd.f32 %v2255, %v2791
      %v2858 = vadd.f32 %v2256, %v2795
      %v2859 = vadd.f32 %v2257, %v2798
      %v2860 = vadd.f32 %v2258, %v2802
      %v2861 = vadd.f32 %v2259, %v2804
      %v2862 = vadd.f32 %v2260, %v2808
      %v2863 = vadd.f32 %v2261, %v2811
      %v2864 = vadd.f32 %v2262, %v2815
      %v2865 = vadd.f32 %v2263, %v2817
      %v2866 = vadd.f32 %v2264, %v2821
      %v2867 = vadd.f32 %v2265, %v2824
      %v2868 = vadd.f32 %v2266, %v2828
      %v2869 = vadd.f32 %v2267, %v2830
      %v2870 = vadd.f32 %v2268, %v2834
      %v2871 = vadd.f32 %v2269, %v2837
      %v2872 = vld [vmem:[#allocation2 + $0xc] sm:$0xe]
      %s2873 = scalar_lea.vmem %s260, 320
      %v2874 = vld [vmem:[%s2873] sm:$0xf]
      %v2875 = vld [vmem:[%s2873 + $0x4] sm:$0xf]
      %v2876 = vld [vmem:[%s2873 + $0x8] sm:$0xf]
      %v2877 = vld [vmem:[%s2873 + $0xc] sm:$0xf]
      %v2878 = vld [vmem:[%s2873 + $0x10] sm:$0xf]
      %v2879 = vld [vmem:[%s2873 + $0x14] sm:$0xf]
      %v2880 = vld [vmem:[%s2873 + $0x18] sm:$0xf]
      %v2881 = vld [vmem:[%s2873 + $0x1c] sm:$0xf]
      %v2882 = vld [vmem:[%s2873 + $0x20] sm:$0xf]
      %v2883 = vld [vmem:[%s2873 + $0x24] sm:$0xf]
      %v2884 = vld [vmem:[%s2873 + $0x28] sm:$0xf]
      %v2885 = vld [vmem:[%s2873 + $0x2c] sm:$0xf]
      %v2886 = vld [vmem:[%s2873 + $0x30] sm:$0xf]
      %v2887 = vld [vmem:[%s2873 + $0x34] sm:$0xf]
      %v2888 = vld [vmem:[%s2873 + $0x38] sm:$0xf]
      %v2889 = vld [vmem:[%s2873 + $0x3c] sm:$0xf]
      %v2891 = vunpack.c.l.b16 %v2872
      %v2892 = vpack.c.b16 %v2386, %v2891
      %v2893 = vrot.slane %v2892, 1
      %v2894 = vrot.slane %v2435, 1
      %v2895 = vsel %vm1601, %v2893, %v2894
      %v2896 = vrot.slane %v2436, 1
      %v2897 = vsel %vm1601, %v2894, %v2896
      %v2898 = vrot.slane %v2437, 1
      %v2899 = vsel %vm1601, %v2896, %v2898
      %v2900 = vrot.slane %v2438, 1
      %v2901 = vsel %vm1601, %v2898, %v2900
      %v2902 = vrot.slane %v2439, 1
      %v2903 = vsel %vm1601, %v2900, %v2902
      %v2904 = vrot.slane %v2440, 1
      %v2905 = vsel %vm1601, %v2902, %v2904
      %v2906 = vrot.slane %v2441, 1
      %v2907 = vsel %vm1601, %v2904, %v2906
      %v2908 = vrot.slane %v2442, 1
      %v2909 = vsel %vm1601, %v2906, %v2908
      %v2910 = vrot.slane %v2443, 1
      %v2911 = vsel %vm1601, %v2908, %v2910
      %v2912 = vrot.slane %v2444, 1
      %v2913 = vsel %vm1601, %v2910, %v2912
      %v2914 = vrot.slane %v2445, 1
      %v2915 = vsel %vm1601, %v2912, %v2914
      %v2916 = vrot.slane %v2446, 1
      %v2917 = vsel %vm1601, %v2914, %v2916
      %v2918 = vrot.slane %v2447, 1
      %v2919 = vsel %vm1601, %v2916, %v2918
      %v2920 = vrot.slane %v2448, 1
      %v2921 = vsel %vm1601, %v2918, %v2920
      %v2922 = vrot.slane %v2449, 1
      %v2923 = vsel %vm1601, %v2920, %v2922
      %v2924 = vrot.slane %v2450, 1
      %v2925 = vsel %vm1601, %v2922, %v2924
      %v2926 = vrot.slane %v2451, 1
      %v2927 = vsel %vm1601, %v2924, %v2926
      %v2928 = vrot.slane %v2452, 1
      %v2929 = vsel %vm1601, %v2926, %v2928
      %v2930 = vrot.slane %v2453, 1
      %v2931 = vsel %vm1601, %v2928, %v2930
      %v2932 = vrot.slane %v2454, 1
      %v2933 = vsel %vm1601, %v2930, %v2932
      %v2934 = vrot.slane %v2455, 1
      %v2935 = vsel %vm1601, %v2932, %v2934
      %v2936 = vrot.slane %v2456, 1
      %v2937 = vsel %vm1601, %v2934, %v2936
      %v2938 = vrot.slane %v2457, 1
      %v2939 = vsel %vm1601, %v2936, %v2938
      %v2940 = vrot.slane %v2458, 1
      %v2941 = vsel %vm1601, %v2938, %v2940
      %v2982 = vunpack.c.l.b16 %v2874
      %v2983 = vunpack.c.l.b16 %v2875
      %v2984 = vunpack.c.l.b16 %v2876
      %v2985 = vunpack.c.l.b16 %v2877
      %v2986 = vunpack.c.l.b16 %v2878
      %v2987 = vunpack.c.l.b16 %v2879
      %v2988 = vunpack.c.l.b16 %v2880
      %v2989 = vunpack.c.l.b16 %v2881
      %v2990 = vunpack.c.l.b16 %v2882
      %v2991 = vunpack.c.l.b16 %v2883
      %v2992 = vunpack.c.l.b16 %v2884
      %v2993 = vunpack.c.l.b16 %v2885
      %v2994 = vunpack.c.l.b16 %v2886
      %v2995 = vunpack.c.l.b16 %v2887
      %v2996 = vunpack.c.l.b16 %v2888
      %v2997 = vunpack.c.l.b16 %v2889
      %v2998 = vpack.c.b16 %v2983, %v2982
      %v2999 = vpack.c.b16 %v2985, %v2984
      %v3000 = vpack.c.b16 %v2987, %v2986
      %v3001 = vpack.c.b16 %v2989, %v2988
      %v3002 = vpack.c.b16 %v2991, %v2990
      %v3003 = vpack.c.b16 %v2993, %v2992
      %v3004 = vpack.c.b16 %v2995, %v2994
      %v3005 = vpack.c.b16 %v2997, %v2996
      %3014 = vmatpush.bf16.msra.mxu0 %v3005
      %3015 = vmatpush.bf16.msra.mxu0 %v3004
      %3016 = vmatpush.bf16.msra.mxu0 %v3003
      %3017 = vmatpush.bf16.msra.mxu0 %v3002
      %3018 = vmatpush.bf16.msra.mxu0 %v3001
      %3019 = vmatpush.bf16.msra.mxu0 %v3000
      %3020 = vmatpush.bf16.msra.mxu0 %v2999
      %3021 = vmatpush.bf16.msra.mxu0 %v2998
      %3022 = vmatmul.bf16.gmra.mxu0 %v2895
      %v3023 = vpop.f32.mrf.mxu0
      %v3024 = vadd.f32 0.0, %v3023
      %v3025 = vpop.f32.mrf.mxu0
      %v3026 = vadd.f32 0.0, %v3025
      %3027 = vmatmul.bf16.gmra.mxu0 %v2897
      %v3028 = vpop.f32.mrf.mxu0
      %v3029 = vpop.f32.mrf.mxu0
      %v3030 = vadd.f32 0.0, %v3029
      %3031 = vmatmul.bf16.gmra.mxu0 %v2899
      %v3032 = vpop.f32.mrf.mxu0
      %v3033 = vadd.f32 0.0, %v3032
      %v3034 = vpop.f32.mrf.mxu0
      %3035 = vmatmul.bf16.gmra.mxu0 %v2901
      %v3036 = vpop.f32.mrf.mxu0
      %v3037 = vadd.f32 0.0, %v3036
      %v3038 = vpop.f32.mrf.mxu0
      %v3039 = vadd.f32 0.0, %v3038
      %3040 = vmatmul.bf16.gmra.mxu0 %v2903
      %v3041 = vpop.f32.mrf.mxu0
      %v3042 = vpop.f32.mrf.mxu0
      %v3043 = vadd.f32 0.0, %v3042
      %3044 = vmatmul.bf16.gmra.mxu0 %v2905
      %v3045 = vpop.f32.mrf.mxu0
      %v3046 = vadd.f32 0.0, %v3045
      %v3047 = vpop.f32.mrf.mxu0
      %3048 = vmatmul.bf16.gmra.mxu0 %v2907
      %v3049 = vpop.f32.mrf.mxu0
      %v3050 = vadd.f32 0.0, %v3049
      %v3051 = vpop.f32.mrf.mxu0
      %v3052 = vadd.f32 0.0, %v3051
      %3053 = vmatmul.bf16.gmra.mxu0 %v2909
      %v3054 = vpop.f32.mrf.mxu0
      %v3055 = vpop.f32.mrf.mxu0
      %v3056 = vadd.f32 0.0, %v3055
      %3057 = vmatmul.bf16.gmra.mxu0 %v2911
      %v3058 = vpop.f32.mrf.mxu0
      %v3059 = vadd.f32 0.0, %v3058
      %v3060 = vpop.f32.mrf.mxu0
      %3061 = vmatmul.bf16.gmra.mxu0 %v2913
      %v3062 = vpop.f32.mrf.mxu0
      %v3063 = vadd.f32 0.0, %v3062
      %v3064 = vpop.f32.mrf.mxu0
      %v3065 = vadd.f32 0.0, %v3064
      %3066 = vmatmul.bf16.gmra.mxu0 %v2915
      %v3067 = vpop.f32.mrf.mxu0
      %v3068 = vpop.f32.mrf.mxu0
      %v3069 = vadd.f32 0.0, %v3068
      %3070 = vmatmul.bf16.gmra.mxu0 %v2917
      %v3071 = vpop.f32.mrf.mxu0
      %v3072 = vadd.f32 0.0, %v3071
      %v3073 = vpop.f32.mrf.mxu0
      %3074 = vmatmul.bf16.gmra.mxu0 %v2919
      %v3075 = vpop.f32.mrf.mxu0
      %v3076 = vadd.f32 0.0, %v3075
      %v3077 = vpop.f32.mrf.mxu0
      %v3078 = vadd.f32 0.0, %v3077
      %3079 = vmatmul.bf16.gmra.mxu0 %v2921
      %v3080 = vpop.f32.mrf.mxu0
      %v3081 = vpop.f32.mrf.mxu0
      %v3082 = vadd.f32 0.0, %v3081
      %3083 = vmatmul.bf16.gmra.mxu0 %v2923
      %v3084 = vpop.f32.mrf.mxu0
      %v3085 = vadd.f32 0.0, %v3084
      %v3086 = vpop.f32.mrf.mxu0
      %3087 = vmatmul.bf16.gmra.mxu0 %v2925
      %v3088 = vpop.f32.mrf.mxu0
      %v3089 = vadd.f32 0.0, %v3088
      %v3090 = vpop.f32.mrf.mxu0
      %v3091 = vadd.f32 0.0, %v3090
      %3092 = vmatmul.bf16.gmra.mxu0 %v2927
      %v3093 = vpop.f32.mrf.mxu0
      %v3094 = vpop.f32.mrf.mxu0
      %v3095 = vadd.f32 0.0, %v3094
      %3096 = vmatmul.bf16.gmra.mxu0 %v2929
      %v3097 = vpop.f32.mrf.mxu0
      %v3098 = vadd.f32 0.0, %v3097
      %v3099 = vpop.f32.mrf.mxu0
      %3100 = vmatmul.bf16.gmra.mxu0 %v2931
      %v3101 = vpop.f32.mrf.mxu0
      %v3102 = vadd.f32 0.0, %v3101
      %v3103 = vpop.f32.mrf.mxu0
      %v3104 = vadd.f32 0.0, %v3103
      %3105 = vmatmul.bf16.gmra.mxu0 %v2933
      %v3106 = vpop.f32.mrf.mxu0
      %v3107 = vpop.f32.mrf.mxu0
      %v3108 = vadd.f32 0.0, %v3107
      %3109 = vmatmul.bf16.gmra.mxu0 %v2935
      %v3110 = vpop.f32.mrf.mxu0
      %v3111 = vadd.f32 0.0, %v3110
      %v3112 = vpop.f32.mrf.mxu0
      %3113 = vmatmul.bf16.gmra.mxu0 %v2937
      %v3114 = vpop.f32.mrf.mxu0
      %v3115 = vadd.f32 0.0, %v3114
      %v3116 = vpop.f32.mrf.mxu0
      %v3117 = vadd.f32 0.0, %v3116
      %3118 = vmatmul.bf16.gmra.mxu0 %v2939
      %v3119 = vpop.f32.mrf.mxu0
      %v3120 = vpop.f32.mrf.mxu0
      %v3121 = vadd.f32 0.0, %v3120
      %3122 = vmatmul.bf16.gmra.mxu0 %v2941
      %v3123 = vpop.f32.mrf.mxu0
      %v3124 = vadd.f32 0.0, %v3123
      %v3125 = vpop.f32.mrf.mxu0
      %3126 = vdwg.mxu0
      %v3127 = vadd.f32 %v2840, %v3024
      %v3128 = vadd.f32 %v2841, %v3026
      %v3129 = vadd.f32 %v2842, %v3030
      %v3130 = vadd.f32 %v2843, %v3033
      %v3131 = vadd.f32 %v2844, %v3037
      %v3132 = vadd.f32 %v2845, %v3039
      %v3133 = vadd.f32 %v2846, %v3043
      %v3134 = vadd.f32 %v2847, %v3046
      %v3135 = vadd.f32 %v2848, %v3050
      %v3136 = vadd.f32 %v2849, %v3052
      %v3137 = vadd.f32 %v2850, %v3056
      %v3138 = vadd.f32 %v2851, %v3059
      %v3139 = vadd.f32 %v2852, %v3063
      %v3140 = vadd.f32 %v2853, %v3065
      %v3141 = vadd.f32 %v2854, %v3069
      %v3142 = vadd.f32 %v2855, %v3072
      %v3143 = vadd.f32 %v2856, %v3076
      %v3144 = vadd.f32 %v2857, %v3078
      %v3145 = vadd.f32 %v2858, %v3082
      %v3146 = vadd.f32 %v2859, %v3085
      %v3147 = vadd.f32 %v2860, %v3089
      %v3148 = vadd.f32 %v2861, %v3091
      %v3149 = vadd.f32 %v2862, %v3095
      %v3150 = vadd.f32 %v2863, %v3098
      %v3151 = vadd.f32 %v2864, %v3102
      %v3152 = vadd.f32 %v2865, %v3104
      %v3153 = vadd.f32 %v2866, %v3108
      %v3154 = vadd.f32 %v2867, %v3111
      %v3155 = vadd.f32 %v2868, %v3115
      %v3156 = vadd.f32 %v2869, %v3117
      %v3157 = vadd.f32 %v2870, %v3121
      %v3158 = vadd.f32 %v2871, %v3124
      %v3159 = vld [vmem:[#allocation2 + $0x18] sm:$0xf]
      %v3160 = vld [vmem:[#allocation2 + $0x1c] sm:$0xf]
      %v3161 = vld [vmem:[#allocation2 + $0x20] sm:$0xf]
      %v3162 = vld [vmem:[#allocation2 + $0x24] sm:$0xf]
      %v3163 = vld [vmem:[#allocation2 + $0x28] sm:$0xf]
      %v3164 = vld [vmem:[#allocation2 + $0x2c] sm:$0xf]
      %v3165 = vld [vmem:[#allocation2 + $0x30] sm:$0xf]
      %v3166 = vld [vmem:[#allocation2 + $0x34] sm:$0xf]
      %v3167 = vld [vmem:[#allocation2 + $0x38] sm:$0xf]
      %v3168 = vld [vmem:[#allocation2 + $0x3c] sm:$0xf]
      %v3169 = vld [vmem:[#allocation2 + $0x40] sm:$0xf]
      %v3170 = vld [vmem:[#allocation2 + $0x44] sm:$0xf]
      %v3171 = vld [vmem:[#allocation2 + $0x48] sm:$0xf]
      %v3172 = vld [vmem:[#allocation2 + $0x4c] sm:$0xf]
      %v3173 = vld [vmem:[#allocation2 + $0x50] sm:$0xf]
      %v3174 = vld [vmem:[#allocation2 + $0x54] sm:$0xf]
      %v3175 = vld [vmem:[#allocation2 + $0x58] sm:$0xf]
      %v3176 = vld [vmem:[#allocation2 + $0x5c] sm:$0xf]
      %v3177 = vld [vmem:[#allocation2 + $0x60] sm:$0xf]
      %v3178 = vld [vmem:[#allocation2 + $0x64] sm:$0xf]
      %v3179 = vld [vmem:[#allocation2 + $0x68] sm:$0xf]
      %v3180 = vld [vmem:[#allocation2 + $0x6c] sm:$0xf]
      %v3181 = vld [vmem:[#allocation2 + $0x70] sm:$0xf]
      %v3182 = vld [vmem:[#allocation2 + $0x74] sm:$0xf]
      %v3183 = vld [vmem:[#allocation2 + $0x78] sm:$0xf]
      %v3184 = vld [vmem:[#allocation2 + $0x7c] sm:$0xf]
      %v3185 = vld [vmem:[#allocation2 + $0x80] sm:$0xf]
      %v3186 = vld [vmem:[#allocation2 + $0x84] sm:$0xf]
      %v3187 = vld [vmem:[#allocation2 + $0x88] sm:$0xf]
      %v3188 = vld [vmem:[#allocation2 + $0x8c] sm:$0xf]
      %v3189 = vld [vmem:[#allocation2 + $0x90] sm:$0xf]
      %v3190 = vld [vmem:[#allocation2 + $0x94] sm:$0xf]
      %v3191 = vld [vmem:[#allocation2 + $0x98] sm:$0xf]
      %v3192 = vld [vmem:[#allocation2 + $0x9c] sm:$0xf]
      %v3193 = vld [vmem:[#allocation2 + $0xa0] sm:$0xf]
      %v3194 = vld [vmem:[#allocation2 + $0xa4] sm:$0xf]
      %v3195 = vld [vmem:[#allocation2 + $0xa8] sm:$0xf]
      %v3196 = vld [vmem:[#allocation2 + $0xac] sm:$0xf]
      %v3197 = vld [vmem:[#allocation2 + $0xb0] sm:$0xf]
      %v3198 = vld [vmem:[#allocation2 + $0xb4] sm:$0xf]
      %v3199 = vld [vmem:[#allocation2 + $0xb8] sm:$0xf]
      %v3200 = vld [vmem:[#allocation2 + $0xbc] sm:$0xf]
      %v3201 = vld [vmem:[#allocation2 + $0xc0] sm:$0xf]
      %v3202 = vld [vmem:[#allocation2 + $0xc4] sm:$0xf]
      %v3203 = vld [vmem:[#allocation2 + $0xc8] sm:$0xf]
      %v3204 = vld [vmem:[#allocation2 + $0xcc] sm:$0xf]
      %v3205 = vld [vmem:[#allocation2 + $0xd0] sm:$0xf]
      %v3206 = vld [vmem:[#allocation2 + $0xd4] sm:$0xf]
      %s3207 = scalar_lea.vmem %s260, 384
      %v3208 = vld [vmem:[%s3207] sm:$0xf]
      %v3209 = vld [vmem:[%s3207 + $0x4] sm:$0xf]
      %v3210 = vld [vmem:[%s3207 + $0x8] sm:$0xf]
      %v3211 = vld [vmem:[%s3207 + $0xc] sm:$0xf]
      %v3212 = vld [vmem:[%s3207 + $0x10] sm:$0xf]
      %v3213 = vld [vmem:[%s3207 + $0x14] sm:$0xf]
      %v3214 = vld [vmem:[%s3207 + $0x18] sm:$0xf]
      %v3215 = vld [vmem:[%s3207 + $0x1c] sm:$0xf]
      %v3216 = vld [vmem:[%s3207 + $0x20] sm:$0xf]
      %v3217 = vld [vmem:[%s3207 + $0x24] sm:$0xf]
      %v3218 = vld [vmem:[%s3207 + $0x28] sm:$0xf]
      %v3219 = vld [vmem:[%s3207 + $0x2c] sm:$0xf]
      %v3220 = vld [vmem:[%s3207 + $0x30] sm:$0xf]
      %v3221 = vld [vmem:[%s3207 + $0x34] sm:$0xf]
      %v3222 = vld [vmem:[%s3207 + $0x38] sm:$0xf]
      %v3223 = vld [vmem:[%s3207 + $0x3c] sm:$0xf]
      %v3272 = vunpack.c.l.b16 %v3159
      %v3273 = vunpack.c.l.b16 %v3160
      %v3274 = vunpack.c.l.b16 %v3161
      %v3275 = vunpack.c.l.b16 %v3162
      %v3276 = vunpack.c.l.b16 %v3163
      %v3277 = vunpack.c.l.b16 %v3164
      %v3278 = vunpack.c.l.b16 %v3165
      %v3279 = vunpack.c.l.b16 %v3166
      %v3280 = vunpack.c.l.b16 %v3167
      %v3281 = vunpack.c.l.b16 %v3168
      %v3282 = vunpack.c.l.b16 %v3169
      %v3283 = vunpack.c.l.b16 %v3170
      %v3284 = vunpack.c.l.b16 %v3171
      %v3285 = vunpack.c.l.b16 %v3172
      %v3286 = vunpack.c.l.b16 %v3173
      %v3287 = vunpack.c.l.b16 %v3174
      %v3288 = vunpack.c.l.b16 %v3175
      %v3289 = vunpack.c.l.b16 %v3176
      %v3290 = vunpack.c.l.b16 %v3177
      %v3291 = vunpack.c.l.b16 %v3178
      %v3292 = vunpack.c.l.b16 %v3179
      %v3293 = vunpack.c.l.b16 %v3180
      %v3294 = vunpack.c.l.b16 %v3181
      %v3295 = vunpack.c.l.b16 %v3182
      %v3296 = vunpack.c.l.b16 %v3183
      %v3297 = vunpack.c.l.b16 %v3184
      %v3298 = vunpack.c.l.b16 %v3185
      %v3299 = vunpack.c.l.b16 %v3186
      %v3300 = vunpack.c.l.b16 %v3187
      %v3301 = vunpack.c.l.b16 %v3188
      %v3302 = vunpack.c.l.b16 %v3189
      %v3303 = vunpack.c.l.b16 %v3190
      %v3304 = vunpack.c.l.b16 %v3191
      %v3305 = vunpack.c.l.b16 %v3192
      %v3306 = vunpack.c.l.b16 %v3193
      %v3307 = vunpack.c.l.b16 %v3194
      %v3308 = vunpack.c.l.b16 %v3195
      %v3309 = vunpack.c.l.b16 %v3196
      %v3310 = vunpack.c.l.b16 %v3197
      %v3311 = vunpack.c.l.b16 %v3198
      %v3312 = vunpack.c.l.b16 %v3199
      %v3313 = vunpack.c.l.b16 %v3200
      %v3314 = vunpack.c.l.b16 %v3201
      %v3315 = vunpack.c.l.b16 %v3202
      %v3316 = vunpack.c.l.b16 %v3203
      %v3317 = vunpack.c.l.b16 %v3204
      %v3318 = vunpack.c.l.b16 %v3205
      %v3319 = vunpack.c.l.b16 %v3206
      %v3320 = vpack.c.b16 %v3273, %v3272
      %v3321 = vpack.c.b16 %v3275, %v3274
      %v3322 = vpack.c.b16 %v3277, %v3276
      %v3323 = vpack.c.b16 %v3279, %v3278
      %v3324 = vpack.c.b16 %v3281, %v3280
      %v3325 = vpack.c.b16 %v3283, %v3282
      %v3326 = vpack.c.b16 %v3285, %v3284
      %v3327 = vpack.c.b16 %v3287, %v3286
      %v3328 = vpack.c.b16 %v3289, %v3288
      %v3329 = vpack.c.b16 %v3291, %v3290
      %v3330 = vpack.c.b16 %v3293, %v3292
      %v3331 = vpack.c.b16 %v3295, %v3294
      %v3332 = vpack.c.b16 %v3297, %v3296
      %v3333 = vpack.c.b16 %v3299, %v3298
      %v3334 = vpack.c.b16 %v3301, %v3300
      %v3335 = vpack.c.b16 %v3303, %v3302
      %v3336 = vpack.c.b16 %v3305, %v3304
      %v3337 = vpack.c.b16 %v3307, %v3306
      %v3338 = vpack.c.b16 %v3309, %v3308
      %v3339 = vpack.c.b16 %v3311, %v3310
      %v3340 = vpack.c.b16 %v3313, %v3312
      %v3341 = vpack.c.b16 %v3315, %v3314
      %v3342 = vpack.c.b16 %v3317, %v3316
      %v3343 = vpack.c.b16 %v3319, %v3318
      %v3384 = vunpack.c.l.b16 %v3208
      %v3385 = vunpack.c.l.b16 %v3209
      %v3386 = vunpack.c.l.b16 %v3210
      %v3387 = vunpack.c.l.b16 %v3211
      %v3388 = vunpack.c.l.b16 %v3212
      %v3389 = vunpack.c.l.b16 %v3213
      %v3390 = vunpack.c.l.b16 %v3214
      %v3391 = vunpack.c.l.b16 %v3215
      %v3392 = vunpack.c.l.b16 %v3216
      %v3393 = vunpack.c.l.b16 %v3217
      %v3394 = vunpack.c.l.b16 %v3218
      %v3395 = vunpack.c.l.b16 %v3219
      %v3396 = vunpack.c.l.b16 %v3220
      %v3397 = vunpack.c.l.b16 %v3221
      %v3398 = vunpack.c.l.b16 %v3222
      %v3399 = vunpack.c.l.b16 %v3223
      %v3400 = vpack.c.b16 %v3385, %v3384
      %v3401 = vpack.c.b16 %v3387, %v3386
      %v3402 = vpack.c.b16 %v3389, %v3388
      %v3403 = vpack.c.b16 %v3391, %v3390
      %v3404 = vpack.c.b16 %v3393, %v3392
      %v3405 = vpack.c.b16 %v3395, %v3394
      %v3406 = vpack.c.b16 %v3397, %v3396
      %v3407 = vpack.c.b16 %v3399, %v3398
      %3416 = vmatpush.bf16.msra.mxu0 %v3407
      %3417 = vmatpush.bf16.msra.mxu0 %v3406
      %3418 = vmatpush.bf16.msra.mxu0 %v3405
      %3419 = vmatpush.bf16.msra.mxu0 %v3404
      %3420 = vmatpush.bf16.msra.mxu0 %v3403
      %3421 = vmatpush.bf16.msra.mxu0 %v3402
      %3422 = vmatpush.bf16.msra.mxu0 %v3401
      %3423 = vmatpush.bf16.msra.mxu0 %v3400
      %3424 = vmatmul.bf16.gmra.mxu0 %v3320
      %v3425 = vpop.f32.mrf.mxu0
      %v3426 = vadd.f32 0.0, %v3425
      %v3427 = vpop.f32.mrf.mxu0
      %v3428 = vadd.f32 0.0, %v3427
      %3429 = vmatmul.bf16.gmra.mxu0 %v3321
      %v3430 = vpop.f32.mrf.mxu0
      %v3431 = vpop.f32.mrf.mxu0
      %v3432 = vadd.f32 0.0, %v3431
      %3433 = vmatmul.bf16.gmra.mxu0 %v3322
      %v3434 = vpop.f32.mrf.mxu0
      %v3435 = vadd.f32 0.0, %v3434
      %v3436 = vpop.f32.mrf.mxu0
      %3437 = vmatmul.bf16.gmra.mxu0 %v3323
      %v3438 = vpop.f32.mrf.mxu0
      %v3439 = vadd.f32 0.0, %v3438
      %v3440 = vpop.f32.mrf.mxu0
      %v3441 = vadd.f32 0.0, %v3440
      %3442 = vmatmul.bf16.gmra.mxu0 %v3324
      %v3443 = vpop.f32.mrf.mxu0
      %v3444 = vpop.f32.mrf.mxu0
      %v3445 = vadd.f32 0.0, %v3444
      %3446 = vmatmul.bf16.gmra.mxu0 %v3325
      %v3447 = vpop.f32.mrf.mxu0
      %v3448 = vadd.f32 0.0, %v3447
      %v3449 = vpop.f32.mrf.mxu0
      %3450 = vmatmul.bf16.gmra.mxu0 %v3326
      %v3451 = vpop.f32.mrf.mxu0
      %v3452 = vadd.f32 0.0, %v3451
      %v3453 = vpop.f32.mrf.mxu0
      %v3454 = vadd.f32 0.0, %v3453
      %3455 = vmatmul.bf16.gmra.mxu0 %v3327
      %v3456 = vpop.f32.mrf.mxu0
      %v3457 = vpop.f32.mrf.mxu0
      %v3458 = vadd.f32 0.0, %v3457
      %3459 = vmatmul.bf16.gmra.mxu0 %v3328
      %v3460 = vpop.f32.mrf.mxu0
      %v3461 = vadd.f32 0.0, %v3460
      %v3462 = vpop.f32.mrf.mxu0
      %3463 = vmatmul.bf16.gmra.mxu0 %v3329
      %v3464 = vpop.f32.mrf.mxu0
      %v3465 = vadd.f32 0.0, %v3464
      %v3466 = vpop.f32.mrf.mxu0
      %v3467 = vadd.f32 0.0, %v3466
      %3468 = vmatmul.bf16.gmra.mxu0 %v3330
      %v3469 = vpop.f32.mrf.mxu0
      %v3470 = vpop.f32.mrf.mxu0
      %v3471 = vadd.f32 0.0, %v3470
      %3472 = vmatmul.bf16.gmra.mxu0 %v3331
      %v3473 = vpop.f32.mrf.mxu0
      %v3474 = vadd.f32 0.0, %v3473
      %v3475 = vpop.f32.mrf.mxu0
      %3476 = vmatmul.bf16.gmra.mxu0 %v3332
      %v3477 = vpop.f32.mrf.mxu0
      %v3478 = vadd.f32 0.0, %v3477
      %v3479 = vpop.f32.mrf.mxu0
      %v3480 = vadd.f32 0.0, %v3479
      %3481 = vmatmul.bf16.gmra.mxu0 %v3333
      %v3482 = vpop.f32.mrf.mxu0
      %v3483 = vpop.f32.mrf.mxu0
      %v3484 = vadd.f32 0.0, %v3483
      %3485 = vmatmul.bf16.gmra.mxu0 %v3334
      %v3486 = vpop.f32.mrf.mxu0
      %v3487 = vadd.f32 0.0, %v3486
      %v3488 = vpop.f32.mrf.mxu0
      %3489 = vmatmul.bf16.gmra.mxu0 %v3335
      %v3490 = vpop.f32.mrf.mxu0
      %v3491 = vadd.f32 0.0, %v3490
      %v3492 = vpop.f32.mrf.mxu0
      %v3493 = vadd.f32 0.0, %v3492
      %3494 = vmatmul.bf16.gmra.mxu0 %v3336
      %v3495 = vpop.f32.mrf.mxu0
      %v3496 = vpop.f32.mrf.mxu0
      %v3497 = vadd.f32 0.0, %v3496
      %3498 = vmatmul.bf16.gmra.mxu0 %v3337
      %v3499 = vpop.f32.mrf.mxu0
      %v3500 = vadd.f32 0.0, %v3499
      %v3501 = vpop.f32.mrf.mxu0
      %3502 = vmatmul.bf16.gmra.mxu0 %v3338
      %v3503 = vpop.f32.mrf.mxu0
      %v3504 = vadd.f32 0.0, %v3503
      %v3505 = vpop.f32.mrf.mxu0
      %v3506 = vadd.f32 0.0, %v3505
      %3507 = vmatmul.bf16.gmra.mxu0 %v3339
      %v3508 = vpop.f32.mrf.mxu0
      %v3509 = vpop.f32.mrf.mxu0
      %v3510 = vadd.f32 0.0, %v3509
      %3511 = vmatmul.bf16.gmra.mxu0 %v3340
      %v3512 = vpop.f32.mrf.mxu0
      %v3513 = vadd.f32 0.0, %v3512
      %v3514 = vpop.f32.mrf.mxu0
      %3515 = vmatmul.bf16.gmra.mxu0 %v3341
      %v3516 = vpop.f32.mrf.mxu0
      %v3517 = vadd.f32 0.0, %v3516
      %v3518 = vpop.f32.mrf.mxu0
      %v3519 = vadd.f32 0.0, %v3518
      %3520 = vmatmul.bf16.gmra.mxu0 %v3342
      %v3521 = vpop.f32.mrf.mxu0
      %v3522 = vpop.f32.mrf.mxu0
      %v3523 = vadd.f32 0.0, %v3522
      %3524 = vmatmul.bf16.gmra.mxu0 %v3343
      %v3525 = vpop.f32.mrf.mxu0
      %v3526 = vadd.f32 0.0, %v3525
      %v3527 = vpop.f32.mrf.mxu0
      %3528 = vdwg.mxu0
      %v3529 = vadd.f32 %v3127, %v3426
      %v3530 = vadd.f32 %v3128, %v3428
      %v3531 = vadd.f32 %v3129, %v3432
      %v3532 = vadd.f32 %v3130, %v3435
      %v3533 = vadd.f32 %v3131, %v3439
      %v3534 = vadd.f32 %v3132, %v3441
      %v3535 = vadd.f32 %v3133, %v3445
      %v3536 = vadd.f32 %v3134, %v3448
      %v3537 = vadd.f32 %v3135, %v3452
      %v3538 = vadd.f32 %v3136, %v3454
      %v3539 = vadd.f32 %v3137, %v3458
      %v3540 = vadd.f32 %v3138, %v3461
      %v3541 = vadd.f32 %v3139, %v3465
      %v3542 = vadd.f32 %v3140, %v3467
      %v3543 = vadd.f32 %v3141, %v3471
      %v3544 = vadd.f32 %v3142, %v3474
      %v3545 = vadd.f32 %v3143, %v3478
      %v3546 = vadd.f32 %v3144, %v3480
      %v3547 = vadd.f32 %v3145, %v3484
      %v3548 = vadd.f32 %v3146, %v3487
      %v3549 = vadd.f32 %v3147, %v3491
      %v3550 = vadd.f32 %v3148, %v3493
      %v3551 = vadd.f32 %v3149, %v3497
      %v3552 = vadd.f32 %v3150, %v3500
      %v3553 = vadd.f32 %v3151, %v3504
      %v3554 = vadd.f32 %v3152, %v3506
      %v3555 = vadd.f32 %v3153, %v3510
      %v3556 = vadd.f32 %v3154, %v3513
      %v3557 = vadd.f32 %v3155, %v3517
      %v3558 = vadd.f32 %v3156, %v3519
      %v3559 = vadd.f32 %v3157, %v3523
      %v3560 = vadd.f32 %v3158, %v3526
      %v3561 = vld [vmem:[#allocation2 + $0x18] sm:$0xf]
      %v3562 = vld [vmem:[#allocation2 + $0x1c] sm:$0xf]
      %v3563 = vld [vmem:[#allocation2 + $0x20] sm:$0xf]
      %v3564 = vld [vmem:[#allocation2 + $0x24] sm:$0xf]
      %v3565 = vld [vmem:[#allocation2 + $0x28] sm:$0xf]
      %v3566 = vld [vmem:[#allocation2 + $0x2c] sm:$0xf]
      %v3567 = vld [vmem:[#allocation2 + $0x30] sm:$0xf]
      %v3568 = vld [vmem:[#allocation2 + $0x34] sm:$0xf]
      %v3569 = vld [vmem:[#allocation2 + $0x38] sm:$0xf]
      %v3570 = vld [vmem:[#allocation2 + $0x3c] sm:$0xf]
      %v3571 = vld [vmem:[#allocation2 + $0x40] sm:$0xf]
      %v3572 = vld [vmem:[#allocation2 + $0x44] sm:$0xf]
      %v3573 = vld [vmem:[#allocation2 + $0x48] sm:$0xf]
      %v3574 = vld [vmem:[#allocation2 + $0x4c] sm:$0xf]
      %v3575 = vld [vmem:[#allocation2 + $0x50] sm:$0xf]
      %v3576 = vld [vmem:[#allocation2 + $0x54] sm:$0xf]
      %v3577 = vld [vmem:[#allocation2 + $0x58] sm:$0xf]
      %v3578 = vld [vmem:[#allocation2 + $0x5c] sm:$0xf]
      %v3579 = vld [vmem:[#allocation2 + $0x60] sm:$0xf]
      %v3580 = vld [vmem:[#allocation2 + $0x64] sm:$0xf]
      %v3581 = vld [vmem:[#allocation2 + $0x68] sm:$0xf]
      %v3582 = vld [vmem:[#allocation2 + $0x6c] sm:$0xf]
      %v3583 = vld [vmem:[#allocation2 + $0x70] sm:$0xf]
      %v3584 = vld [vmem:[#allocation2 + $0x74] sm:$0xf]
      %v3585 = vld [vmem:[#allocation2 + $0x78] sm:$0xf]
      %v3586 = vld [vmem:[#allocation2 + $0x7c] sm:$0xf]
      %v3587 = vld [vmem:[#allocation2 + $0x80] sm:$0xf]
      %v3588 = vld [vmem:[#allocation2 + $0x84] sm:$0xf]
      %v3589 = vld [vmem:[#allocation2 + $0x88] sm:$0xf]
      %v3590 = vld [vmem:[#allocation2 + $0x8c] sm:$0xf]
      %v3591 = vld [vmem:[#allocation2 + $0x90] sm:$0xf]
      %v3592 = vld [vmem:[#allocation2 + $0x94] sm:$0xf]
      %v3593 = vld [vmem:[#allocation2 + $0x98] sm:$0xf]
      %v3594 = vld [vmem:[#allocation2 + $0x9c] sm:$0xf]
      %v3595 = vld [vmem:[#allocation2 + $0xa0] sm:$0xf]
      %v3596 = vld [vmem:[#allocation2 + $0xa4] sm:$0xf]
      %v3597 = vld [vmem:[#allocation2 + $0xa8] sm:$0xf]
      %v3598 = vld [vmem:[#allocation2 + $0xac] sm:$0xf]
      %v3599 = vld [vmem:[#allocation2 + $0xb0] sm:$0xf]
      %v3600 = vld [vmem:[#allocation2 + $0xb4] sm:$0xf]
      %v3601 = vld [vmem:[#allocation2 + $0xb8] sm:$0xf]
      %v3602 = vld [vmem:[#allocation2 + $0xbc] sm:$0xf]
      %v3603 = vld [vmem:[#allocation2 + $0xc0] sm:$0xf]
      %v3604 = vld [vmem:[#allocation2 + $0xc4] sm:$0xf]
      %v3605 = vld [vmem:[#allocation2 + $0xc8] sm:$0xf]
      %v3606 = vld [vmem:[#allocation2 + $0xcc] sm:$0xf]
      %v3607 = vld [vmem:[#allocation2 + $0xd0] sm:$0xf]
      %v3608 = vld [vmem:[#allocation2 + $0xd4] sm:$0xf]
      %v3609 = vld [vmem:[#allocation2 + $0xd8] sm:$0x1]
      %s3610 = scalar_lea.vmem %s260, 448
      %v3611 = vld [vmem:[%s3610] sm:$0xf]
      %v3612 = vld [vmem:[%s3610 + $0x4] sm:$0xf]
      %v3613 = vld [vmem:[%s3610 + $0x8] sm:$0xf]
      %v3614 = vld [vmem:[%s3610 + $0xc] sm:$0xf]
      %v3615 = vld [vmem:[%s3610 + $0x10] sm:$0xf]
      %v3616 = vld [vmem:[%s3610 + $0x14] sm:$0xf]
      %v3617 = vld [vmem:[%s3610 + $0x18] sm:$0xf]
      %v3618 = vld [vmem:[%s3610 + $0x1c] sm:$0xf]
      %v3619 = vld [vmem:[%s3610 + $0x20] sm:$0xf]
      %v3620 = vld [vmem:[%s3610 + $0x24] sm:$0xf]
      %v3621 = vld [vmem:[%s3610 + $0x28] sm:$0xf]
      %v3622 = vld [vmem:[%s3610 + $0x2c] sm:$0xf]
      %v3623 = vld [vmem:[%s3610 + $0x30] sm:$0xf]
      %v3624 = vld [vmem:[%s3610 + $0x34] sm:$0xf]
      %v3625 = vld [vmem:[%s3610 + $0x38] sm:$0xf]
      %v3626 = vld [vmem:[%s3610 + $0x3c] sm:$0xf]
      %v3676 = vunpack.c.l.b16 %v3561
      %v3677 = vunpack.c.l.b16 %v3562
      %v3678 = vunpack.c.l.b16 %v3563
      %v3679 = vunpack.c.l.b16 %v3564
      %v3680 = vunpack.c.l.b16 %v3565
      %v3681 = vunpack.c.l.b16 %v3566
      %v3682 = vunpack.c.l.b16 %v3567
      %v3683 = vunpack.c.l.b16 %v3568
      %v3684 = vunpack.c.l.b16 %v3569
      %v3685 = vunpack.c.l.b16 %v3570
      %v3686 = vunpack.c.l.b16 %v3571
      %v3687 = vunpack.c.l.b16 %v3572
      %v3688 = vunpack.c.l.b16 %v3573
      %v3689 = vunpack.c.l.b16 %v3574
      %v3690 = vunpack.c.l.b16 %v3575
      %v3691 = vunpack.c.l.b16 %v3576
      %v3692 = vunpack.c.l.b16 %v3577
      %v3693 = vunpack.c.l.b16 %v3578
      %v3694 = vunpack.c.l.b16 %v3579
      %v3695 = vunpack.c.l.b16 %v3580
      %v3696 = vunpack.c.l.b16 %v3581
      %v3697 = vunpack.c.l.b16 %v3582
      %v3698 = vunpack.c.l.b16 %v3583
      %v3699 = vunpack.c.l.b16 %v3584
      %v3700 = vunpack.c.l.b16 %v3585
      %v3701 = vunpack.c.l.b16 %v3586
      %v3702 = vunpack.c.l.b16 %v3587
      %v3703 = vunpack.c.l.b16 %v3588
      %v3704 = vunpack.c.l.b16 %v3589
      %v3705 = vunpack.c.l.b16 %v3590
      %v3706 = vunpack.c.l.b16 %v3591
      %v3707 = vunpack.c.l.b16 %v3592
      %v3708 = vunpack.c.l.b16 %v3593
      %v3709 = vunpack.c.l.b16 %v3594
      %v3710 = vunpack.c.l.b16 %v3595
      %v3711 = vunpack.c.l.b16 %v3596
      %v3712 = vunpack.c.l.b16 %v3597
      %v3713 = vunpack.c.l.b16 %v3598
      %v3714 = vunpack.c.l.b16 %v3599
      %v3715 = vunpack.c.l.b16 %v3600
      %v3716 = vunpack.c.l.b16 %v3601
      %v3717 = vunpack.c.l.b16 %v3602
      %v3718 = vunpack.c.l.b16 %v3603
      %v3719 = vunpack.c.l.b16 %v3604
      %v3720 = vunpack.c.l.b16 %v3605
      %v3721 = vunpack.c.l.b16 %v3606
      %v3722 = vunpack.c.l.b16 %v3607
      %v3723 = vunpack.c.l.b16 %v3608
      %v3724 = vunpack.c.l.b16 %v3609
      %v3725 = vpack.c.b16 %v3677, %v3676
      %v3726 = vpack.c.b16 %v3679, %v3678
      %v3727 = vpack.c.b16 %v3681, %v3680
      %v3728 = vpack.c.b16 %v3683, %v3682
      %v3729 = vpack.c.b16 %v3685, %v3684
      %v3730 = vpack.c.b16 %v3687, %v3686
      %v3731 = vpack.c.b16 %v3689, %v3688
      %v3732 = vpack.c.b16 %v3691, %v3690
      %v3733 = vpack.c.b16 %v3693, %v3692
      %v3734 = vpack.c.b16 %v3695, %v3694
      %v3735 = vpack.c.b16 %v3697, %v3696
      %v3736 = vpack.c.b16 %v3699, %v3698
      %v3737 = vpack.c.b16 %v3701, %v3700
      %v3738 = vpack.c.b16 %v3703, %v3702
      %v3739 = vpack.c.b16 %v3705, %v3704
      %v3740 = vpack.c.b16 %v3707, %v3706
      %v3741 = vpack.c.b16 %v3709, %v3708
      %v3742 = vpack.c.b16 %v3711, %v3710
      %v3743 = vpack.c.b16 %v3713, %v3712
      %v3744 = vpack.c.b16 %v3715, %v3714
      %v3745 = vpack.c.b16 %v3717, %v3716
      %v3746 = vpack.c.b16 %v3719, %v3718
      %v3747 = vpack.c.b16 %v3721, %v3720
      %v3748 = vpack.c.b16 %v3723, %v3722
      %v3749 = vpack.c.b16 %v3724, %v3724
      %v3751 = vshrl.u32 %v3725, 16
      %v3753 = vshll.u32 %v3725, 16
      %v3755 = vrot.slane %v3753, 1
      %v3756 = vor.u32 %v3751, %v3755
      %v3758 = vshll.u32 %v3726, 16
      %v3760 = vrot.slane %v3758, 1
      %v3761 = vsel %vm1013, %v3756, %v3760
      %v3762 = vshrl.u32 %v3726, 16
      %v3764 = vor.u32 %v3762, %v3760
      %v3766 = vshll.u32 %v3727, 16
      %v3768 = vrot.slane %v3766, 1
      %v3769 = vsel %vm1013, %v3764, %v3768
      %v3770 = vshrl.u32 %v3727, 16
      %v3772 = vor.u32 %v3770, %v3768
      %v3774 = vshll.u32 %v3728, 16
      %v3776 = vrot.slane %v3774, 1
      %v3777 = vsel %vm1013, %v3772, %v3776
      %v3778 = vshrl.u32 %v3728, 16
      %v3780 = vor.u32 %v3778, %v3776
      %v3782 = vshll.u32 %v3729, 16
      %v3784 = vrot.slane %v3782, 1
      %v3785 = vsel %vm1013, %v3780, %v3784
      %v3786 = vshrl.u32 %v3729, 16
      %v3788 = vor.u32 %v3786, %v3784
      %v3790 = vshll.u32 %v3730, 16
      %v3792 = vrot.slane %v3790, 1
      %v3793 = vsel %vm1013, %v3788, %v3792
      %v3794 = vshrl.u32 %v3730, 16
      %v3796 = vor.u32 %v3794, %v3792
      %v3798 = vshll.u32 %v3731, 16
      %v3800 = vrot.slane %v3798, 1
      %v3801 = vsel %vm1013, %v3796, %v3800
      %v3802 = vshrl.u32 %v3731, 16
      %v3804 = vor.u32 %v3802, %v3800
      %v3806 = vshll.u32 %v3732, 16
      %v3808 = vrot.slane %v3806, 1
      %v3809 = vsel %vm1013, %v3804, %v3808
      %v3810 = vshrl.u32 %v3732, 16
      %v3812 = vor.u32 %v3810, %v3808
      %v3814 = vshll.u32 %v3733, 16
      %v3816 = vrot.slane %v3814, 1
      %v3817 = vsel %vm1013, %v3812, %v3816
      %v3818 = vshrl.u32 %v3733, 16
      %v3820 = vor.u32 %v3818, %v3816
      %v3822 = vshll.u32 %v3734, 16
      %v3824 = vrot.slane %v3822, 1
      %v3825 = vsel %vm1013, %v3820, %v3824
      %v3826 = vshrl.u32 %v3734, 16
      %v3828 = vor.u32 %v3826, %v3824
      %v3830 = vshll.u32 %v3735, 16
      %v3832 = vrot.slane %v3830, 1
      %v3833 = vsel %vm1013, %v3828, %v3832
      %v3834 = vshrl.u32 %v3735, 16
      %v3836 = vor.u32 %v3834, %v3832
      %v3838 = vshll.u32 %v3736, 16
      %v3840 = vrot.slane %v3838, 1
      %v3841 = vsel %vm1013, %v3836, %v3840
      %v3842 = vshrl.u32 %v3736, 16
      %v3844 = vor.u32 %v3842, %v3840
      %v3846 = vshll.u32 %v3737, 16
      %v3848 = vrot.slane %v3846, 1
      %v3849 = vsel %vm1013, %v3844, %v3848
      %v3850 = vshrl.u32 %v3737, 16
      %v3852 = vor.u32 %v3850, %v3848
      %v3854 = vshll.u32 %v3738, 16
      %v3856 = vrot.slane %v3854, 1
      %v3857 = vsel %vm1013, %v3852, %v3856
      %v3858 = vshrl.u32 %v3738, 16
      %v3860 = vor.u32 %v3858, %v3856
      %v3862 = vshll.u32 %v3739, 16
      %v3864 = vrot.slane %v3862, 1
      %v3865 = vsel %vm1013, %v3860, %v3864
      %v3866 = vshrl.u32 %v3739, 16
      %v3868 = vor.u32 %v3866, %v3864
      %v3870 = vshll.u32 %v3740, 16
      %v3872 = vrot.slane %v3870, 1
      %v3873 = vsel %vm1013, %v3868, %v3872
      %v3874 = vshrl.u32 %v3740, 16
      %v3876 = vor.u32 %v3874, %v3872
      %v3878 = vshll.u32 %v3741, 16
      %v3880 = vrot.slane %v3878, 1
      %v3881 = vsel %vm1013, %v3876, %v3880
      %v3882 = vshrl.u32 %v3741, 16
      %v3884 = vor.u32 %v3882, %v3880
      %v3886 = vshll.u32 %v3742, 16
      %v3888 = vrot.slane %v3886, 1
      %v3889 = vsel %vm1013, %v3884, %v3888
      %v3890 = vshrl.u32 %v3742, 16
      %v3892 = vor.u32 %v3890, %v3888
      %v3894 = vshll.u32 %v3743, 16
      %v3896 = vrot.slane %v3894, 1
      %v3897 = vsel %vm1013, %v3892, %v3896
      %v3898 = vshrl.u32 %v3743, 16
      %v3900 = vor.u32 %v3898, %v3896
      %v3902 = vshll.u32 %v3744, 16
      %v3904 = vrot.slane %v3902, 1
      %v3905 = vsel %vm1013, %v3900, %v3904
      %v3906 = vshrl.u32 %v3744, 16
      %v3908 = vor.u32 %v3906, %v3904
      %v3910 = vshll.u32 %v3745, 16
      %v3912 = vrot.slane %v3910, 1
      %v3913 = vsel %vm1013, %v3908, %v3912
      %v3914 = vshrl.u32 %v3745, 16
      %v3916 = vor.u32 %v3914, %v3912
      %v3918 = vshll.u32 %v3746, 16
      %v3920 = vrot.slane %v3918, 1
      %v3921 = vsel %vm1013, %v3916, %v3920
      %v3922 = vshrl.u32 %v3746, 16
      %v3924 = vor.u32 %v3922, %v3920
      %v3926 = vshll.u32 %v3747, 16
      %v3928 = vrot.slane %v3926, 1
      %v3929 = vsel %vm1013, %v3924, %v3928
      %v3930 = vshrl.u32 %v3747, 16
      %v3932 = vor.u32 %v3930, %v3928
      %v3934 = vshll.u32 %v3748, 16
      %v3936 = vrot.slane %v3934, 1
      %v3937 = vsel %vm1013, %v3932, %v3936
      %v3938 = vshrl.u32 %v3748, 16
      %v3940 = vor.u32 %v3938, %v3936
      %v3942 = vshll.u32 %v3749, 16
      %v3944 = vrot.slane %v3942, 1
      %v3945 = vsel %vm1013, %v3940, %v3944
      %v3986 = vunpack.c.l.b16 %v3611
      %v3987 = vunpack.c.l.b16 %v3612
      %v3988 = vunpack.c.l.b16 %v3613
      %v3989 = vunpack.c.l.b16 %v3614
      %v3990 = vunpack.c.l.b16 %v3615
      %v3991 = vunpack.c.l.b16 %v3616
      %v3992 = vunpack.c.l.b16 %v3617
      %v3993 = vunpack.c.l.b16 %v3618
      %v3994 = vunpack.c.l.b16 %v3619
      %v3995 = vunpack.c.l.b16 %v3620
      %v3996 = vunpack.c.l.b16 %v3621
      %v3997 = vunpack.c.l.b16 %v3622
      %v3998 = vunpack.c.l.b16 %v3623
      %v3999 = vunpack.c.l.b16 %v3624
      %v4000 = vunpack.c.l.b16 %v3625
      %v4001 = vunpack.c.l.b16 %v3626
      %v4002 = vpack.c.b16 %v3987, %v3986
      %v4003 = vpack.c.b16 %v3989, %v3988
      %v4004 = vpack.c.b16 %v3991, %v3990
      %v4005 = vpack.c.b16 %v3993, %v3992
      %v4006 = vpack.c.b16 %v3995, %v3994
      %v4007 = vpack.c.b16 %v3997, %v3996
      %v4008 = vpack.c.b16 %v3999, %v3998
      %v4009 = vpack.c.b16 %v4001, %v4000
      %4018 = vmatpush.bf16.msra.mxu0 %v4009
      %4019 = vmatpush.bf16.msra.mxu0 %v4008
      %4020 = vmatpush.bf16.msra.mxu0 %v4007
      %4021 = vmatpush.bf16.msra.mxu0 %v4006
      %4022 = vmatpush.bf16.msra.mxu0 %v4005
      %4023 = vmatpush.bf16.msra.mxu0 %v4004
      %4024 = vmatpush.bf16.msra.mxu0 %v4003
      %4025 = vmatpush.bf16.msra.mxu0 %v4002
      %4026 = vmatmul.bf16.gmra.mxu0 %v3761
      %v4027 = vpop.f32.mrf.mxu0
      %v4028 = vadd.f32 0.0, %v4027
      %v4029 = vpop.f32.mrf.mxu0
      %v4030 = vadd.f32 0.0, %v4029
      %4031 = vmatmul.bf16.gmra.mxu0 %v3769
      %v4032 = vpop.f32.mrf.mxu0
      %v4033 = vpop.f32.mrf.mxu0
      %v4034 = vadd.f32 0.0, %v4033
      %4035 = vmatmul.bf16.gmra.mxu0 %v3777
      %v4036 = vpop.f32.mrf.mxu0
      %v4037 = vadd.f32 0.0, %v4036
      %v4038 = vpop.f32.mrf.mxu0
      %4039 = vmatmul.bf16.gmra.mxu0 %v3785
      %v4040 = vpop.f32.mrf.mxu0
      %v4041 = vadd.f32 0.0, %v4040
      %v4042 = vpop.f32.mrf.mxu0
      %v4043 = vadd.f32 0.0, %v4042
      %4044 = vmatmul.bf16.gmra.mxu0 %v3793
      %v4045 = vpop.f32.mrf.mxu0
      %v4046 = vpop.f32.mrf.mxu0
      %v4047 = vadd.f32 0.0, %v4046
      %4048 = vmatmul.bf16.gmra.mxu0 %v3801
      %v4049 = vpop.f32.mrf.mxu0
      %v4050 = vadd.f32 0.0, %v4049
      %v4051 = vpop.f32.mrf.mxu0
      %4052 = vmatmul.bf16.gmra.mxu0 %v3809
      %v4053 = vpop.f32.mrf.mxu0
      %v4054 = vadd.f32 0.0, %v4053
      %v4055 = vpop.f32.mrf.mxu0
      %v4056 = vadd.f32 0.0, %v4055
      %4057 = vmatmul.bf16.gmra.mxu0 %v3817
      %v4058 = vpop.f32.mrf.mxu0
      %v4059 = vpop.f32.mrf.mxu0
      %v4060 = vadd.f32 0.0, %v4059
      %4061 = vmatmul.bf16.gmra.mxu0 %v3825
      %v4062 = vpop.f32.mrf.mxu0
      %v4063 = vadd.f32 0.0, %v4062
      %v4064 = vpop.f32.mrf.mxu0
      %4065 = vmatmul.bf16.gmra.mxu0 %v3833
      %v4066 = vpop.f32.mrf.mxu0
      %v4067 = vadd.f32 0.0, %v4066
      %v4068 = vpop.f32.mrf.mxu0
      %v4069 = vadd.f32 0.0, %v4068
      %4070 = vmatmul.bf16.gmra.mxu0 %v3841
      %v4071 = vpop.f32.mrf.mxu0
      %v4072 = vpop.f32.mrf.mxu0
      %v4073 = vadd.f32 0.0, %v4072
      %4074 = vmatmul.bf16.gmra.mxu0 %v3849
      %v4075 = vpop.f32.mrf.mxu0
      %v4076 = vadd.f32 0.0, %v4075
      %v4077 = vpop.f32.mrf.mxu0
      %4078 = vmatmul.bf16.gmra.mxu0 %v3857
      %v4079 = vpop.f32.mrf.mxu0
      %v4080 = vadd.f32 0.0, %v4079
      %v4081 = vpop.f32.mrf.mxu0
      %v4082 = vadd.f32 0.0, %v4081
      %4083 = vmatmul.bf16.gmra.mxu0 %v3865
      %v4084 = vpop.f32.mrf.mxu0
      %v4085 = vpop.f32.mrf.mxu0
      %v4086 = vadd.f32 0.0, %v4085
      %4087 = vmatmul.bf16.gmra.mxu0 %v3873
      %v4088 = vpop.f32.mrf.mxu0
      %v4089 = vadd.f32 0.0, %v4088
      %v4090 = vpop.f32.mrf.mxu0
      %4091 = vmatmul.bf16.gmra.mxu0 %v3881
      %v4092 = vpop.f32.mrf.mxu0
      %v4093 = vadd.f32 0.0, %v4092
      %v4094 = vpop.f32.mrf.mxu0
      %v4095 = vadd.f32 0.0, %v4094
      %4096 = vmatmul.bf16.gmra.mxu0 %v3889
      %v4097 = vpop.f32.mrf.mxu0
      %v4098 = vpop.f32.mrf.mxu0
      %v4099 = vadd.f32 0.0, %v4098
      %4100 = vmatmul.bf16.gmra.mxu0 %v3897
      %v4101 = vpop.f32.mrf.mxu0
      %v4102 = vadd.f32 0.0, %v4101
      %v4103 = vpop.f32.mrf.mxu0
      %4104 = vmatmul.bf16.gmra.mxu0 %v3905
      %v4105 = vpop.f32.mrf.mxu0
      %v4106 = vadd.f32 0.0, %v4105
      %v4107 = vpop.f32.mrf.mxu0
      %v4108 = vadd.f32 0.0, %v4107
      %4109 = vmatmul.bf16.gmra.mxu0 %v3913
      %v4110 = vpop.f32.mrf.mxu0
      %v4111 = vpop.f32.mrf.mxu0
      %v4112 = vadd.f32 0.0, %v4111
      %4113 = vmatmul.bf16.gmra.mxu0 %v3921
      %v4114 = vpop.f32.mrf.mxu0
      %v4115 = vadd.f32 0.0, %v4114
      %v4116 = vpop.f32.mrf.mxu0
      %4117 = vmatmul.bf16.gmra.mxu0 %v3929
      %v4118 = vpop.f32.mrf.mxu0
      %v4119 = vadd.f32 0.0, %v4118
      %v4120 = vpop.f32.mrf.mxu0
      %v4121 = vadd.f32 0.0, %v4120
      %4122 = vmatmul.bf16.gmra.mxu0 %v3937
      %v4123 = vpop.f32.mrf.mxu0
      %v4124 = vpop.f32.mrf.mxu0
      %v4125 = vadd.f32 0.0, %v4124
      %4126 = vmatmul.bf16.gmra.mxu0 %v3945
      %v4127 = vpop.f32.mrf.mxu0
      %v4128 = vadd.f32 0.0, %v4127
      %v4129 = vpop.f32.mrf.mxu0
      %4130 = vdwg.mxu0
      %v4131 = vadd.f32 %v3529, %v4028
      %v4132 = vadd.f32 %v3530, %v4030
      %v4133 = vadd.f32 %v3531, %v4034
      %v4134 = vadd.f32 %v3532, %v4037
      %v4135 = vadd.f32 %v3533, %v4041
      %v4136 = vadd.f32 %v3534, %v4043
      %v4137 = vadd.f32 %v3535, %v4047
      %v4138 = vadd.f32 %v3536, %v4050
      %v4139 = vadd.f32 %v3537, %v4054
      %v4140 = vadd.f32 %v3538, %v4056
      %v4141 = vadd.f32 %v3539, %v4060
      %v4142 = vadd.f32 %v3540, %v4063
      %v4143 = vadd.f32 %v3541, %v4067
      %v4144 = vadd.f32 %v3542, %v4069
      %v4145 = vadd.f32 %v3543, %v4073
      %v4146 = vadd.f32 %v3544, %v4076
      %v4147 = vadd.f32 %v3545, %v4080
      %v4148 = vadd.f32 %v3546, %v4082
      %v4149 = vadd.f32 %v3547, %v4086
      %v4150 = vadd.f32 %v3548, %v4089
      %v4151 = vadd.f32 %v3549, %v4093
      %v4152 = vadd.f32 %v3550, %v4095
      %v4153 = vadd.f32 %v3551, %v4099
      %v4154 = vadd.f32 %v3552, %v4102
      %v4155 = vadd.f32 %v3553, %v4106
      %v4156 = vadd.f32 %v3554, %v4108
      %v4157 = vadd.f32 %v3555, %v4112
      %v4158 = vadd.f32 %v3556, %v4115
      %v4159 = vadd.f32 %v3557, %v4119
      %v4160 = vadd.f32 %v3558, %v4121
      %v4161 = vadd.f32 %v3559, %v4125
      %v4162 = vadd.f32 %v3560, %v4128
      %v4163 = vld [vmem:[#allocation2 + $0x18] sm:$0xe]
      %s4164 = scalar_lea.vmem %s260, 512
      %v4165 = vld [vmem:[%s4164] sm:$0xf]
      %v4166 = vld [vmem:[%s4164 + $0x4] sm:$0xf]
      %v4167 = vld [vmem:[%s4164 + $0x8] sm:$0xf]
      %v4168 = vld [vmem:[%s4164 + $0xc] sm:$0xf]
      %v4169 = vld [vmem:[%s4164 + $0x10] sm:$0xf]
      %v4170 = vld [vmem:[%s4164 + $0x14] sm:$0xf]
      %v4171 = vld [vmem:[%s4164 + $0x18] sm:$0xf]
      %v4172 = vld [vmem:[%s4164 + $0x1c] sm:$0xf]
      %v4173 = vld [vmem:[%s4164 + $0x20] sm:$0xf]
      %v4174 = vld [vmem:[%s4164 + $0x24] sm:$0xf]
      %v4175 = vld [vmem:[%s4164 + $0x28] sm:$0xf]
      %v4176 = vld [vmem:[%s4164 + $0x2c] sm:$0xf]
      %v4177 = vld [vmem:[%s4164 + $0x30] sm:$0xf]
      %v4178 = vld [vmem:[%s4164 + $0x34] sm:$0xf]
      %v4179 = vld [vmem:[%s4164 + $0x38] sm:$0xf]
      %v4180 = vld [vmem:[%s4164 + $0x3c] sm:$0xf]
      %v4182 = vunpack.c.l.b16 %v4163
      %v4183 = vpack.c.b16 %v3677, %v4182
      %v4184 = vrot.slane %v4183, 1
      %v4185 = vrot.slane %v3726, 1
      %v4186 = vsel %vm1601, %v4184, %v4185
      %v4187 = vrot.slane %v3727, 1
      %v4188 = vsel %vm1601, %v4185, %v4187
      %v4189 = vrot.slane %v3728, 1
      %v4190 = vsel %vm1601, %v4187, %v4189
      %v4191 = vrot.slane %v3729, 1
      %v4192 = vsel %vm1601, %v4189, %v4191
      %v4193 = vrot.slane %v3730, 1
      %v4194 = vsel %vm1601, %v4191, %v4193
      %v4195 = vrot.slane %v3731, 1
      %v4196 = vsel %vm1601, %v4193, %v4195
      %v4197 = vrot.slane %v3732, 1
      %v4198 = vsel %vm1601, %v4195, %v4197
      %v4199 = vrot.slane %v3733, 1
      %v4200 = vsel %vm1601, %v4197, %v4199
      %v4201 = vrot.slane %v3734, 1
      %v4202 = vsel %vm1601, %v4199, %v4201
      %v4203 = vrot.slane %v3735, 1
      %v4204 = vsel %vm1601, %v4201, %v4203
      %v4205 = vrot.slane %v3736, 1
      %v4206 = vsel %vm1601, %v4203, %v4205
      %v4207 = vrot.slane %v3737, 1
      %v4208 = vsel %vm1601, %v4205, %v4207
      %v4209 = vrot.slane %v3738, 1
      %v4210 = vsel %vm1601, %v4207, %v4209
      %v4211 = vrot.slane %v3739, 1
      %v4212 = vsel %vm1601, %v4209, %v4211
      %v4213 = vrot.slane %v3740, 1
      %v4214 = vsel %vm1601, %v4211, %v4213
      %v4215 = vrot.slane %v3741, 1
      %v4216 = vsel %vm1601, %v4213, %v4215
      %v4217 = vrot.slane %v3742, 1
      %v4218 = vsel %vm1601, %v4215, %v4217
      %v4219 = vrot.slane %v3743, 1
      %v4220 = vsel %vm1601, %v4217, %v4219
      %v4221 = vrot.slane %v3744, 1
      %v4222 = vsel %vm1601, %v4219, %v4221
      %v4223 = vrot.slane %v3745, 1
      %v4224 = vsel %vm1601, %v4221, %v4223
      %v4225 = vrot.slane %v3746, 1
      %v4226 = vsel %vm1601, %v4223, %v4225
      %v4227 = vrot.slane %v3747, 1
      %v4228 = vsel %vm1601, %v4225, %v4227
      %v4229 = vrot.slane %v3748, 1
      %v4230 = vsel %vm1601, %v4227, %v4229
      %v4231 = vrot.slane %v3749, 1
      %v4232 = vsel %vm1601, %v4229, %v4231
      %v4273 = vunpack.c.l.b16 %v4165
      %v4274 = vunpack.c.l.b16 %v4166
      %v4275 = vunpack.c.l.b16 %v4167
      %v4276 = vunpack.c.l.b16 %v4168
      %v4277 = vunpack.c.l.b16 %v4169
      %v4278 = vunpack.c.l.b16 %v4170
      %v4279 = vunpack.c.l.b16 %v4171
      %v4280 = vunpack.c.l.b16 %v4172
      %v4281 = vunpack.c.l.b16 %v4173
      %v4282 = vunpack.c.l.b16 %v4174
      %v4283 = vunpack.c.l.b16 %v4175
      %v4284 = vunpack.c.l.b16 %v4176
      %v4285 = vunpack.c.l.b16 %v4177
      %v4286 = vunpack.c.l.b16 %v4178
      %v4287 = vunpack.c.l.b16 %v4179
      %v4288 = vunpack.c.l.b16 %v4180
      %v4289 = vpack.c.b16 %v4274, %v4273
      %v4290 = vpack.c.b16 %v4276, %v4275
      %v4291 = vpack.c.b16 %v4278, %v4277
      %v4292 = vpack.c.b16 %v4280, %v4279
      %v4293 = vpack.c.b16 %v4282, %v4281
      %v4294 = vpack.c.b16 %v4284, %v4283
      %v4295 = vpack.c.b16 %v4286, %v4285
      %v4296 = vpack.c.b16 %v4288, %v4287
      %4305 = vmatpush.bf16.msra.mxu0 %v4296
      %4306 = vmatpush.bf16.msra.mxu0 %v4295
      %4307 = vmatpush.bf16.msra.mxu0 %v4294
      %4308 = vmatpush.bf16.msra.mxu0 %v4293
      %4309 = vmatpush.bf16.msra.mxu0 %v4292
      %4310 = vmatpush.bf16.msra.mxu0 %v4291
      %4311 = vmatpush.bf16.msra.mxu0 %v4290
      %4312 = vmatpush.bf16.msra.mxu0 %v4289
      %4313 = vmatmul.bf16.gmra.mxu0 %v4186
      %v4314 = vpop.f32.mrf.mxu0
      %v4315 = vadd.f32 0.0, %v4314
      %v4316 = vpop.f32.mrf.mxu0
      %v4317 = vadd.f32 0.0, %v4316
      %4318 = vmatmul.bf16.gmra.mxu0 %v4188
      %v4319 = vpop.f32.mrf.mxu0
      %v4320 = vpop.f32.mrf.mxu0
      %v4321 = vadd.f32 0.0, %v4320
      %4322 = vmatmul.bf16.gmra.mxu0 %v4190
      %v4323 = vpop.f32.mrf.mxu0
      %v4324 = vadd.f32 0.0, %v4323
      %v4325 = vpop.f32.mrf.mxu0
      %4326 = vmatmul.bf16.gmra.mxu0 %v4192
      %v4327 = vpop.f32.mrf.mxu0
      %v4328 = vadd.f32 0.0, %v4327
      %v4329 = vpop.f32.mrf.mxu0
      %v4330 = vadd.f32 0.0, %v4329
      %4331 = vmatmul.bf16.gmra.mxu0 %v4194
      %v4332 = vpop.f32.mrf.mxu0
      %v4333 = vpop.f32.mrf.mxu0
      %v4334 = vadd.f32 0.0, %v4333
      %4335 = vmatmul.bf16.gmra.mxu0 %v4196
      %v4336 = vpop.f32.mrf.mxu0
      %v4337 = vadd.f32 0.0, %v4336
      %v4338 = vpop.f32.mrf.mxu0
      %4339 = vmatmul.bf16.gmra.mxu0 %v4198
      %v4340 = vpop.f32.mrf.mxu0
      %v4341 = vadd.f32 0.0, %v4340
      %v4342 = vpop.f32.mrf.mxu0
      %v4343 = vadd.f32 0.0, %v4342
      %4344 = vmatmul.bf16.gmra.mxu0 %v4200
      %v4345 = vpop.f32.mrf.mxu0
      %v4346 = vpop.f32.mrf.mxu0
      %v4347 = vadd.f32 0.0, %v4346
      %4348 = vmatmul.bf16.gmra.mxu0 %v4202
      %v4349 = vpop.f32.mrf.mxu0
      %v4350 = vadd.f32 0.0, %v4349
      %v4351 = vpop.f32.mrf.mxu0
      %4352 = vmatmul.bf16.gmra.mxu0 %v4204
      %v4353 = vpop.f32.mrf.mxu0
      %v4354 = vadd.f32 0.0, %v4353
      %v4355 = vpop.f32.mrf.mxu0
      %v4356 = vadd.f32 0.0, %v4355
      %4357 = vmatmul.bf16.gmra.mxu0 %v4206
      %v4358 = vpop.f32.mrf.mxu0
      %v4359 = vpop.f32.mrf.mxu0
      %v4360 = vadd.f32 0.0, %v4359
      %4361 = vmatmul.bf16.gmra.mxu0 %v4208
      %v4362 = vpop.f32.mrf.mxu0
      %v4363 = vadd.f32 0.0, %v4362
      %v4364 = vpop.f32.mrf.mxu0
      %4365 = vmatmul.bf16.gmra.mxu0 %v4210
      %v4366 = vpop.f32.mrf.mxu0
      %v4367 = vadd.f32 0.0, %v4366
      %v4368 = vpop.f32.mrf.mxu0
      %v4369 = vadd.f32 0.0, %v4368
      %4370 = vmatmul.bf16.gmra.mxu0 %v4212
      %v4371 = vpop.f32.mrf.mxu0
      %v4372 = vpop.f32.mrf.mxu0
      %v4373 = vadd.f32 0.0, %v4372
      %4374 = vmatmul.bf16.gmra.mxu0 %v4214
      %v4375 = vpop.f32.mrf.mxu0
      %v4376 = vadd.f32 0.0, %v4375
      %v4377 = vpop.f32.mrf.mxu0
      %4378 = vmatmul.bf16.gmra.mxu0 %v4216
      %v4379 = vpop.f32.mrf.mxu0
      %v4380 = vadd.f32 0.0, %v4379
      %v4381 = vpop.f32.mrf.mxu0
      %v4382 = vadd.f32 0.0, %v4381
      %4383 = vmatmul.bf16.gmra.mxu0 %v4218
      %v4384 = vpop.f32.mrf.mxu0
      %v4385 = vpop.f32.mrf.mxu0
      %v4386 = vadd.f32 0.0, %v4385
      %4387 = vmatmul.bf16.gmra.mxu0 %v4220
      %v4388 = vpop.f32.mrf.mxu0
      %v4389 = vadd.f32 0.0, %v4388
      %v4390 = vpop.f32.mrf.mxu0
      %4391 = vmatmul.bf16.gmra.mxu0 %v4222
      %v4392 = vpop.f32.mrf.mxu0
      %v4393 = vadd.f32 0.0, %v4392
      %v4394 = vpop.f32.mrf.mxu0
      %v4395 = vadd.f32 0.0, %v4394
      %4396 = vmatmul.bf16.gmra.mxu0 %v4224
      %v4397 = vpop.f32.mrf.mxu0
      %v4398 = vpop.f32.mrf.mxu0
      %v4399 = vadd.f32 0.0, %v4398
      %4400 = vmatmul.bf16.gmra.mxu0 %v4226
      %v4401 = vpop.f32.mrf.mxu0
      %v4402 = vadd.f32 0.0, %v4401
      %v4403 = vpop.f32.mrf.mxu0
      %4404 = vmatmul.bf16.gmra.mxu0 %v4228
      %v4405 = vpop.f32.mrf.mxu0
      %v4406 = vadd.f32 0.0, %v4405
      %v4407 = vpop.f32.mrf.mxu0
      %v4408 = vadd.f32 0.0, %v4407
      %4409 = vmatmul.bf16.gmra.mxu0 %v4230
      %v4410 = vpop.f32.mrf.mxu0
      %v4411 = vpop.f32.mrf.mxu0
      %v4412 = vadd.f32 0.0, %v4411
      %4413 = vmatmul.bf16.gmra.mxu0 %v4232
      %v4414 = vpop.f32.mrf.mxu0
      %v4415 = vadd.f32 0.0, %v4414
      %v4416 = vpop.f32.mrf.mxu0
      %4417 = vdwg.mxu0
      %v4418 = vadd.f32 %v4131, %v4315
      %v4419 = vadd.f32 %v4132, %v4317
      %v4420 = vadd.f32 %v4133, %v4321
      %v4421 = vadd.f32 %v4134, %v4324
      %v4422 = vadd.f32 %v4135, %v4328
      %v4423 = vadd.f32 %v4136, %v4330
      %v4424 = vadd.f32 %v4137, %v4334
      %v4425 = vadd.f32 %v4138, %v4337
      %v4426 = vadd.f32 %v4139, %v4341
      %v4427 = vadd.f32 %v4140, %v4343
      %v4428 = vadd.f32 %v4141, %v4347
      %v4429 = vadd.f32 %v4142, %v4350
      %v4430 = vadd.f32 %v4143, %v4354
      %v4431 = vadd.f32 %v4144, %v4356
      %v4432 = vadd.f32 %v4145, %v4360
      %v4433 = vadd.f32 %v4146, %v4363
      %v4434 = vadd.f32 %v4147, %v4367
      %v4435 = vadd.f32 %v4148, %v4369
      %v4436 = vadd.f32 %v4149, %v4373
      %v4437 = vadd.f32 %v4150, %v4376
      %v4438 = vadd.f32 %v4151, %v4380
      %v4439 = vadd.f32 %v4152, %v4382
      %v4440 = vadd.f32 %v4153, %v4386
      %v4441 = vadd.f32 %v4154, %v4389
      %v4442 = vadd.f32 %v4155, %v4393
      %v4443 = vadd.f32 %v4156, %v4395
      %v4444 = vadd.f32 %v4157, %v4399
      %v4445 = vadd.f32 %v4158, %v4402
      %v4446 = vadd.f32 %v4159, %v4406
      %v4447 = vadd.f32 %v4160, %v4408
      %v4448 = vadd.f32 %v4161, %v4412
      %v4449 = vadd.f32 %v4162, %v4415
      %v4450 = vld [vmem:[%s263] sm:$0x1]
      %v4452 = vperm.slane %v4450, 0
      %v4454 = vadd.f32 %v4418, %v4452
      %v4455 = vadd.f32 %v4419, %v4452
      %v4456 = vadd.f32 %v4420, %v4452
      %v4457 = vadd.f32 %v4421, %v4452
      %v4458 = vadd.f32 %v4422, %v4452
      %v4459 = vadd.f32 %v4423, %v4452
      %v4460 = vadd.f32 %v4424, %v4452
      %v4461 = vadd.f32 %v4425, %v4452
      %v4462 = vadd.f32 %v4426, %v4452
      %v4463 = vadd.f32 %v4427, %v4452
      %v4464 = vadd.f32 %v4428, %v4452
      %v4465 = vadd.f32 %v4429, %v4452
      %v4466 = vadd.f32 %v4430, %v4452
      %v4467 = vadd.f32 %v4431, %v4452
      %v4468 = vadd.f32 %v4432, %v4452
      %v4469 = vadd.f32 %v4433, %v4452
      %v4470 = vadd.f32 %v4434, %v4452
      %v4471 = vadd.f32 %v4435, %v4452
      %v4472 = vadd.f32 %v4436, %v4452
      %v4473 = vadd.f32 %v4437, %v4452
      %v4474 = vadd.f32 %v4438, %v4452
      %v4475 = vadd.f32 %v4439, %v4452
      %v4476 = vadd.f32 %v4440, %v4452
      %v4477 = vadd.f32 %v4441, %v4452
      %v4478 = vadd.f32 %v4442, %v4452
      %v4479 = vadd.f32 %v4443, %v4452
      %v4480 = vadd.f32 %v4444, %v4452
      %v4481 = vadd.f32 %v4445, %v4452
      %v4482 = vadd.f32 %v4446, %v4452
      %v4483 = vadd.f32 %v4447, %v4452
      %v4484 = vadd.f32 %v4448, %v4452
      %v4485 = vadd.f32 %v4449, %v4452
      %v4486 = vld [vmem:[%s271] sm:$0xf]
      %v4487 = vld [vmem:[%s271 + $0x4] sm:$0xf]
      %v4488 = vld [vmem:[%s271 + $0x8] sm:$0xf]
      %v4489 = vld [vmem:[%s271 + $0xc] sm:$0xf]
      %v4490 = vld [vmem:[%s271 + $0x10] sm:$0xf]
      %v4491 = vld [vmem:[%s271 + $0x14] sm:$0xf]
      %v4492 = vld [vmem:[%s271 + $0x18] sm:$0xf]
      %v4493 = vld [vmem:[%s271 + $0x1c] sm:$0xf]
      %v4494 = vld [vmem:[%s271 + $0x20] sm:$0xf]
      %v4495 = vld [vmem:[%s271 + $0x24] sm:$0xf]
      %v4496 = vld [vmem:[%s271 + $0x28] sm:$0xf]
      %v4497 = vld [vmem:[%s271 + $0x2c] sm:$0xf]
      %v4498 = vld [vmem:[%s271 + $0x30] sm:$0xf]
      %v4499 = vld [vmem:[%s271 + $0x34] sm:$0xf]
      %v4500 = vld [vmem:[%s271 + $0x38] sm:$0xf]
      %v4501 = vld [vmem:[%s271 + $0x3c] sm:$0xf]
      %v4502 = vld [vmem:[%s271 + $0x40] sm:$0xf]
      %v4503 = vld [vmem:[%s271 + $0x44] sm:$0xf]
      %v4504 = vld [vmem:[%s271 + $0x48] sm:$0xf]
      %v4505 = vld [vmem:[%s271 + $0x4c] sm:$0xf]
      %v4506 = vld [vmem:[%s271 + $0x50] sm:$0xf]
      %v4507 = vld [vmem:[%s271 + $0x54] sm:$0xf]
      %v4508 = vld [vmem:[%s271 + $0x58] sm:$0xf]
      %v4509 = vld [vmem:[%s271 + $0x5c] sm:$0xf]
      %v4510 = vld [vmem:[%s271 + $0x60] sm:$0xf]
      %v4511 = vld [vmem:[%s271 + $0x64] sm:$0xf]
      %v4512 = vld [vmem:[%s271 + $0x68] sm:$0xf]
      %v4513 = vld [vmem:[%s271 + $0x6c] sm:$0xf]
      %v4514 = vld [vmem:[%s271 + $0x70] sm:$0xf]
      %v4515 = vld [vmem:[%s271 + $0x74] sm:$0xf]
      %v4516 = vld [vmem:[%s271 + $0x78] sm:$0xf]
      %v4517 = vld [vmem:[%s271 + $0x7c] sm:$0xf]
      %v4518 = vunpack.c.l.bf16 %v4486
      %v4519 = vunpack.c.l.bf16 %v4487
      %v4520 = vunpack.c.l.bf16 %v4488
      %v4521 = vunpack.c.l.bf16 %v4489
      %v4522 = vunpack.c.l.bf16 %v4490
      %v4523 = vunpack.c.l.bf16 %v4491
      %v4524 = vunpack.c.l.bf16 %v4492
      %v4525 = vunpack.c.l.bf16 %v4493
      %v4526 = vunpack.c.l.bf16 %v4494
      %v4527 = vunpack.c.l.bf16 %v4495
      %v4528 = vunpack.c.l.bf16 %v4496
      %v4529 = vunpack.c.l.bf16 %v4497
      %v4530 = vunpack.c.l.bf16 %v4498
      %v4531 = vunpack.c.l.bf16 %v4499
      %v4532 = vunpack.c.l.bf16 %v4500
      %v4533 = vunpack.c.l.bf16 %v4501
      %v4534 = vunpack.c.l.bf16 %v4502
      %v4535 = vunpack.c.l.bf16 %v4503
      %v4536 = vunpack.c.l.bf16 %v4504
      %v4537 = vunpack.c.l.bf16 %v4505
      %v4538 = vunpack.c.l.bf16 %v4506
      %v4539 = vunpack.c.l.bf16 %v4507
      %v4540 = vunpack.c.l.bf16 %v4508
      %v4541 = vunpack.c.l.bf16 %v4509
      %v4542 = vunpack.c.l.bf16 %v4510
      %v4543 = vunpack.c.l.bf16 %v4511
      %v4544 = vunpack.c.l.bf16 %v4512
      %v4545 = vunpack.c.l.bf16 %v4513
      %v4546 = vunpack.c.l.bf16 %v4514
      %v4547 = vunpack.c.l.bf16 %v4515
      %v4548 = vunpack.c.l.bf16 %v4516
      %v4549 = vunpack.c.l.bf16 %v4517
      %v4550 = vadd.f32 %v4454, %v4518
      %v4551 = vadd.f32 %v4455, %v4519
      %v4552 = vadd.f32 %v4456, %v4520
      %v4553 = vadd.f32 %v4457, %v4521
      %v4554 = vadd.f32 %v4458, %v4522
      %v4555 = vadd.f32 %v4459, %v4523
      %v4556 = vadd.f32 %v4460, %v4524
      %v4557 = vadd.f32 %v4461, %v4525
      %v4558 = vadd.f32 %v4462, %v4526
      %v4559 = vadd.f32 %v4463, %v4527
      %v4560 = vadd.f32 %v4464, %v4528
      %v4561 = vadd.f32 %v4465, %v4529
      %v4562 = vadd.f32 %v4466, %v4530
      %v4563 = vadd.f32 %v4467, %v4531
      %v4564 = vadd.f32 %v4468, %v4532
      %v4565 = vadd.f32 %v4469, %v4533
      %v4566 = vadd.f32 %v4470, %v4534
      %v4567 = vadd.f32 %v4471, %v4535
      %v4568 = vadd.f32 %v4472, %v4536
      %v4569 = vadd.f32 %v4473, %v4537
      %v4570 = vadd.f32 %v4474, %v4538
      %v4571 = vadd.f32 %v4475, %v4539
      %v4572 = vadd.f32 %v4476, %v4540
      %v4573 = vadd.f32 %v4477, %v4541
      %v4574 = vadd.f32 %v4478, %v4542
      %v4575 = vadd.f32 %v4479, %v4543
      %v4576 = vadd.f32 %v4480, %v4544
      %v4577 = vadd.f32 %v4481, %v4545
      %v4578 = vadd.f32 %v4482, %v4546
      %v4579 = vadd.f32 %v4483, %v4547
      %v4580 = vadd.f32 %v4484, %v4548
      %v4581 = vadd.f32 %v4485, %v4549
      %v4582 = vmax.f32 %v4550, 0.0
      %v4583 = vmax.f32 %v4551, 0.0
      %v4584 = vmax.f32 %v4552, 0.0
      %v4585 = vmax.f32 %v4553, 0.0
      %v4586 = vmax.f32 %v4554, 0.0
      %v4587 = vmax.f32 %v4555, 0.0
      %v4588 = vmax.f32 %v4556, 0.0
      %v4589 = vmax.f32 %v4557, 0.0
      %v4590 = vmax.f32 %v4558, 0.0
      %v4591 = vmax.f32 %v4559, 0.0
      %v4592 = vmax.f32 %v4560, 0.0
      %v4593 = vmax.f32 %v4561, 0.0
      %v4594 = vmax.f32 %v4562, 0.0
      %v4595 = vmax.f32 %v4563, 0.0
      %v4596 = vmax.f32 %v4564, 0.0
      %v4597 = vmax.f32 %v4565, 0.0
      %v4598 = vmax.f32 %v4566, 0.0
      %v4599 = vmax.f32 %v4567, 0.0
      %v4600 = vmax.f32 %v4568, 0.0
      %v4601 = vmax.f32 %v4569, 0.0
      %v4602 = vmax.f32 %v4570, 0.0
      %v4603 = vmax.f32 %v4571, 0.0
      %v4604 = vmax.f32 %v4572, 0.0
      %v4605 = vmax.f32 %v4573, 0.0
      %v4606 = vmax.f32 %v4574, 0.0
      %v4607 = vmax.f32 %v4575, 0.0
      %v4608 = vmax.f32 %v4576, 0.0
      %v4609 = vmax.f32 %v4577, 0.0
      %v4610 = vmax.f32 %v4578, 0.0
      %v4611 = vmax.f32 %v4579, 0.0
      %v4612 = vmax.f32 %v4580, 0.0
      %v4613 = vmax.f32 %v4581, 0.0
      %4614 = vst [vmem:[%s279] sm:$0xff] %v4582
      %4615 = vst [vmem:[%s279 + $0x8] sm:$0xff] %v4583
      %4616 = vst [vmem:[%s279 + $0x10] sm:$0xff] %v4584
      %4617 = vst [vmem:[%s279 + $0x18] sm:$0xff] %v4585
      %4618 = vst [vmem:[%s279 + $0x20] sm:$0xff] %v4586
      %4619 = vst [vmem:[%s279 + $0x28] sm:$0xff] %v4587
      %4620 = vst [vmem:[%s279 + $0x30] sm:$0xff] %v4588
      %4621 = vst [vmem:[%s279 + $0x38] sm:$0xff] %v4589
      %4622 = vst [vmem:[%s279 + $0x40] sm:$0xff] %v4590
      %4623 = vst [vmem:[%s279 + $0x48] sm:$0xff] %v4591
      %4624 = vst [vmem:[%s279 + $0x50] sm:$0xff] %v4592
      %4625 = vst [vmem:[%s279 + $0x58] sm:$0xff] %v4593
      %4626 = vst [vmem:[%s279 + $0x60] sm:$0xff] %v4594
      %4627 = vst [vmem:[%s279 + $0x68] sm:$0xff] %v4595
      %4628 = vst [vmem:[%s279 + $0x70] sm:$0xff] %v4596
      %4629 = vst [vmem:[%s279 + $0x78] sm:$0xff] %v4597
      %4630 = vst [vmem:[%s279 + $0x80] sm:$0xff] %v4598
      %4631 = vst [vmem:[%s279 + $0x88] sm:$0xff] %v4599
      %4632 = vst [vmem:[%s279 + $0x90] sm:$0xff] %v4600
      %4633 = vst [vmem:[%s279 + $0x98] sm:$0xff] %v4601
      %4634 = vst [vmem:[%s279 + $0xa0] sm:$0xff] %v4602
      %4635 = vst [vmem:[%s279 + $0xa8] sm:$0xff] %v4603
      %4636 = vst [vmem:[%s279 + $0xb0] sm:$0xff] %v4604
      %4637 = vst [vmem:[%s279 + $0xb8] sm:$0xff] %v4605
      %4638 = vst [vmem:[%s279 + $0xc0] sm:$0xff] %v4606
      %4639 = vst [vmem:[%s279 + $0xc8] sm:$0xff] %v4607
      %4640 = vst [vmem:[%s279 + $0xd0] sm:$0xff] %v4608
      %4641 = vst [vmem:[%s279 + $0xd8] sm:$0xff] %v4609
      %4642 = vst [vmem:[%s279 + $0xe0] sm:$0xff] %v4610
      %4643 = vst [vmem:[%s279 + $0xe8] sm:$0xff] %v4611
      %4644 = vst [vmem:[%s279 + $0xf0] sm:$0xff] %v4612
      %4645 = vst [vmem:[%s279 + $0xf8] sm:$0xff] %v4613
      %p4646 = scmp.lt.s32.totalorder %s20, 1
      %s4647 = scalar_select %p4646, %s20, 1
      %p4648 = scmp.lt.s32.totalorder %s19, 0
      %s4649 = scalar_select %p4648, %s19, 0
      %s4650 = smul.addr %s4647, 32
      %s4651 = sadd.s32 %s4649, %s4650
      %s4652 = smul.addr %s4651, 8
      %s4653 = scalar_lea.vmem %s4, %s4652
      // Predicated region
      $region37: #{basic_block_forward.3} parent=35 // pred_check
        %p4654 = pneg %p153
      $region38: #{basic_block_forward.3} parent=35 // pred_check_branch
        %4656 = sbr.rel (%p4654) target = $region40
      $region39: #{basic_block_forward.3} parent=35 // pred_region
        _
      $region40: #{basic_block_forward.3} parent=35 // pred_fallthru
        _
    $region36: #{basic_block_forward.3} parent=5 // pred_fallthru
      _
    %p4657 = scmp.le.s32.totalorder 2, %s10
    // Predicated region
    $region41: #{basic_block_forward.3} parent=5 // pred_check
      %p4658 = pneg %p4657
    $region42: #{basic_block_forward.3} parent=5 // pred_check_branch
      %4660 = sbr.rel (%p4658) target = $region44
    $region43: #{basic_block_forward.3} parent=5 // pred_region
      %s4661 = ssub.s32 %s10, 2
      // Predicated region
      $region45: #{basic_block_forward.3} parent=43 // pred_check
        %p4662 = pneg %p159
      $region46: #{basic_block_forward.3} parent=43 // pred_check_branch
        %4664 = sbr.rel (%p4662) target = $region48
      $region47: #{basic_block_forward.3} parent=43 // pred_region
        %p4665 = scmp.lt.s32.totalorder %s22, 1
        %s4666 = scalar_select %p4665, %s22, 1
        %p4667 = scmp.lt.s32.totalorder %s21, 0
        %s4668 = scalar_select %p4667, %s21, 0
        %s4669 = smul.addr %s4666, 32
        %s4670 = sadd.s32 %s4668, %s4669
        %s4671 = smul.addr %s4670, 8
        %s4672 = scalar_lea.vmem %s4, %s4671
      $region48: #{basic_block_forward.3} parent=43 // pred_fallthru
        _
    $region44: #{basic_block_forward.3} parent=5 // pred_fallthru
      _
  $region6: #{basic_block_forward.3} parent=0 // loop_footer
    %s14 = sadd.s32 1, %s10
  $region7: #{basic_block_forward.3} parent=0 // loop_footer_branch
    %9 = sbr.rel target = $region3
  $region8: #{basic_block_forward.3} parent=0 // loop_exit
    _

// kernel: basic_block_forward.2
$region0: #{basic_block_forward.2}
  #allocation0 [shape = 'u32[]', space=smem, size = 0x4, offset = 0x4, fixed_abs, tag = 'smem constant byte address 0x4 - core index']
  #allocation1 [shape = 'u32[72,128]{1,0:T(1,128)}', space=vmem, size = 0x9000, scoped, tag = 'internal scratch']
  #allocation2 [shape = 'bf16[440,128]{1,0:T(8,128)(2,1)}', space=vmem, size = 0x1b800, scoped, tag = 'scratch operand']
  %s0 = inlined_call_operand.vmem [shape: bf16[2,256,128], index: 0, kind: input, shape index: {}]
  %s1 = inlined_call_operand.vmem [shape: bf16[9,128,128], index: 1, kind: input, shape index: {}]
  %s2 = inlined_call_operand.vmem [shape: f32[1,128], index: 2, kind: input, shape index: {}]
  %s3 = inlined_call_operand.vmem [shape: bf16[2,256,128], index: 3, kind: output, shape index: {}]
  %s4 = sld [smem:[#allocation0]]
  $region45: #{basic_block_forward.2} parent=0
    _
  %s6 = ssub.s32 1, %s4
  %s7 = scalar_select 0, %s6, %s4
  loop: start=0, step=1, limit=4
  $region2: #{basic_block_forward.2} parent=0 // loop_pre_header
    _
  $region3: #{basic_block_forward.2} parent=0 // loop_header
    %s9 = sphi 0, %s13
    %p10 = scmp.ge.s32.totalorder %s9, 4
    %s16 = sphi 0, %s28
    %s17 = sphi 0, %s24
    %s18 = sphi 0, %s16
    %s19 = sphi 0, %s17
    %s20 = sphi 0, %s18
    %s21 = sphi 0, %s19
    %s31 = sphi 0, %s33
    %s34 = sphi 0, %s31
    %s35 = sphi 0, %s34
    %s51 = sphi 0, %s35
    %s57 = sphi 0, %s59
    %s60 = sphi 0, %s57
    %s61 = sphi 0, %s60
    %s77 = sphi 0, %s61
    %s83 = sphi 0, %s85
    %s86 = sphi 0, %s83
    %s87 = sphi 0, %s86
    %s103 = sphi 0, %s87
    %s111 = sphi 0, %s113
    %s114 = sphi 0, %s111
    %s115 = sphi 0, %s114
    %s131 = sphi 0, %s115
  $region4: #{basic_block_forward.2} parent=0 // loop_header_branch
    %12 = sbr.rel (%p10) target = $region8
  $region5: #{basic_block_forward.2} parent=0 // loop_body
    %s14 = ssub.s32 %s9, 1
    %s15 = ssub.s32 %s9, 2
    %s22 = sadd.s32 1, %s17
    %p23 = scmp.ge.s32.totalorder %s22, 2
    %s24 = scalar_select %p23, 0, %s22
    %s25 = sadd.s32 1, %s16
    %s26 = scalar_select %p23, %s25, %s16
    %p27 = scmp.ge.s32.totalorder %s26, 1
    %s28 = scalar_select %p27, 0, %s26
    %s29 = ssub.s32 %s17, %s24
    %p30 = scmp.eq.s32.totalorder %s29, 0
    %s32 = sadd.s32 %s31, 1
    %s33 = scalar_select %p30, %s31, %s32
    %p36 = pneg %p30
    %p37 = scmp.eq.s32.totalorder %s9, 1
    %p38 = por %p36, %p37
    %p39 = scmp.ne.s32.totalorder %s31, %s34
    %p40 = scmp.eq.s32.totalorder %s9, 0
    %p41 = por %p39, %p40
    %p42 = scmp.ne.s32.totalorder %s31, %s34
    %p43 = scmp.eq.s32.totalorder %s14, 1
    %p44 = por %p42, %p43
    %p45 = scmp.ne.s32.totalorder %s34, %s35
    %p46 = scmp.eq.s32.totalorder %s14, 0
    %p47 = por %p45, %p46
    %p48 = scmp.ne.s32.totalorder %s34, %s35
    %p49 = scmp.eq.s32.totalorder %s15, 1
    %p50 = por %p48, %p49
    %p52 = scmp.ne.s32.totalorder %s35, %s51
    %p53 = scmp.eq.s32.totalorder %s15, 0
    %p54 = por %p52, %p53
    %s55 = ssub.s32 %s16, %s28
    %p56 = scmp.eq.s32.totalorder %s55, 0
    %s58 = sadd.s32 %s57, 1
    %s59 = scalar_select %p56, %s57, %s58
    %p62 = pneg %p56
    %p63 = scmp.eq.s32.totalorder %s9, 1
    %p64 = por %p62, %p63
    %p65 = scmp.ne.s32.totalorder %s57, %s60
    %p66 = scmp.eq.s32.totalorder %s9, 0
    %p67 = por %p65, %p66
    %p68 = scmp.ne.s32.totalorder %s57, %s60
    %p69 = scmp.eq.s32.totalorder %s14, 1
    %p70 = por %p68, %p69
    %p71 = scmp.ne.s32.totalorder %s60, %s61
    %p72 = scmp.eq.s32.totalorder %s14, 0
    %p73 = por %p71, %p72
    %p74 = scmp.ne.s32.totalorder %s60, %s61
    %p75 = scmp.eq.s32.totalorder %s15, 1
    %p76 = por %p74, %p75
    %p78 = scmp.ne.s32.totalorder %s61, %s77
    %p79 = scmp.eq.s32.totalorder %s15, 0
    %p80 = por %p78, %p79
    %s81 = ssub.s32 %s16, %s28
    %p82 = scmp.eq.s32.totalorder %s81, 0
    %s84 = sadd.s32 %s83, 1
    %s85 = scalar_select %p82, %s83, %s84
    %p88 = pneg %p82
    %p89 = scmp.eq.s32.totalorder %s9, 1
    %p90 = por %p88, %p89
    %p91 = scmp.ne.s32.totalorder %s83, %s86
    %p92 = scmp.eq.s32.totalorder %s9, 0
    %p93 = por %p91, %p92
    %p94 = scmp.ne.s32.totalorder %s83, %s86
    %p95 = scmp.eq.s32.totalorder %s14, 1
    %p96 = por %p94, %p95
    %p97 = scmp.ne.s32.totalorder %s86, %s87
    %p98 = scmp.eq.s32.totalorder %s14, 0
    %p99 = por %p97, %p98
    %p100 = scmp.ne.s32.totalorder %s86, %s87
    %p101 = scmp.eq.s32.totalorder %s15, 1
    %p102 = por %p100, %p101
    %p104 = scmp.ne.s32.totalorder %s87, %s103
    %p105 = scmp.eq.s32.totalorder %s15, 0
    %p106 = por %p104, %p105
    %s107 = ssub.s32 %s17, %s24
    %s108 = ssub.s32 %s16, %s28
    %s109 = sor.u32 %s107, %s108
    %p110 = scmp.eq.s32.totalorder %s109, 0
    %s112 = sadd.s32 %s111, 1
    %s113 = scalar_select %p110, %s111, %s112
    %p116 = pneg %p110
    %p117 = scmp.eq.s32.totalorder %s9, 1
    %p118 = por %p116, %p117
    %p119 = scmp.ne.s32.totalorder %s111, %s114
    %p120 = scmp.eq.s32.totalorder %s9, 0
    %p121 = por %p119, %p120
    %p122 = scmp.ne.s32.totalorder %s111, %s114
    %p123 = scmp.eq.s32.totalorder %s14, 1
    %p124 = por %p122, %p123
    %p125 = scmp.ne.s32.totalorder %s114, %s115
    %p126 = scmp.eq.s32.totalorder %s14, 0
    %p127 = por %p125, %p126
    %p128 = scmp.ne.s32.totalorder %s114, %s115
    %p129 = scmp.eq.s32.totalorder %s15, 1
    %p130 = por %p128, %p129
    %p132 = scmp.ne.s32.totalorder %s115, %s131
    %p133 = scmp.eq.s32.totalorder %s15, 0
    %p134 = por %p132, %p133
    %p135 = scmp.le.s32.totalorder 1, %s9
    %p136 = scmp.lt.s32.totalorder %s9, 3
    %p137 = pnand %p135, %p136
    %p138 = pneg %p137
    // Predicated region
    $region9: #{basic_block_forward.2} parent=5 // pred_check
      _
    $region10: #{basic_block_forward.2} parent=5 // pred_check_branch
      %140 = sbr.rel (%p137) target = $region12
    $region11: #{basic_block_forward.2} parent=5 // pred_region
      %s141 = ssub.s32 %s9, 1
      // Predicated region
      $region13: #{basic_block_forward.2} parent=11 // pred_check
        %p142 = pneg %p73
      $region14: #{basic_block_forward.2} parent=11 // pred_check_branch
        %144 = sbr.rel (%p142) target = $region16
      $region15: #{basic_block_forward.2} parent=11 // pred_region
        %p145 = scmp.lt.s32.totalorder %s18, 0
        %s146 = scalar_select %p145, %s18, 0
        %s147 = smul.addr %s146, 4
        %s148 = scalar_lea.vmem %s1, %s147
      $region16: #{basic_block_forward.2} parent=11 // pred_fallthru
        _
      // Predicated region
      $region17: #{basic_block_forward.2} parent=11 // pred_check
        %p149 = pneg %p99
      $region18: #{basic_block_forward.2} parent=11 // pred_check_branch
        %151 = sbr.rel (%p149) target = $region20
      $region19: #{basic_block_forward.2} parent=11 // pred_region
        %p152 = scmp.lt.s32.totalorder %s18, 0
        %s153 = scalar_select %p152, %s18, 0
        %s154 = scalar_lea.vmem %s2, %s153
      $region20: #{basic_block_forward.2} parent=11 // pred_fallthru
        _
    $region12: #{basic_block_forward.2} parent=5 // pred_fallthru
      _
    %p155 = scmp.lt.s32.totalorder %s9, 2
    // Predicated region
    $region21: #{basic_block_forward.2} parent=5 // pred_check
      %p156 = pneg %p155
    $region22: #{basic_block_forward.2} parent=5 // pred_check_branch
      %158 = sbr.rel (%p156) target = $region24
    $region23: #{basic_block_forward.2} parent=5 // pred_region
      // Predicated region
      $region25: #{basic_block_forward.2} parent=23 // pred_check
        %p159 = pneg %p41
      $region26: #{basic_block_forward.2} parent=23 // pred_check_branch
        %161 = sbr.rel (%p159) target = $region28
      $region27: #{basic_block_forward.2} parent=23 // pred_region
        %p162 = scmp.lt.s32.totalorder %s17, 1
        %s163 = scalar_select %p162, %s17, 1
        %s164 = smul.addr %s163, 32
        %s165 = smul.addr %s164, 4
        %s166 = scalar_lea.vmem %s0, %s165
      $region28: #{basic_block_forward.2} parent=23 // pred_fallthru
        _
    $region24: #{basic_block_forward.2} parent=5 // pred_fallthru
      _
    %p167 = scmp.le.s32.totalorder 1, %s9
    %p168 = scmp.lt.s32.totalorder %s9, 3
    %p169 = pnand %p167, %p168
    %p170 = pneg %p169
    // Predicated region
    $region29: #{basic_block_forward.2} parent=5 // pred_check
      _
    $region30: #{basic_block_forward.2} parent=5 // pred_check_branch
      %172 = sbr.rel (%p169) target = $region32
    $region31: #{basic_block_forward.2} parent=5 // pred_region
      %s173 = ssub.s32 %s9, 1
      %p174 = scmp.lt.s32.totalorder %s19, 1
      %s175 = scalar_select %p174, %s19, 1
      %s176 = smul.addr %s175, 32
      %s177 = smul.addr %s176, 4
      %s178 = scalar_lea.vmem %s0, %s177
      %p179 = pneg %p47
      %p180 = pneg %p44
      %p181 = scmp.lt.s32.totalorder %s18, 0
      %s182 = scalar_select %p181, %s18, 0
      %s183 = smul.addr %s182, 4
      %s184 = scalar_lea.vmem %s1, %s183
      %p185 = pneg %p73
      %p186 = pneg %p70
      %p187 = scmp.lt.s32.totalorder %s18, 0
      %s188 = scalar_select %p187, %s18, 0
      %s189 = scalar_lea.vmem %s2, %s188
      %p190 = pneg %p99
      %p191 = pneg %p96
      %p192 = pneg %p127
      %p193 = pneg %p124
      %p194 = scmp.lt.s32.totalorder %s19, 1
      %s195 = scalar_select %p194, %s19, 1
      %p196 = scmp.lt.s32.totalorder %s18, 0
      %s197 = scalar_select %p196, %s18, 0
      %s198 = smul.addr %s195, 32
      %s199 = sadd.s32 %s197, %s198
      %s200 = smul.addr %s199, 4
      %s201 = scalar_lea.vmem %s3, %s200
      %p202 = scmp.lt.s32.totalorder %s19, 1
      %s203 = scalar_select %p202, %s19, 1
      %s204 = smul.addr %s203, 32
      %s205 = smul.addr %s204, 4
      %s206 = scalar_lea.vmem %s0, %s205
      %p207 = scmp.lt.s32.totalorder %s18, 0
      %s208 = scalar_select %p207, %s18, 0
      %s209 = smul.addr %s208, 4
      %s210 = scalar_lea.vmem %s1, %s209
      %p211 = scmp.lt.s32.totalorder %s18, 0
      %s212 = scalar_select %p211, %s18, 0
      %s213 = scalar_lea.vmem %s2, %s212
      %p214 = scmp.lt.s32.totalorder %s19, 1
      %s215 = scalar_select %p214, %s19, 1
      %p216 = scmp.lt.s32.totalorder %s18, 0
      %s217 = scalar_select %p216, %s18, 0
      %s218 = smul.addr %s215, 32
      %s219 = sadd.s32 %s217, %s218
      %s220 = smul.addr %s219, 4
      %s221 = scalar_lea.vmem %s3, %s220
      %223 = vst [vmem:[#allocation2] sm:$0xf] 0
      %224 = vst [vmem:[#allocation2 + $0x4] sm:$0xf] 0
      %225 = vst [vmem:[#allocation2 + $0x8] sm:$0xf] 0
      %226 = vst [vmem:[#allocation2 + $0xc] sm:$0xf] 0
      %227 = vst [vmem:[#allocation2 + $0x10] sm:$0xf] 0
      %228 = vst [vmem:[#allocation2 + $0x14] sm:$0xf] 0
      %229 = vst [vmem:[#allocation2 + $0x18] sm:$0xf] 0
      %230 = vst [vmem:[#allocation2 + $0x1c] sm:$0xf] 0
      %231 = vst [vmem:[#allocation2 + $0x20] sm:$0xf] 0
      %232 = vst [vmem:[#allocation2 + $0x24] sm:$0xf] 0
      %233 = vst [vmem:[#allocation2 + $0x28] sm:$0xf] 0
      %234 = vst [vmem:[#allocation2 + $0x2c] sm:$0xf] 0
      %235 = vst [vmem:[#allocation2 + $0x30] sm:$0xf] 0
      %236 = vst [vmem:[#allocation2 + $0x34] sm:$0xf] 0
      %237 = vst [vmem:[#allocation2 + $0x38] sm:$0xf] 0
      %238 = vst [vmem:[#allocation2 + $0x3c] sm:$0xf] 0
      %239 = vst [vmem:[#allocation2 + $0x40] sm:$0xf] 0
      %240 = vst [vmem:[#allocation2 + $0x44] sm:$0xf] 0
      %241 = vst [vmem:[#allocation2 + $0x48] sm:$0xf] 0
      %242 = vst [vmem:[#allocation2 + $0x4c] sm:$0xf] 0
      %243 = vst [vmem:[#allocation2 + $0x50] sm:$0xf] 0
      %244 = vst [vmem:[#allocation2 + $0x54] sm:$0xf] 0
      %245 = vst [vmem:[#allocation2 + $0x58] sm:$0xf] 0
      %246 = vst [vmem:[#allocation2 + $0x5c] sm:$0xf] 0
      %247 = vst [vmem:[#allocation2 + $0x60] sm:$0xf] 0
      %248 = vst [vmem:[#allocation2 + $0x64] sm:$0xf] 0
      %249 = vst [vmem:[#allocation2 + $0x68] sm:$0xf] 0
      %250 = vst [vmem:[#allocation2 + $0x6c] sm:$0xf] 0
      %251 = vst [vmem:[#allocation2 + $0x70] sm:$0xf] 0
      %252 = vst [vmem:[#allocation2 + $0x74] sm:$0xf] 0
      %253 = vst [vmem:[#allocation2 + $0x78] sm:$0xf] 0
      %254 = vst [vmem:[#allocation2 + $0x7c] sm:$0xf] 0
      %255 = vst [vmem:[#allocation2 + $0x80] sm:$0xf] 0
      %256 = vst [vmem:[#allocation2 + $0x84] sm:$0xf] 0
      %257 = vst [vmem:[#allocation2 + $0x88] sm:$0xf] 0
      %258 = vst [vmem:[#allocation2 + $0x8c] sm:$0xf] 0
      %259 = vst [vmem:[#allocation2 + $0x90] sm:$0xf] 0
      %260 = vst [vmem:[#allocation2 + $0x94] sm:$0xf] 0
      %261 = vst [vmem:[#allocation2 + $0x98] sm:$0xf] 0
      %262 = vst [vmem:[#allocation2 + $0x9c] sm:$0xf] 0
      %263 = vst [vmem:[#allocation2 + $0xa0] sm:$0xf] 0
      %264 = vst [vmem:[#allocation2 + $0xa4] sm:$0xf] 0
      %265 = vst [vmem:[#allocation2 + $0xa8] sm:$0xf] 0
      %266 = vst [vmem:[#allocation2 + $0xac] sm:$0xf] 0
      %267 = vst [vmem:[#allocation2 + $0xb0] sm:$0xf] 0
      %268 = vst [vmem:[#allocation2 + $0xb4] sm:$0xf] 0
      %269 = vst [vmem:[#allocation2 + $0xb8] sm:$0xf] 0
      %270 = vst [vmem:[#allocation2 + $0xbc] sm:$0xf] 0
      %271 = vst [vmem:[#allocation2 + $0xc0] sm:$0xf] 0
      %272 = vst [vmem:[#allocation2 + $0xc4] sm:$0xf] 0
      %273 = vst [vmem:[#allocation2 + $0xc8] sm:$0xf] 0
      %274 = vst [vmem:[#allocation2 + $0xcc] sm:$0xf] 0
      %275 = vst [vmem:[#allocation2 + $0xd0] sm:$0xf] 0
      %276 = vst [vmem:[#allocation2 + $0xd4] sm:$0xf] 0
      %277 = vst [vmem:[#allocation2 + $0xd8] sm:$0xf] 0
      %v278 = vld [vmem:[%s206] sm:$0xf]
      %v279 = vld [vmem:[%s206 + $0x4] sm:$0xf]
      %vm280 = vsmask.f32 256
      %vm281 = vsmask.f32 4368
      %vm282 = vmor %vm280, %vm281
      %v284 = vshrl.u32 %v278, 16
      %v286 = vrot.slane %v284, 7
      %v287 = vshll.u32 %v278, 16
      %v289 = vor.u32 %v286, %v287
      %v290 = vrot.slane %v286, 4
      %v292 = vshrl.u32 %v279, 16
      %v294 = vrot.slane %v292, 7
      %v295 = vshll.u32 %v279, 16
      %v297 = vor.u32 %v294, %v295
      %v298 = vsel %vm282, %v290, %v297
      %v299 = vrot.slane %v294, 4
      %vm303 = vcmask 1043456
      %vm304 = vsmask.f32 7938
      %vm305 = vmand %vm303, %vm304
      %v306 = vld [vmem:[#allocation2 + $0xc] sm:$0xf]
      %v307 = vsel %vm305, %v289, %v306
      %308 = vst [vmem:[#allocation2 + $0xc] sm:$0xf] %v307
      %309 = vst [vmem:[#allocation2 + $0x10] sm:$0xf] %v298
      %vm310 = vcmask 1040384
      %vm311 = vmand %vm310, %vm280
      %v312 = vld [vmem:[#allocation2 + $0x14] sm:$0x1]
      %v313 = vsel %vm311, %v299, %v312
      %314 = vst [vmem:[#allocation2 + $0x14] sm:$0x1] %v313
      %v315 = vld [vmem:[%s206 + $0x8] sm:$0xf]
      %v316 = vld [vmem:[%s206 + $0xc] sm:$0xf]
      %v318 = vshrl.u32 %v315, 16
      %v320 = vrot.slane %v318, 7
      %v321 = vshll.u32 %v315, 16
      %v323 = vor.u32 %v320, %v321
      %v324 = vrot.slane %v320, 4
      %v326 = vshrl.u32 %v316, 16
      %v328 = vrot.slane %v326, 7
      %v329 = vshll.u32 %v316, 16
      %v331 = vor.u32 %v328, %v329
      %v332 = vsel %vm282, %v324, %v331
      %v333 = vrot.slane %v328, 4
      %v337 = vld [vmem:[#allocation2 + $0x18] sm:$0xf]
      %v338 = vsel %vm305, %v323, %v337
      %339 = vst [vmem:[#allocation2 + $0x18] sm:$0xf] %v338
      %340 = vst [vmem:[#allocation2 + $0x1c] sm:$0xf] %v332
      %v341 = vld [vmem:[#allocation2 + $0x20] sm:$0x1]
      %v342 = vsel %vm311, %v333, %v341
      %343 = vst [vmem:[#allocation2 + $0x20] sm:$0x1] %v342
      %v344 = vld [vmem:[%s206 + $0x10] sm:$0xf]
      %v345 = vld [vmem:[%s206 + $0x14] sm:$0xf]
      %v347 = vshrl.u32 %v344, 16
      %v349 = vrot.slane %v347, 7
      %v350 = vshll.u32 %v344, 16
      %v352 = vor.u32 %v349, %v350
      %v353 = vrot.slane %v349, 4
      %v355 = vshrl.u32 %v345, 16
      %v357 = vrot.slane %v355, 7
      %v358 = vshll.u32 %v345, 16
      %v360 = vor.u32 %v357, %v358
      %v361 = vsel %vm282, %v353, %v360
      %v362 = vrot.slane %v357, 4
      %v366 = vld [vmem:[#allocation2 + $0x24] sm:$0xf]
      %v367 = vsel %vm305, %v352, %v366
      %368 = vst [vmem:[#allocation2 + $0x24] sm:$0xf] %v367
      %369 = vst [vmem:[#allocation2 + $0x28] sm:$0xf] %v361
      %v370 = vld [vmem:[#allocation2 + $0x2c] sm:$0x1]
      %v371 = vsel %vm311, %v362, %v370
      %372 = vst [vmem:[#allocation2 + $0x2c] sm:$0x1] %v371
      %v373 = vld [vmem:[%s206 + $0x18] sm:$0xf]
      %v374 = vld [vmem:[%s206 + $0x1c] sm:$0xf]
      %v376 = vshrl.u32 %v373, 16
      %v378 = vrot.slane %v376, 7
      %v379 = vshll.u32 %v373, 16
      %v381 = vor.u32 %v378, %v379
      %v382 = vrot.slane %v378, 4
      %v384 = vshrl.u32 %v374, 16
      %v386 = vrot.slane %v384, 7
      %v387 = vshll.u32 %v374, 16
      %v389 = vor.u32 %v386, %v387
      %v390 = vsel %vm282, %v382, %v389
      %v391 = vrot.slane %v386, 4
      %v395 = vld [vmem:[#allocation2 + $0x30] sm:$0xf]
      %v396 = vsel %vm305, %v381, %v395
      %397 = vst [vmem:[#allocation2 + $0x30] sm:$0xf] %v396
      %398 = vst [vmem:[#allocation2 + $0x34] sm:$0xf] %v390
      %v399 = vld [vmem:[#allocation2 + $0x38] sm:$0x1]
      %v400 = vsel %vm311, %v391, %v399
      %401 = vst [vmem:[#allocation2 + $0x38] sm:$0x1] %v400
      %v402 = vld [vmem:[%s206 + $0x20] sm:$0xf]
      %v403 = vld [vmem:[%s206 + $0x24] sm:$0xf]
      %v405 = vshrl.u32 %v402, 16
      %v407 = vrot.slane %v405, 7
      %v408 = vshll.u32 %v402, 16
      %v410 = vor.u32 %v407, %v408
      %v411 = vrot.slane %v407, 4
      %v413 = vshrl.u32 %v403, 16
      %v415 = vrot.slane %v413, 7
      %v416 = vshll.u32 %v403, 16
      %v418 = vor.u32 %v415, %v416
      %v419 = vsel %vm282, %v411, %v418
      %v420 = vrot.slane %v415, 4
      %v424 = vld [vmem:[#allocation2 + $0x3c] sm:$0xf]
      %v425 = vsel %vm305, %v410, %v424
      %426 = vst [vmem:[#allocation2 + $0x3c] sm:$0xf] %v425
      %427 = vst [vmem:[#allocation2 + $0x40] sm:$0xf] %v419
      %v428 = vld [vmem:[#allocation2 + $0x44] sm:$0x1]
      %v429 = vsel %vm311, %v420, %v428
      %430 = vst [vmem:[#allocation2 + $0x44] sm:$0x1] %v429
      %v431 = vld [vmem:[%s206 + $0x28] sm:$0xf]
      %v432 = vld [vmem:[%s206 + $0x2c] sm:$0xf]
      %v434 = vshrl.u32 %v431, 16
      %v436 = vrot.slane %v434, 7
      %v437 = vshll.u32 %v431, 16
      %v439 = vor.u32 %v436, %v437
      %v440 = vrot.slane %v436, 4
      %v442 = vshrl.u32 %v432, 16
      %v444 = vrot.slane %v442, 7
      %v445 = vshll.u32 %v432, 16
      %v447 = vor.u32 %v444, %v445
      %v448 = vsel %vm282, %v440, %v447
      %v449 = vrot.slane %v444, 4
      %v453 = vld [vmem:[#allocation2 + $0x48] sm:$0xf]
      %v454 = vsel %vm305, %v439, %v453
      %455 = vst [vmem:[#allocation2 + $0x48] sm:$0xf] %v454
      %456 = vst [vmem:[#allocation2 + $0x4c] sm:$0xf] %v448
      %v457 = vld [vmem:[#allocation2 + $0x50] sm:$0x1]
      %v458 = vsel %vm311, %v449, %v457
      %459 = vst [vmem:[#allocation2 + $0x50] sm:$0x1] %v458
      %v460 = vld [vmem:[%s206 + $0x30] sm:$0xf]
      %v461 = vld [vmem:[%s206 + $0x34] sm:$0xf]
      %v463 = vshrl.u32 %v460, 16
      %v465 = vrot.slane %v463, 7
      %v466 = vshll.u32 %v460, 16
      %v468 = vor.u32 %v465, %v466
      %v469 = vrot.slane %v465, 4
      %v471 = vshrl.u32 %v461, 16
      %v473 = vrot.slane %v471, 7
      %v474 = vshll.u32 %v461, 16
      %v476 = vor.u32 %v473, %v474
      %v477 = vsel %vm282, %v469, %v476
      %v478 = vrot.slane %v473, 4
      %v482 = vld [vmem:[#allocation2 + $0x54] sm:$0xf]
      %v483 = vsel %vm305, %v468, %v482
      %484 = vst [vmem:[#allocation2 + $0x54] sm:$0xf] %v483
      %485 = vst [vmem:[#allocation2 + $0x58] sm:$0xf] %v477
      %v486 = vld [vmem:[#allocation2 + $0x5c] sm:$0x1]
      %v487 = vsel %vm311, %v478, %v486
      %488 = vst [vmem:[#allocation2 + $0x5c] sm:$0x1] %v487
      %v489 = vld [vmem:[%s206 + $0x38] sm:$0xf]
      %v490 = vld [vmem:[%s206 + $0x3c] sm:$0xf]
      %v492 = vshrl.u32 %v489, 16
      %v494 = vrot.slane %v492, 7
      %v495 = vshll.u32 %v489, 16
      %v497 = vor.u32 %v494, %v495
      %v498 = vrot.slane %v494, 4
      %v500 = vshrl.u32 %v490, 16
      %v502 = vrot.slane %v500, 7
      %v503 = vshll.u32 %v490, 16
      %v505 = vor.u32 %v502, %v503
      %v506 = vsel %vm282, %v498, %v505
      %v507 = vrot.slane %v502, 4
      %v511 = vld [vmem:[#allocation2 + $0x60] sm:$0xf]
      %v512 = vsel %vm305, %v497, %v511
      %513 = vst [vmem:[#allocation2 + $0x60] sm:$0xf] %v512
      %514 = vst [vmem:[#allocation2 + $0x64] sm:$0xf] %v506
      %v515 = vld [vmem:[#allocation2 + $0x68] sm:$0x1]
      %v516 = vsel %vm311, %v507, %v515
      %517 = vst [vmem:[#allocation2 + $0x68] sm:$0x1] %v516
      %v518 = vld [vmem:[%s206 + $0x40] sm:$0xf]
      %v519 = vld [vmem:[%s206 + $0x44] sm:$0xf]
      %v521 = vshrl.u32 %v518, 16
      %v523 = vrot.slane %v521, 7
      %v524 = vshll.u32 %v518, 16
      %v526 = vor.u32 %v523, %v524
      %v527 = vrot.slane %v523, 4
      %v529 = vshrl.u32 %v519, 16
      %v531 = vrot.slane %v529, 7
      %v532 = vshll.u32 %v519, 16
      %v534 = vor.u32 %v531, %v532
      %v535 = vsel %vm282, %v527, %v534
      %v536 = vrot.slane %v531, 4
      %v540 = vld [vmem:[#allocation2 + $0x6c] sm:$0xf]
      %v541 = vsel %vm305, %v526, %v540
      %542 = vst [vmem:[#allocation2 + $0x6c] sm:$0xf] %v541
      %543 = vst [vmem:[#allocation2 + $0x70] sm:$0xf] %v535
      %v544 = vld [vmem:[#allocation2 + $0x74] sm:$0x1]
      %v545 = vsel %vm311, %v536, %v544
      %546 = vst [vmem:[#allocation2 + $0x74] sm:$0x1] %v545
      %v547 = vld [vmem:[%s206 + $0x48] sm:$0xf]
      %v548 = vld [vmem:[%s206 + $0x4c] sm:$0xf]
      %v550 = vshrl.u32 %v547, 16
      %v552 = vrot.slane %v550, 7
      %v553 = vshll.u32 %v547, 16
      %v555 = vor.u32 %v552, %v553
      %v556 = vrot.slane %v552, 4
      %v558 = vshrl.u32 %v548, 16
      %v560 = vrot.slane %v558, 7
      %v561 = vshll.u32 %v548, 16
      %v563 = vor.u32 %v560, %v561
      %v564 = vsel %vm282, %v556, %v563
      %v565 = vrot.slane %v560, 4
      %v569 = vld [vmem:[#allocation2 + $0x78] sm:$0xf]
      %v570 = vsel %vm305, %v555, %v569
      %571 = vst [vmem:[#allocation2 + $0x78] sm:$0xf] %v570
      %572 = vst [vmem:[#allocation2 + $0x7c] sm:$0xf] %v564
      %v573 = vld [vmem:[#allocation2 + $0x80] sm:$0x1]
      %v574 = vsel %vm311, %v565, %v573
      %575 = vst [vmem:[#allocation2 + $0x80] sm:$0x1] %v574
      %v576 = vld [vmem:[%s206 + $0x50] sm:$0xf]
      %v577 = vld [vmem:[%s206 + $0x54] sm:$0xf]
      %v579 = vshrl.u32 %v576, 16
      %v581 = vrot.slane %v579, 7
      %v582 = vshll.u32 %v576, 16
      %v584 = vor.u32 %v581, %v582
      %v585 = vrot.slane %v581, 4
      %v587 = vshrl.u32 %v577, 16
      %v589 = vrot.slane %v587, 7
      %v590 = vshll.u32 %v577, 16
      %v592 = vor.u32 %v589, %v590
      %v593 = vsel %vm282, %v585, %v592
      %v594 = vrot.slane %v589, 4
      %v598 = vld [vmem:[#allocation2 + $0x84] sm:$0xf]
      %v599 = vsel %vm305, %v584, %v598
      %600 = vst [vmem:[#allocation2 + $0x84] sm:$0xf] %v599
      %601 = vst [vmem:[#allocation2 + $0x88] sm:$0xf] %v593
      %v602 = vld [vmem:[#allocation2 + $0x8c] sm:$0x1]
      %v603 = vsel %vm311, %v594, %v602
      %604 = vst [vmem:[#allocation2 + $0x8c] sm:$0x1] %v603
      %v605 = vld [vmem:[%s206 + $0x58] sm:$0xf]
      %v606 = vld [vmem:[%s206 + $0x5c] sm:$0xf]
      %v608 = vshrl.u32 %v605, 16
      %v610 = vrot.slane %v608, 7
      %v611 = vshll.u32 %v605, 16
      %v613 = vor.u32 %v610, %v611
      %v614 = vrot.slane %v610, 4
      %v616 = vshrl.u32 %v606, 16
      %v618 = vrot.slane %v616, 7
      %v619 = vshll.u32 %v606, 16
      %v621 = vor.u32 %v618, %v619
      %v622 = vsel %vm282, %v614, %v621
      %v623 = vrot.slane %v618, 4
      %v627 = vld [vmem:[#allocation2 + $0x90] sm:$0xf]
      %v628 = vsel %vm305, %v613, %v627
      %629 = vst [vmem:[#allocation2 + $0x90] sm:$0xf] %v628
      %630 = vst [vmem:[#allocation2 + $0x94] sm:$0xf] %v622
      %v631 = vld [vmem:[#allocation2 + $0x98] sm:$0x1]
      %v632 = vsel %vm311, %v623, %v631
      %633 = vst [vmem:[#allocation2 + $0x98] sm:$0x1] %v632
      %v634 = vld [vmem:[%s206 + $0x60] sm:$0xf]
      %v635 = vld [vmem:[%s206 + $0x64] sm:$0xf]
      %v637 = vshrl.u32 %v634, 16
      %v639 = vrot.slane %v637, 7
      %v640 = vshll.u32 %v634, 16
      %v642 = vor.u32 %v639, %v640
      %v643 = vrot.slane %v639, 4
      %v645 = vshrl.u32 %v635, 16
      %v647 = vrot.slane %v645, 7
      %v648 = vshll.u32 %v635, 16
      %v650 = vor.u32 %v647, %v648
      %v651 = vsel %vm282, %v643, %v650
      %v652 = vrot.slane %v647, 4
      %v656 = vld [vmem:[#allocation2 + $0x9c] sm:$0xf]
      %v657 = vsel %vm305, %v642, %v656
      %658 = vst [vmem:[#allocation2 + $0x9c] sm:$0xf] %v657
      %659 = vst [vmem:[#allocation2 + $0xa0] sm:$0xf] %v651
      %v660 = vld [vmem:[#allocation2 + $0xa4] sm:$0x1]
      %v661 = vsel %vm311, %v652, %v660
      %662 = vst [vmem:[#allocation2 + $0xa4] sm:$0x1] %v661
      %v663 = vld [vmem:[%s206 + $0x68] sm:$0xf]
      %v664 = vld [vmem:[%s206 + $0x6c] sm:$0xf]
      %v666 = vshrl.u32 %v663, 16
      %v668 = vrot.slane %v666, 7
      %v669 = vshll.u32 %v663, 16
      %v671 = vor.u32 %v668, %v669
      %v672 = vrot.slane %v668, 4
      %v674 = vshrl.u32 %v664, 16
      %v676 = vrot.slane %v674, 7
      %v677 = vshll.u32 %v664, 16
      %v679 = vor.u32 %v676, %v677
      %v680 = vsel %vm282, %v672, %v679
      %v681 = vrot.slane %v676, 4
      %v685 = vld [vmem:[#allocation2 + $0xa8] sm:$0xf]
      %v686 = vsel %vm305, %v671, %v685
      %687 = vst [vmem:[#allocation2 + $0xa8] sm:$0xf] %v686
      %688 = vst [vmem:[#allocation2 + $0xac] sm:$0xf] %v680
      %v689 = vld [vmem:[#allocation2 + $0xb0] sm:$0x1]
      %v690 = vsel %vm311, %v681, %v689
      %691 = vst [vmem:[#allocation2 + $0xb0] sm:$0x1] %v690
      %v692 = vld [vmem:[%s206 + $0x70] sm:$0xf]
      %v693 = vld [vmem:[%s206 + $0x74] sm:$0xf]
      %v695 = vshrl.u32 %v692, 16
      %v697 = vrot.slane %v695, 7
      %v698 = vshll.u32 %v692, 16
      %v700 = vor.u32 %v697, %v698
      %v701 = vrot.slane %v697, 4
      %v703 = vshrl.u32 %v693, 16
      %v705 = vrot.slane %v703, 7
      %v706 = vshll.u32 %v693, 16
      %v708 = vor.u32 %v705, %v706
      %v709 = vsel %vm282, %v701, %v708
      %v710 = vrot.slane %v705, 4
      %v714 = vld [vmem:[#allocation2 + $0xb4] sm:$0xf]
      %v715 = vsel %vm305, %v700, %v714
      %716 = vst [vmem:[#allocation2 + $0xb4] sm:$0xf] %v715
      %717 = vst [vmem:[#allocation2 + $0xb8] sm:$0xf] %v709
      %v718 = vld [vmem:[#allocation2 + $0xbc] sm:$0x1]
      %v719 = vsel %vm311, %v710, %v718
      %720 = vst [vmem:[#allocation2 + $0xbc] sm:$0x1] %v719
      %v721 = vld [vmem:[%s206 + $0x78] sm:$0xf]
      %v722 = vld [vmem:[%s206 + $0x7c] sm:$0xf]
      %v724 = vshrl.u32 %v721, 16
      %v726 = vrot.slane %v724, 7
      %v727 = vshll.u32 %v721, 16
      %v729 = vor.u32 %v726, %v727
      %v730 = vrot.slane %v726, 4
      %v732 = vshrl.u32 %v722, 16
      %v734 = vrot.slane %v732, 7
      %v735 = vshll.u32 %v722, 16
      %v737 = vor.u32 %v734, %v735
      %v738 = vsel %vm282, %v730, %v737
      %v739 = vrot.slane %v734, 4
      %v743 = vld [vmem:[#allocation2 + $0xc0] sm:$0xf]
      %v744 = vsel %vm305, %v729, %v743
      %745 = vst [vmem:[#allocation2 + $0xc0] sm:$0xf] %v744
      %746 = vst [vmem:[#allocation2 + $0xc4] sm:$0xf] %v738
      %v747 = vld [vmem:[#allocation2 + $0xc8] sm:$0x1]
      %v748 = vsel %vm311, %v739, %v747
      %749 = vst [vmem:[#allocation2 + $0xc8] sm:$0x1] %v748
      %v750 = vld [vmem:[#allocation2] sm:$0xf]
      %v751 = vld [vmem:[#allocation2 + $0x4] sm:$0xf]
      %v752 = vld [vmem:[#allocation2 + $0x8] sm:$0xf]
      %v753 = vld [vmem:[#allocation2 + $0xc] sm:$0xf]
      %v754 = vld [vmem:[#allocation2 + $0x10] sm:$0xf]
      %v755 = vld [vmem:[#allocation2 + $0x14] sm:$0xf]
      %v756 = vld [vmem:[#allocation2 + $0x18] sm:$0xf]
      %v757 = vld [vmem:[#allocation2 + $0x1c] sm:$0xf]
      %v758 = vld [vmem:[#allocation2 + $0x20] sm:$0xf]
      %v759 = vld [vmem:[#allocation2 + $0x24] sm:$0xf]
      %v760 = vld [vmem:[#allocation2 + $0x28] sm:$0xf]
      %v761 = vld [vmem:[#allocation2 + $0x2c] sm:$0xf]
      %v762 = vld [vmem:[#allocation2 + $0x30] sm:$0xf]
      %v763 = vld [vmem:[#allocation2 + $0x34] sm:$0xf]
      %v764 = vld [vmem:[#allocation2 + $0x38] sm:$0xf]
      %v765 = vld [vmem:[#allocation2 + $0x3c] sm:$0xf]
      %v766 = vld [vmem:[#allocation2 + $0x40] sm:$0xf]
      %v767 = vld [vmem:[#allocation2 + $0x44] sm:$0xf]
      %v768 = vld [vmem:[#allocation2 + $0x48] sm:$0xf]
      %v769 = vld [vmem:[#allocation2 + $0x4c] sm:$0xf]
      %v770 = vld [vmem:[#allocation2 + $0x50] sm:$0xf]
      %v771 = vld [vmem:[#allocation2 + $0x54] sm:$0xf]
      %v772 = vld [vmem:[#allocation2 + $0x58] sm:$0xf]
      %v773 = vld [vmem:[#allocation2 + $0x5c] sm:$0xf]
      %v774 = vld [vmem:[#allocation2 + $0x60] sm:$0xf]
      %v775 = vld [vmem:[#allocation2 + $0x64] sm:$0xf]
      %v776 = vld [vmem:[#allocation2 + $0x68] sm:$0xf]
      %v777 = vld [vmem:[#allocation2 + $0x6c] sm:$0xf]
      %v778 = vld [vmem:[#allocation2 + $0x70] sm:$0xf]
      %v779 = vld [vmem:[#allocation2 + $0x74] sm:$0xf]
      %v780 = vld [vmem:[#allocation2 + $0x78] sm:$0xf]
      %v781 = vld [vmem:[#allocation2 + $0x7c] sm:$0xf]
      %v782 = vld [vmem:[#allocation2 + $0x80] sm:$0xf]
      %v783 = vld [vmem:[#allocation2 + $0x84] sm:$0xf]
      %v784 = vld [vmem:[#allocation2 + $0x88] sm:$0xf]
      %v785 = vld [vmem:[#allocation2 + $0x8c] sm:$0xf]
      %v786 = vld [vmem:[#allocation2 + $0x90] sm:$0xf]
      %v787 = vld [vmem:[#allocation2 + $0x94] sm:$0xf]
      %v788 = vld [vmem:[#allocation2 + $0x98] sm:$0xf]
      %v789 = vld [vmem:[#allocation2 + $0x9c] sm:$0xf]
      %v790 = vld [vmem:[#allocation2 + $0xa0] sm:$0xf]
      %v791 = vld [vmem:[#allocation2 + $0xa4] sm:$0xf]
      %v792 = vld [vmem:[#allocation2 + $0xa8] sm:$0xf]
      %v793 = vld [vmem:[#allocation2 + $0xac] sm:$0xf]
      %v794 = vld [vmem:[#allocation2 + $0xb0] sm:$0xf]
      %v795 = vld [vmem:[#allocation2 + $0xb4] sm:$0xf]
      %v796 = vld [vmem:[#allocation2 + $0xb8] sm:$0xf]
      %v797 = vld [vmem:[#allocation2 + $0xbc] sm:$0xf]
      %v798 = vld [vmem:[%s210] sm:$0xf]
      %v799 = vld [vmem:[%s210 + $0x4] sm:$0xf]
      %v800 = vld [vmem:[%s210 + $0x8] sm:$0xf]
      %v801 = vld [vmem:[%s210 + $0xc] sm:$0xf]
      %v802 = vld [vmem:[%s210 + $0x10] sm:$0xf]
      %v803 = vld [vmem:[%s210 + $0x14] sm:$0xf]
      %v804 = vld [vmem:[%s210 + $0x18] sm:$0xf]
      %v805 = vld [vmem:[%s210 + $0x1c] sm:$0xf]
      %v806 = vld [vmem:[%s210 + $0x20] sm:$0xf]
      %v807 = vld [vmem:[%s210 + $0x24] sm:$0xf]
      %v808 = vld [vmem:[%s210 + $0x28] sm:$0xf]
      %v809 = vld [vmem:[%s210 + $0x2c] sm:$0xf]
      %v810 = vld [vmem:[%s210 + $0x30] sm:$0xf]
      %v811 = vld [vmem:[%s210 + $0x34] sm:$0xf]
      %v812 = vld [vmem:[%s210 + $0x38] sm:$0xf]
      %v813 = vld [vmem:[%s210 + $0x3c] sm:$0xf]
      %v814 = vld [vmem:[#allocation2 + $0xc0] sm:$0x1]
      %s815 = scalar_lea.vmem %s210, 64
      %v816 = vld [vmem:[%s815] sm:$0xf]
      %v817 = vld [vmem:[%s815 + $0x4] sm:$0xf]
      %v818 = vld [vmem:[%s815 + $0x8] sm:$0xf]
      %v819 = vld [vmem:[%s815 + $0xc] sm:$0xf]
      %v820 = vld [vmem:[%s815 + $0x10] sm:$0xf]
      %v821 = vld [vmem:[%s815 + $0x14] sm:$0xf]
      %v822 = vld [vmem:[%s815 + $0x18] sm:$0xf]
      %v823 = vld [vmem:[%s815 + $0x1c] sm:$0xf]
      %v824 = vld [vmem:[%s815 + $0x20] sm:$0xf]
      %v825 = vld [vmem:[%s815 + $0x24] sm:$0xf]
      %v826 = vld [vmem:[%s815 + $0x28] sm:$0xf]
      %v827 = vld [vmem:[%s815 + $0x2c] sm:$0xf]
      %v828 = vld [vmem:[%s815 + $0x30] sm:$0xf]
      %v829 = vld [vmem:[%s815 + $0x34] sm:$0xf]
      %v830 = vld [vmem:[%s815 + $0x38] sm:$0xf]
      %v831 = vld [vmem:[%s815 + $0x3c] sm:$0xf]
      %v881 = vunpack.c.l.b16 %v750
      %v882 = vunpack.c.l.b16 %v751
      %v883 = vunpack.c.l.b16 %v752
      %v884 = vunpack.c.l.b16 %v753
      %v885 = vunpack.c.l.b16 %v754
      %v886 = vunpack.c.l.b16 %v755
      %v887 = vunpack.c.l.b16 %v756
      %v888 = vunpack.c.l.b16 %v757
      %v889 = vunpack.c.l.b16 %v758
      %v890 = vunpack.c.l.b16 %v759
      %v891 = vunpack.c.l.b16 %v760
      %v892 = vunpack.c.l.b16 %v761
      %v893 = vunpack.c.l.b16 %v762
      %v894 = vunpack.c.l.b16 %v763
      %v895 = vunpack.c.l.b16 %v764
      %v896 = vunpack.c.l.b16 %v765
      %v897 = vunpack.c.l.b16 %v766
      %v898 = vunpack.c.l.b16 %v767
      %v899 = vunpack.c.l.b16 %v768
      %v900 = vunpack.c.l.b16 %v769
      %v901 = vunpack.c.l.b16 %v770
      %v902 = vunpack.c.l.b16 %v771
      %v903 = vunpack.c.l.b16 %v772
      %v904 = vunpack.c.l.b16 %v773
      %v905 = vunpack.c.l.b16 %v774
      %v906 = vunpack.c.l.b16 %v775
      %v907 = vunpack.c.l.b16 %v776
      %v908 = vunpack.c.l.b16 %v777
      %v909 = vunpack.c.l.b16 %v778
      %v910 = vunpack.c.l.b16 %v779
      %v911 = vunpack.c.l.b16 %v780
      %v912 = vunpack.c.l.b16 %v781
      %v913 = vunpack.c.l.b16 %v782
      %v914 = vunpack.c.l.b16 %v783
      %v915 = vunpack.c.l.b16 %v784
      %v916 = vunpack.c.l.b16 %v785
      %v917 = vunpack.c.l.b16 %v786
      %v918 = vunpack.c.l.b16 %v787
      %v919 = vunpack.c.l.b16 %v788
      %v920 = vunpack.c.l.b16 %v789
      %v921 = vunpack.c.l.b16 %v790
      %v922 = vunpack.c.l.b16 %v791
      %v923 = vunpack.c.l.b16 %v792
      %v924 = vunpack.c.l.b16 %v793
      %v925 = vunpack.c.l.b16 %v794
      %v926 = vunpack.c.l.b16 %v795
      %v927 = vunpack.c.l.b16 %v796
      %v928 = vunpack.c.l.b16 %v797
      %v929 = vunpack.c.l.b16 %v814
      %v930 = vpack.c.b16 %v882, %v881
      %v931 = vpack.c.b16 %v884, %v883
      %v932 = vpack.c.b16 %v886, %v885
      %v933 = vpack.c.b16 %v888, %v887
      %v934 = vpack.c.b16 %v890, %v889
      %v935 = vpack.c.b16 %v892, %v891
      %v936 = vpack.c.b16 %v894, %v893
      %v937 = vpack.c.b16 %v896, %v895
      %v938 = vpack.c.b16 %v898, %v897
      %v939 = vpack.c.b16 %v900, %v899
      %v940 = vpack.c.b16 %v902, %v901
      %v941 = vpack.c.b16 %v904, %v903
      %v942 = vpack.c.b16 %v906, %v905
      %v943 = vpack.c.b16 %v908, %v907
      %v944 = vpack.c.b16 %v910, %v909
      %v945 = vpack.c.b16 %v912, %v911
      %v946 = vpack.c.b16 %v914, %v913
      %v947 = vpack.c.b16 %v916, %v915
      %v948 = vpack.c.b16 %v918, %v917
      %v949 = vpack.c.b16 %v920, %v919
      %v950 = vpack.c.b16 %v922, %v921
      %v951 = vpack.c.b16 %v924, %v923
      %v952 = vpack.c.b16 %v926, %v925
      %v953 = vpack.c.b16 %v928, %v927
      %v954 = vpack.c.b16 %v929, %v929
      %vm955 = vsmask.f32 7424
      %v957 = vshrl.u32 %v930, 16
      %v959 = vshll.u32 %v930, 16
      %v961 = vrot.slane %v959, 1
      %v962 = vor.u32 %v957, %v961
      %v964 = vshll.u32 %v931, 16
      %v966 = vrot.slane %v964, 1
      %v967 = vsel %vm955, %v962, %v966
      %v968 = vshrl.u32 %v931, 16
      %v970 = vor.u32 %v968, %v966
      %v972 = vshll.u32 %v932, 16
      %v974 = vrot.slane %v972, 1
      %v975 = vsel %vm955, %v970, %v974
      %v976 = vshrl.u32 %v932, 16
      %v978 = vor.u32 %v976, %v974
      %v980 = vshll.u32 %v933, 16
      %v982 = vrot.slane %v980, 1
      %v983 = vsel %vm955, %v978, %v982
      %v984 = vshrl.u32 %v933, 16
      %v986 = vor.u32 %v984, %v982
      %v988 = vshll.u32 %v934, 16
      %v990 = vrot.slane %v988, 1
      %v991 = vsel %vm955, %v986, %v990
      %v992 = vshrl.u32 %v934, 16
      %v994 = vor.u32 %v992, %v990
      %v996 = vshll.u32 %v935, 16
      %v998 = vrot.slane %v996, 1
      %v999 = vsel %vm955, %v994, %v998
      %v1000 = vshrl.u32 %v935, 16
      %v1002 = vor.u32 %v1000, %v998
      %v1004 = vshll.u32 %v936, 16
      %v1006 = vrot.slane %v1004, 1
      %v1007 = vsel %vm955, %v1002, %v1006
      %v1008 = vshrl.u32 %v936, 16
      %v1010 = vor.u32 %v1008, %v1006
      %v1012 = vshll.u32 %v937, 16
      %v1014 = vrot.slane %v1012, 1
      %v1015 = vsel %vm955, %v1010, %v1014
      %v1016 = vshrl.u32 %v937, 16
      %v1018 = vor.u32 %v1016, %v1014
      %v1020 = vshll.u32 %v938, 16
      %v1022 = vrot.slane %v1020, 1
      %v1023 = vsel %vm955, %v1018, %v1022
      %v1024 = vshrl.u32 %v938, 16
      %v1026 = vor.u32 %v1024, %v1022
      %v1028 = vshll.u32 %v939, 16
      %v1030 = vrot.slane %v1028, 1
      %v1031 = vsel %vm955, %v1026, %v1030
      %v1032 = vshrl.u32 %v939, 16
      %v1034 = vor.u32 %v1032, %v1030
      %v1036 = vshll.u32 %v940, 16
      %v1038 = vrot.slane %v1036, 1
      %v1039 = vsel %vm955, %v1034, %v1038
      %v1040 = vshrl.u32 %v940, 16
      %v1042 = vor.u32 %v1040, %v1038
      %v1044 = vshll.u32 %v941, 16
      %v1046 = vrot.slane %v1044, 1
      %v1047 = vsel %vm955, %v1042, %v1046
      %v1048 = vshrl.u32 %v941, 16
      %v1050 = vor.u32 %v1048, %v1046
      %v1052 = vshll.u32 %v942, 16
      %v1054 = vrot.slane %v1052, 1
      %v1055 = vsel %vm955, %v1050, %v1054
      %v1056 = vshrl.u32 %v942, 16
      %v1058 = vor.u32 %v1056, %v1054
      %v1060 = vshll.u32 %v943, 16
      %v1062 = vrot.slane %v1060, 1
      %v1063 = vsel %vm955, %v1058, %v1062
      %v1064 = vshrl.u32 %v943, 16
      %v1066 = vor.u32 %v1064, %v1062
      %v1068 = vshll.u32 %v944, 16
      %v1070 = vrot.slane %v1068, 1
      %v1071 = vsel %vm955, %v1066, %v1070
      %v1072 = vshrl.u32 %v944, 16
      %v1074 = vor.u32 %v1072, %v1070
      %v1076 = vshll.u32 %v945, 16
      %v1078 = vrot.slane %v1076, 1
      %v1079 = vsel %vm955, %v1074, %v1078
      %v1080 = vshrl.u32 %v945, 16
      %v1082 = vor.u32 %v1080, %v1078
      %v1084 = vshll.u32 %v946, 16
      %v1086 = vrot.slane %v1084, 1
      %v1087 = vsel %vm955, %v1082, %v1086
      %v1088 = vshrl.u32 %v946, 16
      %v1090 = vor.u32 %v1088, %v1086
      %v1092 = vshll.u32 %v947, 16
      %v1094 = vrot.slane %v1092, 1
      %v1095 = vsel %vm955, %v1090, %v1094
      %v1096 = vshrl.u32 %v947, 16
      %v1098 = vor.u32 %v1096, %v1094
      %v1100 = vshll.u32 %v948, 16
      %v1102 = vrot.slane %v1100, 1
      %v1103 = vsel %vm955, %v1098, %v1102
      %v1104 = vshrl.u32 %v948, 16
      %v1106 = vor.u32 %v1104, %v1102
      %v1108 = vshll.u32 %v949, 16
      %v1110 = vrot.slane %v1108, 1
      %v1111 = vsel %vm955, %v1106, %v1110
      %v1112 = vshrl.u32 %v949, 16
      %v1114 = vor.u32 %v1112, %v1110
      %v1116 = vshll.u32 %v950, 16
      %v1118 = vrot.slane %v1116, 1
      %v1119 = vsel %vm955, %v1114, %v1118
      %v1120 = vshrl.u32 %v950, 16
      %v1122 = vor.u32 %v1120, %v1118
      %v1124 = vshll.u32 %v951, 16
      %v1126 = vrot.slane %v1124, 1
      %v1127 = vsel %vm955, %v1122, %v1126
      %v1128 = vshrl.u32 %v951, 16
      %v1130 = vor.u32 %v1128, %v1126
      %v1132 = vshll.u32 %v952, 16
      %v1134 = vrot.slane %v1132, 1
      %v1135 = vsel %vm955, %v1130, %v1134
      %v1136 = vshrl.u32 %v952, 16
      %v1138 = vor.u32 %v1136, %v1134
      %v1140 = vshll.u32 %v953, 16
      %v1142 = vrot.slane %v1140, 1
      %v1143 = vsel %vm955, %v1138, %v1142
      %v1144 = vshrl.u32 %v953, 16
      %v1146 = vor.u32 %v1144, %v1142
      %v1148 = vshll.u32 %v954, 16
      %v1150 = vrot.slane %v1148, 1
      %v1151 = vsel %vm955, %v1146, %v1150
      %v1192 = vunpack.c.l.b16 %v816
      %v1193 = vunpack.c.l.b16 %v817
      %v1194 = vunpack.c.l.b16 %v818
      %v1195 = vunpack.c.l.b16 %v819
      %v1196 = vunpack.c.l.b16 %v820
      %v1197 = vunpack.c.l.b16 %v821
      %v1198 = vunpack.c.l.b16 %v822
      %v1199 = vunpack.c.l.b16 %v823
      %v1200 = vunpack.c.l.b16 %v824
      %v1201 = vunpack.c.l.b16 %v825
      %v1202 = vunpack.c.l.b16 %v826
      %v1203 = vunpack.c.l.b16 %v827
      %v1204 = vunpack.c.l.b16 %v828
      %v1205 = vunpack.c.l.b16 %v829
      %v1206 = vunpack.c.l.b16 %v830
      %v1207 = vunpack.c.l.b16 %v831
      %v1208 = vpack.c.b16 %v1193, %v1192
      %v1209 = vpack.c.b16 %v1195, %v1194
      %v1210 = vpack.c.b16 %v1197, %v1196
      %v1211 = vpack.c.b16 %v1199, %v1198
      %v1212 = vpack.c.b16 %v1201, %v1200
      %v1213 = vpack.c.b16 %v1203, %v1202
      %v1214 = vpack.c.b16 %v1205, %v1204
      %v1215 = vpack.c.b16 %v1207, %v1206
      %1224 = vmatpush.bf16.msra.mxu0 %v1215
      %1225 = vmatpush.bf16.msra.mxu0 %v1214
      %1226 = vmatpush.bf16.msra.mxu0 %v1213
      %1227 = vmatpush.bf16.msra.mxu0 %v1212
      %1228 = vmatpush.bf16.msra.mxu0 %v1211
      %1229 = vmatpush.bf16.msra.mxu0 %v1210
      %1230 = vmatpush.bf16.msra.mxu0 %v1209
      %1231 = vmatpush.bf16.msra.mxu0 %v1208
      %1232 = vmatmul.bf16.gmra.mxu0 %v967
      %v1233 = vpop.f32.mrf.mxu0
      %v1234 = vadd.f32 0.0, %v1233
      %v1235 = vpop.f32.mrf.mxu0
      %v1236 = vadd.f32 0.0, %v1235
      %1237 = vmatmul.bf16.gmra.mxu0 %v975
      %v1238 = vpop.f32.mrf.mxu0
      %v1239 = vpop.f32.mrf.mxu0
      %v1240 = vadd.f32 0.0, %v1239
      %1241 = vmatmul.bf16.gmra.mxu0 %v983
      %v1242 = vpop.f32.mrf.mxu0
      %v1243 = vadd.f32 0.0, %v1242
      %v1244 = vpop.f32.mrf.mxu0
      %1245 = vmatmul.bf16.gmra.mxu0 %v991
      %v1246 = vpop.f32.mrf.mxu0
      %v1247 = vadd.f32 0.0, %v1246
      %v1248 = vpop.f32.mrf.mxu0
      %v1249 = vadd.f32 0.0, %v1248
      %1250 = vmatmul.bf16.gmra.mxu0 %v999
      %v1251 = vpop.f32.mrf.mxu0
      %v1252 = vpop.f32.mrf.mxu0
      %v1253 = vadd.f32 0.0, %v1252
      %1254 = vmatmul.bf16.gmra.mxu0 %v1007
      %v1255 = vpop.f32.mrf.mxu0
      %v1256 = vadd.f32 0.0, %v1255
      %v1257 = vpop.f32.mrf.mxu0
      %1258 = vmatmul.bf16.gmra.mxu0 %v1015
      %v1259 = vpop.f32.mrf.mxu0
      %v1260 = vadd.f32 0.0, %v1259
      %v1261 = vpop.f32.mrf.mxu0
      %v1262 = vadd.f32 0.0, %v1261
      %1263 = vmatmul.bf16.gmra.mxu0 %v1023
      %v1264 = vpop.f32.mrf.mxu0
      %v1265 = vpop.f32.mrf.mxu0
      %v1266 = vadd.f32 0.0, %v1265
      %1267 = vmatmul.bf16.gmra.mxu0 %v1031
      %v1268 = vpop.f32.mrf.mxu0
      %v1269 = vadd.f32 0.0, %v1268
      %v1270 = vpop.f32.mrf.mxu0
      %1271 = vmatmul.bf16.gmra.mxu0 %v1039
      %v1272 = vpop.f32.mrf.mxu0
      %v1273 = vadd.f32 0.0, %v1272
      %v1274 = vpop.f32.mrf.mxu0
      %v1275 = vadd.f32 0.0, %v1274
      %1276 = vmatmul.bf16.gmra.mxu0 %v1047
      %v1277 = vpop.f32.mrf.mxu0
      %v1278 = vpop.f32.mrf.mxu0
      %v1279 = vadd.f32 0.0, %v1278
      %1280 = vmatmul.bf16.gmra.mxu0 %v1055
      %v1281 = vpop.f32.mrf.mxu0
      %v1282 = vadd.f32 0.0, %v1281
      %v1283 = vpop.f32.mrf.mxu0
      %1284 = vmatmul.bf16.gmra.mxu0 %v1063
      %v1285 = vpop.f32.mrf.mxu0
      %v1286 = vadd.f32 0.0, %v1285
      %v1287 = vpop.f32.mrf.mxu0
      %v1288 = vadd.f32 0.0, %v1287
      %1289 = vmatmul.bf16.gmra.mxu0 %v1071
      %v1290 = vpop.f32.mrf.mxu0
      %v1291 = vpop.f32.mrf.mxu0
      %v1292 = vadd.f32 0.0, %v1291
      %1293 = vmatmul.bf16.gmra.mxu0 %v1079
      %v1294 = vpop.f32.mrf.mxu0
      %v1295 = vadd.f32 0.0, %v1294
      %v1296 = vpop.f32.mrf.mxu0
      %1297 = vmatmul.bf16.gmra.mxu0 %v1087
      %v1298 = vpop.f32.mrf.mxu0
      %v1299 = vadd.f32 0.0, %v1298
      %v1300 = vpop.f32.mrf.mxu0
      %v1301 = vadd.f32 0.0, %v1300
      %1302 = vmatmul.bf16.gmra.mxu0 %v1095
      %v1303 = vpop.f32.mrf.mxu0
      %v1304 = vpop.f32.mrf.mxu0
      %v1305 = vadd.f32 0.0, %v1304
      %1306 = vmatmul.bf16.gmra.mxu0 %v1103
      %v1307 = vpop.f32.mrf.mxu0
      %v1308 = vadd.f32 0.0, %v1307
      %v1309 = vpop.f32.mrf.mxu0
      %1310 = vmatmul.bf16.gmra.mxu0 %v1111
      %v1311 = vpop.f32.mrf.mxu0
      %v1312 = vadd.f32 0.0, %v1311
      %v1313 = vpop.f32.mrf.mxu0
      %v1314 = vadd.f32 0.0, %v1313
      %1315 = vmatmul.bf16.gmra.mxu0 %v1119
      %v1316 = vpop.f32.mrf.mxu0
      %v1317 = vpop.f32.mrf.mxu0
      %v1318 = vadd.f32 0.0, %v1317
      %1319 = vmatmul.bf16.gmra.mxu0 %v1127
      %v1320 = vpop.f32.mrf.mxu0
      %v1321 = vadd.f32 0.0, %v1320
      %v1322 = vpop.f32.mrf.mxu0
      %1323 = vmatmul.bf16.gmra.mxu0 %v1135
      %v1324 = vpop.f32.mrf.mxu0
      %v1325 = vadd.f32 0.0, %v1324
      %v1326 = vpop.f32.mrf.mxu0
      %v1327 = vadd.f32 0.0, %v1326
      %1328 = vmatmul.bf16.gmra.mxu0 %v1143
      %v1329 = vpop.f32.mrf.mxu0
      %v1330 = vpop.f32.mrf.mxu0
      %v1331 = vadd.f32 0.0, %v1330
      %1332 = vmatmul.bf16.gmra.mxu0 %v1151
      %v1333 = vpop.f32.mrf.mxu0
      %v1334 = vadd.f32 0.0, %v1333
      %v1335 = vpop.f32.mrf.mxu0
      %1336 = vdwg.mxu0
      %v1377 = vunpack.c.l.b16 %v798
      %v1378 = vunpack.c.l.b16 %v799
      %v1379 = vunpack.c.l.b16 %v800
      %v1380 = vunpack.c.l.b16 %v801
      %v1381 = vunpack.c.l.b16 %v802
      %v1382 = vunpack.c.l.b16 %v803
      %v1383 = vunpack.c.l.b16 %v804
      %v1384 = vunpack.c.l.b16 %v805
      %v1385 = vunpack.c.l.b16 %v806
      %v1386 = vunpack.c.l.b16 %v807
      %v1387 = vunpack.c.l.b16 %v808
      %v1388 = vunpack.c.l.b16 %v809
      %v1389 = vunpack.c.l.b16 %v810
      %v1390 = vunpack.c.l.b16 %v811
      %v1391 = vunpack.c.l.b16 %v812
      %v1392 = vunpack.c.l.b16 %v813
      %v1393 = vpack.c.b16 %v1378, %v1377
      %v1394 = vpack.c.b16 %v1380, %v1379
      %v1395 = vpack.c.b16 %v1382, %v1381
      %v1396 = vpack.c.b16 %v1384, %v1383
      %v1397 = vpack.c.b16 %v1386, %v1385
      %v1398 = vpack.c.b16 %v1388, %v1387
      %v1399 = vpack.c.b16 %v1390, %v1389
      %v1400 = vpack.c.b16 %v1392, %v1391
      %1409 = vmatpush.bf16.msra.mxu0 %v1400
      %1410 = vmatpush.bf16.msra.mxu0 %v1399
      %1411 = vmatpush.bf16.msra.mxu0 %v1398
      %1412 = vmatpush.bf16.msra.mxu0 %v1397
      %1413 = vmatpush.bf16.msra.mxu0 %v1396
      %1414 = vmatpush.bf16.msra.mxu0 %v1395
      %1415 = vmatpush.bf16.msra.mxu0 %v1394
      %1416 = vmatpush.bf16.msra.mxu0 %v1393
      %1417 = vmatmul.bf16.gmra.mxu0 %v930
      %v1418 = vpop.f32.mrf.mxu0
      %v1419 = vadd.f32 %v1234, %v1418
      %v1420 = vpop.f32.mrf.mxu0
      %v1421 = vadd.f32 %v1236, %v1420
      %1422 = vmatmul.bf16.gmra.mxu0 %v931
      %v1423 = vpop.f32.mrf.mxu0
      %v1424 = vpop.f32.mrf.mxu0
      %v1425 = vadd.f32 %v1240, %v1424
      %1426 = vmatmul.bf16.gmra.mxu0 %v932
      %v1427 = vpop.f32.mrf.mxu0
      %v1428 = vadd.f32 %v1243, %v1427
      %v1429 = vpop.f32.mrf.mxu0
      %1430 = vmatmul.bf16.gmra.mxu0 %v933
      %v1431 = vpop.f32.mrf.mxu0
      %v1432 = vadd.f32 %v1247, %v1431
      %v1433 = vpop.f32.mrf.mxu0
      %v1434 = vadd.f32 %v1249, %v1433
      %1435 = vmatmul.bf16.gmra.mxu0 %v934
      %v1436 = vpop.f32.mrf.mxu0
      %v1437 = vpop.f32.mrf.mxu0
      %v1438 = vadd.f32 %v1253, %v1437
      %1439 = vmatmul.bf16.gmra.mxu0 %v935
      %v1440 = vpop.f32.mrf.mxu0
      %v1441 = vadd.f32 %v1256, %v1440
      %v1442 = vpop.f32.mrf.mxu0
      %1443 = vmatmul.bf16.gmra.mxu0 %v936
      %v1444 = vpop.f32.mrf.mxu0
      %v1445 = vadd.f32 %v1260, %v1444
      %v1446 = vpop.f32.mrf.mxu0
      %v1447 = vadd.f32 %v1262, %v1446
      %1448 = vmatmul.bf16.gmra.mxu0 %v937
      %v1449 = vpop.f32.mrf.mxu0
      %v1450 = vpop.f32.mrf.mxu0
      %v1451 = vadd.f32 %v1266, %v1450
      %1452 = vmatmul.bf16.gmra.mxu0 %v938
      %v1453 = vpop.f32.mrf.mxu0
      %v1454 = vadd.f32 %v1269, %v1453
      %v1455 = vpop.f32.mrf.mxu0
      %1456 = vmatmul.bf16.gmra.mxu0 %v939
      %v1457 = vpop.f32.mrf.mxu0
      %v1458 = vadd.f32 %v1273, %v1457
      %v1459 = vpop.f32.mrf.mxu0
      %v1460 = vadd.f32 %v1275, %v1459
      %1461 = vmatmul.bf16.gmra.mxu0 %v940
      %v1462 = vpop.f32.mrf.mxu0
      %v1463 = vpop.f32.mrf.mxu0
      %v1464 = vadd.f32 %v1279, %v1463
      %1465 = vmatmul.bf16.gmra.mxu0 %v941
      %v1466 = vpop.f32.mrf.mxu0
      %v1467 = vadd.f32 %v1282, %v1466
      %v1468 = vpop.f32.mrf.mxu0
      %1469 = vmatmul.bf16.gmra.mxu0 %v942
      %v1470 = vpop.f32.mrf.mxu0
      %v1471 = vadd.f32 %v1286, %v1470
      %v1472 = vpop.f32.mrf.mxu0
      %v1473 = vadd.f32 %v1288, %v1472
      %1474 = vmatmul.bf16.gmra.mxu0 %v943
      %v1475 = vpop.f32.mrf.mxu0
      %v1476 = vpop.f32.mrf.mxu0
      %v1477 = vadd.f32 %v1292, %v1476
      %1478 = vmatmul.bf16.gmra.mxu0 %v944
      %v1479 = vpop.f32.mrf.mxu0
      %v1480 = vadd.f32 %v1295, %v1479
      %v1481 = vpop.f32.mrf.mxu0
      %1482 = vmatmul.bf16.gmra.mxu0 %v945
      %v1483 = vpop.f32.mrf.mxu0
      %v1484 = vadd.f32 %v1299, %v1483
      %v1485 = vpop.f32.mrf.mxu0
      %v1486 = vadd.f32 %v1301, %v1485
      %1487 = vmatmul.bf16.gmra.mxu0 %v946
      %v1488 = vpop.f32.mrf.mxu0
      %v1489 = vpop.f32.mrf.mxu0
      %v1490 = vadd.f32 %v1305, %v1489
      %1491 = vmatmul.bf16.gmra.mxu0 %v947
      %v1492 = vpop.f32.mrf.mxu0
      %v1493 = vadd.f32 %v1308, %v1492
      %v1494 = vpop.f32.mrf.mxu0
      %1495 = vmatmul.bf16.gmra.mxu0 %v948
      %v1496 = vpop.f32.mrf.mxu0
      %v1497 = vadd.f32 %v1312, %v1496
      %v1498 = vpop.f32.mrf.mxu0
      %v1499 = vadd.f32 %v1314, %v1498
      %1500 = vmatmul.bf16.gmra.mxu0 %v949
      %v1501 = vpop.f32.mrf.mxu0
      %v1502 = vpop.f32.mrf.mxu0
      %v1503 = vadd.f32 %v1318, %v1502
      %1504 = vmatmul.bf16.gmra.mxu0 %v950
      %v1505 = vpop.f32.mrf.mxu0
      %v1506 = vadd.f32 %v1321, %v1505
      %v1507 = vpop.f32.mrf.mxu0
      %1508 = vmatmul.bf16.gmra.mxu0 %v951
      %v1509 = vpop.f32.mrf.mxu0
      %v1510 = vadd.f32 %v1325, %v1509
      %v1511 = vpop.f32.mrf.mxu0
      %v1512 = vadd.f32 %v1327, %v1511
      %1513 = vmatmul.bf16.gmra.mxu0 %v952
      %v1514 = vpop.f32.mrf.mxu0
      %v1515 = vpop.f32.mrf.mxu0
      %v1516 = vadd.f32 %v1331, %v1515
      %1517 = vmatmul.bf16.gmra.mxu0 %v953
      %v1518 = vpop.f32.mrf.mxu0
      %v1519 = vadd.f32 %v1334, %v1518
      %v1520 = vpop.f32.mrf.mxu0
      %1521 = vdwg.mxu0
      %v1522 = vld [vmem:[#allocation2] sm:$0xe]
      %s1523 = scalar_lea.vmem %s210, 128
      %v1524 = vld [vmem:[%s1523] sm:$0xf]
      %v1525 = vld [vmem:[%s1523 + $0x4] sm:$0xf]
      %v1526 = vld [vmem:[%s1523 + $0x8] sm:$0xf]
      %v1527 = vld [vmem:[%s1523 + $0xc] sm:$0xf]
      %v1528 = vld [vmem:[%s1523 + $0x10] sm:$0xf]
      %v1529 = vld [vmem:[%s1523 + $0x14] sm:$0xf]
      %v1530 = vld [vmem:[%s1523 + $0x18] sm:$0xf]
      %v1531 = vld [vmem:[%s1523 + $0x1c] sm:$0xf]
      %v1532 = vld [vmem:[%s1523 + $0x20] sm:$0xf]
      %v1533 = vld [vmem:[%s1523 + $0x24] sm:$0xf]
      %v1534 = vld [vmem:[%s1523 + $0x28] sm:$0xf]
      %v1535 = vld [vmem:[%s1523 + $0x2c] sm:$0xf]
      %v1536 = vld [vmem:[%s1523 + $0x30] sm:$0xf]
      %v1537 = vld [vmem:[%s1523 + $0x34] sm:$0xf]
      %v1538 = vld [vmem:[%s1523 + $0x38] sm:$0xf]
      %v1539 = vld [vmem:[%s1523 + $0x3c] sm:$0xf]
      %v1541 = vunpack.c.l.b16 %v1522
      %v1542 = vpack.c.b16 %v882, %v1541
      %vm1543 = vcmask 1046528
      %v1544 = vrot.slane %v1542, 1
      %v1545 = vrot.slane %v931, 1
      %v1546 = vsel %vm1543, %v1544, %v1545
      %v1547 = vrot.slane %v932, 1
      %v1548 = vsel %vm1543, %v1545, %v1547
      %v1549 = vrot.slane %v933, 1
      %v1550 = vsel %vm1543, %v1547, %v1549
      %v1551 = vrot.slane %v934, 1
      %v1552 = vsel %vm1543, %v1549, %v1551
      %v1553 = vrot.slane %v935, 1
      %v1554 = vsel %vm1543, %v1551, %v1553
      %v1555 = vrot.slane %v936, 1
      %v1556 = vsel %vm1543, %v1553, %v1555
      %v1557 = vrot.slane %v937, 1
      %v1558 = vsel %vm1543, %v1555, %v1557
      %v1559 = vrot.slane %v938, 1
      %v1560 = vsel %vm1543, %v1557, %v1559
      %v1561 = vrot.slane %v939, 1
      %v1562 = vsel %vm1543, %v1559, %v1561
      %v1563 = vrot.slane %v940, 1
      %v1564 = vsel %vm1543, %v1561, %v1563
      %v1565 = vrot.slane %v941, 1
      %v1566 = vsel %vm1543, %v1563, %v1565
      %v1567 = vrot.slane %v942, 1
      %v1568 = vsel %vm1543, %v1565, %v1567
      %v1569 = vrot.slane %v943, 1
      %v1570 = vsel %vm1543, %v1567, %v1569
      %v1571 = vrot.slane %v944, 1
      %v1572 = vsel %vm1543, %v1569, %v1571
      %v1573 = vrot.slane %v945, 1
      %v1574 = vsel %vm1543, %v1571, %v1573
      %v1575 = vrot.slane %v946, 1
      %v1576 = vsel %vm1543, %v1573, %v1575
      %v1577 = vrot.slane %v947, 1
      %v1578 = vsel %vm1543, %v1575, %v1577
      %v1579 = vrot.slane %v948, 1
      %v1580 = vsel %vm1543, %v1577, %v1579
      %v1581 = vrot.slane %v949, 1
      %v1582 = vsel %vm1543, %v1579, %v1581
      %v1583 = vrot.slane %v950, 1
      %v1584 = vsel %vm1543, %v1581, %v1583
      %v1585 = vrot.slane %v951, 1
      %v1586 = vsel %vm1543, %v1583, %v1585
      %v1587 = vrot.slane %v952, 1
      %v1588 = vsel %vm1543, %v1585, %v1587
      %v1589 = vrot.slane %v953, 1
      %v1590 = vsel %vm1543, %v1587, %v1589
      %v1591 = vrot.slane %v954, 1
      %v1592 = vsel %vm1543, %v1589, %v1591
      %v1633 = vunpack.c.l.b16 %v1524
      %v1634 = vunpack.c.l.b16 %v1525
      %v1635 = vunpack.c.l.b16 %v1526
      %v1636 = vunpack.c.l.b16 %v1527
      %v1637 = vunpack.c.l.b16 %v1528
      %v1638 = vunpack.c.l.b16 %v1529
      %v1639 = vunpack.c.l.b16 %v1530
      %v1640 = vunpack.c.l.b16 %v1531
      %v1641 = vunpack.c.l.b16 %v1532
      %v1642 = vunpack.c.l.b16 %v1533
      %v1643 = vunpack.c.l.b16 %v1534
      %v1644 = vunpack.c.l.b16 %v1535
      %v1645 = vunpack.c.l.b16 %v1536
      %v1646 = vunpack.c.l.b16 %v1537
      %v1647 = vunpack.c.l.b16 %v1538
      %v1648 = vunpack.c.l.b16 %v1539
      %v1649 = vpack.c.b16 %v1634, %v1633
      %v1650 = vpack.c.b16 %v1636, %v1635
      %v1651 = vpack.c.b16 %v1638, %v1637
      %v1652 = vpack.c.b16 %v1640, %v1639
      %v1653 = vpack.c.b16 %v1642, %v1641
      %v1654 = vpack.c.b16 %v1644, %v1643
      %v1655 = vpack.c.b16 %v1646, %v1645
      %v1656 = vpack.c.b16 %v1648, %v1647
      %1665 = vmatpush.bf16.msra.mxu0 %v1656
      %1666 = vmatpush.bf16.msra.mxu0 %v1655
      %1667 = vmatpush.bf16.msra.mxu0 %v1654
      %1668 = vmatpush.bf16.msra.mxu0 %v1653
      %1669 = vmatpush.bf16.msra.mxu0 %v1652
      %1670 = vmatpush.bf16.msra.mxu0 %v1651
      %1671 = vmatpush.bf16.msra.mxu0 %v1650
      %1672 = vmatpush.bf16.msra.mxu0 %v1649
      %1673 = vmatmul.bf16.gmra.mxu0 %v1546
      %v1674 = vpop.f32.mrf.mxu0
      %v1675 = vadd.f32 0.0, %v1674
      %v1676 = vpop.f32.mrf.mxu0
      %v1677 = vadd.f32 0.0, %v1676
      %1678 = vmatmul.bf16.gmra.mxu0 %v1548
      %v1679 = vpop.f32.mrf.mxu0
      %v1680 = vpop.f32.mrf.mxu0
      %v1681 = vadd.f32 0.0, %v1680
      %1682 = vmatmul.bf16.gmra.mxu0 %v1550
      %v1683 = vpop.f32.mrf.mxu0
      %v1684 = vadd.f32 0.0, %v1683
      %v1685 = vpop.f32.mrf.mxu0
      %1686 = vmatmul.bf16.gmra.mxu0 %v1552
      %v1687 = vpop.f32.mrf.mxu0
      %v1688 = vadd.f32 0.0, %v1687
      %v1689 = vpop.f32.mrf.mxu0
      %v1690 = vadd.f32 0.0, %v1689
      %1691 = vmatmul.bf16.gmra.mxu0 %v1554
      %v1692 = vpop.f32.mrf.mxu0
      %v1693 = vpop.f32.mrf.mxu0
      %v1694 = vadd.f32 0.0, %v1693
      %1695 = vmatmul.bf16.gmra.mxu0 %v1556
      %v1696 = vpop.f32.mrf.mxu0
      %v1697 = vadd.f32 0.0, %v1696
      %v1698 = vpop.f32.mrf.mxu0
      %1699 = vmatmul.bf16.gmra.mxu0 %v1558
      %v1700 = vpop.f32.mrf.mxu0
      %v1701 = vadd.f32 0.0, %v1700
      %v1702 = vpop.f32.mrf.mxu0
      %v1703 = vadd.f32 0.0, %v1702
      %1704 = vmatmul.bf16.gmra.mxu0 %v1560
      %v1705 = vpop.f32.mrf.mxu0
      %v1706 = vpop.f32.mrf.mxu0
      %v1707 = vadd.f32 0.0, %v1706
      %1708 = vmatmul.bf16.gmra.mxu0 %v1562
      %v1709 = vpop.f32.mrf.mxu0
      %v1710 = vadd.f32 0.0, %v1709
      %v1711 = vpop.f32.mrf.mxu0
      %1712 = vmatmul.bf16.gmra.mxu0 %v1564
      %v1713 = vpop.f32.mrf.mxu0
      %v1714 = vadd.f32 0.0, %v1713
      %v1715 = vpop.f32.mrf.mxu0
      %v1716 = vadd.f32 0.0, %v1715
      %1717 = vmatmul.bf16.gmra.mxu0 %v1566
      %v1718 = vpop.f32.mrf.mxu0
      %v1719 = vpop.f32.mrf.mxu0
      %v1720 = vadd.f32 0.0, %v1719
      %1721 = vmatmul.bf16.gmra.mxu0 %v1568
      %v1722 = vpop.f32.mrf.mxu0
      %v1723 = vadd.f32 0.0, %v1722
      %v1724 = vpop.f32.mrf.mxu0
      %1725 = vmatmul.bf16.gmra.mxu0 %v1570
      %v1726 = vpop.f32.mrf.mxu0
      %v1727 = vadd.f32 0.0, %v1726
      %v1728 = vpop.f32.mrf.mxu0
      %v1729 = vadd.f32 0.0, %v1728
      %1730 = vmatmul.bf16.gmra.mxu0 %v1572
      %v1731 = vpop.f32.mrf.mxu0
      %v1732 = vpop.f32.mrf.mxu0
      %v1733 = vadd.f32 0.0, %v1732
      %1734 = vmatmul.bf16.gmra.mxu0 %v1574
      %v1735 = vpop.f32.mrf.mxu0
      %v1736 = vadd.f32 0.0, %v1735
      %v1737 = vpop.f32.mrf.mxu0
      %1738 = vmatmul.bf16.gmra.mxu0 %v1576
      %v1739 = vpop.f32.mrf.mxu0
      %v1740 = vadd.f32 0.0, %v1739
      %v1741 = vpop.f32.mrf.mxu0
      %v1742 = vadd.f32 0.0, %v1741
      %1743 = vmatmul.bf16.gmra.mxu0 %v1578
      %v1744 = vpop.f32.mrf.mxu0
      %v1745 = vpop.f32.mrf.mxu0
      %v1746 = vadd.f32 0.0, %v1745
      %1747 = vmatmul.bf16.gmra.mxu0 %v1580
      %v1748 = vpop.f32.mrf.mxu0
      %v1749 = vadd.f32 0.0, %v1748
      %v1750 = vpop.f32.mrf.mxu0
      %1751 = vmatmul.bf16.gmra.mxu0 %v1582
      %v1752 = vpop.f32.mrf.mxu0
      %v1753 = vadd.f32 0.0, %v1752
      %v1754 = vpop.f32.mrf.mxu0
      %v1755 = vadd.f32 0.0, %v1754
      %1756 = vmatmul.bf16.gmra.mxu0 %v1584
      %v1757 = vpop.f32.mrf.mxu0
      %v1758 = vpop.f32.mrf.mxu0
      %v1759 = vadd.f32 0.0, %v1758
      %1760 = vmatmul.bf16.gmra.mxu0 %v1586
      %v1761 = vpop.f32.mrf.mxu0
      %v1762 = vadd.f32 0.0, %v1761
      %v1763 = vpop.f32.mrf.mxu0
      %1764 = vmatmul.bf16.gmra.mxu0 %v1588
      %v1765 = vpop.f32.mrf.mxu0
      %v1766 = vadd.f32 0.0, %v1765
      %v1767 = vpop.f32.mrf.mxu0
      %v1768 = vadd.f32 0.0, %v1767
      %1769 = vmatmul.bf16.gmra.mxu0 %v1590
      %v1770 = vpop.f32.mrf.mxu0
      %v1771 = vpop.f32.mrf.mxu0
      %v1772 = vadd.f32 0.0, %v1771
      %1773 = vmatmul.bf16.gmra.mxu0 %v1592
      %v1774 = vpop.f32.mrf.mxu0
      %v1775 = vadd.f32 0.0, %v1774
      %v1776 = vpop.f32.mrf.mxu0
      %1777 = vdwg.mxu0
      %v1778 = vadd.f32 %v1419, %v1675
      %v1779 = vadd.f32 %v1421, %v1677
      %v1780 = vadd.f32 %v1425, %v1681
      %v1781 = vadd.f32 %v1428, %v1684
      %v1782 = vadd.f32 %v1432, %v1688
      %v1783 = vadd.f32 %v1434, %v1690
      %v1784 = vadd.f32 %v1438, %v1694
      %v1785 = vadd.f32 %v1441, %v1697
      %v1786 = vadd.f32 %v1445, %v1701
      %v1787 = vadd.f32 %v1447, %v1703
      %v1788 = vadd.f32 %v1451, %v1707
      %v1789 = vadd.f32 %v1454, %v1710
      %v1790 = vadd.f32 %v1458, %v1714
      %v1791 = vadd.f32 %v1460, %v1716
      %v1792 = vadd.f32 %v1464, %v1720
      %v1793 = vadd.f32 %v1467, %v1723
      %v1794 = vadd.f32 %v1471, %v1727
      %v1795 = vadd.f32 %v1473, %v1729
      %v1796 = vadd.f32 %v1477, %v1733
      %v1797 = vadd.f32 %v1480, %v1736
      %v1798 = vadd.f32 %v1484, %v1740
      %v1799 = vadd.f32 %v1486, %v1742
      %v1800 = vadd.f32 %v1490, %v1746
      %v1801 = vadd.f32 %v1493, %v1749
      %v1802 = vadd.f32 %v1497, %v1753
      %v1803 = vadd.f32 %v1499, %v1755
      %v1804 = vadd.f32 %v1503, %v1759
      %v1805 = vadd.f32 %v1506, %v1762
      %v1806 = vadd.f32 %v1510, %v1766
      %v1807 = vadd.f32 %v1512, %v1768
      %v1808 = vadd.f32 %v1516, %v1772
      %v1809 = vadd.f32 %v1519, %v1775
      %v1810 = vld [vmem:[#allocation2 + $0xc] sm:$0xf]
      %v1811 = vld [vmem:[#allocation2 + $0x10] sm:$0xf]
      %v1812 = vld [vmem:[#allocation2 + $0x14] sm:$0xf]
      %v1813 = vld [vmem:[#allocation2 + $0x18] sm:$0xf]
      %v1814 = vld [vmem:[#allocation2 + $0x1c] sm:$0xf]
      %v1815 = vld [vmem:[#allocation2 + $0x20] sm:$0xf]
      %v1816 = vld [vmem:[#allocation2 + $0x24] sm:$0xf]
      %v1817 = vld [vmem:[#allocation2 + $0x28] sm:$0xf]
      %v1818 = vld [vmem:[#allocation2 + $0x2c] sm:$0xf]
      %v1819 = vld [vmem:[#allocation2 + $0x30] sm:$0xf]
      %v1820 = vld [vmem:[#allocation2 + $0x34] sm:$0xf]
      %v1821 = vld [vmem:[#allocation2 + $0x38] sm:$0xf]
      %v1822 = vld [vmem:[#allocation2 + $0x3c] sm:$0xf]
      %v1823 = vld [vmem:[#allocation2 + $0x40] sm:$0xf]
      %v1824 = vld [vmem:[#allocation2 + $0x44] sm:$0xf]
      %v1825 = vld [vmem:[#allocation2 + $0x48] sm:$0xf]
      %v1826 = vld [vmem:[#allocation2 + $0x4c] sm:$0xf]
      %v1827 = vld [vmem:[#allocation2 + $0x50] sm:$0xf]
      %v1828 = vld [vmem:[#allocation2 + $0x54] sm:$0xf]
      %v1829 = vld [vmem:[#allocation2 + $0x58] sm:$0xf]
      %v1830 = vld [vmem:[#allocation2 + $0x5c] sm:$0xf]
      %v1831 = vld [vmem:[#allocation2 + $0x60] sm:$0xf]
      %v1832 = vld [vmem:[#allocation2 + $0x64] sm:$0xf]
      %v1833 = vld [vmem:[#allocation2 + $0x68] sm:$0xf]
      %v1834 = vld [vmem:[#allocation2 + $0x6c] sm:$0xf]
      %v1835 = vld [vmem:[#allocation2 + $0x70] sm:$0xf]
      %v1836 = vld [vmem:[#allocation2 + $0x74] sm:$0xf]
      %v1837 = vld [vmem:[#allocation2 + $0x78] sm:$0xf]
      %v1838 = vld [vmem:[#allocation2 + $0x7c] sm:$0xf]
      %v1839 = vld [vmem:[#allocation2 + $0x80] sm:$0xf]
      %v1840 = vld [vmem:[#allocation2 + $0x84] sm:$0xf]
      %v1841 = vld [vmem:[#allocation2 + $0x88] sm:$0xf]
      %v1842 = vld [vmem:[#allocation2 + $0x8c] sm:$0xf]
      %v1843 = vld [vmem:[#allocation2 + $0x90] sm:$0xf]
      %v1844 = vld [vmem:[#allocation2 + $0x94] sm:$0xf]
      %v1845 = vld [vmem:[#allocation2 + $0x98] sm:$0xf]
      %v1846 = vld [vmem:[#allocation2 + $0x9c] sm:$0xf]
      %v1847 = vld [vmem:[#allocation2 + $0xa0] sm:$0xf]
      %v1848 = vld [vmem:[#allocation2 + $0xa4] sm:$0xf]
      %v1849 = vld [vmem:[#allocation2 + $0xa8] sm:$0xf]
      %v1850 = vld [vmem:[#allocation2 + $0xac] sm:$0xf]
      %v1851 = vld [vmem:[#allocation2 + $0xb0] sm:$0xf]
      %v1852 = vld [vmem:[#allocation2 + $0xb4] sm:$0xf]
      %v1853 = vld [vmem:[#allocation2 + $0xb8] sm:$0xf]
      %v1854 = vld [vmem:[#allocation2 + $0xbc] sm:$0xf]
      %v1855 = vld [vmem:[#allocation2 + $0xc0] sm:$0xf]
      %v1856 = vld [vmem:[#allocation2 + $0xc4] sm:$0xf]
      %v1857 = vld [vmem:[#allocation2 + $0xc8] sm:$0xf]
      %s1858 = scalar_lea.vmem %s210, 192
      %v1859 = vld [vmem:[%s1858] sm:$0xf]
      %v1860 = vld [vmem:[%s1858 + $0x4] sm:$0xf]
      %v1861 = vld [vmem:[%s1858 + $0x8] sm:$0xf]
      %v1862 = vld [vmem:[%s1858 + $0xc] sm:$0xf]
      %v1863 = vld [vmem:[%s1858 + $0x10] sm:$0xf]
      %v1864 = vld [vmem:[%s1858 + $0x14] sm:$0xf]
      %v1865 = vld [vmem:[%s1858 + $0x18] sm:$0xf]
      %v1866 = vld [vmem:[%s1858 + $0x1c] sm:$0xf]
      %v1867 = vld [vmem:[%s1858 + $0x20] sm:$0xf]
      %v1868 = vld [vmem:[%s1858 + $0x24] sm:$0xf]
      %v1869 = vld [vmem:[%s1858 + $0x28] sm:$0xf]
      %v1870 = vld [vmem:[%s1858 + $0x2c] sm:$0xf]
      %v1871 = vld [vmem:[%s1858 + $0x30] sm:$0xf]
      %v1872 = vld [vmem:[%s1858 + $0x34] sm:$0xf]
      %v1873 = vld [vmem:[%s1858 + $0x38] sm:$0xf]
      %v1874 = vld [vmem:[%s1858 + $0x3c] sm:$0xf]
      %v1923 = vunpack.c.l.b16 %v1810
      %v1924 = vunpack.c.l.b16 %v1811
      %v1925 = vunpack.c.l.b16 %v1812
      %v1926 = vunpack.c.l.b16 %v1813
      %v1927 = vunpack.c.l.b16 %v1814
      %v1928 = vunpack.c.l.b16 %v1815
      %v1929 = vunpack.c.l.b16 %v1816
      %v1930 = vunpack.c.l.b16 %v1817
      %v1931 = vunpack.c.l.b16 %v1818
      %v1932 = vunpack.c.l.b16 %v1819
      %v1933 = vunpack.c.l.b16 %v1820
      %v1934 = vunpack.c.l.b16 %v1821
      %v1935 = vunpack.c.l.b16 %v1822
      %v1936 = vunpack.c.l.b16 %v1823
      %v1937 = vunpack.c.l.b16 %v1824
      %v1938 = vunpack.c.l.b16 %v1825
      %v1939 = vunpack.c.l.b16 %v1826
      %v1940 = vunpack.c.l.b16 %v1827
      %v1941 = vunpack.c.l.b16 %v1828
      %v1942 = vunpack.c.l.b16 %v1829
      %v1943 = vunpack.c.l.b16 %v1830
      %v1944 = vunpack.c.l.b16 %v1831
      %v1945 = vunpack.c.l.b16 %v1832
      %v1946 = vunpack.c.l.b16 %v1833
      %v1947 = vunpack.c.l.b16 %v1834
      %v1948 = vunpack.c.l.b16 %v1835
      %v1949 = vunpack.c.l.b16 %v1836
      %v1950 = vunpack.c.l.b16 %v1837
      %v1951 = vunpack.c.l.b16 %v1838
      %v1952 = vunpack.c.l.b16 %v1839
      %v1953 = vunpack.c.l.b16 %v1840
      %v1954 = vunpack.c.l.b16 %v1841
      %v1955 = vunpack.c.l.b16 %v1842
      %v1956 = vunpack.c.l.b16 %v1843
      %v1957 = vunpack.c.l.b16 %v1844
      %v1958 = vunpack.c.l.b16 %v1845
      %v1959 = vunpack.c.l.b16 %v1846
      %v1960 = vunpack.c.l.b16 %v1847
      %v1961 = vunpack.c.l.b16 %v1848
      %v1962 = vunpack.c.l.b16 %v1849
      %v1963 = vunpack.c.l.b16 %v1850
      %v1964 = vunpack.c.l.b16 %v1851
      %v1965 = vunpack.c.l.b16 %v1852
      %v1966 = vunpack.c.l.b16 %v1853
      %v1967 = vunpack.c.l.b16 %v1854
      %v1968 = vunpack.c.l.b16 %v1855
      %v1969 = vunpack.c.l.b16 %v1856
      %v1970 = vunpack.c.l.b16 %v1857
      %v1971 = vpack.c.b16 %v1924, %v1923
      %v1972 = vpack.c.b16 %v1926, %v1925
      %v1973 = vpack.c.b16 %v1928, %v1927
      %v1974 = vpack.c.b16 %v1930, %v1929
      %v1975 = vpack.c.b16 %v1932, %v1931
      %v1976 = vpack.c.b16 %v1934, %v1933
      %v1977 = vpack.c.b16 %v1936, %v1935
      %v1978 = vpack.c.b16 %v1938, %v1937
      %v1979 = vpack.c.b16 %v1940, %v1939
      %v1980 = vpack.c.b16 %v1942, %v1941
      %v1981 = vpack.c.b16 %v1944, %v1943
      %v1982 = vpack.c.b16 %v1946, %v1945
      %v1983 = vpack.c.b16 %v1948, %v1947
      %v1984 = vpack.c.b16 %v1950, %v1949
      %v1985 = vpack.c.b16 %v1952, %v1951
      %v1986 = vpack.c.b16 %v1954, %v1953
      %v1987 = vpack.c.b16 %v1956, %v1955
      %v1988 = vpack.c.b16 %v1958, %v1957
      %v1989 = vpack.c.b16 %v1960, %v1959
      %v1990 = vpack.c.b16 %v1962, %v1961
      %v1991 = vpack.c.b16 %v1964, %v1963
      %v1992 = vpack.c.b16 %v1966, %v1965
      %v1993 = vpack.c.b16 %v1968, %v1967
      %v1994 = vpack.c.b16 %v1970, %v1969
      %v2035 = vunpack.c.l.b16 %v1859
      %v2036 = vunpack.c.l.b16 %v1860
      %v2037 = vunpack.c.l.b16 %v1861
      %v2038 = vunpack.c.l.b16 %v1862
      %v2039 = vunpack.c.l.b16 %v1863
      %v2040 = vunpack.c.l.b16 %v1864
      %v2041 = vunpack.c.l.b16 %v1865
      %v2042 = vunpack.c.l.b16 %v1866
      %v2043 = vunpack.c.l.b16 %v1867
      %v2044 = vunpack.c.l.b16 %v1868
      %v2045 = vunpack.c.l.b16 %v1869
      %v2046 = vunpack.c.l.b16 %v1870
      %v2047 = vunpack.c.l.b16 %v1871
      %v2048 = vunpack.c.l.b16 %v1872
      %v2049 = vunpack.c.l.b16 %v1873
      %v2050 = vunpack.c.l.b16 %v1874
      %v2051 = vpack.c.b16 %v2036, %v2035
      %v2052 = vpack.c.b16 %v2038, %v2037
      %v2053 = vpack.c.b16 %v2040, %v2039
      %v2054 = vpack.c.b16 %v2042, %v2041
      %v2055 = vpack.c.b16 %v2044, %v2043
      %v2056 = vpack.c.b16 %v2046, %v2045
      %v2057 = vpack.c.b16 %v2048, %v2047
      %v2058 = vpack.c.b16 %v2050, %v2049
      %2067 = vmatpush.bf16.msra.mxu0 %v2058
      %2068 = vmatpush.bf16.msra.mxu0 %v2057
      %2069 = vmatpush.bf16.msra.mxu0 %v2056
      %2070 = vmatpush.bf16.msra.mxu0 %v2055
      %2071 = vmatpush.bf16.msra.mxu0 %v2054
      %2072 = vmatpush.bf16.msra.mxu0 %v2053
      %2073 = vmatpush.bf16.msra.mxu0 %v2052
      %2074 = vmatpush.bf16.msra.mxu0 %v2051
      %2075 = vmatmul.bf16.gmra.mxu0 %v1971
      %v2076 = vpop.f32.mrf.mxu0
      %v2077 = vadd.f32 0.0, %v2076
      %v2078 = vpop.f32.mrf.mxu0
      %v2079 = vadd.f32 0.0, %v2078
      %2080 = vmatmul.bf16.gmra.mxu0 %v1972
      %v2081 = vpop.f32.mrf.mxu0
      %v2082 = vpop.f32.mrf.mxu0
      %v2083 = vadd.f32 0.0, %v2082
      %2084 = vmatmul.bf16.gmra.mxu0 %v1973
      %v2085 = vpop.f32.mrf.mxu0
      %v2086 = vadd.f32 0.0, %v2085
      %v2087 = vpop.f32.mrf.mxu0
      %2088 = vmatmul.bf16.gmra.mxu0 %v1974
      %v2089 = vpop.f32.mrf.mxu0
      %v2090 = vadd.f32 0.0, %v2089
      %v2091 = vpop.f32.mrf.mxu0
      %v2092 = vadd.f32 0.0, %v2091
      %2093 = vmatmul.bf16.gmra.mxu0 %v1975
      %v2094 = vpop.f32.mrf.mxu0
      %v2095 = vpop.f32.mrf.mxu0
      %v2096 = vadd.f32 0.0, %v2095
      %2097 = vmatmul.bf16.gmra.mxu0 %v1976
      %v2098 = vpop.f32.mrf.mxu0
      %v2099 = vadd.f32 0.0, %v2098
      %v2100 = vpop.f32.mrf.mxu0
      %2101 = vmatmul.bf16.gmra.mxu0 %v1977
      %v2102 = vpop.f32.mrf.mxu0
      %v2103 = vadd.f32 0.0, %v2102
      %v2104 = vpop.f32.mrf.mxu0
      %v2105 = vadd.f32 0.0, %v2104
      %2106 = vmatmul.bf16.gmra.mxu0 %v1978
      %v2107 = vpop.f32.mrf.mxu0
      %v2108 = vpop.f32.mrf.mxu0
      %v2109 = vadd.f32 0.0, %v2108
      %2110 = vmatmul.bf16.gmra.mxu0 %v1979
      %v2111 = vpop.f32.mrf.mxu0
      %v2112 = vadd.f32 0.0, %v2111
      %v2113 = vpop.f32.mrf.mxu0
      %2114 = vmatmul.bf16.gmra.mxu0 %v1980
      %v2115 = vpop.f32.mrf.mxu0
      %v2116 = vadd.f32 0.0, %v2115
      %v2117 = vpop.f32.mrf.mxu0
      %v2118 = vadd.f32 0.0, %v2117
      %2119 = vmatmul.bf16.gmra.mxu0 %v1981
      %v2120 = vpop.f32.mrf.mxu0
      %v2121 = vpop.f32.mrf.mxu0
      %v2122 = vadd.f32 0.0, %v2121
      %2123 = vmatmul.bf16.gmra.mxu0 %v1982
      %v2124 = vpop.f32.mrf.mxu0
      %v2125 = vadd.f32 0.0, %v2124
      %v2126 = vpop.f32.mrf.mxu0
      %2127 = vmatmul.bf16.gmra.mxu0 %v1983
      %v2128 = vpop.f32.mrf.mxu0
      %v2129 = vadd.f32 0.0, %v2128
      %v2130 = vpop.f32.mrf.mxu0
      %v2131 = vadd.f32 0.0, %v2130
      %2132 = vmatmul.bf16.gmra.mxu0 %v1984
      %v2133 = vpop.f32.mrf.mxu0
      %v2134 = vpop.f32.mrf.mxu0
      %v2135 = vadd.f32 0.0, %v2134
      %2136 = vmatmul.bf16.gmra.mxu0 %v1985
      %v2137 = vpop.f32.mrf.mxu0
      %v2138 = vadd.f32 0.0, %v2137
      %v2139 = vpop.f32.mrf.mxu0
      %2140 = vmatmul.bf16.gmra.mxu0 %v1986
      %v2141 = vpop.f32.mrf.mxu0
      %v2142 = vadd.f32 0.0, %v2141
      %v2143 = vpop.f32.mrf.mxu0
      %v2144 = vadd.f32 0.0, %v2143
      %2145 = vmatmul.bf16.gmra.mxu0 %v1987
      %v2146 = vpop.f32.mrf.mxu0
      %v2147 = vpop.f32.mrf.mxu0
      %v2148 = vadd.f32 0.0, %v2147
      %2149 = vmatmul.bf16.gmra.mxu0 %v1988
      %v2150 = vpop.f32.mrf.mxu0
      %v2151 = vadd.f32 0.0, %v2150
      %v2152 = vpop.f32.mrf.mxu0
      %2153 = vmatmul.bf16.gmra.mxu0 %v1989
      %v2154 = vpop.f32.mrf.mxu0
      %v2155 = vadd.f32 0.0, %v2154
      %v2156 = vpop.f32.mrf.mxu0
      %v2157 = vadd.f32 0.0, %v2156
      %2158 = vmatmul.bf16.gmra.mxu0 %v1990
      %v2159 = vpop.f32.mrf.mxu0
      %v2160 = vpop.f32.mrf.mxu0
      %v2161 = vadd.f32 0.0, %v2160
      %2162 = vmatmul.bf16.gmra.mxu0 %v1991
      %v2163 = vpop.f32.mrf.mxu0
      %v2164 = vadd.f32 0.0, %v2163
      %v2165 = vpop.f32.mrf.mxu0
      %2166 = vmatmul.bf16.gmra.mxu0 %v1992
      %v2167 = vpop.f32.mrf.mxu0
      %v2168 = vadd.f32 0.0, %v2167
      %v2169 = vpop.f32.mrf.mxu0
      %v2170 = vadd.f32 0.0, %v2169
      %2171 = vmatmul.bf16.gmra.mxu0 %v1993
      %v2172 = vpop.f32.mrf.mxu0
      %v2173 = vpop.f32.mrf.mxu0
      %v2174 = vadd.f32 0.0, %v2173
      %2175 = vmatmul.bf16.gmra.mxu0 %v1994
      %v2176 = vpop.f32.mrf.mxu0
      %v2177 = vadd.f32 0.0, %v2176
      %v2178 = vpop.f32.mrf.mxu0
      %2179 = vdwg.mxu0
      %v2180 = vadd.f32 %v1778, %v2077
      %v2181 = vadd.f32 %v1779, %v2079
      %v2182 = vadd.f32 %v1780, %v2083
      %v2183 = vadd.f32 %v1781, %v2086
      %v2184 = vadd.f32 %v1782, %v2090
      %v2185 = vadd.f32 %v1783, %v2092
      %v2186 = vadd.f32 %v1784, %v2096
      %v2187 = vadd.f32 %v1785, %v2099
      %v2188 = vadd.f32 %v1786, %v2103
      %v2189 = vadd.f32 %v1787, %v2105
      %v2190 = vadd.f32 %v1788, %v2109
      %v2191 = vadd.f32 %v1789, %v2112
      %v2192 = vadd.f32 %v1790, %v2116
      %v2193 = vadd.f32 %v1791, %v2118
      %v2194 = vadd.f32 %v1792, %v2122
      %v2195 = vadd.f32 %v1793, %v2125
      %v2196 = vadd.f32 %v1794, %v2129
      %v2197 = vadd.f32 %v1795, %v2131
      %v2198 = vadd.f32 %v1796, %v2135
      %v2199 = vadd.f32 %v1797, %v2138
      %v2200 = vadd.f32 %v1798, %v2142
      %v2201 = vadd.f32 %v1799, %v2144
      %v2202 = vadd.f32 %v1800, %v2148
      %v2203 = vadd.f32 %v1801, %v2151
      %v2204 = vadd.f32 %v1802, %v2155
      %v2205 = vadd.f32 %v1803, %v2157
      %v2206 = vadd.f32 %v1804, %v2161
      %v2207 = vadd.f32 %v1805, %v2164
      %v2208 = vadd.f32 %v1806, %v2168
      %v2209 = vadd.f32 %v1807, %v2170
      %v2210 = vadd.f32 %v1808, %v2174
      %v2211 = vadd.f32 %v1809, %v2177
      %v2212 = vld [vmem:[#allocation2 + $0xc] sm:$0xf]
      %v2213 = vld [vmem:[#allocation2 + $0x10] sm:$0xf]
      %v2214 = vld [vmem:[#allocation2 + $0x14] sm:$0xf]
      %v2215 = vld [vmem:[#allocation2 + $0x18] sm:$0xf]
      %v2216 = vld [vmem:[#allocation2 + $0x1c] sm:$0xf]
      %v2217 = vld [vmem:[#allocation2 + $0x20] sm:$0xf]
      %v2218 = vld [vmem:[#allocation2 + $0x24] sm:$0xf]
      %v2219 = vld [vmem:[#allocation2 + $0x28] sm:$0xf]
      %v2220 = vld [vmem:[#allocation2 + $0x2c] sm:$0xf]
      %v2221 = vld [vmem:[#allocation2 + $0x30] sm:$0xf]
      %v2222 = vld [vmem:[#allocation2 + $0x34] sm:$0xf]
      %v2223 = vld [vmem:[#allocation2 + $0x38] sm:$0xf]
      %v2224 = vld [vmem:[#allocation2 + $0x3c] sm:$0xf]
      %v2225 = vld [vmem:[#allocation2 + $0x40] sm:$0xf]
      %v2226 = vld [vmem:[#allocation2 + $0x44] sm:$0xf]
      %v2227 = vld [vmem:[#allocation2 + $0x48] sm:$0xf]
      %v2228 = vld [vmem:[#allocation2 + $0x4c] sm:$0xf]
      %v2229 = vld [vmem:[#allocation2 + $0x50] sm:$0xf]
      %v2230 = vld [vmem:[#allocation2 + $0x54] sm:$0xf]
      %v2231 = vld [vmem:[#allocation2 + $0x58] sm:$0xf]
      %v2232 = vld [vmem:[#allocation2 + $0x5c] sm:$0xf]
      %v2233 = vld [vmem:[#allocation2 + $0x60] sm:$0xf]
      %v2234 = vld [vmem:[#allocation2 + $0x64] sm:$0xf]
      %v2235 = vld [vmem:[#allocation2 + $0x68] sm:$0xf]
      %v2236 = vld [vmem:[#allocation2 + $0x6c] sm:$0xf]
      %v2237 = vld [vmem:[#allocation2 + $0x70] sm:$0xf]
      %v2238 = vld [vmem:[#allocation2 + $0x74] sm:$0xf]
      %v2239 = vld [vmem:[#allocation2 + $0x78] sm:$0xf]
      %v2240 = vld [vmem:[#allocation2 + $0x7c] sm:$0xf]
      %v2241 = vld [vmem:[#allocation2 + $0x80] sm:$0xf]
      %v2242 = vld [vmem:[#allocation2 + $0x84] sm:$0xf]
      %v2243 = vld [vmem:[#allocation2 + $0x88] sm:$0xf]
      %v2244 = vld [vmem:[#allocation2 + $0x8c] sm:$0xf]
      %v2245 = vld [vmem:[#allocation2 + $0x90] sm:$0xf]
      %v2246 = vld [vmem:[#allocation2 + $0x94] sm:$0xf]
      %v2247 = vld [vmem:[#allocation2 + $0x98] sm:$0xf]
      %v2248 = vld [vmem:[#allocation2 + $0x9c] sm:$0xf]
      %v2249 = vld [vmem:[#allocation2 + $0xa0] sm:$0xf]
      %v2250 = vld [vmem:[#allocation2 + $0xa4] sm:$0xf]
      %v2251 = vld [vmem:[#allocation2 + $0xa8] sm:$0xf]
      %v2252 = vld [vmem:[#allocation2 + $0xac] sm:$0xf]
      %v2253 = vld [vmem:[#allocation2 + $0xb0] sm:$0xf]
      %v2254 = vld [vmem:[#allocation2 + $0xb4] sm:$0xf]
      %v2255 = vld [vmem:[#allocation2 + $0xb8] sm:$0xf]
      %v2256 = vld [vmem:[#allocation2 + $0xbc] sm:$0xf]
      %v2257 = vld [vmem:[#allocation2 + $0xc0] sm:$0xf]
      %v2258 = vld [vmem:[#allocation2 + $0xc4] sm:$0xf]
      %v2259 = vld [vmem:[#allocation2 + $0xc8] sm:$0xf]
      %v2260 = vld [vmem:[#allocation2 + $0xcc] sm:$0x1]
      %s2261 = scalar_lea.vmem %s210, 256
      %v2262 = vld [vmem:[%s2261] sm:$0xf]
      %v2263 = vld [vmem:[%s2261 + $0x4] sm:$0xf]
      %v2264 = vld [vmem:[%s2261 + $0x8] sm:$0xf]
      %v2265 = vld [vmem:[%s2261 + $0xc] sm:$0xf]
      %v2266 = vld [vmem:[%s2261 + $0x10] sm:$0xf]
      %v2267 = vld [vmem:[%s2261 + $0x14] sm:$0xf]
      %v2268 = vld [vmem:[%s2261 + $0x18] sm:$0xf]
      %v2269 = vld [vmem:[%s2261 + $0x1c] sm:$0xf]
      %v2270 = vld [vmem:[%s2261 + $0x20] sm:$0xf]
      %v2271 = vld [vmem:[%s2261 + $0x24] sm:$0xf]
      %v2272 = vld [vmem:[%s2261 + $0x28] sm:$0xf]
      %v2273 = vld [vmem:[%s2261 + $0x2c] sm:$0xf]
      %v2274 = vld [vmem:[%s2261 + $0x30] sm:$0xf]
      %v2275 = vld [vmem:[%s2261 + $0x34] sm:$0xf]
      %v2276 = vld [vmem:[%s2261 + $0x38] sm:$0xf]
      %v2277 = vld [vmem:[%s2261 + $0x3c] sm:$0xf]
      %v2327 = vunpack.c.l.b16 %v2212
      %v2328 = vunpack.c.l.b16 %v2213
      %v2329 = vunpack.c.l.b16 %v2214
      %v2330 = vunpack.c.l.b16 %v2215
      %v2331 = vunpack.c.l.b16 %v2216
      %v2332 = vunpack.c.l.b16 %v2217
      %v2333 = vunpack.c.l.b16 %v2218
      %v2334 = vunpack.c.l.b16 %v2219
      %v2335 = vunpack.c.l.b16 %v2220
      %v2336 = vunpack.c.l.b16 %v2221
      %v2337 = vunpack.c.l.b16 %v2222
      %v2338 = vunpack.c.l.b16 %v2223
      %v2339 = vunpack.c.l.b16 %v2224
      %v2340 = vunpack.c.l.b16 %v2225
      %v2341 = vunpack.c.l.b16 %v2226
      %v2342 = vunpack.c.l.b16 %v2227
      %v2343 = vunpack.c.l.b16 %v2228
      %v2344 = vunpack.c.l.b16 %v2229
      %v2345 = vunpack.c.l.b16 %v2230
      %v2346 = vunpack.c.l.b16 %v2231
      %v2347 = vunpack.c.l.b16 %v2232
      %v2348 = vunpack.c.l.b16 %v2233
      %v2349 = vunpack.c.l.b16 %v2234
      %v2350 = vunpack.c.l.b16 %v2235
      %v2351 = vunpack.c.l.b16 %v2236
      %v2352 = vunpack.c.l.b16 %v2237
      %v2353 = vunpack.c.l.b16 %v2238
      %v2354 = vunpack.c.l.b16 %v2239
      %v2355 = vunpack.c.l.b16 %v2240
      %v2356 = vunpack.c.l.b16 %v2241
      %v2357 = vunpack.c.l.b16 %v2242
      %v2358 = vunpack.c.l.b16 %v2243
      %v2359 = vunpack.c.l.b16 %v2244
      %v2360 = vunpack.c.l.b16 %v2245
      %v2361 = vunpack.c.l.b16 %v2246
      %v2362 = vunpack.c.l.b16 %v2247
      %v2363 = vunpack.c.l.b16 %v2248
      %v2364 = vunpack.c.l.b16 %v2249
      %v2365 = vunpack.c.l.b16 %v2250
      %v2366 = vunpack.c.l.b16 %v2251
      %v2367 = vunpack.c.l.b16 %v2252
      %v2368 = vunpack.c.l.b16 %v2253
      %v2369 = vunpack.c.l.b16 %v2254
      %v2370 = vunpack.c.l.b16 %v2255
      %v2371 = vunpack.c.l.b16 %v2256
      %v2372 = vunpack.c.l.b16 %v2257
      %v2373 = vunpack.c.l.b16 %v2258
      %v2374 = vunpack.c.l.b16 %v2259
      %v2375 = vunpack.c.l.b16 %v2260
      %v2376 = vpack.c.b16 %v2328, %v2327
      %v2377 = vpack.c.b16 %v2330, %v2329
      %v2378 = vpack.c.b16 %v2332, %v2331
      %v2379 = vpack.c.b16 %v2334, %v2333
      %v2380 = vpack.c.b16 %v2336, %v2335
      %v2381 = vpack.c.b16 %v2338, %v2337
      %v2382 = vpack.c.b16 %v2340, %v2339
      %v2383 = vpack.c.b16 %v2342, %v2341
      %v2384 = vpack.c.b16 %v2344, %v2343
      %v2385 = vpack.c.b16 %v2346, %v2345
      %v2386 = vpack.c.b16 %v2348, %v2347
      %v2387 = vpack.c.b16 %v2350, %v2349
      %v2388 = vpack.c.b16 %v2352, %v2351
      %v2389 = vpack.c.b16 %v2354, %v2353
      %v2390 = vpack.c.b16 %v2356, %v2355
      %v2391 = vpack.c.b16 %v2358, %v2357
      %v2392 = vpack.c.b16 %v2360, %v2359
      %v2393 = vpack.c.b16 %v2362, %v2361
      %v2394 = vpack.c.b16 %v2364, %v2363
      %v2395 = vpack.c.b16 %v2366, %v2365
      %v2396 = vpack.c.b16 %v2368, %v2367
      %v2397 = vpack.c.b16 %v2370, %v2369
      %v2398 = vpack.c.b16 %v2372, %v2371
      %v2399 = vpack.c.b16 %v2374, %v2373
      %v2400 = vpack.c.b16 %v2375, %v2375
      %v2402 = vshrl.u32 %v2376, 16
      %v2404 = vshll.u32 %v2376, 16
      %v2406 = vrot.slane %v2404, 1
      %v2407 = vor.u32 %v2402, %v2406
      %v2409 = vshll.u32 %v2377, 16
      %v2411 = vrot.slane %v2409, 1
      %v2412 = vsel %vm955, %v2407, %v2411
      %v2413 = vshrl.u32 %v2377, 16
      %v2415 = vor.u32 %v2413, %v2411
      %v2417 = vshll.u32 %v2378, 16
      %v2419 = vrot.slane %v2417, 1
      %v2420 = vsel %vm955, %v2415, %v2419
      %v2421 = vshrl.u32 %v2378, 16
      %v2423 = vor.u32 %v2421, %v2419
      %v2425 = vshll.u32 %v2379, 16
      %v2427 = vrot.slane %v2425, 1
      %v2428 = vsel %vm955, %v2423, %v2427
      %v2429 = vshrl.u32 %v2379, 16
      %v2431 = vor.u32 %v2429, %v2427
      %v2433 = vshll.u32 %v2380, 16
      %v2435 = vrot.slane %v2433, 1
      %v2436 = vsel %vm955, %v2431, %v2435
      %v2437 = vshrl.u32 %v2380, 16
      %v2439 = vor.u32 %v2437, %v2435
      %v2441 = vshll.u32 %v2381, 16
      %v2443 = vrot.slane %v2441, 1
      %v2444 = vsel %vm955, %v2439, %v2443
      %v2445 = vshrl.u32 %v2381, 16
      %v2447 = vor.u32 %v2445, %v2443
      %v2449 = vshll.u32 %v2382, 16
      %v2451 = vrot.slane %v2449, 1
      %v2452 = vsel %vm955, %v2447, %v2451
      %v2453 = vshrl.u32 %v2382, 16
      %v2455 = vor.u32 %v2453, %v2451
      %v2457 = vshll.u32 %v2383, 16
      %v2459 = vrot.slane %v2457, 1
      %v2460 = vsel %vm955, %v2455, %v2459
      %v2461 = vshrl.u32 %v2383, 16
      %v2463 = vor.u32 %v2461, %v2459
      %v2465 = vshll.u32 %v2384, 16
      %v2467 = vrot.slane %v2465, 1
      %v2468 = vsel %vm955, %v2463, %v2467
      %v2469 = vshrl.u32 %v2384, 16
      %v2471 = vor.u32 %v2469, %v2467
      %v2473 = vshll.u32 %v2385, 16
      %v2475 = vrot.slane %v2473, 1
      %v2476 = vsel %vm955, %v2471, %v2475
      %v2477 = vshrl.u32 %v2385, 16
      %v2479 = vor.u32 %v2477, %v2475
      %v2481 = vshll.u32 %v2386, 16
      %v2483 = vrot.slane %v2481, 1
      %v2484 = vsel %vm955, %v2479, %v2483
      %v2485 = vshrl.u32 %v2386, 16
      %v2487 = vor.u32 %v2485, %v2483
      %v2489 = vshll.u32 %v2387, 16
      %v2491 = vrot.slane %v2489, 1
      %v2492 = vsel %vm955, %v2487, %v2491
      %v2493 = vshrl.u32 %v2387, 16
      %v2495 = vor.u32 %v2493, %v2491
      %v2497 = vshll.u32 %v2388, 16
      %v2499 = vrot.slane %v2497, 1
      %v2500 = vsel %vm955, %v2495, %v2499
      %v2501 = vshrl.u32 %v2388, 16
      %v2503 = vor.u32 %v2501, %v2499
      %v2505 = vshll.u32 %v2389, 16
      %v2507 = vrot.slane %v2505, 1
      %v2508 = vsel %vm955, %v2503, %v2507
      %v2509 = vshrl.u32 %v2389, 16
      %v2511 = vor.u32 %v2509, %v2507
      %v2513 = vshll.u32 %v2390, 16
      %v2515 = vrot.slane %v2513, 1
      %v2516 = vsel %vm955, %v2511, %v2515
      %v2517 = vshrl.u32 %v2390, 16
      %v2519 = vor.u32 %v2517, %v2515
      %v2521 = vshll.u32 %v2391, 16
      %v2523 = vrot.slane %v2521, 1
      %v2524 = vsel %vm955, %v2519, %v2523
      %v2525 = vshrl.u32 %v2391, 16
      %v2527 = vor.u32 %v2525, %v2523
      %v2529 = vshll.u32 %v2392, 16
      %v2531 = vrot.slane %v2529, 1
      %v2532 = vsel %vm955, %v2527, %v2531
      %v2533 = vshrl.u32 %v2392, 16
      %v2535 = vor.u32 %v2533, %v2531
      %v2537 = vshll.u32 %v2393, 16
      %v2539 = vrot.slane %v2537, 1
      %v2540 = vsel %vm955, %v2535, %v2539
      %v2541 = vshrl.u32 %v2393, 16
      %v2543 = vor.u32 %v2541, %v2539
      %v2545 = vshll.u32 %v2394, 16
      %v2547 = vrot.slane %v2545, 1
      %v2548 = vsel %vm955, %v2543, %v2547
      %v2549 = vshrl.u32 %v2394, 16
      %v2551 = vor.u32 %v2549, %v2547
      %v2553 = vshll.u32 %v2395, 16
      %v2555 = vrot.slane %v2553, 1
      %v2556 = vsel %vm955, %v2551, %v2555
      %v2557 = vshrl.u32 %v2395, 16
      %v2559 = vor.u32 %v2557, %v2555
      %v2561 = vshll.u32 %v2396, 16
      %v2563 = vrot.slane %v2561, 1
      %v2564 = vsel %vm955, %v2559, %v2563
      %v2565 = vshrl.u32 %v2396, 16
      %v2567 = vor.u32 %v2565, %v2563
      %v2569 = vshll.u32 %v2397, 16
      %v2571 = vrot.slane %v2569, 1
      %v2572 = vsel %vm955, %v2567, %v2571
      %v2573 = vshrl.u32 %v2397, 16
      %v2575 = vor.u32 %v2573, %v2571
      %v2577 = vshll.u32 %v2398, 16
      %v2579 = vrot.slane %v2577, 1
      %v2580 = vsel %vm955, %v2575, %v2579
      %v2581 = vshrl.u32 %v2398, 16
      %v2583 = vor.u32 %v2581, %v2579
      %v2585 = vshll.u32 %v2399, 16
      %v2587 = vrot.slane %v2585, 1
      %v2588 = vsel %vm955, %v2583, %v2587
      %v2589 = vshrl.u32 %v2399, 16
      %v2591 = vor.u32 %v2589, %v2587
      %v2593 = vshll.u32 %v2400, 16
      %v2595 = vrot.slane %v2593, 1
      %v2596 = vsel %vm955, %v2591, %v2595
      %v2637 = vunpack.c.l.b16 %v2262
      %v2638 = vunpack.c.l.b16 %v2263
      %v2639 = vunpack.c.l.b16 %v2264
      %v2640 = vunpack.c.l.b16 %v2265
      %v2641 = vunpack.c.l.b16 %v2266
      %v2642 = vunpack.c.l.b16 %v2267
      %v2643 = vunpack.c.l.b16 %v2268
      %v2644 = vunpack.c.l.b16 %v2269
      %v2645 = vunpack.c.l.b16 %v2270
      %v2646 = vunpack.c.l.b16 %v2271
      %v2647 = vunpack.c.l.b16 %v2272
      %v2648 = vunpack.c.l.b16 %v2273
      %v2649 = vunpack.c.l.b16 %v2274
      %v2650 = vunpack.c.l.b16 %v2275
      %v2651 = vunpack.c.l.b16 %v2276
      %v2652 = vunpack.c.l.b16 %v2277
      %v2653 = vpack.c.b16 %v2638, %v2637
      %v2654 = vpack.c.b16 %v2640, %v2639
      %v2655 = vpack.c.b16 %v2642, %v2641
      %v2656 = vpack.c.b16 %v2644, %v2643
      %v2657 = vpack.c.b16 %v2646, %v2645
      %v2658 = vpack.c.b16 %v2648, %v2647
      %v2659 = vpack.c.b16 %v2650, %v2649
      %v2660 = vpack.c.b16 %v2652, %v2651
      %2669 = vmatpush.bf16.msra.mxu0 %v2660
      %2670 = vmatpush.bf16.msra.mxu0 %v2659
      %2671 = vmatpush.bf16.msra.mxu0 %v2658
      %2672 = vmatpush.bf16.msra.mxu0 %v2657
      %2673 = vmatpush.bf16.msra.mxu0 %v2656
      %2674 = vmatpush.bf16.msra.mxu0 %v2655
      %2675 = vmatpush.bf16.msra.mxu0 %v2654
      %2676 = vmatpush.bf16.msra.mxu0 %v2653
      %2677 = vmatmul.bf16.gmra.mxu0 %v2412
      %v2678 = vpop.f32.mrf.mxu0
      %v2679 = vadd.f32 0.0, %v2678
      %v2680 = vpop.f32.mrf.mxu0
      %v2681 = vadd.f32 0.0, %v2680
      %2682 = vmatmul.bf16.gmra.mxu0 %v2420
      %v2683 = vpop.f32.mrf.mxu0
      %v2684 = vpop.f32.mrf.mxu0
      %v2685 = vadd.f32 0.0, %v2684
      %2686 = vmatmul.bf16.gmra.mxu0 %v2428
      %v2687 = vpop.f32.mrf.mxu0
      %v2688 = vadd.f32 0.0, %v2687
      %v2689 = vpop.f32.mrf.mxu0
      %2690 = vmatmul.bf16.gmra.mxu0 %v2436
      %v2691 = vpop.f32.mrf.mxu0
      %v2692 = vadd.f32 0.0, %v2691
      %v2693 = vpop.f32.mrf.mxu0
      %v2694 = vadd.f32 0.0, %v2693
      %2695 = vmatmul.bf16.gmra.mxu0 %v2444
      %v2696 = vpop.f32.mrf.mxu0
      %v2697 = vpop.f32.mrf.mxu0
      %v2698 = vadd.f32 0.0, %v2697
      %2699 = vmatmul.bf16.gmra.mxu0 %v2452
      %v2700 = vpop.f32.mrf.mxu0
      %v2701 = vadd.f32 0.0, %v2700
      %v2702 = vpop.f32.mrf.mxu0
      %2703 = vmatmul.bf16.gmra.mxu0 %v2460
      %v2704 = vpop.f32.mrf.mxu0
      %v2705 = vadd.f32 0.0, %v2704
      %v2706 = vpop.f32.mrf.mxu0
      %v2707 = vadd.f32 0.0, %v2706
      %2708 = vmatmul.bf16.gmra.mxu0 %v2468
      %v2709 = vpop.f32.mrf.mxu0
      %v2710 = vpop.f32.mrf.mxu0
      %v2711 = vadd.f32 0.0, %v2710
      %2712 = vmatmul.bf16.gmra.mxu0 %v2476
      %v2713 = vpop.f32.mrf.mxu0
      %v2714 = vadd.f32 0.0, %v2713
      %v2715 = vpop.f32.mrf.mxu0
      %2716 = vmatmul.bf16.gmra.mxu0 %v2484
      %v2717 = vpop.f32.mrf.mxu0
      %v2718 = vadd.f32 0.0, %v2717
      %v2719 = vpop.f32.mrf.mxu0
      %v2720 = vadd.f32 0.0, %v2719
      %2721 = vmatmul.bf16.gmra.mxu0 %v2492
      %v2722 = vpop.f32.mrf.mxu0
      %v2723 = vpop.f32.mrf.mxu0
      %v2724 = vadd.f32 0.0, %v2723
      %2725 = vmatmul.bf16.gmra.mxu0 %v2500
      %v2726 = vpop.f32.mrf.mxu0
      %v2727 = vadd.f32 0.0, %v2726
      %v2728 = vpop.f32.mrf.mxu0
      %2729 = vmatmul.bf16.gmra.mxu0 %v2508
      %v2730 = vpop.f32.mrf.mxu0
      %v2731 = vadd.f32 0.0, %v2730
      %v2732 = vpop.f32.mrf.mxu0
      %v2733 = vadd.f32 0.0, %v2732
      %2734 = vmatmul.bf16.gmra.mxu0 %v2516
      %v2735 = vpop.f32.mrf.mxu0
      %v2736 = vpop.f32.mrf.mxu0
      %v2737 = vadd.f32 0.0, %v2736
      %2738 = vmatmul.bf16.gmra.mxu0 %v2524
      %v2739 = vpop.f32.mrf.mxu0
      %v2740 = vadd.f32 0.0, %v2739
      %v2741 = vpop.f32.mrf.mxu0
      %2742 = vmatmul.bf16.gmra.mxu0 %v2532
      %v2743 = vpop.f32.mrf.mxu0
      %v2744 = vadd.f32 0.0, %v2743
      %v2745 = vpop.f32.mrf.mxu0
      %v2746 = vadd.f32 0.0, %v2745
      %2747 = vmatmul.bf16.gmra.mxu0 %v2540
      %v2748 = vpop.f32.mrf.mxu0
      %v2749 = vpop.f32.mrf.mxu0
      %v2750 = vadd.f32 0.0, %v2749
      %2751 = vmatmul.bf16.gmra.mxu0 %v2548
      %v2752 = vpop.f32.mrf.mxu0
      %v2753 = vadd.f32 0.0, %v2752
      %v2754 = vpop.f32.mrf.mxu0
      %2755 = vmatmul.bf16.gmra.mxu0 %v2556
      %v2756 = vpop.f32.mrf.mxu0
      %v2757 = vadd.f32 0.0, %v2756
      %v2758 = vpop.f32.mrf.mxu0
      %v2759 = vadd.f32 0.0, %v2758
      %2760 = vmatmul.bf16.gmra.mxu0 %v2564
      %v2761 = vpop.f32.mrf.mxu0
      %v2762 = vpop.f32.mrf.mxu0
      %v2763 = vadd.f32 0.0, %v2762
      %2764 = vmatmul.bf16.gmra.mxu0 %v2572
      %v2765 = vpop.f32.mrf.mxu0
      %v2766 = vadd.f32 0.0, %v2765
      %v2767 = vpop.f32.mrf.mxu0
      %2768 = vmatmul.bf16.gmra.mxu0 %v2580
      %v2769 = vpop.f32.mrf.mxu0
      %v2770 = vadd.f32 0.0, %v2769
      %v2771 = vpop.f32.mrf.mxu0
      %v2772 = vadd.f32 0.0, %v2771
      %2773 = vmatmul.bf16.gmra.mxu0 %v2588
      %v2774 = vpop.f32.mrf.mxu0
      %v2775 = vpop.f32.mrf.mxu0
      %v2776 = vadd.f32 0.0, %v2775
      %2777 = vmatmul.bf16.gmra.mxu0 %v2596
      %v2778 = vpop.f32.mrf.mxu0
      %v2779 = vadd.f32 0.0, %v2778
      %v2780 = vpop.f32.mrf.mxu0
      %2781 = vdwg.mxu0
      %v2782 = vadd.f32 %v2180, %v2679
      %v2783 = vadd.f32 %v2181, %v2681
      %v2784 = vadd.f32 %v2182, %v2685
      %v2785 = vadd.f32 %v2183, %v2688
      %v2786 = vadd.f32 %v2184, %v2692
      %v2787 = vadd.f32 %v2185, %v2694
      %v2788 = vadd.f32 %v2186, %v2698
      %v2789 = vadd.f32 %v2187, %v2701
      %v2790 = vadd.f32 %v2188, %v2705
      %v2791 = vadd.f32 %v2189, %v2707
      %v2792 = vadd.f32 %v2190, %v2711
      %v2793 = vadd.f32 %v2191, %v2714
      %v2794 = vadd.f32 %v2192, %v2718
      %v2795 = vadd.f32 %v2193, %v2720
      %v2796 = vadd.f32 %v2194, %v2724
      %v2797 = vadd.f32 %v2195, %v2727
      %v2798 = vadd.f32 %v2196, %v2731
      %v2799 = vadd.f32 %v2197, %v2733
      %v2800 = vadd.f32 %v2198, %v2737
      %v2801 = vadd.f32 %v2199, %v2740
      %v2802 = vadd.f32 %v2200, %v2744
      %v2803 = vadd.f32 %v2201, %v2746
      %v2804 = vadd.f32 %v2202, %v2750
      %v2805 = vadd.f32 %v2203, %v2753
      %v2806 = vadd.f32 %v2204, %v2757
      %v2807 = vadd.f32 %v2205, %v2759
      %v2808 = vadd.f32 %v2206, %v2763
      %v2809 = vadd.f32 %v2207, %v2766
      %v2810 = vadd.f32 %v2208, %v2770
      %v2811 = vadd.f32 %v2209, %v2772
      %v2812 = vadd.f32 %v2210, %v2776
      %v2813 = vadd.f32 %v2211, %v2779
      %v2814 = vld [vmem:[#allocation2 + $0xc] sm:$0xe]
      %s2815 = scalar_lea.vmem %s210, 320
      %v2816 = vld [vmem:[%s2815] sm:$0xf]
      %v2817 = vld [vmem:[%s2815 + $0x4] sm:$0xf]
      %v2818 = vld [vmem:[%s2815 + $0x8] sm:$0xf]
      %v2819 = vld [vmem:[%s2815 + $0xc] sm:$0xf]
      %v2820 = vld [vmem:[%s2815 + $0x10] sm:$0xf]
      %v2821 = vld [vmem:[%s2815 + $0x14] sm:$0xf]
      %v2822 = vld [vmem:[%s2815 + $0x18] sm:$0xf]
      %v2823 = vld [vmem:[%s2815 + $0x1c] sm:$0xf]
      %v2824 = vld [vmem:[%s2815 + $0x20] sm:$0xf]
      %v2825 = vld [vmem:[%s2815 + $0x24] sm:$0xf]
      %v2826 = vld [vmem:[%s2815 + $0x28] sm:$0xf]
      %v2827 = vld [vmem:[%s2815 + $0x2c] sm:$0xf]
      %v2828 = vld [vmem:[%s2815 + $0x30] sm:$0xf]
      %v2829 = vld [vmem:[%s2815 + $0x34] sm:$0xf]
      %v2830 = vld [vmem:[%s2815 + $0x38] sm:$0xf]
      %v2831 = vld [vmem:[%s2815 + $0x3c] sm:$0xf]
      %v2833 = vunpack.c.l.b16 %v2814
      %v2834 = vpack.c.b16 %v2328, %v2833
      %v2835 = vrot.slane %v2834, 1
      %v2836 = vrot.slane %v2377, 1
      %v2837 = vsel %vm1543, %v2835, %v2836
      %v2838 = vrot.slane %v2378, 1
      %v2839 = vsel %vm1543, %v2836, %v2838
      %v2840 = vrot.slane %v2379, 1
      %v2841 = vsel %vm1543, %v2838, %v2840
      %v2842 = vrot.slane %v2380, 1
      %v2843 = vsel %vm1543, %v2840, %v2842
      %v2844 = vrot.slane %v2381, 1
      %v2845 = vsel %vm1543, %v2842, %v2844
      %v2846 = vrot.slane %v2382, 1
      %v2847 = vsel %vm1543, %v2844, %v2846
      %v2848 = vrot.slane %v2383, 1
      %v2849 = vsel %vm1543, %v2846, %v2848
      %v2850 = vrot.slane %v2384, 1
      %v2851 = vsel %vm1543, %v2848, %v2850
      %v2852 = vrot.slane %v2385, 1
      %v2853 = vsel %vm1543, %v2850, %v2852
      %v2854 = vrot.slane %v2386, 1
      %v2855 = vsel %vm1543, %v2852, %v2854
      %v2856 = vrot.slane %v2387, 1
      %v2857 = vsel %vm1543, %v2854, %v2856
      %v2858 = vrot.slane %v2388, 1
      %v2859 = vsel %vm1543, %v2856, %v2858
      %v2860 = vrot.slane %v2389, 1
      %v2861 = vsel %vm1543, %v2858, %v2860
      %v2862 = vrot.slane %v2390, 1
      %v2863 = vsel %vm1543, %v2860, %v2862
      %v2864 = vrot.slane %v2391, 1
      %v2865 = vsel %vm1543, %v2862, %v2864
      %v2866 = vrot.slane %v2392, 1
      %v2867 = vsel %vm1543, %v2864, %v2866
      %v2868 = vrot.slane %v2393, 1
      %v2869 = vsel %vm1543, %v2866, %v2868
      %v2870 = vrot.slane %v2394, 1
      %v2871 = vsel %vm1543, %v2868, %v2870
      %v2872 = vrot.slane %v2395, 1
      %v2873 = vsel %vm1543, %v2870, %v2872
      %v2874 = vrot.slane %v2396, 1
      %v2875 = vsel %vm1543, %v2872, %v2874
      %v2876 = vrot.slane %v2397, 1
      %v2877 = vsel %vm1543, %v2874, %v2876
      %v2878 = vrot.slane %v2398, 1
      %v2879 = vsel %vm1543, %v2876, %v2878
      %v2880 = vrot.slane %v2399, 1
      %v2881 = vsel %vm1543, %v2878, %v2880
      %v2882 = vrot.slane %v2400, 1
      %v2883 = vsel %vm1543, %v2880, %v2882
      %v2924 = vunpack.c.l.b16 %v2816
      %v2925 = vunpack.c.l.b16 %v2817
      %v2926 = vunpack.c.l.b16 %v2818
      %v2927 = vunpack.c.l.b16 %v2819
      %v2928 = vunpack.c.l.b16 %v2820
      %v2929 = vunpack.c.l.b16 %v2821
      %v2930 = vunpack.c.l.b16 %v2822
      %v2931 = vunpack.c.l.b16 %v2823
      %v2932 = vunpack.c.l.b16 %v2824
      %v2933 = vunpack.c.l.b16 %v2825
      %v2934 = vunpack.c.l.b16 %v2826
      %v2935 = vunpack.c.l.b16 %v2827
      %v2936 = vunpack.c.l.b16 %v2828
      %v2937 = vunpack.c.l.b16 %v2829
      %v2938 = vunpack.c.l.b16 %v2830
      %v2939 = vunpack.c.l.b16 %v2831
      %v2940 = vpack.c.b16 %v2925, %v2924
      %v2941 = vpack.c.b16 %v2927, %v2926
      %v2942 = vpack.c.b16 %v2929, %v2928
      %v2943 = vpack.c.b16 %v2931, %v2930
      %v2944 = vpack.c.b16 %v2933, %v2932
      %v2945 = vpack.c.b16 %v2935, %v2934
      %v2946 = vpack.c.b16 %v2937, %v2936
      %v2947 = vpack.c.b16 %v2939, %v2938
      %2956 = vmatpush.bf16.msra.mxu0 %v2947
      %2957 = vmatpush.bf16.msra.mxu0 %v2946
      %2958 = vmatpush.bf16.msra.mxu0 %v2945
      %2959 = vmatpush.bf16.msra.mxu0 %v2944
      %2960 = vmatpush.bf16.msra.mxu0 %v2943
      %2961 = vmatpush.bf16.msra.mxu0 %v2942
      %2962 = vmatpush.bf16.msra.mxu0 %v2941
      %2963 = vmatpush.bf16.msra.mxu0 %v2940
      %2964 = vmatmul.bf16.gmra.mxu0 %v2837
      %v2965 = vpop.f32.mrf.mxu0
      %v2966 = vadd.f32 0.0, %v2965
      %v2967 = vpop.f32.mrf.mxu0
      %v2968 = vadd.f32 0.0, %v2967
      %2969 = vmatmul.bf16.gmra.mxu0 %v2839
      %v2970 = vpop.f32.mrf.mxu0
      %v2971 = vpop.f32.mrf.mxu0
      %v2972 = vadd.f32 0.0, %v2971
      %2973 = vmatmul.bf16.gmra.mxu0 %v2841
      %v2974 = vpop.f32.mrf.mxu0
      %v2975 = vadd.f32 0.0, %v2974
      %v2976 = vpop.f32.mrf.mxu0
      %2977 = vmatmul.bf16.gmra.mxu0 %v2843
      %v2978 = vpop.f32.mrf.mxu0
      %v2979 = vadd.f32 0.0, %v2978
      %v2980 = vpop.f32.mrf.mxu0
      %v2981 = vadd.f32 0.0, %v2980
      %2982 = vmatmul.bf16.gmra.mxu0 %v2845
      %v2983 = vpop.f32.mrf.mxu0
      %v2984 = vpop.f32.mrf.mxu0
      %v2985 = vadd.f32 0.0, %v2984
      %2986 = vmatmul.bf16.gmra.mxu0 %v2847
      %v2987 = vpop.f32.mrf.mxu0
      %v2988 = vadd.f32 0.0, %v2987
      %v2989 = vpop.f32.mrf.mxu0
      %2990 = vmatmul.bf16.gmra.mxu0 %v2849
      %v2991 = vpop.f32.mrf.mxu0
      %v2992 = vadd.f32 0.0, %v2991
      %v2993 = vpop.f32.mrf.mxu0
      %v2994 = vadd.f32 0.0, %v2993
      %2995 = vmatmul.bf16.gmra.mxu0 %v2851
      %v2996 = vpop.f32.mrf.mxu0
      %v2997 = vpop.f32.mrf.mxu0
      %v2998 = vadd.f32 0.0, %v2997
      %2999 = vmatmul.bf16.gmra.mxu0 %v2853
      %v3000 = vpop.f32.mrf.mxu0
      %v3001 = vadd.f32 0.0, %v3000
      %v3002 = vpop.f32.mrf.mxu0
      %3003 = vmatmul.bf16.gmra.mxu0 %v2855
      %v3004 = vpop.f32.mrf.mxu0
      %v3005 = vadd.f32 0.0, %v3004
      %v3006 = vpop.f32.mrf.mxu0
      %v3007 = vadd.f32 0.0, %v3006
      %3008 = vmatmul.bf16.gmra.mxu0 %v2857
      %v3009 = vpop.f32.mrf.mxu0
      %v3010 = vpop.f32.mrf.mxu0
      %v3011 = vadd.f32 0.0, %v3010
      %3012 = vmatmul.bf16.gmra.mxu0 %v2859
      %v3013 = vpop.f32.mrf.mxu0
      %v3014 = vadd.f32 0.0, %v3013
      %v3015 = vpop.f32.mrf.mxu0
      %3016 = vmatmul.bf16.gmra.mxu0 %v2861
      %v3017 = vpop.f32.mrf.mxu0
      %v3018 = vadd.f32 0.0, %v3017
      %v3019 = vpop.f32.mrf.mxu0
      %v3020 = vadd.f32 0.0, %v3019
      %3021 = vmatmul.bf16.gmra.mxu0 %v2863
      %v3022 = vpop.f32.mrf.mxu0
      %v3023 = vpop.f32.mrf.mxu0
      %v3024 = vadd.f32 0.0, %v3023
      %3025 = vmatmul.bf16.gmra.mxu0 %v2865
      %v3026 = vpop.f32.mrf.mxu0
      %v3027 = vadd.f32 0.0, %v3026
      %v3028 = vpop.f32.mrf.mxu0
      %3029 = vmatmul.bf16.gmra.mxu0 %v2867
      %v3030 = vpop.f32.mrf.mxu0
      %v3031 = vadd.f32 0.0, %v3030
      %v3032 = vpop.f32.mrf.mxu0
      %v3033 = vadd.f32 0.0, %v3032
      %3034 = vmatmul.bf16.gmra.mxu0 %v2869
      %v3035 = vpop.f32.mrf.mxu0
      %v3036 = vpop.f32.mrf.mxu0
      %v3037 = vadd.f32 0.0, %v3036
      %3038 = vmatmul.bf16.gmra.mxu0 %v2871
      %v3039 = vpop.f32.mrf.mxu0
      %v3040 = vadd.f32 0.0, %v3039
      %v3041 = vpop.f32.mrf.mxu0
      %3042 = vmatmul.bf16.gmra.mxu0 %v2873
      %v3043 = vpop.f32.mrf.mxu0
      %v3044 = vadd.f32 0.0, %v3043
      %v3045 = vpop.f32.mrf.mxu0
      %v3046 = vadd.f32 0.0, %v3045
      %3047 = vmatmul.bf16.gmra.mxu0 %v2875
      %v3048 = vpop.f32.mrf.mxu0
      %v3049 = vpop.f32.mrf.mxu0
      %v3050 = vadd.f32 0.0, %v3049
      %3051 = vmatmul.bf16.gmra.mxu0 %v2877
      %v3052 = vpop.f32.mrf.mxu0
      %v3053 = vadd.f32 0.0, %v3052
      %v3054 = vpop.f32.mrf.mxu0
      %3055 = vmatmul.bf16.gmra.mxu0 %v2879
      %v3056 = vpop.f32.mrf.mxu0
      %v3057 = vadd.f32 0.0, %v3056
      %v3058 = vpop.f32.mrf.mxu0
      %v3059 = vadd.f32 0.0, %v3058
      %3060 = vmatmul.bf16.gmra.mxu0 %v2881
      %v3061 = vpop.f32.mrf.mxu0
      %v3062 = vpop.f32.mrf.mxu0
      %v3063 = vadd.f32 0.0, %v3062
      %3064 = vmatmul.bf16.gmra.mxu0 %v2883
      %v3065 = vpop.f32.mrf.mxu0
      %v3066 = vadd.f32 0.0, %v3065
      %v3067 = vpop.f32.mrf.mxu0
      %3068 = vdwg.mxu0
      %v3069 = vadd.f32 %v2782, %v2966
      %v3070 = vadd.f32 %v2783, %v2968
      %v3071 = vadd.f32 %v2784, %v2972
      %v3072 = vadd.f32 %v2785, %v2975
      %v3073 = vadd.f32 %v2786, %v2979
      %v3074 = vadd.f32 %v2787, %v2981
      %v3075 = vadd.f32 %v2788, %v2985
      %v3076 = vadd.f32 %v2789, %v2988
      %v3077 = vadd.f32 %v2790, %v2992
      %v3078 = vadd.f32 %v2791, %v2994
      %v3079 = vadd.f32 %v2792, %v2998
      %v3080 = vadd.f32 %v2793, %v3001
      %v3081 = vadd.f32 %v2794, %v3005
      %v3082 = vadd.f32 %v2795, %v3007
      %v3083 = vadd.f32 %v2796, %v3011
      %v3084 = vadd.f32 %v2797, %v3014
      %v3085 = vadd.f32 %v2798, %v3018
      %v3086 = vadd.f32 %v2799, %v3020
      %v3087 = vadd.f32 %v2800, %v3024
      %v3088 = vadd.f32 %v2801, %v3027
      %v3089 = vadd.f32 %v2802, %v3031
      %v3090 = vadd.f32 %v2803, %v3033
      %v3091 = vadd.f32 %v2804, %v3037
      %v3092 = vadd.f32 %v2805, %v3040
      %v3093 = vadd.f32 %v2806, %v3044
      %v3094 = vadd.f32 %v2807, %v3046
      %v3095 = vadd.f32 %v2808, %v3050
      %v3096 = vadd.f32 %v2809, %v3053
      %v3097 = vadd.f32 %v2810, %v3057
      %v3098 = vadd.f32 %v2811, %v3059
      %v3099 = vadd.f32 %v2812, %v3063
      %v3100 = vadd.f32 %v2813, %v3066
      %v3101 = vld [vmem:[#allocation2 + $0x18] sm:$0xf]
      %v3102 = vld [vmem:[#allocation2 + $0x1c] sm:$0xf]
      %v3103 = vld [vmem:[#allocation2 + $0x20] sm:$0xf]
      %v3104 = vld [vmem:[#allocation2 + $0x24] sm:$0xf]
      %v3105 = vld [vmem:[#allocation2 + $0x28] sm:$0xf]
      %v3106 = vld [vmem:[#allocation2 + $0x2c] sm:$0xf]
      %v3107 = vld [vmem:[#allocation2 + $0x30] sm:$0xf]
      %v3108 = vld [vmem:[#allocation2 + $0x34] sm:$0xf]
      %v3109 = vld [vmem:[#allocation2 + $0x38] sm:$0xf]
      %v3110 = vld [vmem:[#allocation2 + $0x3c] sm:$0xf]
      %v3111 = vld [vmem:[#allocation2 + $0x40] sm:$0xf]
      %v3112 = vld [vmem:[#allocation2 + $0x44] sm:$0xf]
      %v3113 = vld [vmem:[#allocation2 + $0x48] sm:$0xf]
      %v3114 = vld [vmem:[#allocation2 + $0x4c] sm:$0xf]
      %v3115 = vld [vmem:[#allocation2 + $0x50] sm:$0xf]
      %v3116 = vld [vmem:[#allocation2 + $0x54] sm:$0xf]
      %v3117 = vld [vmem:[#allocation2 + $0x58] sm:$0xf]
      %v3118 = vld [vmem:[#allocation2 + $0x5c] sm:$0xf]
      %v3119 = vld [vmem:[#allocation2 + $0x60] sm:$0xf]
      %v3120 = vld [vmem:[#allocation2 + $0x64] sm:$0xf]
      %v3121 = vld [vmem:[#allocation2 + $0x68] sm:$0xf]
      %v3122 = vld [vmem:[#allocation2 + $0x6c] sm:$0xf]
      %v3123 = vld [vmem:[#allocation2 + $0x70] sm:$0xf]
      %v3124 = vld [vmem:[#allocation2 + $0x74] sm:$0xf]
      %v3125 = vld [vmem:[#allocation2 + $0x78] sm:$0xf]
      %v3126 = vld [vmem:[#allocation2 + $0x7c] sm:$0xf]
      %v3127 = vld [vmem:[#allocation2 + $0x80] sm:$0xf]
      %v3128 = vld [vmem:[#allocation2 + $0x84] sm:$0xf]
      %v3129 = vld [vmem:[#allocation2 + $0x88] sm:$0xf]
      %v3130 = vld [vmem:[#allocation2 + $0x8c] sm:$0xf]
      %v3131 = vld [vmem:[#allocation2 + $0x90] sm:$0xf]
      %v3132 = vld [vmem:[#allocation2 + $0x94] sm:$0xf]
      %v3133 = vld [vmem:[#allocation2 + $0x98] sm:$0xf]
      %v3134 = vld [vmem:[#allocation2 + $0x9c] sm:$0xf]
      %v3135 = vld [vmem:[#allocation2 + $0xa0] sm:$0xf]
      %v3136 = vld [vmem:[#allocation2 + $0xa4] sm:$0xf]
      %v3137 = vld [vmem:[#allocation2 + $0xa8] sm:$0xf]
      %v3138 = vld [vmem:[#allocation2 + $0xac] sm:$0xf]
      %v3139 = vld [vmem:[#allocation2 + $0xb0] sm:$0xf]
      %v3140 = vld [vmem:[#allocation2 + $0xb4] sm:$0xf]
      %v3141 = vld [vmem:[#allocation2 + $0xb8] sm:$0xf]
      %v3142 = vld [vmem:[#allocation2 + $0xbc] sm:$0xf]
      %v3143 = vld [vmem:[#allocation2 + $0xc0] sm:$0xf]
      %v3144 = vld [vmem:[#allocation2 + $0xc4] sm:$0xf]
      %v3145 = vld [vmem:[#allocation2 + $0xc8] sm:$0xf]
      %v3146 = vld [vmem:[#allocation2 + $0xcc] sm:$0xf]
      %v3147 = vld [vmem:[#allocation2 + $0xd0] sm:$0xf]
      %v3148 = vld [vmem:[#allocation2 + $0xd4] sm:$0xf]
      %s3149 = scalar_lea.vmem %s210, 384
      %v3150 = vld [vmem:[%s3149] sm:$0xf]
      %v3151 = vld [vmem:[%s3149 + $0x4] sm:$0xf]
      %v3152 = vld [vmem:[%s3149 + $0x8] sm:$0xf]
      %v3153 = vld [vmem:[%s3149 + $0xc] sm:$0xf]
      %v3154 = vld [vmem:[%s3149 + $0x10] sm:$0xf]
      %v3155 = vld [vmem:[%s3149 + $0x14] sm:$0xf]
      %v3156 = vld [vmem:[%s3149 + $0x18] sm:$0xf]
      %v3157 = vld [vmem:[%s3149 + $0x1c] sm:$0xf]
      %v3158 = vld [vmem:[%s3149 + $0x20] sm:$0xf]
      %v3159 = vld [vmem:[%s3149 + $0x24] sm:$0xf]
      %v3160 = vld [vmem:[%s3149 + $0x28] sm:$0xf]
      %v3161 = vld [vmem:[%s3149 + $0x2c] sm:$0xf]
      %v3162 = vld [vmem:[%s3149 + $0x30] sm:$0xf]
      %v3163 = vld [vmem:[%s3149 + $0x34] sm:$0xf]
      %v3164 = vld [vmem:[%s3149 + $0x38] sm:$0xf]
      %v3165 = vld [vmem:[%s3149 + $0x3c] sm:$0xf]
      %v3214 = vunpack.c.l.b16 %v3101
      %v3215 = vunpack.c.l.b16 %v3102
      %v3216 = vunpack.c.l.b16 %v3103
      %v3217 = vunpack.c.l.b16 %v3104
      %v3218 = vunpack.c.l.b16 %v3105
      %v3219 = vunpack.c.l.b16 %v3106
      %v3220 = vunpack.c.l.b16 %v3107
      %v3221 = vunpack.c.l.b16 %v3108
      %v3222 = vunpack.c.l.b16 %v3109
      %v3223 = vunpack.c.l.b16 %v3110
      %v3224 = vunpack.c.l.b16 %v3111
      %v3225 = vunpack.c.l.b16 %v3112
      %v3226 = vunpack.c.l.b16 %v3113
      %v3227 = vunpack.c.l.b16 %v3114
      %v3228 = vunpack.c.l.b16 %v3115
      %v3229 = vunpack.c.l.b16 %v3116
      %v3230 = vunpack.c.l.b16 %v3117
      %v3231 = vunpack.c.l.b16 %v3118
      %v3232 = vunpack.c.l.b16 %v3119
      %v3233 = vunpack.c.l.b16 %v3120
      %v3234 = vunpack.c.l.b16 %v3121
      %v3235 = vunpack.c.l.b16 %v3122
      %v3236 = vunpack.c.l.b16 %v3123
      %v3237 = vunpack.c.l.b16 %v3124
      %v3238 = vunpack.c.l.b16 %v3125
      %v3239 = vunpack.c.l.b16 %v3126
      %v3240 = vunpack.c.l.b16 %v3127
      %v3241 = vunpack.c.l.b16 %v3128
      %v3242 = vunpack.c.l.b16 %v3129
      %v3243 = vunpack.c.l.b16 %v3130
      %v3244 = vunpack.c.l.b16 %v3131
      %v3245 = vunpack.c.l.b16 %v3132
      %v3246 = vunpack.c.l.b16 %v3133
      %v3247 = vunpack.c.l.b16 %v3134
      %v3248 = vunpack.c.l.b16 %v3135
      %v3249 = vunpack.c.l.b16 %v3136
      %v3250 = vunpack.c.l.b16 %v3137
      %v3251 = vunpack.c.l.b16 %v3138
      %v3252 = vunpack.c.l.b16 %v3139
      %v3253 = vunpack.c.l.b16 %v3140
      %v3254 = vunpack.c.l.b16 %v3141
      %v3255 = vunpack.c.l.b16 %v3142
      %v3256 = vunpack.c.l.b16 %v3143
      %v3257 = vunpack.c.l.b16 %v3144
      %v3258 = vunpack.c.l.b16 %v3145
      %v3259 = vunpack.c.l.b16 %v3146
      %v3260 = vunpack.c.l.b16 %v3147
      %v3261 = vunpack.c.l.b16 %v3148
      %v3262 = vpack.c.b16 %v3215, %v3214
      %v3263 = vpack.c.b16 %v3217, %v3216
      %v3264 = vpack.c.b16 %v3219, %v3218
      %v3265 = vpack.c.b16 %v3221, %v3220
      %v3266 = vpack.c.b16 %v3223, %v3222
      %v3267 = vpack.c.b16 %v3225, %v3224
      %v3268 = vpack.c.b16 %v3227, %v3226
      %v3269 = vpack.c.b16 %v3229, %v3228
      %v3270 = vpack.c.b16 %v3231, %v3230
      %v3271 = vpack.c.b16 %v3233, %v3232
      %v3272 = vpack.c.b16 %v3235, %v3234
      %v3273 = vpack.c.b16 %v3237, %v3236
      %v3274 = vpack.c.b16 %v3239, %v3238
      %v3275 = vpack.c.b16 %v3241, %v3240
      %v3276 = vpack.c.b16 %v3243, %v3242
      %v3277 = vpack.c.b16 %v3245, %v3244
      %v3278 = vpack.c.b16 %v3247, %v3246
      %v3279 = vpack.c.b16 %v3249, %v3248
      %v3280 = vpack.c.b16 %v3251, %v3250
      %v3281 = vpack.c.b16 %v3253, %v3252
      %v3282 = vpack.c.b16 %v3255, %v3254
      %v3283 = vpack.c.b16 %v3257, %v3256
      %v3284 = vpack.c.b16 %v3259, %v3258
      %v3285 = vpack.c.b16 %v3261, %v3260
      %v3326 = vunpack.c.l.b16 %v3150
      %v3327 = vunpack.c.l.b16 %v3151
      %v3328 = vunpack.c.l.b16 %v3152
      %v3329 = vunpack.c.l.b16 %v3153
      %v3330 = vunpack.c.l.b16 %v3154
      %v3331 = vunpack.c.l.b16 %v3155
      %v3332 = vunpack.c.l.b16 %v3156
      %v3333 = vunpack.c.l.b16 %v3157
      %v3334 = vunpack.c.l.b16 %v3158
      %v3335 = vunpack.c.l.b16 %v3159
      %v3336 = vunpack.c.l.b16 %v3160
      %v3337 = vunpack.c.l.b16 %v3161
      %v3338 = vunpack.c.l.b16 %v3162
      %v3339 = vunpack.c.l.b16 %v3163
      %v3340 = vunpack.c.l.b16 %v3164
      %v3341 = vunpack.c.l.b16 %v3165
      %v3342 = vpack.c.b16 %v3327, %v3326
      %v3343 = vpack.c.b16 %v3329, %v3328
      %v3344 = vpack.c.b16 %v3331, %v3330
      %v3345 = vpack.c.b16 %v3333, %v3332
      %v3346 = vpack.c.b16 %v3335, %v3334
      %v3347 = vpack.c.b16 %v3337, %v3336
      %v3348 = vpack.c.b16 %v3339, %v3338
      %v3349 = vpack.c.b16 %v3341, %v3340
      %3358 = vmatpush.bf16.msra.mxu0 %v3349
      %3359 = vmatpush.bf16.msra.mxu0 %v3348
      %3360 = vmatpush.bf16.msra.mxu0 %v3347
      %3361 = vmatpush.bf16.msra.mxu0 %v3346
      %3362 = vmatpush.bf16.msra.mxu0 %v3345
      %3363 = vmatpush.bf16.msra.mxu0 %v3344
      %3364 = vmatpush.bf16.msra.mxu0 %v3343
      %3365 = vmatpush.bf16.msra.mxu0 %v3342
      %3366 = vmatmul.bf16.gmra.mxu0 %v3262
      %v3367 = vpop.f32.mrf.mxu0
      %v3368 = vadd.f32 0.0, %v3367
      %v3369 = vpop.f32.mrf.mxu0
      %v3370 = vadd.f32 0.0, %v3369
      %3371 = vmatmul.bf16.gmra.mxu0 %v3263
      %v3372 = vpop.f32.mrf.mxu0
      %v3373 = vpop.f32.mrf.mxu0
      %v3374 = vadd.f32 0.0, %v3373
      %3375 = vmatmul.bf16.gmra.mxu0 %v3264
      %v3376 = vpop.f32.mrf.mxu0
      %v3377 = vadd.f32 0.0, %v3376
      %v3378 = vpop.f32.mrf.mxu0
      %3379 = vmatmul.bf16.gmra.mxu0 %v3265
      %v3380 = vpop.f32.mrf.mxu0
      %v3381 = vadd.f32 0.0, %v3380
      %v3382 = vpop.f32.mrf.mxu0
      %v3383 = vadd.f32 0.0, %v3382
      %3384 = vmatmul.bf16.gmra.mxu0 %v3266
      %v3385 = vpop.f32.mrf.mxu0
      %v3386 = vpop.f32.mrf.mxu0
      %v3387 = vadd.f32 0.0, %v3386
      %3388 = vmatmul.bf16.gmra.mxu0 %v3267
      %v3389 = vpop.f32.mrf.mxu0
      %v3390 = vadd.f32 0.0, %v3389
      %v3391 = vpop.f32.mrf.mxu0
      %3392 = vmatmul.bf16.gmra.mxu0 %v3268
      %v3393 = vpop.f32.mrf.mxu0
      %v3394 = vadd.f32 0.0, %v3393
      %v3395 = vpop.f32.mrf.mxu0
      %v3396 = vadd.f32 0.0, %v3395
      %3397 = vmatmul.bf16.gmra.mxu0 %v3269
      %v3398 = vpop.f32.mrf.mxu0
      %v3399 = vpop.f32.mrf.mxu0
      %v3400 = vadd.f32 0.0, %v3399
      %3401 = vmatmul.bf16.gmra.mxu0 %v3270
      %v3402 = vpop.f32.mrf.mxu0
      %v3403 = vadd.f32 0.0, %v3402
      %v3404 = vpop.f32.mrf.mxu0
      %3405 = vmatmul.bf16.gmra.mxu0 %v3271
      %v3406 = vpop.f32.mrf.mxu0
      %v3407 = vadd.f32 0.0, %v3406
      %v3408 = vpop.f32.mrf.mxu0
      %v3409 = vadd.f32 0.0, %v3408
      %3410 = vmatmul.bf16.gmra.mxu0 %v3272
      %v3411 = vpop.f32.mrf.mxu0
      %v3412 = vpop.f32.mrf.mxu0
      %v3413 = vadd.f32 0.0, %v3412
      %3414 = vmatmul.bf16.gmra.mxu0 %v3273
      %v3415 = vpop.f32.mrf.mxu0
      %v3416 = vadd.f32 0.0, %v3415
      %v3417 = vpop.f32.mrf.mxu0
      %3418 = vmatmul.bf16.gmra.mxu0 %v3274
      %v3419 = vpop.f32.mrf.mxu0
      %v3420 = vadd.f32 0.0, %v3419
      %v3421 = vpop.f32.mrf.mxu0
      %v3422 = vadd.f32 0.0, %v3421
      %3423 = vmatmul.bf16.gmra.mxu0 %v3275
      %v3424 = vpop.f32.mrf.mxu0
      %v3425 = vpop.f32.mrf.mxu0
      %v3426 = vadd.f32 0.0, %v3425
      %3427 = vmatmul.bf16.gmra.mxu0 %v3276
      %v3428 = vpop.f32.mrf.mxu0
      %v3429 = vadd.f32 0.0, %v3428
      %v3430 = vpop.f32.mrf.mxu0
      %3431 = vmatmul.bf16.gmra.mxu0 %v3277
      %v3432 = vpop.f32.mrf.mxu0
      %v3433 = vadd.f32 0.0, %v3432
      %v3434 = vpop.f32.mrf.mxu0
      %v3435 = vadd.f32 0.0, %v3434
      %3436 = vmatmul.bf16.gmra.mxu0 %v3278
      %v3437 = vpop.f32.mrf.mxu0
      %v3438 = vpop.f32.mrf.mxu0
      %v3439 = vadd.f32 0.0, %v3438
      %3440 = vmatmul.bf16.gmra.mxu0 %v3279
      %v3441 = vpop.f32.mrf.mxu0
      %v3442 = vadd.f32 0.0, %v3441
      %v3443 = vpop.f32.mrf.mxu0
      %3444 = vmatmul.bf16.gmra.mxu0 %v3280
      %v3445 = vpop.f32.mrf.mxu0
      %v3446 = vadd.f32 0.0, %v3445
      %v3447 = vpop.f32.mrf.mxu0
      %v3448 = vadd.f32 0.0, %v3447
      %3449 = vmatmul.bf16.gmra.mxu0 %v3281
      %v3450 = vpop.f32.mrf.mxu0
      %v3451 = vpop.f32.mrf.mxu0
      %v3452 = vadd.f32 0.0, %v3451
      %3453 = vmatmul.bf16.gmra.mxu0 %v3282
      %v3454 = vpop.f32.mrf.mxu0
      %v3455 = vadd.f32 0.0, %v3454
      %v3456 = vpop.f32.mrf.mxu0
      %3457 = vmatmul.bf16.gmra.mxu0 %v3283
      %v3458 = vpop.f32.mrf.mxu0
      %v3459 = vadd.f32 0.0, %v3458
      %v3460 = vpop.f32.mrf.mxu0
      %v3461 = vadd.f32 0.0, %v3460
      %3462 = vmatmul.bf16.gmra.mxu0 %v3284
      %v3463 = vpop.f32.mrf.mxu0
      %v3464 = vpop.f32.mrf.mxu0
      %v3465 = vadd.f32 0.0, %v3464
      %3466 = vmatmul.bf16.gmra.mxu0 %v3285
      %v3467 = vpop.f32.mrf.mxu0
      %v3468 = vadd.f32 0.0, %v3467
      %v3469 = vpop.f32.mrf.mxu0
      %3470 = vdwg.mxu0
      %v3471 = vadd.f32 %v3069, %v3368
      %v3472 = vadd.f32 %v3070, %v3370
      %v3473 = vadd.f32 %v3071, %v3374
      %v3474 = vadd.f32 %v3072, %v3377
      %v3475 = vadd.f32 %v3073, %v3381
      %v3476 = vadd.f32 %v3074, %v3383
      %v3477 = vadd.f32 %v3075, %v3387
      %v3478 = vadd.f32 %v3076, %v3390
      %v3479 = vadd.f32 %v3077, %v3394
      %v3480 = vadd.f32 %v3078, %v3396
      %v3481 = vadd.f32 %v3079, %v3400
      %v3482 = vadd.f32 %v3080, %v3403
      %v3483 = vadd.f32 %v3081, %v3407
      %v3484 = vadd.f32 %v3082, %v3409
      %v3485 = vadd.f32 %v3083, %v3413
      %v3486 = vadd.f32 %v3084, %v3416
      %v3487 = vadd.f32 %v3085, %v3420
      %v3488 = vadd.f32 %v3086, %v3422
      %v3489 = vadd.f32 %v3087, %v3426
      %v3490 = vadd.f32 %v3088, %v3429
      %v3491 = vadd.f32 %v3089, %v3433
      %v3492 = vadd.f32 %v3090, %v3435
      %v3493 = vadd.f32 %v3091, %v3439
      %v3494 = vadd.f32 %v3092, %v3442
      %v3495 = vadd.f32 %v3093, %v3446
      %v3496 = vadd.f32 %v3094, %v3448
      %v3497 = vadd.f32 %v3095, %v3452
      %v3498 = vadd.f32 %v3096, %v3455
      %v3499 = vadd.f32 %v3097, %v3459
      %v3500 = vadd.f32 %v3098, %v3461
      %v3501 = vadd.f32 %v3099, %v3465
      %v3502 = vadd.f32 %v3100, %v3468
      %v3503 = vld [vmem:[#allocation2 + $0x18] sm:$0xf]
      %v3504 = vld [vmem:[#allocation2 + $0x1c] sm:$0xf]
      %v3505 = vld [vmem:[#allocation2 + $0x20] sm:$0xf]
      %v3506 = vld [vmem:[#allocation2 + $0x24] sm:$0xf]
      %v3507 = vld [vmem:[#allocation2 + $0x28] sm:$0xf]
      %v3508 = vld [vmem:[#allocation2 + $0x2c] sm:$0xf]
      %v3509 = vld [vmem:[#allocation2 + $0x30] sm:$0xf]
      %v3510 = vld [vmem:[#allocation2 + $0x34] sm:$0xf]
      %v3511 = vld [vmem:[#allocation2 + $0x38] sm:$0xf]
      %v3512 = vld [vmem:[#allocation2 + $0x3c] sm:$0xf]
      %v3513 = vld [vmem:[#allocation2 + $0x40] sm:$0xf]
      %v3514 = vld [vmem:[#allocation2 + $0x44] sm:$0xf]
      %v3515 = vld [vmem:[#allocation2 + $0x48] sm:$0xf]
      %v3516 = vld [vmem:[#allocation2 + $0x4c] sm:$0xf]
      %v3517 = vld [vmem:[#allocation2 + $0x50] sm:$0xf]
      %v3518 = vld [vmem:[#allocation2 + $0x54] sm:$0xf]
      %v3519 = vld [vmem:[#allocation2 + $0x58] sm:$0xf]
      %v3520 = vld [vmem:[#allocation2 + $0x5c] sm:$0xf]
      %v3521 = vld [vmem:[#allocation2 + $0x60] sm:$0xf]
      %v3522 = vld [vmem:[#allocation2 + $0x64] sm:$0xf]
      %v3523 = vld [vmem:[#allocation2 + $0x68] sm:$0xf]
      %v3524 = vld [vmem:[#allocation2 + $0x6c] sm:$0xf]
      %v3525 = vld [vmem:[#allocation2 + $0x70] sm:$0xf]
      %v3526 = vld [vmem:[#allocation2 + $0x74] sm:$0xf]
      %v3527 = vld [vmem:[#allocation2 + $0x78] sm:$0xf]
      %v3528 = vld [vmem:[#allocation2 + $0x7c] sm:$0xf]
      %v3529 = vld [vmem:[#allocation2 + $0x80] sm:$0xf]
      %v3530 = vld [vmem:[#allocation2 + $0x84] sm:$0xf]
      %v3531 = vld [vmem:[#allocation2 + $0x88] sm:$0xf]
      %v3532 = vld [vmem:[#allocation2 + $0x8c] sm:$0xf]
      %v3533 = vld [vmem:[#allocation2 + $0x90] sm:$0xf]
      %v3534 = vld [vmem:[#allocation2 + $0x94] sm:$0xf]
      %v3535 = vld [vmem:[#allocation2 + $0x98] sm:$0xf]
      %v3536 = vld [vmem:[#allocation2 + $0x9c] sm:$0xf]
      %v3537 = vld [vmem:[#allocation2 + $0xa0] sm:$0xf]
      %v3538 = vld [vmem:[#allocation2 + $0xa4] sm:$0xf]
      %v3539 = vld [vmem:[#allocation2 + $0xa8] sm:$0xf]
      %v3540 = vld [vmem:[#allocation2 + $0xac] sm:$0xf]
      %v3541 = vld [vmem:[#allocation2 + $0xb0] sm:$0xf]
      %v3542 = vld [vmem:[#allocation2 + $0xb4] sm:$0xf]
      %v3543 = vld [vmem:[#allocation2 + $0xb8] sm:$0xf]
      %v3544 = vld [vmem:[#allocation2 + $0xbc] sm:$0xf]
      %v3545 = vld [vmem:[#allocation2 + $0xc0] sm:$0xf]
      %v3546 = vld [vmem:[#allocation2 + $0xc4] sm:$0xf]
      %v3547 = vld [vmem:[#allocation2 + $0xc8] sm:$0xf]
      %v3548 = vld [vmem:[#allocation2 + $0xcc] sm:$0xf]
      %v3549 = vld [vmem:[#allocation2 + $0xd0] sm:$0xf]
      %v3550 = vld [vmem:[#allocation2 + $0xd4] sm:$0xf]
      %v3551 = vld [vmem:[#allocation2 + $0xd8] sm:$0x1]
      %s3552 = scalar_lea.vmem %s210, 448
      %v3553 = vld [vmem:[%s3552] sm:$0xf]
      %v3554 = vld [vmem:[%s3552 + $0x4] sm:$0xf]
      %v3555 = vld [vmem:[%s3552 + $0x8] sm:$0xf]
      %v3556 = vld [vmem:[%s3552 + $0xc] sm:$0xf]
      %v3557 = vld [vmem:[%s3552 + $0x10] sm:$0xf]
      %v3558 = vld [vmem:[%s3552 + $0x14] sm:$0xf]
      %v3559 = vld [vmem:[%s3552 + $0x18] sm:$0xf]
      %v3560 = vld [vmem:[%s3552 + $0x1c] sm:$0xf]
      %v3561 = vld [vmem:[%s3552 + $0x20] sm:$0xf]
      %v3562 = vld [vmem:[%s3552 + $0x24] sm:$0xf]
      %v3563 = vld [vmem:[%s3552 + $0x28] sm:$0xf]
      %v3564 = vld [vmem:[%s3552 + $0x2c] sm:$0xf]
      %v3565 = vld [vmem:[%s3552 + $0x30] sm:$0xf]
      %v3566 = vld [vmem:[%s3552 + $0x34] sm:$0xf]
      %v3567 = vld [vmem:[%s3552 + $0x38] sm:$0xf]
      %v3568 = vld [vmem:[%s3552 + $0x3c] sm:$0xf]
      %v3618 = vunpack.c.l.b16 %v3503
      %v3619 = vunpack.c.l.b16 %v3504
      %v3620 = vunpack.c.l.b16 %v3505
      %v3621 = vunpack.c.l.b16 %v3506
      %v3622 = vunpack.c.l.b16 %v3507
      %v3623 = vunpack.c.l.b16 %v3508
      %v3624 = vunpack.c.l.b16 %v3509
      %v3625 = vunpack.c.l.b16 %v3510
      %v3626 = vunpack.c.l.b16 %v3511
      %v3627 = vunpack.c.l.b16 %v3512
      %v3628 = vunpack.c.l.b16 %v3513
      %v3629 = vunpack.c.l.b16 %v3514
      %v3630 = vunpack.c.l.b16 %v3515
      %v3631 = vunpack.c.l.b16 %v3516
      %v3632 = vunpack.c.l.b16 %v3517
      %v3633 = vunpack.c.l.b16 %v3518
      %v3634 = vunpack.c.l.b16 %v3519
      %v3635 = vunpack.c.l.b16 %v3520
      %v3636 = vunpack.c.l.b16 %v3521
      %v3637 = vunpack.c.l.b16 %v3522
      %v3638 = vunpack.c.l.b16 %v3523
      %v3639 = vunpack.c.l.b16 %v3524
      %v3640 = vunpack.c.l.b16 %v3525
      %v3641 = vunpack.c.l.b16 %v3526
      %v3642 = vunpack.c.l.b16 %v3527
      %v3643 = vunpack.c.l.b16 %v3528
      %v3644 = vunpack.c.l.b16 %v3529
      %v3645 = vunpack.c.l.b16 %v3530
      %v3646 = vunpack.c.l.b16 %v3531
      %v3647 = vunpack.c.l.b16 %v3532
      %v3648 = vunpack.c.l.b16 %v3533
      %v3649 = vunpack.c.l.b16 %v3534
      %v3650 = vunpack.c.l.b16 %v3535
      %v3651 = vunpack.c.l.b16 %v3536
      %v3652 = vunpack.c.l.b16 %v3537
      %v3653 = vunpack.c.l.b16 %v3538
      %v3654 = vunpack.c.l.b16 %v3539
      %v3655 = vunpack.c.l.b16 %v3540
      %v3656 = vunpack.c.l.b16 %v3541
      %v3657 = vunpack.c.l.b16 %v3542
      %v3658 = vunpack.c.l.b16 %v3543
      %v3659 = vunpack.c.l.b16 %v3544
      %v3660 = vunpack.c.l.b16 %v3545
      %v3661 = vunpack.c.l.b16 %v3546
      %v3662 = vunpack.c.l.b16 %v3547
      %v3663 = vunpack.c.l.b16 %v3548
      %v3664 = vunpack.c.l.b16 %v3549
      %v3665 = vunpack.c.l.b16 %v3550
      %v3666 = vunpack.c.l.b16 %v3551
      %v3667 = vpack.c.b16 %v3619, %v3618
      %v3668 = vpack.c.b16 %v3621, %v3620
      %v3669 = vpack.c.b16 %v3623, %v3622
      %v3670 = vpack.c.b16 %v3625, %v3624
      %v3671 = vpack.c.b16 %v3627, %v3626
      %v3672 = vpack.c.b16 %v3629, %v3628
      %v3673 = vpack.c.b16 %v3631, %v3630
      %v3674 = vpack.c.b16 %v3633, %v3632
      %v3675 = vpack.c.b16 %v3635, %v3634
      %v3676 = vpack.c.b16 %v3637, %v3636
      %v3677 = vpack.c.b16 %v3639, %v3638
      %v3678 = vpack.c.b16 %v3641, %v3640
      %v3679 = vpack.c.b16 %v3643, %v3642
      %v3680 = vpack.c.b16 %v3645, %v3644
      %v3681 = vpack.c.b16 %v3647, %v3646
      %v3682 = vpack.c.b16 %v3649, %v3648
      %v3683 = vpack.c.b16 %v3651, %v3650
      %v3684 = vpack.c.b16 %v3653, %v3652
      %v3685 = vpack.c.b16 %v3655, %v3654
      %v3686 = vpack.c.b16 %v3657, %v3656
      %v3687 = vpack.c.b16 %v3659, %v3658
      %v3688 = vpack.c.b16 %v3661, %v3660
      %v3689 = vpack.c.b16 %v3663, %v3662
      %v3690 = vpack.c.b16 %v3665, %v3664
      %v3691 = vpack.c.b16 %v3666, %v3666
      %v3693 = vshrl.u32 %v3667, 16
      %v3695 = vshll.u32 %v3667, 16
      %v3697 = vrot.slane %v3695, 1
      %v3698 = vor.u32 %v3693, %v3697
      %v3700 = vshll.u32 %v3668, 16
      %v3702 = vrot.slane %v3700, 1
      %v3703 = vsel %vm955, %v3698, %v3702
      %v3704 = vshrl.u32 %v3668, 16
      %v3706 = vor.u32 %v3704, %v3702
      %v3708 = vshll.u32 %v3669, 16
      %v3710 = vrot.slane %v3708, 1
      %v3711 = vsel %vm955, %v3706, %v3710
      %v3712 = vshrl.u32 %v3669, 16
      %v3714 = vor.u32 %v3712, %v3710
      %v3716 = vshll.u32 %v3670, 16
      %v3718 = vrot.slane %v3716, 1
      %v3719 = vsel %vm955, %v3714, %v3718
      %v3720 = vshrl.u32 %v3670, 16
      %v3722 = vor.u32 %v3720, %v3718
      %v3724 = vshll.u32 %v3671, 16
      %v3726 = vrot.slane %v3724, 1
      %v3727 = vsel %vm955, %v3722, %v3726
      %v3728 = vshrl.u32 %v3671, 16
      %v3730 = vor.u32 %v3728, %v3726
      %v3732 = vshll.u32 %v3672, 16
      %v3734 = vrot.slane %v3732, 1
      %v3735 = vsel %vm955, %v3730, %v3734
      %v3736 = vshrl.u32 %v3672, 16
      %v3738 = vor.u32 %v3736, %v3734
      %v3740 = vshll.u32 %v3673, 16
      %v3742 = vrot.slane %v3740, 1
      %v3743 = vsel %vm955, %v3738, %v3742
      %v3744 = vshrl.u32 %v3673, 16
      %v3746 = vor.u32 %v3744, %v3742
      %v3748 = vshll.u32 %v3674, 16
      %v3750 = vrot.slane %v3748, 1
      %v3751 = vsel %vm955, %v3746, %v3750
      %v3752 = vshrl.u32 %v3674, 16
      %v3754 = vor.u32 %v3752, %v3750
      %v3756 = vshll.u32 %v3675, 16
      %v3758 = vrot.slane %v3756, 1
      %v3759 = vsel %vm955, %v3754, %v3758
      %v3760 = vshrl.u32 %v3675, 16
      %v3762 = vor.u32 %v3760, %v3758
      %v3764 = vshll.u32 %v3676, 16
      %v3766 = vrot.slane %v3764, 1
      %v3767 = vsel %vm955, %v3762, %v3766
      %v3768 = vshrl.u32 %v3676, 16
      %v3770 = vor.u32 %v3768, %v3766
      %v3772 = vshll.u32 %v3677, 16
      %v3774 = vrot.slane %v3772, 1
      %v3775 = vsel %vm955, %v3770, %v3774
      %v3776 = vshrl.u32 %v3677, 16
      %v3778 = vor.u32 %v3776, %v3774
      %v3780 = vshll.u32 %v3678, 16
      %v3782 = vrot.slane %v3780, 1
      %v3783 = vsel %vm955, %v3778, %v3782
      %v3784 = vshrl.u32 %v3678, 16
      %v3786 = vor.u32 %v3784, %v3782
      %v3788 = vshll.u32 %v3679, 16
      %v3790 = vrot.slane %v3788, 1
      %v3791 = vsel %vm955, %v3786, %v3790
      %v3792 = vshrl.u32 %v3679, 16
      %v3794 = vor.u32 %v3792, %v3790
      %v3796 = vshll.u32 %v3680, 16
      %v3798 = vrot.slane %v3796, 1
      %v3799 = vsel %vm955, %v3794, %v3798
      %v3800 = vshrl.u32 %v3680, 16
      %v3802 = vor.u32 %v3800, %v3798
      %v3804 = vshll.u32 %v3681, 16
      %v3806 = vrot.slane %v3804, 1
      %v3807 = vsel %vm955, %v3802, %v3806
      %v3808 = vshrl.u32 %v3681, 16
      %v3810 = vor.u32 %v3808, %v3806
      %v3812 = vshll.u32 %v3682, 16
      %v3814 = vrot.slane %v3812, 1
      %v3815 = vsel %vm955, %v3810, %v3814
      %v3816 = vshrl.u32 %v3682, 16
      %v3818 = vor.u32 %v3816, %v3814
      %v3820 = vshll.u32 %v3683, 16
      %v3822 = vrot.slane %v3820, 1
      %v3823 = vsel %vm955, %v3818, %v3822
      %v3824 = vshrl.u32 %v3683, 16
      %v3826 = vor.u32 %v3824, %v3822
      %v3828 = vshll.u32 %v3684, 16
      %v3830 = vrot.slane %v3828, 1
      %v3831 = vsel %vm955, %v3826, %v3830
      %v3832 = vshrl.u32 %v3684, 16
      %v3834 = vor.u32 %v3832, %v3830
      %v3836 = vshll.u32 %v3685, 16
      %v3838 = vrot.slane %v3836, 1
      %v3839 = vsel %vm955, %v3834, %v3838
      %v3840 = vshrl.u32 %v3685, 16
      %v3842 = vor.u32 %v3840, %v3838
      %v3844 = vshll.u32 %v3686, 16
      %v3846 = vrot.slane %v3844, 1
      %v3847 = vsel %vm955, %v3842, %v3846
      %v3848 = vshrl.u32 %v3686, 16
      %v3850 = vor.u32 %v3848, %v3846
      %v3852 = vshll.u32 %v3687, 16
      %v3854 = vrot.slane %v3852, 1
      %v3855 = vsel %vm955, %v3850, %v3854
      %v3856 = vshrl.u32 %v3687, 16
      %v3858 = vor.u32 %v3856, %v3854
      %v3860 = vshll.u32 %v3688, 16
      %v3862 = vrot.slane %v3860, 1
      %v3863 = vsel %vm955, %v3858, %v3862
      %v3864 = vshrl.u32 %v3688, 16
      %v3866 = vor.u32 %v3864, %v3862
      %v3868 = vshll.u32 %v3689, 16
      %v3870 = vrot.slane %v3868, 1
      %v3871 = vsel %vm955, %v3866, %v3870
      %v3872 = vshrl.u32 %v3689, 16
      %v3874 = vor.u32 %v3872, %v3870
      %v3876 = vshll.u32 %v3690, 16
      %v3878 = vrot.slane %v3876, 1
      %v3879 = vsel %vm955, %v3874, %v3878
      %v3880 = vshrl.u32 %v3690, 16
      %v3882 = vor.u32 %v3880, %v3878
      %v3884 = vshll.u32 %v3691, 16
      %v3886 = vrot.slane %v3884, 1
      %v3887 = vsel %vm955, %v3882, %v3886
      %v3928 = vunpack.c.l.b16 %v3553
      %v3929 = vunpack.c.l.b16 %v3554
      %v3930 = vunpack.c.l.b16 %v3555
      %v3931 = vunpack.c.l.b16 %v3556
      %v3932 = vunpack.c.l.b16 %v3557
      %v3933 = vunpack.c.l.b16 %v3558
      %v3934 = vunpack.c.l.b16 %v3559
      %v3935 = vunpack.c.l.b16 %v3560
      %v3936 = vunpack.c.l.b16 %v3561
      %v3937 = vunpack.c.l.b16 %v3562
      %v3938 = vunpack.c.l.b16 %v3563
      %v3939 = vunpack.c.l.b16 %v3564
      %v3940 = vunpack.c.l.b16 %v3565
      %v3941 = vunpack.c.l.b16 %v3566
      %v3942 = vunpack.c.l.b16 %v3567
      %v3943 = vunpack.c.l.b16 %v3568
      %v3944 = vpack.c.b16 %v3929, %v3928
      %v3945 = vpack.c.b16 %v3931, %v3930
      %v3946 = vpack.c.b16 %v3933, %v3932
      %v3947 = vpack.c.b16 %v3935, %v3934
      %v3948 = vpack.c.b16 %v3937, %v3936
      %v3949 = vpack.c.b16 %v3939, %v3938
      %v3950 = vpack.c.b16 %v3941, %v3940
      %v3951 = vpack.c.b16 %v3943, %v3942
      %3960 = vmatpush.bf16.msra.mxu0 %v3951
      %3961 = vmatpush.bf16.msra.mxu0 %v3950
      %3962 = vmatpush.bf16.msra.mxu0 %v3949
      %3963 = vmatpush.bf16.msra.mxu0 %v3948
      %3964 = vmatpush.bf16.msra.mxu0 %v3947
      %3965 = vmatpush.bf16.msra.mxu0 %v3946
      %3966 = vmatpush.bf16.msra.mxu0 %v3945
      %3967 = vmatpush.bf16.msra.mxu0 %v3944
      %3968 = vmatmul.bf16.gmra.mxu0 %v3703
      %v3969 = vpop.f32.mrf.mxu0
      %v3970 = vadd.f32 0.0, %v3969
      %v3971 = vpop.f32.mrf.mxu0
      %v3972 = vadd.f32 0.0, %v3971
      %3973 = vmatmul.bf16.gmra.mxu0 %v3711
      %v3974 = vpop.f32.mrf.mxu0
      %v3975 = vpop.f32.mrf.mxu0
      %v3976 = vadd.f32 0.0, %v3975
      %3977 = vmatmul.bf16.gmra.mxu0 %v3719
      %v3978 = vpop.f32.mrf.mxu0
      %v3979 = vadd.f32 0.0, %v3978
      %v3980 = vpop.f32.mrf.mxu0
      %3981 = vmatmul.bf16.gmra.mxu0 %v3727
      %v3982 = vpop.f32.mrf.mxu0
      %v3983 = vadd.f32 0.0, %v3982
      %v3984 = vpop.f32.mrf.mxu0
      %v3985 = vadd.f32 0.0, %v3984
      %3986 = vmatmul.bf16.gmra.mxu0 %v3735
      %v3987 = vpop.f32.mrf.mxu0
      %v3988 = vpop.f32.mrf.mxu0
      %v3989 = vadd.f32 0.0, %v3988
      %3990 = vmatmul.bf16.gmra.mxu0 %v3743
      %v3991 = vpop.f32.mrf.mxu0
      %v3992 = vadd.f32 0.0, %v3991
      %v3993 = vpop.f32.mrf.mxu0
      %3994 = vmatmul.bf16.gmra.mxu0 %v3751
      %v3995 = vpop.f32.mrf.mxu0
      %v3996 = vadd.f32 0.0, %v3995
      %v3997 = vpop.f32.mrf.mxu0
      %v3998 = vadd.f32 0.0, %v3997
      %3999 = vmatmul.bf16.gmra.mxu0 %v3759
      %v4000 = vpop.f32.mrf.mxu0
      %v4001 = vpop.f32.mrf.mxu0
      %v4002 = vadd.f32 0.0, %v4001
      %4003 = vmatmul.bf16.gmra.mxu0 %v3767
      %v4004 = vpop.f32.mrf.mxu0
      %v4005 = vadd.f32 0.0, %v4004
      %v4006 = vpop.f32.mrf.mxu0
      %4007 = vmatmul.bf16.gmra.mxu0 %v3775
      %v4008 = vpop.f32.mrf.mxu0
      %v4009 = vadd.f32 0.0, %v4008
      %v4010 = vpop.f32.mrf.mxu0
      %v4011 = vadd.f32 0.0, %v4010
      %4012 = vmatmul.bf16.gmra.mxu0 %v3783
      %v4013 = vpop.f32.mrf.mxu0
      %v4014 = vpop.f32.mrf.mxu0
      %v4015 = vadd.f32 0.0, %v4014
      %4016 = vmatmul.bf16.gmra.mxu0 %v3791
      %v4017 = vpop.f32.mrf.mxu0
      %v4018 = vadd.f32 0.0, %v4017
      %v4019 = vpop.f32.mrf.mxu0
      %4020 = vmatmul.bf16.gmra.mxu0 %v3799
      %v4021 = vpop.f32.mrf.mxu0
      %v4022 = vadd.f32 0.0, %v4021
      %v4023 = vpop.f32.mrf.mxu0
      %v4024 = vadd.f32 0.0, %v4023
      %4025 = vmatmul.bf16.gmra.mxu0 %v3807
      %v4026 = vpop.f32.mrf.mxu0
      %v4027 = vpop.f32.mrf.mxu0
      %v4028 = vadd.f32 0.0, %v4027
      %4029 = vmatmul.bf16.gmra.mxu0 %v3815
      %v4030 = vpop.f32.mrf.mxu0
      %v4031 = vadd.f32 0.0, %v4030
      %v4032 = vpop.f32.mrf.mxu0
      %4033 = vmatmul.bf16.gmra.mxu0 %v3823
      %v4034 = vpop.f32.mrf.mxu0
      %v4035 = vadd.f32 0.0, %v4034
      %v4036 = vpop.f32.mrf.mxu0
      %v4037 = vadd.f32 0.0, %v4036
      %4038 = vmatmul.bf16.gmra.mxu0 %v3831
      %v4039 = vpop.f32.mrf.mxu0
      %v4040 = vpop.f32.mrf.mxu0
      %v4041 = vadd.f32 0.0, %v4040
      %4042 = vmatmul.bf16.gmra.mxu0 %v3839
      %v4043 = vpop.f32.mrf.mxu0
      %v4044 = vadd.f32 0.0, %v4043
      %v4045 = vpop.f32.mrf.mxu0
      %4046 = vmatmul.bf16.gmra.mxu0 %v3847
      %v4047 = vpop.f32.mrf.mxu0
      %v4048 = vadd.f32 0.0, %v4047
      %v4049 = vpop.f32.mrf.mxu0
      %v4050 = vadd.f32 0.0, %v4049
      %4051 = vmatmul.bf16.gmra.mxu0 %v3855
      %v4052 = vpop.f32.mrf.mxu0
      %v4053 = vpop.f32.mrf.mxu0
      %v4054 = vadd.f32 0.0, %v4053
      %4055 = vmatmul.bf16.gmra.mxu0 %v3863
      %v4056 = vpop.f32.mrf.mxu0
      %v4057 = vadd.f32 0.0, %v4056
      %v4058 = vpop.f32.mrf.mxu0
      %4059 = vmatmul.bf16.gmra.mxu0 %v3871
      %v4060 = vpop.f32.mrf.mxu0
      %v4061 = vadd.f32 0.0, %v4060
      %v4062 = vpop.f32.mrf.mxu0
      %v4063 = vadd.f32 0.0, %v4062
      %4064 = vmatmul.bf16.gmra.mxu0 %v3879
      %v4065 = vpop.f32.mrf.mxu0
      %v4066 = vpop.f32.mrf.mxu0
      %v4067 = vadd.f32 0.0, %v4066
      %4068 = vmatmul.bf16.gmra.mxu0 %v3887
      %v4069 = vpop.f32.mrf.mxu0
      %v4070 = vadd.f32 0.0, %v4069
      %v4071 = vpop.f32.mrf.mxu0
      %4072 = vdwg.mxu0
      %v4073 = vadd.f32 %v3471, %v3970
      %v4074 = vadd.f32 %v3472, %v3972
      %v4075 = vadd.f32 %v3473, %v3976
      %v4076 = vadd.f32 %v3474, %v3979
      %v4077 = vadd.f32 %v3475, %v3983
      %v4078 = vadd.f32 %v3476, %v3985
      %v4079 = vadd.f32 %v3477, %v3989
      %v4080 = vadd.f32 %v3478, %v3992
      %v4081 = vadd.f32 %v3479, %v3996
      %v4082 = vadd.f32 %v3480, %v3998
      %v4083 = vadd.f32 %v3481, %v4002
      %v4084 = vadd.f32 %v3482, %v4005
      %v4085 = vadd.f32 %v3483, %v4009
      %v4086 = vadd.f32 %v3484, %v4011
      %v4087 = vadd.f32 %v3485, %v4015
      %v4088 = vadd.f32 %v3486, %v4018
      %v4089 = vadd.f32 %v3487, %v4022
      %v4090 = vadd.f32 %v3488, %v4024
      %v4091 = vadd.f32 %v3489, %v4028
      %v4092 = vadd.f32 %v3490, %v4031
      %v4093 = vadd.f32 %v3491, %v4035
      %v4094 = vadd.f32 %v3492, %v4037
      %v4095 = vadd.f32 %v3493, %v4041
      %v4096 = vadd.f32 %v3494, %v4044
      %v4097 = vadd.f32 %v3495, %v4048
      %v4098 = vadd.f32 %v3496, %v4050
      %v4099 = vadd.f32 %v3497, %v4054
      %v4100 = vadd.f32 %v3498, %v4057
      %v4101 = vadd.f32 %v3499, %v4061
      %v4102 = vadd.f32 %v3500, %v4063
      %v4103 = vadd.f32 %v3501, %v4067
      %v4104 = vadd.f32 %v3502, %v4070
      %v4105 = vld [vmem:[#allocation2 + $0x18] sm:$0xe]
      %s4106 = scalar_lea.vmem %s210, 512
      %v4107 = vld [vmem:[%s4106] sm:$0xf]
      %v4108 = vld [vmem:[%s4106 + $0x4] sm:$0xf]
      %v4109 = vld [vmem:[%s4106 + $0x8] sm:$0xf]
      %v4110 = vld [vmem:[%s4106 + $0xc] sm:$0xf]
      %v4111 = vld [vmem:[%s4106 + $0x10] sm:$0xf]
      %v4112 = vld [vmem:[%s4106 + $0x14] sm:$0xf]
      %v4113 = vld [vmem:[%s4106 + $0x18] sm:$0xf]
      %v4114 = vld [vmem:[%s4106 + $0x1c] sm:$0xf]
      %v4115 = vld [vmem:[%s4106 + $0x20] sm:$0xf]
      %v4116 = vld [vmem:[%s4106 + $0x24] sm:$0xf]
      %v4117 = vld [vmem:[%s4106 + $0x28] sm:$0xf]
      %v4118 = vld [vmem:[%s4106 + $0x2c] sm:$0xf]
      %v4119 = vld [vmem:[%s4106 + $0x30] sm:$0xf]
      %v4120 = vld [vmem:[%s4106 + $0x34] sm:$0xf]
      %v4121 = vld [vmem:[%s4106 + $0x38] sm:$0xf]
      %v4122 = vld [vmem:[%s4106 + $0x3c] sm:$0xf]
      %v4124 = vunpack.c.l.b16 %v4105
      %v4125 = vpack.c.b16 %v3619, %v4124
      %v4126 = vrot.slane %v4125, 1
      %v4127 = vrot.slane %v3668, 1
      %v4128 = vsel %vm1543, %v4126, %v4127
      %v4129 = vrot.slane %v3669, 1
      %v4130 = vsel %vm1543, %v4127, %v4129
      %v4131 = vrot.slane %v3670, 1
      %v4132 = vsel %vm1543, %v4129, %v4131
      %v4133 = vrot.slane %v3671, 1
      %v4134 = vsel %vm1543, %v4131, %v4133
      %v4135 = vrot.slane %v3672, 1
      %v4136 = vsel %vm1543, %v4133, %v4135
      %v4137 = vrot.slane %v3673, 1
      %v4138 = vsel %vm1543, %v4135, %v4137
      %v4139 = vrot.slane %v3674, 1
      %v4140 = vsel %vm1543, %v4137, %v4139
      %v4141 = vrot.slane %v3675, 1
      %v4142 = vsel %vm1543, %v4139, %v4141
      %v4143 = vrot.slane %v3676, 1
      %v4144 = vsel %vm1543, %v4141, %v4143
      %v4145 = vrot.slane %v3677, 1
      %v4146 = vsel %vm1543, %v4143, %v4145
      %v4147 = vrot.slane %v3678, 1
      %v4148 = vsel %vm1543, %v4145, %v4147
      %v4149 = vrot.slane %v3679, 1
      %v4150 = vsel %vm1543, %v4147, %v4149
      %v4151 = vrot.slane %v3680, 1
      %v4152 = vsel %vm1543, %v4149, %v4151
      %v4153 = vrot.slane %v3681, 1
      %v4154 = vsel %vm1543, %v4151, %v4153
      %v4155 = vrot.slane %v3682, 1
      %v4156 = vsel %vm1543, %v4153, %v4155
      %v4157 = vrot.slane %v3683, 1
      %v4158 = vsel %vm1543, %v4155, %v4157
      %v4159 = vrot.slane %v3684, 1
      %v4160 = vsel %vm1543, %v4157, %v4159
      %v4161 = vrot.slane %v3685, 1
      %v4162 = vsel %vm1543, %v4159, %v4161
      %v4163 = vrot.slane %v3686, 1
      %v4164 = vsel %vm1543, %v4161, %v4163
      %v4165 = vrot.slane %v3687, 1
      %v4166 = vsel %vm1543, %v4163, %v4165
      %v4167 = vrot.slane %v3688, 1
      %v4168 = vsel %vm1543, %v4165, %v4167
      %v4169 = vrot.slane %v3689, 1
      %v4170 = vsel %vm1543, %v4167, %v4169
      %v4171 = vrot.slane %v3690, 1
      %v4172 = vsel %vm1543, %v4169, %v4171
      %v4173 = vrot.slane %v3691, 1
      %v4174 = vsel %vm1543, %v4171, %v4173
      %v4215 = vunpack.c.l.b16 %v4107
      %v4216 = vunpack.c.l.b16 %v4108
      %v4217 = vunpack.c.l.b16 %v4109
      %v4218 = vunpack.c.l.b16 %v4110
      %v4219 = vunpack.c.l.b16 %v4111
      %v4220 = vunpack.c.l.b16 %v4112
      %v4221 = vunpack.c.l.b16 %v4113
      %v4222 = vunpack.c.l.b16 %v4114
      %v4223 = vunpack.c.l.b16 %v4115
      %v4224 = vunpack.c.l.b16 %v4116
      %v4225 = vunpack.c.l.b16 %v4117
      %v4226 = vunpack.c.l.b16 %v4118
      %v4227 = vunpack.c.l.b16 %v4119
      %v4228 = vunpack.c.l.b16 %v4120
      %v4229 = vunpack.c.l.b16 %v4121
      %v4230 = vunpack.c.l.b16 %v4122
      %v4231 = vpack.c.b16 %v4216, %v4215
      %v4232 = vpack.c.b16 %v4218, %v4217
      %v4233 = vpack.c.b16 %v4220, %v4219
      %v4234 = vpack.c.b16 %v4222, %v4221
      %v4235 = vpack.c.b16 %v4224, %v4223
      %v4236 = vpack.c.b16 %v4226, %v4225
      %v4237 = vpack.c.b16 %v4228, %v4227
      %v4238 = vpack.c.b16 %v4230, %v4229
      %4247 = vmatpush.bf16.msra.mxu0 %v4238
      %4248 = vmatpush.bf16.msra.mxu0 %v4237
      %4249 = vmatpush.bf16.msra.mxu0 %v4236
      %4250 = vmatpush.bf16.msra.mxu0 %v4235
      %4251 = vmatpush.bf16.msra.mxu0 %v4234
      %4252 = vmatpush.bf16.msra.mxu0 %v4233
      %4253 = vmatpush.bf16.msra.mxu0 %v4232
      %4254 = vmatpush.bf16.msra.mxu0 %v4231
      %4255 = vmatmul.bf16.gmra.mxu0 %v4128
      %v4256 = vpop.f32.mrf.mxu0
      %v4257 = vadd.f32 0.0, %v4256
      %v4258 = vpop.f32.mrf.mxu0
      %v4259 = vadd.f32 0.0, %v4258
      %4260 = vmatmul.bf16.gmra.mxu0 %v4130
      %v4261 = vpop.f32.mrf.mxu0
      %v4262 = vpop.f32.mrf.mxu0
      %v4263 = vadd.f32 0.0, %v4262
      %4264 = vmatmul.bf16.gmra.mxu0 %v4132
      %v4265 = vpop.f32.mrf.mxu0
      %v4266 = vadd.f32 0.0, %v4265
      %v4267 = vpop.f32.mrf.mxu0
      %4268 = vmatmul.bf16.gmra.mxu0 %v4134
      %v4269 = vpop.f32.mrf.mxu0
      %v4270 = vadd.f32 0.0, %v4269
      %v4271 = vpop.f32.mrf.mxu0
      %v4272 = vadd.f32 0.0, %v4271
      %4273 = vmatmul.bf16.gmra.mxu0 %v4136
      %v4274 = vpop.f32.mrf.mxu0
      %v4275 = vpop.f32.mrf.mxu0
      %v4276 = vadd.f32 0.0, %v4275
      %4277 = vmatmul.bf16.gmra.mxu0 %v4138
      %v4278 = vpop.f32.mrf.mxu0
      %v4279 = vadd.f32 0.0, %v4278
      %v4280 = vpop.f32.mrf.mxu0
      %4281 = vmatmul.bf16.gmra.mxu0 %v4140
      %v4282 = vpop.f32.mrf.mxu0
      %v4283 = vadd.f32 0.0, %v4282
      %v4284 = vpop.f32.mrf.mxu0
      %v4285 = vadd.f32 0.0, %v4284
      %4286 = vmatmul.bf16.gmra.mxu0 %v4142
      %v4287 = vpop.f32.mrf.mxu0
      %v4288 = vpop.f32.mrf.mxu0
      %v4289 = vadd.f32 0.0, %v4288
      %4290 = vmatmul.bf16.gmra.mxu0 %v4144
      %v4291 = vpop.f32.mrf.mxu0
      %v4292 = vadd.f32 0.0, %v4291
      %v4293 = vpop.f32.mrf.mxu0
      %4294 = vmatmul.bf16.gmra.mxu0 %v4146
      %v4295 = vpop.f32.mrf.mxu0
      %v4296 = vadd.f32 0.0, %v4295
      %v4297 = vpop.f32.mrf.mxu0
      %v4298 = vadd.f32 0.0, %v4297
      %4299 = vmatmul.bf16.gmra.mxu0 %v4148
      %v4300 = vpop.f32.mrf.mxu0
      %v4301 = vpop.f32.mrf.mxu0
      %v4302 = vadd.f32 0.0, %v4301
      %4303 = vmatmul.bf16.gmra.mxu0 %v4150
      %v4304 = vpop.f32.mrf.mxu0
      %v4305 = vadd.f32 0.0, %v4304
      %v4306 = vpop.f32.mrf.mxu0
      %4307 = vmatmul.bf16.gmra.mxu0 %v4152
      %v4308 = vpop.f32.mrf.mxu0
      %v4309 = vadd.f32 0.0, %v4308
      %v4310 = vpop.f32.mrf.mxu0
      %v4311 = vadd.f32 0.0, %v4310
      %4312 = vmatmul.bf16.gmra.mxu0 %v4154
      %v4313 = vpop.f32.mrf.mxu0
      %v4314 = vpop.f32.mrf.mxu0
      %v4315 = vadd.f32 0.0, %v4314
      %4316 = vmatmul.bf16.gmra.mxu0 %v4156
      %v4317 = vpop.f32.mrf.mxu0
      %v4318 = vadd.f32 0.0, %v4317
      %v4319 = vpop.f32.mrf.mxu0
      %4320 = vmatmul.bf16.gmra.mxu0 %v4158
      %v4321 = vpop.f32.mrf.mxu0
      %v4322 = vadd.f32 0.0, %v4321
      %v4323 = vpop.f32.mrf.mxu0
      %v4324 = vadd.f32 0.0, %v4323
      %4325 = vmatmul.bf16.gmra.mxu0 %v4160
      %v4326 = vpop.f32.mrf.mxu0
      %v4327 = vpop.f32.mrf.mxu0
      %v4328 = vadd.f32 0.0, %v4327
      %4329 = vmatmul.bf16.gmra.mxu0 %v4162
      %v4330 = vpop.f32.mrf.mxu0
      %v4331 = vadd.f32 0.0, %v4330
      %v4332 = vpop.f32.mrf.mxu0
      %4333 = vmatmul.bf16.gmra.mxu0 %v4164
      %v4334 = vpop.f32.mrf.mxu0
      %v4335 = vadd.f32 0.0, %v4334
      %v4336 = vpop.f32.mrf.mxu0
      %v4337 = vadd.f32 0.0, %v4336
      %4338 = vmatmul.bf16.gmra.mxu0 %v4166
      %v4339 = vpop.f32.mrf.mxu0
      %v4340 = vpop.f32.mrf.mxu0
      %v4341 = vadd.f32 0.0, %v4340
      %4342 = vmatmul.bf16.gmra.mxu0 %v4168
      %v4343 = vpop.f32.mrf.mxu0
      %v4344 = vadd.f32 0.0, %v4343
      %v4345 = vpop.f32.mrf.mxu0
      %4346 = vmatmul.bf16.gmra.mxu0 %v4170
      %v4347 = vpop.f32.mrf.mxu0
      %v4348 = vadd.f32 0.0, %v4347
      %v4349 = vpop.f32.mrf.mxu0
      %v4350 = vadd.f32 0.0, %v4349
      %4351 = vmatmul.bf16.gmra.mxu0 %v4172
      %v4352 = vpop.f32.mrf.mxu0
      %v4353 = vpop.f32.mrf.mxu0
      %v4354 = vadd.f32 0.0, %v4353
      %4355 = vmatmul.bf16.gmra.mxu0 %v4174
      %v4356 = vpop.f32.mrf.mxu0
      %v4357 = vadd.f32 0.0, %v4356
      %v4358 = vpop.f32.mrf.mxu0
      %4359 = vdwg.mxu0
      %v4360 = vadd.f32 %v4073, %v4257
      %v4361 = vadd.f32 %v4074, %v4259
      %v4362 = vadd.f32 %v4075, %v4263
      %v4363 = vadd.f32 %v4076, %v4266
      %v4364 = vadd.f32 %v4077, %v4270
      %v4365 = vadd.f32 %v4078, %v4272
      %v4366 = vadd.f32 %v4079, %v4276
      %v4367 = vadd.f32 %v4080, %v4279
      %v4368 = vadd.f32 %v4081, %v4283
      %v4369 = vadd.f32 %v4082, %v4285
      %v4370 = vadd.f32 %v4083, %v4289
      %v4371 = vadd.f32 %v4084, %v4292
      %v4372 = vadd.f32 %v4085, %v4296
      %v4373 = vadd.f32 %v4086, %v4298
      %v4374 = vadd.f32 %v4087, %v4302
      %v4375 = vadd.f32 %v4088, %v4305
      %v4376 = vadd.f32 %v4089, %v4309
      %v4377 = vadd.f32 %v4090, %v4311
      %v4378 = vadd.f32 %v4091, %v4315
      %v4379 = vadd.f32 %v4092, %v4318
      %v4380 = vadd.f32 %v4093, %v4322
      %v4381 = vadd.f32 %v4094, %v4324
      %v4382 = vadd.f32 %v4095, %v4328
      %v4383 = vadd.f32 %v4096, %v4331
      %v4384 = vadd.f32 %v4097, %v4335
      %v4385 = vadd.f32 %v4098, %v4337
      %v4386 = vadd.f32 %v4099, %v4341
      %v4387 = vadd.f32 %v4100, %v4344
      %v4388 = vadd.f32 %v4101, %v4348
      %v4389 = vadd.f32 %v4102, %v4350
      %v4390 = vadd.f32 %v4103, %v4354
      %v4391 = vadd.f32 %v4104, %v4357
      %v4392 = vld [vmem:[%s213] sm:$0x1]
      %v4394 = vperm.slane %v4392, 0
      %v4396 = vadd.f32 %v4360, %v4394
      %v4397 = vadd.f32 %v4361, %v4394
      %v4398 = vadd.f32 %v4362, %v4394
      %v4399 = vadd.f32 %v4363, %v4394
      %v4400 = vadd.f32 %v4364, %v4394
      %v4401 = vadd.f32 %v4365, %v4394
      %v4402 = vadd.f32 %v4366, %v4394
      %v4403 = vadd.f32 %v4367, %v4394
      %v4404 = vadd.f32 %v4368, %v4394
      %v4405 = vadd.f32 %v4369, %v4394
      %v4406 = vadd.f32 %v4370, %v4394
      %v4407 = vadd.f32 %v4371, %v4394
      %v4408 = vadd.f32 %v4372, %v4394
      %v4409 = vadd.f32 %v4373, %v4394
      %v4410 = vadd.f32 %v4374, %v4394
      %v4411 = vadd.f32 %v4375, %v4394
      %v4412 = vadd.f32 %v4376, %v4394
      %v4413 = vadd.f32 %v4377, %v4394
      %v4414 = vadd.f32 %v4378, %v4394
      %v4415 = vadd.f32 %v4379, %v4394
      %v4416 = vadd.f32 %v4380, %v4394
      %v4417 = vadd.f32 %v4381, %v4394
      %v4418 = vadd.f32 %v4382, %v4394
      %v4419 = vadd.f32 %v4383, %v4394
      %v4420 = vadd.f32 %v4384, %v4394
      %v4421 = vadd.f32 %v4385, %v4394
      %v4422 = vadd.f32 %v4386, %v4394
      %v4423 = vadd.f32 %v4387, %v4394
      %v4424 = vadd.f32 %v4388, %v4394
      %v4425 = vadd.f32 %v4389, %v4394
      %v4426 = vadd.f32 %v4390, %v4394
      %v4427 = vadd.f32 %v4391, %v4394
      %v4428 = vmax.f32 %v4396, 0.0
      %v4429 = vmax.f32 %v4397, 0.0
      %v4430 = vmax.f32 %v4398, 0.0
      %v4431 = vmax.f32 %v4399, 0.0
      %v4432 = vmax.f32 %v4400, 0.0
      %v4433 = vmax.f32 %v4401, 0.0
      %v4434 = vmax.f32 %v4402, 0.0
      %v4435 = vmax.f32 %v4403, 0.0
      %v4436 = vmax.f32 %v4404, 0.0
      %v4437 = vmax.f32 %v4405, 0.0
      %v4438 = vmax.f32 %v4406, 0.0
      %v4439 = vmax.f32 %v4407, 0.0
      %v4440 = vmax.f32 %v4408, 0.0
      %v4441 = vmax.f32 %v4409, 0.0
      %v4442 = vmax.f32 %v4410, 0.0
      %v4443 = vmax.f32 %v4411, 0.0
      %v4444 = vmax.f32 %v4412, 0.0
      %v4445 = vmax.f32 %v4413, 0.0
      %v4446 = vmax.f32 %v4414, 0.0
      %v4447 = vmax.f32 %v4415, 0.0
      %v4448 = vmax.f32 %v4416, 0.0
      %v4449 = vmax.f32 %v4417, 0.0
      %v4450 = vmax.f32 %v4418, 0.0
      %v4451 = vmax.f32 %v4419, 0.0
      %v4452 = vmax.f32 %v4420, 0.0
      %v4453 = vmax.f32 %v4421, 0.0
      %v4454 = vmax.f32 %v4422, 0.0
      %v4455 = vmax.f32 %v4423, 0.0
      %v4456 = vmax.f32 %v4424, 0.0
      %v4457 = vmax.f32 %v4425, 0.0
      %v4458 = vmax.f32 %v4426, 0.0
      %v4459 = vmax.f32 %v4427, 0.0
      %v4460 = vpack.c.bf16 %v4428, %v4428
      %v4461 = vpack.c.bf16 %v4429, %v4429
      %v4462 = vpack.c.bf16 %v4430, %v4430
      %v4463 = vpack.c.bf16 %v4431, %v4431
      %v4464 = vpack.c.bf16 %v4432, %v4432
      %v4465 = vpack.c.bf16 %v4433, %v4433
      %v4466 = vpack.c.bf16 %v4434, %v4434
      %v4467 = vpack.c.bf16 %v4435, %v4435
      %v4468 = vpack.c.bf16 %v4436, %v4436
      %v4469 = vpack.c.bf16 %v4437, %v4437
      %v4470 = vpack.c.bf16 %v4438, %v4438
      %v4471 = vpack.c.bf16 %v4439, %v4439
      %v4472 = vpack.c.bf16 %v4440, %v4440
      %v4473 = vpack.c.bf16 %v4441, %v4441
      %v4474 = vpack.c.bf16 %v4442, %v4442
      %v4475 = vpack.c.bf16 %v4443, %v4443
      %v4476 = vpack.c.bf16 %v4444, %v4444
      %v4477 = vpack.c.bf16 %v4445, %v4445
      %v4478 = vpack.c.bf16 %v4446, %v4446
      %v4479 = vpack.c.bf16 %v4447, %v4447
      %v4480 = vpack.c.bf16 %v4448, %v4448
      %v4481 = vpack.c.bf16 %v4449, %v4449
      %v4482 = vpack.c.bf16 %v4450, %v4450
      %v4483 = vpack.c.bf16 %v4451, %v4451
      %v4484 = vpack.c.bf16 %v4452, %v4452
      %v4485 = vpack.c.bf16 %v4453, %v4453
      %v4486 = vpack.c.bf16 %v4454, %v4454
      %v4487 = vpack.c.bf16 %v4455, %v4455
      %v4488 = vpack.c.bf16 %v4456, %v4456
      %v4489 = vpack.c.bf16 %v4457, %v4457
      %v4490 = vpack.c.bf16 %v4458, %v4458
      %v4491 = vpack.c.bf16 %v4459, %v4459
      %4492 = vst [vmem:[%s221] sm:$0xf] %v4460
      %4493 = vst [vmem:[%s221 + $0x4] sm:$0xf] %v4461
      %4494 = vst [vmem:[%s221 + $0x8] sm:$0xf] %v4462
      %4495 = vst [vmem:[%s221 + $0xc] sm:$0xf] %v4463
      %4496 = vst [vmem:[%s221 + $0x10] sm:$0xf] %v4464
      %4497 = vst [vmem:[%s221 + $0x14] sm:$0xf] %v4465
      %4498 = vst [vmem:[%s221 + $0x18] sm:$0xf] %v4466
      %4499 = vst [vmem:[%s221 + $0x1c] sm:$0xf] %v4467
      %4500 = vst [vmem:[%s221 + $0x20] sm:$0xf] %v4468
      %4501 = vst [vmem:[%s221 + $0x24] sm:$0xf] %v4469
      %4502 = vst [vmem:[%s221 + $0x28] sm:$0xf] %v4470
      %4503 = vst [vmem:[%s221 + $0x2c] sm:$0xf] %v4471
      %4504 = vst [vmem:[%s221 + $0x30] sm:$0xf] %v4472
      %4505 = vst [vmem:[%s221 + $0x34] sm:$0xf] %v4473
      %4506 = vst [vmem:[%s221 + $0x38] sm:$0xf] %v4474
      %4507 = vst [vmem:[%s221 + $0x3c] sm:$0xf] %v4475
      %4508 = vst [vmem:[%s221 + $0x40] sm:$0xf] %v4476
      %4509 = vst [vmem:[%s221 + $0x44] sm:$0xf] %v4477
      %4510 = vst [vmem:[%s221 + $0x48] sm:$0xf] %v4478
      %4511 = vst [vmem:[%s221 + $0x4c] sm:$0xf] %v4479
      %4512 = vst [vmem:[%s221 + $0x50] sm:$0xf] %v4480
      %4513 = vst [vmem:[%s221 + $0x54] sm:$0xf] %v4481
      %4514 = vst [vmem:[%s221 + $0x58] sm:$0xf] %v4482
      %4515 = vst [vmem:[%s221 + $0x5c] sm:$0xf] %v4483
      %4516 = vst [vmem:[%s221 + $0x60] sm:$0xf] %v4484
      %4517 = vst [vmem:[%s221 + $0x64] sm:$0xf] %v4485
      %4518 = vst [vmem:[%s221 + $0x68] sm:$0xf] %v4486
      %4519 = vst [vmem:[%s221 + $0x6c] sm:$0xf] %v4487
      %4520 = vst [vmem:[%s221 + $0x70] sm:$0xf] %v4488
      %4521 = vst [vmem:[%s221 + $0x74] sm:$0xf] %v4489
      %4522 = vst [vmem:[%s221 + $0x78] sm:$0xf] %v4490
      %4523 = vst [vmem:[%s221 + $0x7c] sm:$0xf] %v4491
      %p4524 = scmp.lt.s32.totalorder %s19, 1
      %s4525 = scalar_select %p4524, %s19, 1
      %p4526 = scmp.lt.s32.totalorder %s18, 0
      %s4527 = scalar_select %p4526, %s18, 0
      %s4528 = smul.addr %s4525, 32
      %s4529 = sadd.s32 %s4527, %s4528
      %s4530 = smul.addr %s4529, 4
      %s4531 = scalar_lea.vmem %s3, %s4530
      // Predicated region
      $region33: #{basic_block_forward.2} parent=31 // pred_check
        %p4532 = pneg %p124
      $region34: #{basic_block_forward.2} parent=31 // pred_check_branch
        %4534 = sbr.rel (%p4532) target = $region36
      $region35: #{basic_block_forward.2} parent=31 // pred_region
        _
      $region36: #{basic_block_forward.2} parent=31 // pred_fallthru
        _
    $region32: #{basic_block_forward.2} parent=5 // pred_fallthru
      _
    %p4535 = scmp.le.s32.totalorder 2, %s9
    // Predicated region
    $region37: #{basic_block_forward.2} parent=5 // pred_check
      %p4536 = pneg %p4535
    $region38: #{basic_block_forward.2} parent=5 // pred_check_branch
      %4538 = sbr.rel (%p4536) target = $region40
    $region39: #{basic_block_forward.2} parent=5 // pred_region
      %s4539 = ssub.s32 %s9, 2
      // Predicated region
      $region41: #{basic_block_forward.2} parent=39 // pred_check
        %p4540 = pneg %p130
      $region42: #{basic_block_forward.2} parent=39 // pred_check_branch
        %4542 = sbr.rel (%p4540) target = $region44
      $region43: #{basic_block_forward.2} parent=39 // pred_region
        %p4543 = scmp.lt.s32.totalorder %s21, 1
        %s4544 = scalar_select %p4543, %s21, 1
        %p4545 = scmp.lt.s32.totalorder %s20, 0
        %s4546 = scalar_select %p4545, %s20, 0
        %s4547 = smul.addr %s4544, 32
        %s4548 = sadd.s32 %s4546, %s4547
        %s4549 = smul.addr %s4548, 4
        %s4550 = scalar_lea.vmem %s3, %s4549
      $region44: #{basic_block_forward.2} parent=39 // pred_fallthru
        _
    $region40: #{basic_block_forward.2} parent=5 // pred_fallthru
      _
  $region6: #{basic_block_forward.2} parent=0 // loop_footer
    %s13 = sadd.s32 1, %s9
  $region7: #{basic_block_forward.2} parent=0 // loop_footer_branch
    %8 = sbr.rel target = $region3
  $region8: #{basic_block_forward.2} parent=0 // loop_exit
    _

</llo_original>
